<compile_context>
chip_gen: v6e
topology: v6e:2x2x1
jax: 0.10.0
libtpu: 0.0.40
codegen_flags: <defaults>
</compile_context>

<pallas_src>
import math

import jax
import jax.numpy as jnp
from jax.experimental import pallas as pl
from jax.experimental.pallas import tpu as pltpu

D_MODEL = 128
N_LAYER = 4
DIM_IN = 2
D_CONV = 4
D_STATE = 2
DT_RANK = math.ceil(D_MODEL / 16)  # 8
EPS = 1e-5


# --------------------------------------------------------------------------
# Fused full-model forward
# --------------------------------------------------------------------------
def mamba_forward(x, params):
    # x: (s0, s1, DIM_IN). The reference residual mixes transposed frames, so it
    # only type-checks when s0 == s1; we keep that semantic.
    s0, s1, din = x.shape
    assert s0 == s1, "reference MambaBlock residual mixes transposed frames; needs s0 == s1"
    dm, K, N, NL = D_MODEL, D_CONV, D_STATE, N_LAYER
    F = s0 * s1

    # Permutation that swaps the two leading axes of the flattened activations:
    # (perm @ a)[i0 * s1 + i1] == a[i1 * s1 + i0].
    perm = jnp.eye(F, dtype=jnp.float32)[jnp.arange(F).reshape(s0, s1).T.reshape(-1)]

    def kernel(x_ref, perm_ref, enc_w, enc_b, norm_w, w_in, w_conv, b_conv,
               w_bc, w_delta, b_dt, neg_a, d_par, w_out, fnorm_w, dec_w, dec_b,
               o_ref, pad_scr, y_scr):

        def rms(v, w_row):
            ms = jnp.mean(v * v, axis=-1, keepdims=True)
            return v * jax.lax.rsqrt(ms + EPS) * w_row

        # ---- encode: (F, din) @ (din, dm) + bias ----
        h = (jnp.dot(x_ref[...], enc_w[...], preferred_element_type=jnp.float32)
             + enc_b[...])

        # Left zero-pad of the causal-conv buffer, written once (constant across layers).
        pad_scr[0:(K - 1) * s1, :] = jnp.zeros(((K - 1) * s1, dm), jnp.float32)

        for li in range(NL):
            # ---- RMSNorm ----
            x1 = rms(h, norm_w[li])                                          # (F, dm)

            # ---- in_proj (no bias): split into conv branch and gate branch ----
            xr = jnp.dot(x1, w_in[li], preferred_element_type=jnp.float32)   # (F, 2dm)
            xc = xr[:, :dm]
            res = xr[:, dm:]

            # ---- depthwise causal conv along the sequence axis + SiLU ----
            # Rows are (seq, batch)-major, so a k-step sequence shift is a
            # k*s1-row (tile-aligned) shift in the padded scratch buffer.
            pad_scr[(K - 1) * s1:, :] = xc
            acc = jnp.zeros((F, dm), jnp.float32) + b_conv[li]
            for k in range(K):
                acc = acc + pad_scr[k * s1:k * s1 + F, :] * w_conv[li, k:k + 1, :]
            xs = acc * jax.nn.sigmoid(acc)                                   # SiLU

            # ---- projections: fused low-rank delta (x_proj . dt_proj) and B/C ----
            delta = jax.nn.softplus(
                jnp.dot(xs, w_delta[li], preferred_element_type=jnp.float32)
                + b_dt[li])                                                  # (F, dm)
            bc = jnp.dot(xs, w_bc[li], preferred_element_type=jnp.float32)   # (F, 2N)
            na = [neg_a[li, n:n + 1, :] for n in range(N)]                   # N x (1, dm)

            # ---- selective scan: one (s1, dm) = (8, 128) state per SSM dim ----
            states = [jnp.zeros((s1, dm), jnp.float32) for _ in range(N)]
            for t in range(s0):
                d_t = delta[t * s1:(t + 1) * s1, :]                          # (s1, dm)
                bc_t = bc[t * s1:(t + 1) * s1, :]                            # (s1, 2N)
                y_t = jnp.zeros((s1, dm), jnp.float32)
                for n in range(N):
                    dA = jnp.exp(d_t * na[n])
                    states[n] = dA * states[n] + d_t * bc_t[:, n:n + 1]
                    y_t = y_t + states[n] * bc_t[:, N + n:N + n + 1]
                y_scr[t * s1:(t + 1) * s1, :] = y_t                          # direct accumulation

            # ---- skip + gate + out_proj ----
            y = y_scr[...] + xs * d_par[li]
            y = y * (res * jax.nn.sigmoid(res))
            out = jnp.dot(y, w_out[li], preferred_element_type=jnp.float32)  # (F, dm)

            # ---- residual (reference frame swap): h[i0,i1] = out[i1,i0] + x1[i0,i1] ----
            out_sw = jnp.dot(perm_ref[...], out, preferred_element_type=jnp.float32)
            h = out_sw + x1

        # ---- final norm + decode ----
        hf = rms(h, fnorm_w[...])
        o_ref[...] = (jnp.dot(hf, dec_w[...], preferred_element_type=jnp.float32)
                      + dec_b[...]).astype(o_ref.dtype)

    def full(a):
        nd = a.ndim
        return pl.BlockSpec(a.shape, lambda i: (0,) * nd)

    inputs = (
        x.reshape(F, din), perm,
        params['encode_w'], params['encode_b'],
        params['norm_w'], params['w_in'], params['w_conv'], params['b_conv'],
        params['w_bc'], params['w_delta'], params['b_dt'], params['neg_a'],
        params['d_param'], params['w_out'],
        params['final_norm_w'], params['decode_w'], params['decode_b'],
    )

    out_flat = pl.pallas_call(
        kernel,
        out_shape=jax.ShapeDtypeStruct((F, dm), jnp.float32),
        grid=(1,),
        in_specs=[full(a) for a in inputs],
        out_specs=pl.BlockSpec((F, dm), lambda i: (0, 0)),
        scratch_shapes=[
            pltpu.VMEM(((s0 + K - 1) * s1, dm), jnp.float32),   # padded conv buffer
            pltpu.VMEM((F, dm), jnp.float32),                   # scan output
        ],
        compiler_params=pltpu.CompilerParams(
            dimension_semantics=("arbitrary",),
            vmem_limit_bytes=32 * 1024 * 1024,
        ),
    )(*inputs)
    return out_flat.reshape(s0, s1, dm)


# --------------------------------------------------------------------------
# Deterministic synthetic parameters (shapes per the module __init__), with the
# host-side precomputations requested by the performance review.
# --------------------------------------------------------------------------
def init_params(key):
    dm, r, n, kc, nl = D_MODEL, DT_RANK, D_STATE, D_CONV, N_LAYER
    keys = iter(jax.random.split(key, 64))

    def rnd(shape, fan_in):
        s = 1.0 / math.sqrt(fan_in)
        return jax.random.uniform(next(keys), shape, jnp.float32, -s, s)

    # A_log[n, d] = log(n + 1) (same for every layer, as in the reference init);
    # hoist -exp(A_log) to the host.
    a_log = (jnp.log(jnp.arange(1, n + 1, dtype=jnp.float32))[:, None]
             * jnp.ones((1, dm), jnp.float32))
    neg_a = -jnp.exp(a_log)

    w_in, w_conv, b_conv, w_bc, w_delta, b_dt, w_out = ([] for _ in range(7))
    for _ in range(nl):
        w_xproj = rnd((dm, r + 2 * n), dm)
        w_dtp = rnd((r, dm), r)
        w_in.append(rnd((dm, 2 * dm), dm))
        w_conv.append(rnd((kc, dm), kc))       # depthwise conv taps, (K, D)
        b_conv.append(rnd((1, dm), kc))
        w_delta.append(w_xproj[:, :r] @ w_dtp)  # exact low-rank fusion (x_proj . dt_proj)
        w_bc.append(w_xproj[:, r:])             # B/C columns of x_proj
        b_dt.append(rnd((1, dm), r))
        w_out.append(rnd((dm, dm), dm))

    return {
        'encode_w': rnd((DIM_IN, dm), DIM_IN),
        'encode_b': rnd((1, dm), DIM_IN),
        'decode_w': rnd((dm, dm), dm),
        'decode_b': rnd((1, dm), dm),
        'final_norm_w': jnp.ones((1, dm), jnp.float32),
        'norm_w': jnp.ones((nl, 1, dm), jnp.float32),
        'w_in': jnp.stack(w_in),
        'w_conv': jnp.stack(w_conv),
        'b_conv': jnp.stack(b_conv),
        'w_bc': jnp.stack(w_bc),
        'w_delta': jnp.stack(w_delta),
        'b_dt': jnp.stack(b_dt),
        'neg_a': jnp.tile(neg_a[None], (nl, 1, 1)),
        'd_param': jnp.ones((nl, 1, dm), jnp.float32),
        'w_out': jnp.stack(w_out),
    }


if __name__ == "__main__":
    key = jax.random.PRNGKey(0)
    kx, kp = jax.random.split(key)
    L = B = 8  # reference residual needs L == B
    x = jax.random.normal(kx, (L, B, DIM_IN), jnp.float32)
    params = init_params(kp)

    out = jax.jit(mamba_forward)(x, params)
    jax.block_until_ready(out)
    assert out.shape == (L, B, D_MODEL)
    assert bool(jnp.all(jnp.isfinite(out)))
    print("KERNEL_OK")
</pallas_src>

<mosaic_0001>
module attributes {stable_mosaic.version = 11 : i64} {
  func.func @kernel(%arg0: i32, %arg1: memref<64x2xf32, #tpu.memory_space<vmem>>, %arg2: memref<64x64xf32, #tpu.memory_space<vmem>>, %arg3: memref<2x128xf32, #tpu.memory_space<vmem>>, %arg4: memref<1x128xf32, #tpu.memory_space<vmem>>, %arg5: memref<4x1x128xf32, #tpu.memory_space<vmem>>, %arg6: memref<4x128x256xf32, #tpu.memory_space<vmem>>, %arg7: memref<4x4x128xf32, #tpu.memory_space<vmem>>, %arg8: memref<4x1x128xf32, #tpu.memory_space<vmem>>, %arg9: memref<4x128x4xf32, #tpu.memory_space<vmem>>, %arg10: memref<4x128x128xf32, #tpu.memory_space<vmem>>, %arg11: memref<4x1x128xf32, #tpu.memory_space<vmem>>, %arg12: memref<4x2x128xf32, #tpu.memory_space<vmem>>, %arg13: memref<4x1x128xf32, #tpu.memory_space<vmem>>, %arg14: memref<4x128x128xf32, #tpu.memory_space<vmem>>, %arg15: memref<1x128xf32, #tpu.memory_space<vmem>>, %arg16: memref<128x128xf32, #tpu.memory_space<vmem>>, %arg17: memref<1x128xf32, #tpu.memory_space<vmem>>, %arg18: memref<64x128xf32, #tpu.memory_space<vmem>>, %arg19: memref<88x128xf32, #tpu.memory_space<vmem>>, %arg20: memref<64x128xf32, #tpu.memory_space<vmem>>) attributes {dimension_semantics = [#tpu.dimension_semantics<arbitrary>], iteration_bounds = array<i64: 1>, scalar_prefetch = 0 : i64, scratch_operands = 2 : i64, tpu.core_type = #tpu.core_type<tc>, window_params = [{pipeline_mode = #tpu.pipeline_mode<synchronous>, transform_indices = @transform_0, window_bounds = array<i64: 64, 2>}, {pipeline_mode = #tpu.pipeline_mode<synchronous>, transform_indices = @transform_1, window_bounds = array<i64: 64, 64>}, {pipeline_mode = #tpu.pipeline_mode<synchronous>, transform_indices = @transform_2, window_bounds = array<i64: 2, 128>}, {pipeline_mode = #tpu.pipeline_mode<synchronous>, transform_indices = @transform_3, window_bounds = array<i64: 1, 128>}, {pipeline_mode = #tpu.pipeline_mode<synchronous>, transform_indices = @transform_4, window_bounds = array<i64: 4, 1, 128>}, {pipeline_mode = #tpu.pipeline_mode<synchronous>, transform_indices = @transform_5, window_bounds = array<i64: 4, 128, 256>}, {pipeline_mode = #tpu.pipeline_mode<synchronous>, transform_indices = @transform_6, window_bounds = array<i64: 4, 4, 128>}, {pipeline_mode = #tpu.pipeline_mode<synchronous>, transform_indices = @transform_7, window_bounds = array<i64: 4, 1, 128>}, {pipeline_mode = #tpu.pipeline_mode<synchronous>, transform_indices = @transform_8, window_bounds = array<i64: 4, 128, 4>}, {pipeline_mode = #tpu.pipeline_mode<synchronous>, transform_indices = @transform_9, window_bounds = array<i64: 4, 128, 128>}, {pipeline_mode = #tpu.pipeline_mode<synchronous>, transform_indices = @transform_10, window_bounds = array<i64: 4, 1, 128>}, {pipeline_mode = #tpu.pipeline_mode<synchronous>, transform_indices = @transform_11, window_bounds = array<i64: 4, 2, 128>}, {pipeline_mode = #tpu.pipeline_mode<synchronous>, transform_indices = @transform_12, window_bounds = array<i64: 4, 1, 128>}, {pipeline_mode = #tpu.pipeline_mode<synchronous>, transform_indices = @transform_13, window_bounds = array<i64: 4, 128, 128>}, {pipeline_mode = #tpu.pipeline_mode<synchronous>, transform_indices = @transform_14, window_bounds = array<i64: 1, 128>}, {pipeline_mode = #tpu.pipeline_mode<synchronous>, transform_indices = @transform_15, window_bounds = array<i64: 128, 128>}, {pipeline_mode = #tpu.pipeline_mode<synchronous>, transform_indices = @transform_16, window_bounds = array<i64: 1, 128>}, {pipeline_mode = #tpu.pipeline_mode<synchronous>, transform_indices = @transform_17, window_bounds = array<i64: 64, 128>}]} {
    %c0 = arith.constant 0 : index
    %c0_0 = arith.constant 0 : index
    %0 = vector.load %arg1[%c0, %c0_0] : memref<64x2xf32, #tpu.memory_space<vmem>>, vector<64x2xf32>
    %c0_1 = arith.constant 0 : index
    %c0_2 = arith.constant 0 : index
    %1 = vector.load %arg3[%c0_1, %c0_2] : memref<2x128xf32, #tpu.memory_space<vmem>>, vector<2x128xf32>
    %cst = arith.constant dense<0.000000e+00> : vector<64x128xf32>
    %2 = tpu.matmul %0, %1, %cst {dimension_numbers = #tpu.dot_dimension_numbers<[1], [0], [0], [1], [0, 0, 1, 1], [], []>} : vector<64x2xf32>, vector<2x128xf32>, vector<64x128xf32> -> vector<64x128xf32>
    %c0_3 = arith.constant 0 : index
    %c0_4 = arith.constant 0 : index
    %3 = vector.load %arg4[%c0_3, %c0_4] : memref<1x128xf32, #tpu.memory_space<vmem>>, vector<1x128xf32>
    %4 = vector.broadcast %3 : vector<1x128xf32> to vector<64x128xf32>
    %5 = arith.addf %2, %4 : vector<64x128xf32>
    %cst_5 = arith.constant 0.000000e+00 : f32
    %6 = vector.broadcast %cst_5 : f32 to vector<24x128xf32>
    %c0_6 = arith.constant 0 : index
    %c0_7 = arith.constant 0 : index
    %7 = vector.load %arg19[%c0_6, %c0_7] : memref<88x128xf32, #tpu.memory_space<vmem>>, vector<24x128xf32>
    tpu.vector_store %arg19[%c0_6, %c0_7], %6 {strides = array<i32>} : memref<88x128xf32, #tpu.memory_space<vmem>>, vector<24x128xf32>,
    %c0_8 = arith.constant 0 : index
    %c0_9 = arith.constant 0 : index
    %c0_10 = arith.constant 0 : index
    %8 = vector.load %arg5[%c0_8, %c0_9, %c0_10] : memref<4x1x128xf32, #tpu.memory_space<vmem>>, vector<1x1x128xf32>
    %9 = vector.shape_cast %8 : vector<1x1x128xf32> to vector<1x128xf32>
    %10 = arith.mulf %5, %5 : vector<64x128xf32>
    %cst_11 = arith.constant dense<0.000000e+00> : vector<64xf32>
    %11 = vector.multi_reduction <add>, %10, %cst_11 [1] : vector<64x128xf32> to vector<64xf32>
    %12 = vector.shape_cast %11 : vector<64xf32> to vector<64x1xf32>
    %cst_12 = arith.constant 1.280000e+02 : f32
    %13 = vector.broadcast %cst_12 : f32 to vector<64x1xf32>
    %14 = arith.divf %12, %13 : vector<64x1xf32>
    %cst_13 = arith.constant 9.99999974E-6 : f32
    %15 = vector.broadcast %cst_13 : f32 to vector<64x1xf32>
    %16 = arith.addf %14, %15 : vector<64x1xf32>
    %17 = math.rsqrt %16 : vector<64x1xf32>
    %18 = vector.broadcast %17 : vector<64x1xf32> to vector<64x128xf32>
    %19 = arith.mulf %5, %18 : vector<64x128xf32>
    %20 = vector.broadcast %9 : vector<1x128xf32> to vector<64x128xf32>
    %21 = arith.mulf %19, %20 : vector<64x128xf32>
    %c0_14 = arith.constant 0 : index
    %c0_15 = arith.constant 0 : index
    %c0_16 = arith.constant 0 : index
    %22 = vector.load %arg6[%c0_14, %c0_15, %c0_16] : memref<4x128x256xf32, #tpu.memory_space<vmem>>, vector<1x128x256xf32>
    %23 = vector.shape_cast %22 : vector<1x128x256xf32> to vector<128x256xf32>
    %cst_17 = arith.constant dense<0.000000e+00> : vector<64x256xf32>
    %24 = tpu.matmul %21, %23, %cst_17 {dimension_numbers = #tpu.dot_dimension_numbers<[1], [0], [0], [1], [0, 0, 1, 1], [], []>} : vector<64x128xf32>, vector<128x256xf32>, vector<64x256xf32> -> vector<64x256xf32>
    %25 = vector.extract_strided_slice %24 {offsets = [0, 0], sizes = [64, 128], strides = [1, 1]} : vector<64x256xf32> to vector<64x128xf32>
    %26 = vector.extract_strided_slice %24 {offsets = [0, 128], sizes = [64, 128], strides = [1, 1]} : vector<64x256xf32> to vector<64x128xf32>
    %c24 = arith.constant 24 : index
    %c0_18 = arith.constant 0 : index
    %27 = vector.load %arg19[%c24, %c0_18] : memref<88x128xf32, #tpu.memory_space<vmem>>, vector<64x128xf32>
    tpu.vector_store %arg19[%c24, %c0_18], %25 {strides = array<i32>} : memref<88x128xf32, #tpu.memory_space<vmem>>, vector<64x128xf32>,
    %cst_19 = arith.constant 0.000000e+00 : f32
    %28 = vector.broadcast %cst_19 : f32 to vector<64x128xf32>
    %c0_20 = arith.constant 0 : index
    %c0_21 = arith.constant 0 : index
    %c0_22 = arith.constant 0 : index
    %29 = vector.load %arg8[%c0_20, %c0_21, %c0_22] : memref<4x1x128xf32, #tpu.memory_space<vmem>>, vector<1x1x128xf32>
    %30 = vector.shape_cast %29 : vector<1x1x128xf32> to vector<1x128xf32>
    %31 = vector.broadcast %30 : vector<1x128xf32> to vector<64x128xf32>
    %32 = arith.addf %28, %31 : vector<64x128xf32>
    %c0_23 = arith.constant 0 : index
    %c0_24 = arith.constant 0 : index
    %33 = vector.load %arg19[%c0_23, %c0_24] : memref<88x128xf32, #tpu.memory_space<vmem>>, vector<64x128xf32>
    %c0_25 = arith.constant 0 : index
    %c0_26 = arith.constant 0 : index
    %c0_27 = arith.constant 0 : index
    %34 = vector.load %arg7[%c0_25, %c0_26, %c0_27] : memref<4x4x128xf32, #tpu.memory_space<vmem>>, vector<1x1x128xf32>
    %35 = vector.shape_cast %34 : vector<1x1x128xf32> to vector<1x128xf32>
    %36 = vector.broadcast %35 : vector<1x128xf32> to vector<64x128xf32>
    %37 = arith.mulf %33, %36 : vector<64x128xf32>
    %38 = arith.addf %32, %37 : vector<64x128xf32>
    %c8 = arith.constant 8 : index
    %c0_28 = arith.constant 0 : index
    %39 = vector.load %arg19[%c8, %c0_28] : memref<88x128xf32, #tpu.memory_space<vmem>>, vector<64x128xf32>
    %c0_29 = arith.constant 0 : index
    %c1 = arith.constant 1 : index
    %c0_30 = arith.constant 0 : index
    %40 = vector.load %arg7[%c0_29, %c1, %c0_30] : memref<4x4x128xf32, #tpu.memory_space<vmem>>, vector<1x1x128xf32>
    %41 = vector.shape_cast %40 : vector<1x1x128xf32> to vector<1x128xf32>
    %42 = vector.broadcast %41 : vector<1x128xf32> to vector<64x128xf32>
    %43 = arith.mulf %39, %42 : vector<64x128xf32>
    %44 = arith.addf %38, %43 : vector<64x128xf32>
    %c16 = arith.constant 16 : index
    %c0_31 = arith.constant 0 : index
    %45 = vector.load %arg19[%c16, %c0_31] : memref<88x128xf32, #tpu.memory_space<vmem>>, vector<64x128xf32>
    %c0_32 = arith.constant 0 : index
    %c2 = arith.constant 2 : index
    %c0_33 = arith.constant 0 : index
    %46 = vector.load %arg7[%c0_32, %c2, %c0_33] : memref<4x4x128xf32, #tpu.memory_space<vmem>>, vector<1x1x128xf32>
    %47 = vector.shape_cast %46 : vector<1x1x128xf32> to vector<1x128xf32>
    %48 = vector.broadcast %47 : vector<1x128xf32> to vector<64x128xf32>
    %49 = arith.mulf %45, %48 : vector<64x128xf32>
    %50 = arith.addf %44, %49 : vector<64x128xf32>
    %c24_34 = arith.constant 24 : index
    %c0_35 = arith.constant 0 : index
    %51 = vector.load %arg19[%c24_34, %c0_35] : memref<88x128xf32, #tpu.memory_space<vmem>>, vector<64x128xf32>
    %c0_36 = arith.constant 0 : index
    %c3 = arith.constant 3 : index
    %c0_37 = arith.constant 0 : index
    %52 = vector.load %arg7[%c0_36, %c3, %c0_37] : memref<4x4x128xf32, #tpu.memory_space<vmem>>, vector<1x1x128xf32>
    %53 = vector.shape_cast %52 : vector<1x1x128xf32> to vector<1x128xf32>
    %54 = vector.broadcast %53 : vector<1x128xf32> to vector<64x128xf32>
    %55 = arith.mulf %51, %54 : vector<64x128xf32>
    %56 = arith.addf %50, %55 : vector<64x128xf32>
    %57 = arith.negf %56 : vector<64x128xf32>
    %58 = math.exp %57 : vector<64x128xf32>
    %cst_38 = arith.constant 1.000000e+00 : f32
    %59 = vector.broadcast %cst_38 : f32 to vector<64x128xf32>
    %60 = arith.addf %59, %58 : vector<64x128xf32>
    %61 = arith.divf %59, %60 : vector<64x128xf32>
    %62 = arith.mulf %56, %61 : vector<64x128xf32>
    %c0_39 = arith.constant 0 : index
    %c0_40 = arith.constant 0 : index
    %c0_41 = arith.constant 0 : index
    %63 = vector.load %arg10[%c0_39, %c0_40, %c0_41] : memref<4x128x128xf32, #tpu.memory_space<vmem>>, vector<1x128x128xf32>
    %64 = vector.shape_cast %63 : vector<1x128x128xf32> to vector<128x128xf32>
    %cst_42 = arith.constant dense<0.000000e+00> : vector<64x128xf32>
    %65 = tpu.matmul %62, %64, %cst_42 {dimension_numbers = #tpu.dot_dimension_numbers<[1], [0], [0], [1], [0, 0, 1, 1], [], []>} : vector<64x128xf32>, vector<128x128xf32>, vector<64x128xf32> -> vector<64x128xf32>
    %c0_43 = arith.constant 0 : index
    %c0_44 = arith.constant 0 : index
    %c0_45 = arith.constant 0 : index
    %66 = vector.load %arg11[%c0_43, %c0_44, %c0_45] : memref<4x1x128xf32, #tpu.memory_space<vmem>>, vector<1x1x128xf32>
    %67 = vector.shape_cast %66 : vector<1x1x128xf32> to vector<1x128xf32>
    %68 = vector.broadcast %67 : vector<1x128xf32> to vector<64x128xf32>
    %69 = arith.addf %65, %68 : vector<64x128xf32>
    %cst_46 = arith.constant 0.000000e+00 : f32
    %70 = vector.broadcast %cst_46 : f32 to vector<64x128xf32>
    %71 = arith.maximumf %69, %70 : vector<64x128xf32>
    %72 = vector.broadcast %cst_46 : f32 to vector<64x128xf32>
    %73 = arith.subf %69, %72 : vector<64x128xf32>
    %74 = arith.cmpf one, %73, %73 : vector<64x128xf32>
    %75 = vector.broadcast %cst_46 : f32 to vector<64x128xf32>
    %76 = arith.addf %69, %75 : vector<64x128xf32>
    %77 = math.absf %73 : vector<64x128xf32>
    %cst_47 = arith.constant 0.000000e+00 : f32
    %78 = vector.broadcast %cst_47 : f32 to vector<64x128xf32>
    %79 = arith.subf %78, %77 : vector<64x128xf32>
    %80 = math.exp %79 : vector<64x128xf32>
    %81 = math.log1p %80 : vector<64x128xf32>
    %82 = arith.addf %71, %81 : vector<64x128xf32>
    %83 = arith.select %74, %76, %82 : vector<64x128xi1>, vector<64x128xf32>
    %c0_48 = arith.constant 0 : index
    %c0_49 = arith.constant 0 : index
    %c0_50 = arith.constant 0 : index
    %84 = vector.load %arg9[%c0_48, %c0_49, %c0_50] : memref<4x128x4xf32, #tpu.memory_space<vmem>>, vector<1x128x4xf32>
    %85 = vector.shape_cast %84 : vector<1x128x4xf32> to vector<128x4xf32>
    %cst_51 = arith.constant dense<0.000000e+00> : vector<64x4xf32>
    %86 = tpu.matmul %62, %85, %cst_51 {dimension_numbers = #tpu.dot_dimension_numbers<[1], [0], [0], [1], [0, 0, 1, 1], [], []>} : vector<64x128xf32>, vector<128x4xf32>, vector<64x4xf32> -> vector<64x4xf32>
    %c0_52 = arith.constant 0 : index
    %c0_53 = arith.constant 0 : index
    %c0_54 = arith.constant 0 : index
    %87 = vector.load %arg12[%c0_52, %c0_53, %c0_54] : memref<4x2x128xf32, #tpu.memory_space<vmem>>, vector<1x1x128xf32>
    %88 = vector.shape_cast %87 : vector<1x1x128xf32> to vector<1x128xf32>
    %c0_55 = arith.constant 0 : index
    %c1_56 = arith.constant 1 : index
    %c0_57 = arith.constant 0 : index
    %89 = vector.load %arg12[%c0_55, %c1_56, %c0_57] : memref<4x2x128xf32, #tpu.memory_space<vmem>>, vector<1x1x128xf32>
    %90 = vector.shape_cast %89 : vector<1x1x128xf32> to vector<1x128xf32>
    %cst_58 = arith.constant 0.000000e+00 : f32
    %91 = vector.broadcast %cst_58 : f32 to vector<8x128xf32>
    %cst_59 = arith.constant 0.000000e+00 : f32
    %92 = vector.broadcast %cst_59 : f32 to vector<8x128xf32>
    %93 = vector.extract_strided_slice %83 {offsets = [0, 0], sizes = [8, 128], strides = [1, 1]} : vector<64x128xf32> to vector<8x128xf32>
    %94 = vector.extract_strided_slice %86 {offsets = [0, 0], sizes = [8, 4], strides = [1, 1]} : vector<64x4xf32> to vector<8x4xf32>
    %cst_60 = arith.constant 0.000000e+00 : f32
    %95 = vector.broadcast %cst_60 : f32 to vector<8x128xf32>
    %96 = vector.broadcast %88 : vector<1x128xf32> to vector<8x128xf32>
    %97 = arith.mulf %93, %96 : vector<8x128xf32>
    %98 = math.exp %97 : vector<8x128xf32>
    %99 = arith.mulf %98, %91 : vector<8x128xf32>
    %100 = vector.extract_strided_slice %94 {offsets = [0, 0], sizes = [8, 1], strides = [1, 1]} : vector<8x4xf32> to vector<8x1xf32>
    %101 = vector.broadcast %100 : vector<8x1xf32> to vector<8x128xf32>
    %102 = arith.mulf %93, %101 : vector<8x128xf32>
    %103 = arith.addf %99, %102 : vector<8x128xf32>
    %104 = vector.extract_strided_slice %94 {offsets = [0, 2], sizes = [8, 1], strides = [1, 1]} : vector<8x4xf32> to vector<8x1xf32>
    %105 = vector.broadcast %104 : vector<8x1xf32> to vector<8x128xf32>
    %106 = arith.mulf %103, %105 : vector<8x128xf32>
    %107 = arith.addf %95, %106 : vector<8x128xf32>
    %108 = vector.broadcast %90 : vector<1x128xf32> to vector<8x128xf32>
    %109 = arith.mulf %93, %108 : vector<8x128xf32>
    %110 = math.exp %109 : vector<8x128xf32>
    %111 = arith.mulf %110, %92 : vector<8x128xf32>
    %112 = vector.extract_strided_slice %94 {offsets = [0, 1], sizes = [8, 1], strides = [1, 1]} : vector<8x4xf32> to vector<8x1xf32>
    %113 = vector.broadcast %112 : vector<8x1xf32> to vector<8x128xf32>
    %114 = arith.mulf %93, %113 : vector<8x128xf32>
    %115 = arith.addf %111, %114 : vector<8x128xf32>
    %116 = vector.extract_strided_slice %94 {offsets = [0, 3], sizes = [8, 1], strides = [1, 1]} : vector<8x4xf32> to vector<8x1xf32>
    %117 = vector.broadcast %116 : vector<8x1xf32> to vector<8x128xf32>
    %118 = arith.mulf %115, %117 : vector<8x128xf32>
    %119 = arith.addf %107, %118 : vector<8x128xf32>
    %c0_61 = arith.constant 0 : index
    %c0_62 = arith.constant 0 : index
    %120 = vector.load %arg20[%c0_61, %c0_62] : memref<64x128xf32, #tpu.memory_space<vmem>>, vector<8x128xf32>
    tpu.vector_store %arg20[%c0_61, %c0_62], %119 {strides = array<i32>} : memref<64x128xf32, #tpu.memory_space<vmem>>, vector<8x128xf32>,
    %121 = vector.extract_strided_slice %83 {offsets = [8, 0], sizes = [8, 128], strides = [1, 1]} : vector<64x128xf32> to vector<8x128xf32>
    %122 = vector.extract_strided_slice %86 {offsets = [8, 0], sizes = [8, 4], strides = [1, 1]} : vector<64x4xf32> to vector<8x4xf32>
    %cst_63 = arith.constant 0.000000e+00 : f32
    %123 = vector.broadcast %cst_63 : f32 to vector<8x128xf32>
    %124 = vector.broadcast %88 : vector<1x128xf32> to vector<8x128xf32>
    %125 = arith.mulf %121, %124 : vector<8x128xf32>
    %126 = math.exp %125 : vector<8x128xf32>
    %127 = arith.mulf %126, %103 : vector<8x128xf32>
    %128 = vector.extract_strided_slice %122 {offsets = [0, 0], sizes = [8, 1], strides = [1, 1]} : vector<8x4xf32> to vector<8x1xf32>
    %129 = vector.broadcast %128 : vector<8x1xf32> to vector<8x128xf32>
    %130 = arith.mulf %121, %129 : vector<8x128xf32>
    %131 = arith.addf %127, %130 : vector<8x128xf32>
    %132 = vector.extract_strided_slice %122 {offsets = [0, 2], sizes = [8, 1], strides = [1, 1]} : vector<8x4xf32> to vector<8x1xf32>
    %133 = vector.broadcast %132 : vector<8x1xf32> to vector<8x128xf32>
    %134 = arith.mulf %131, %133 : vector<8x128xf32>
    %135 = arith.addf %123, %134 : vector<8x128xf32>
    %136 = vector.broadcast %90 : vector<1x128xf32> to vector<8x128xf32>
    %137 = arith.mulf %121, %136 : vector<8x128xf32>
    %138 = math.exp %137 : vector<8x128xf32>
    %139 = arith.mulf %138, %115 : vector<8x128xf32>
    %140 = vector.extract_strided_slice %122 {offsets = [0, 1], sizes = [8, 1], strides = [1, 1]} : vector<8x4xf32> to vector<8x1xf32>
    %141 = vector.broadcast %140 : vector<8x1xf32> to vector<8x128xf32>
    %142 = arith.mulf %121, %141 : vector<8x128xf32>
    %143 = arith.addf %139, %142 : vector<8x128xf32>
    %144 = vector.extract_strided_slice %122 {offsets = [0, 3], sizes = [8, 1], strides = [1, 1]} : vector<8x4xf32> to vector<8x1xf32>
    %145 = vector.broadcast %144 : vector<8x1xf32> to vector<8x128xf32>
    %146 = arith.mulf %143, %145 : vector<8x128xf32>
    %147 = arith.addf %135, %146 : vector<8x128xf32>
    %c8_64 = arith.constant 8 : index
    %c0_65 = arith.constant 0 : index
    %148 = vector.load %arg20[%c8_64, %c0_65] : memref<64x128xf32, #tpu.memory_space<vmem>>, vector<8x128xf32>
    tpu.vector_store %arg20[%c8_64, %c0_65], %147 {strides = array<i32>} : memref<64x128xf32, #tpu.memory_space<vmem>>, vector<8x128xf32>,
    %149 = vector.extract_strided_slice %83 {offsets = [16, 0], sizes = [8, 128], strides = [1, 1]} : vector<64x128xf32> to vector<8x128xf32>
    %150 = vector.extract_strided_slice %86 {offsets = [16, 0], sizes = [8, 4], strides = [1, 1]} : vector<64x4xf32> to vector<8x4xf32>
    %cst_66 = arith.constant 0.000000e+00 : f32
    %151 = vector.broadcast %cst_66 : f32 to vector<8x128xf32>
    %152 = vector.broadcast %88 : vector<1x128xf32> to vector<8x128xf32>
    %153 = arith.mulf %149, %152 : vector<8x128xf32>
    %154 = math.exp %153 : vector<8x128xf32>
    %155 = arith.mulf %154, %131 : vector<8x128xf32>
    %156 = vector.extract_strided_slice %150 {offsets = [0, 0], sizes = [8, 1], strides = [1, 1]} : vector<8x4xf32> to vector<8x1xf32>
    %157 = vector.broadcast %156 : vector<8x1xf32> to vector<8x128xf32>
    %158 = arith.mulf %149, %157 : vector<8x128xf32>
    %159 = arith.addf %155, %158 : vector<8x128xf32>
    %160 = vector.extract_strided_slice %150 {offsets = [0, 2], sizes = [8, 1], strides = [1, 1]} : vector<8x4xf32> to vector<8x1xf32>
    %161 = vector.broadcast %160 : vector<8x1xf32> to vector<8x128xf32>
    %162 = arith.mulf %159, %161 : vector<8x128xf32>
    %163 = arith.addf %151, %162 : vector<8x128xf32>
    %164 = vector.broadcast %90 : vector<1x128xf32> to vector<8x128xf32>
    %165 = arith.mulf %149, %164 : vector<8x128xf32>
    %166 = math.exp %165 : vector<8x128xf32>
    %167 = arith.mulf %166, %143 : vector<8x128xf32>
    %168 = vector.extract_strided_slice %150 {offsets = [0, 1], sizes = [8, 1], strides = [1, 1]} : vector<8x4xf32> to vector<8x1xf32>
    %169 = vector.broadcast %168 : vector<8x1xf32> to vector<8x128xf32>
    %170 = arith.mulf %149, %169 : vector<8x128xf32>
    %171 = arith.addf %167, %170 : vector<8x128xf32>
    %172 = vector.extract_strided_slice %150 {offsets = [0, 3], sizes = [8, 1], strides = [1, 1]} : vector<8x4xf32> to vector<8x1xf32>
    %173 = vector.broadcast %172 : vector<8x1xf32> to vector<8x128xf32>
    %174 = arith.mulf %171, %173 : vector<8x128xf32>
    %175 = arith.addf %163, %174 : vector<8x128xf32>
    %c16_67 = arith.constant 16 : index
    %c0_68 = arith.constant 0 : index
    %176 = vector.load %arg20[%c16_67, %c0_68] : memref<64x128xf32, #tpu.memory_space<vmem>>, vector<8x128xf32>
    tpu.vector_store %arg20[%c16_67, %c0_68], %175 {strides = array<i32>} : memref<64x128xf32, #tpu.memory_space<vmem>>, vector<8x128xf32>,
    %177 = vector.extract_strided_slice %83 {offsets = [24, 0], sizes = [8, 128], strides = [1, 1]} : vector<64x128xf32> to vector<8x128xf32>
    %178 = vector.extract_strided_slice %86 {offsets = [24, 0], sizes = [8, 4], strides = [1, 1]} : vector<64x4xf32> to vector<8x4xf32>
    %cst_69 = arith.constant 0.000000e+00 : f32
    %179 = vector.broadcast %cst_69 : f32 to vector<8x128xf32>
    %180 = vector.broadcast %88 : vector<1x128xf32> to vector<8x128xf32>
    %181 = arith.mulf %177, %180 : vector<8x128xf32>
    %182 = math.exp %181 : vector<8x128xf32>
    %183 = arith.mulf %182, %159 : vector<8x128xf32>
    %184 = vector.extract_strided_slice %178 {offsets = [0, 0], sizes = [8, 1], strides = [1, 1]} : vector<8x4xf32> to vector<8x1xf32>
    %185 = vector.broadcast %184 : vector<8x1xf32> to vector<8x128xf32>
    %186 = arith.mulf %177, %185 : vector<8x128xf32>
    %187 = arith.addf %183, %186 : vector<8x128xf32>
    %188 = vector.extract_strided_slice %178 {offsets = [0, 2], sizes = [8, 1], strides = [1, 1]} : vector<8x4xf32> to vector<8x1xf32>
    %189 = vector.broadcast %188 : vector<8x1xf32> to vector<8x128xf32>
    %190 = arith.mulf %187, %189 : vector<8x128xf32>
    %191 = arith.addf %179, %190 : vector<8x128xf32>
    %192 = vector.broadcast %90 : vector<1x128xf32> to vector<8x128xf32>
    %193 = arith.mulf %177, %192 : vector<8x128xf32>
    %194 = math.exp %193 : vector<8x128xf32>
    %195 = arith.mulf %194, %171 : vector<8x128xf32>
    %196 = vector.extract_strided_slice %178 {offsets = [0, 1], sizes = [8, 1], strides = [1, 1]} : vector<8x4xf32> to vector<8x1xf32>
    %197 = vector.broadcast %196 : vector<8x1xf32> to vector<8x128xf32>
    %198 = arith.mulf %177, %197 : vector<8x128xf32>
    %199 = arith.addf %195, %198 : vector<8x128xf32>
    %200 = vector.extract_strided_slice %178 {offsets = [0, 3], sizes = [8, 1], strides = [1, 1]} : vector<8x4xf32> to vector<8x1xf32>
    %201 = vector.broadcast %200 : vector<8x1xf32> to vector<8x128xf32>
    %202 = arith.mulf %199, %201 : vector<8x128xf32>
    %203 = arith.addf %191, %202 : vector<8x128xf32>
    %c24_70 = arith.constant 24 : index
    %c0_71 = arith.constant 0 : index
    %204 = vector.load %arg20[%c24_70, %c0_71] : memref<64x128xf32, #tpu.memory_space<vmem>>, vector<8x128xf32>
    tpu.vector_store %arg20[%c24_70, %c0_71], %203 {strides = array<i32>} : memref<64x128xf32, #tpu.memory_space<vmem>>, vector<8x128xf32>,
    %205 = vector.extract_strided_slice %83 {offsets = [32, 0], sizes = [8, 128], strides = [1, 1]} : vector<64x128xf32> to vector<8x128xf32>
    %206 = vector.extract_strided_slice %86 {offsets = [32, 0], sizes = [8, 4], strides = [1, 1]} : vector<64x4xf32> to vector<8x4xf32>
    %cst_72 = arith.constant 0.000000e+00 : f32
    %207 = vector.broadcast %cst_72 : f32 to vector<8x128xf32>
    %208 = vector.broadcast %88 : vector<1x128xf32> to vector<8x128xf32>
    %209 = arith.mulf %205, %208 : vector<8x128xf32>
    %210 = math.exp %209 : vector<8x128xf32>
    %211 = arith.mulf %210, %187 : vector<8x128xf32>
    %212 = vector.extract_strided_slice %206 {offsets = [0, 0], sizes = [8, 1], strides = [1, 1]} : vector<8x4xf32> to vector<8x1xf32>
    %213 = vector.broadcast %212 : vector<8x1xf32> to vector<8x128xf32>
    %214 = arith.mulf %205, %213 : vector<8x128xf32>
    %215 = arith.addf %211, %214 : vector<8x128xf32>
    %216 = vector.extract_strided_slice %206 {offsets = [0, 2], sizes = [8, 1], strides = [1, 1]} : vector<8x4xf32> to vector<8x1xf32>
    %217 = vector.broadcast %216 : vector<8x1xf32> to vector<8x128xf32>
    %218 = arith.mulf %215, %217 : vector<8x128xf32>
    %219 = arith.addf %207, %218 : vector<8x128xf32>
    %220 = vector.broadcast %90 : vector<1x128xf32> to vector<8x128xf32>
    %221 = arith.mulf %205, %220 : vector<8x128xf32>
    %222 = math.exp %221 : vector<8x128xf32>
    %223 = arith.mulf %222, %199 : vector<8x128xf32>
    %224 = vector.extract_strided_slice %206 {offsets = [0, 1], sizes = [8, 1], strides = [1, 1]} : vector<8x4xf32> to vector<8x1xf32>
    %225 = vector.broadcast %224 : vector<8x1xf32> to vector<8x128xf32>
    %226 = arith.mulf %205, %225 : vector<8x128xf32>
    %227 = arith.addf %223, %226 : vector<8x128xf32>
    %228 = vector.extract_strided_slice %206 {offsets = [0, 3], sizes = [8, 1], strides = [1, 1]} : vector<8x4xf32> to vector<8x1xf32>
    %229 = vector.broadcast %228 : vector<8x1xf32> to vector<8x128xf32>
    %230 = arith.mulf %227, %229 : vector<8x128xf32>
    %231 = arith.addf %219, %230 : vector<8x128xf32>
    %c32 = arith.constant 32 : index
    %c0_73 = arith.constant 0 : index
    %232 = vector.load %arg20[%c32, %c0_73] : memref<64x128xf32, #tpu.memory_space<vmem>>, vector<8x128xf32>
    tpu.vector_store %arg20[%c32, %c0_73], %231 {strides = array<i32>} : memref<64x128xf32, #tpu.memory_space<vmem>>, vector<8x128xf32>,
    %233 = vector.extract_strided_slice %83 {offsets = [40, 0], sizes = [8, 128], strides = [1, 1]} : vector<64x128xf32> to vector<8x128xf32>
    %234 = vector.extract_strided_slice %86 {offsets = [40, 0], sizes = [8, 4], strides = [1, 1]} : vector<64x4xf32> to vector<8x4xf32>
    %cst_74 = arith.constant 0.000000e+00 : f32
    %235 = vector.broadcast %cst_74 : f32 to vector<8x128xf32>
    %236 = vector.broadcast %88 : vector<1x128xf32> to vector<8x128xf32>
    %237 = arith.mulf %233, %236 : vector<8x128xf32>
    %238 = math.exp %237 : vector<8x128xf32>
    %239 = arith.mulf %238, %215 : vector<8x128xf32>
    %240 = vector.extract_strided_slice %234 {offsets = [0, 0], sizes = [8, 1], strides = [1, 1]} : vector<8x4xf32> to vector<8x1xf32>
    %241 = vector.broadcast %240 : vector<8x1xf32> to vector<8x128xf32>
    %242 = arith.mulf %233, %241 : vector<8x128xf32>
    %243 = arith.addf %239, %242 : vector<8x128xf32>
    %244 = vector.extract_strided_slice %234 {offsets = [0, 2], sizes = [8, 1], strides = [1, 1]} : vector<8x4xf32> to vector<8x1xf32>
    %245 = vector.broadcast %244 : vector<8x1xf32> to vector<8x128xf32>
    %246 = arith.mulf %243, %245 : vector<8x128xf32>
    %247 = arith.addf %235, %246 : vector<8x128xf32>
    %248 = vector.broadcast %90 : vector<1x128xf32> to vector<8x128xf32>
    %249 = arith.mulf %233, %248 : vector<8x128xf32>
    %250 = math.exp %249 : vector<8x128xf32>
    %251 = arith.mulf %250, %227 : vector<8x128xf32>
    %252 = vector.extract_strided_slice %234 {offsets = [0, 1], sizes = [8, 1], strides = [1, 1]} : vector<8x4xf32> to vector<8x1xf32>
    %253 = vector.broadcast %252 : vector<8x1xf32> to vector<8x128xf32>
    %254 = arith.mulf %233, %253 : vector<8x128xf32>
    %255 = arith.addf %251, %254 : vector<8x128xf32>
    %256 = vector.extract_strided_slice %234 {offsets = [0, 3], sizes = [8, 1], strides = [1, 1]} : vector<8x4xf32> to vector<8x1xf32>
    %257 = vector.broadcast %256 : vector<8x1xf32> to vector<8x128xf32>
    %258 = arith.mulf %255, %257 : vector<8x128xf32>
    %259 = arith.addf %247, %258 : vector<8x128xf32>
    %c40 = arith.constant 40 : index
    %c0_75 = arith.constant 0 : index
    %260 = vector.load %arg20[%c40, %c0_75] : memref<64x128xf32, #tpu.memory_space<vmem>>, vector<8x128xf32>
    tpu.vector_store %arg20[%c40, %c0_75], %259 {strides = array<i32>} : memref<64x128xf32, #tpu.memory_space<vmem>>, vector<8x128xf32>,
    %261 = vector.extract_strided_slice %83 {offsets = [48, 0], sizes = [8, 128], strides = [1, 1]} : vector<64x128xf32> to vector<8x128xf32>
    %262 = vector.extract_strided_slice %86 {offsets = [48, 0], sizes = [8, 4], strides = [1, 1]} : vector<64x4xf32> to vector<8x4xf32>
    %cst_76 = arith.constant 0.000000e+00 : f32
    %263 = vector.broadcast %cst_76 : f32 to vector<8x128xf32>
    %264 = vector.broadcast %88 : vector<1x128xf32> to vector<8x128xf32>
    %265 = arith.mulf %261, %264 : vector<8x128xf32>
    %266 = math.exp %265 : vector<8x128xf32>
    %267 = arith.mulf %266, %243 : vector<8x128xf32>
    %268 = vector.extract_strided_slice %262 {offsets = [0, 0], sizes = [8, 1], strides = [1, 1]} : vector<8x4xf32> to vector<8x1xf32>
    %269 = vector.broadcast %268 : vector<8x1xf32> to vector<8x128xf32>
    %270 = arith.mulf %261, %269 : vector<8x128xf32>
    %271 = arith.addf %267, %270 : vector<8x128xf32>
    %272 = vector.extract_strided_slice %262 {offsets = [0, 2], sizes = [8, 1], strides = [1, 1]} : vector<8x4xf32> to vector<8x1xf32>
    %273 = vector.broadcast %272 : vector<8x1xf32> to vector<8x128xf32>
    %274 = arith.mulf %271, %273 : vector<8x128xf32>
    %275 = arith.addf %263, %274 : vector<8x128xf32>
    %276 = vector.broadcast %90 : vector<1x128xf32> to vector<8x128xf32>
    %277 = arith.mulf %261, %276 : vector<8x128xf32>
    %278 = math.exp %277 : vector<8x128xf32>
    %279 = arith.mulf %278, %255 : vector<8x128xf32>
    %280 = vector.extract_strided_slice %262 {offsets = [0, 1], sizes = [8, 1], strides = [1, 1]} : vector<8x4xf32> to vector<8x1xf32>
    %281 = vector.broadcast %280 : vector<8x1xf32> to vector<8x128xf32>
    %282 = arith.mulf %261, %281 : vector<8x128xf32>
    %283 = arith.addf %279, %282 : vector<8x128xf32>
    %284 = vector.extract_strided_slice %262 {offsets = [0, 3], sizes = [8, 1], strides = [1, 1]} : vector<8x4xf32> to vector<8x1xf32>
    %285 = vector.broadcast %284 : vector<8x1xf32> to vector<8x128xf32>
    %286 = arith.mulf %283, %285 : vector<8x128xf32>
    %287 = arith.addf %275, %286 : vector<8x128xf32>
    %c48 = arith.constant 48 : index
    %c0_77 = arith.constant 0 : index
    %288 = vector.load %arg20[%c48, %c0_77] : memref<64x128xf32, #tpu.memory_space<vmem>>, vector<8x128xf32>
    tpu.vector_store %arg20[%c48, %c0_77], %287 {strides = array<i32>} : memref<64x128xf32, #tpu.memory_space<vmem>>, vector<8x128xf32>,
    %289 = vector.extract_strided_slice %83 {offsets = [56, 0], sizes = [8, 128], strides = [1, 1]} : vector<64x128xf32> to vector<8x128xf32>
    %290 = vector.extract_strided_slice %86 {offsets = [56, 0], sizes = [8, 4], strides = [1, 1]} : vector<64x4xf32> to vector<8x4xf32>
    %cst_78 = arith.constant 0.000000e+00 : f32
    %291 = vector.broadcast %cst_78 : f32 to vector<8x128xf32>
    %292 = vector.broadcast %88 : vector<1x128xf32> to vector<8x128xf32>
    %293 = arith.mulf %289, %292 : vector<8x128xf32>
    %294 = math.exp %293 : vector<8x128xf32>
    %295 = arith.mulf %294, %271 : vector<8x128xf32>
    %296 = vector.extract_strided_slice %290 {offsets = [0, 0], sizes = [8, 1], strides = [1, 1]} : vector<8x4xf32> to vector<8x1xf32>
    %297 = vector.broadcast %296 : vector<8x1xf32> to vector<8x128xf32>
    %298 = arith.mulf %289, %297 : vector<8x128xf32>
    %299 = arith.addf %295, %298 : vector<8x128xf32>
    %300 = vector.extract_strided_slice %290 {offsets = [0, 2], sizes = [8, 1], strides = [1, 1]} : vector<8x4xf32> to vector<8x1xf32>
    %301 = vector.broadcast %300 : vector<8x1xf32> to vector<8x128xf32>
    %302 = arith.mulf %299, %301 : vector<8x128xf32>
    %303 = arith.addf %291, %302 : vector<8x128xf32>
    %304 = vector.broadcast %90 : vector<1x128xf32> to vector<8x128xf32>
    %305 = arith.mulf %289, %304 : vector<8x128xf32>
    %306 = math.exp %305 : vector<8x128xf32>
    %307 = arith.mulf %306, %283 : vector<8x128xf32>
    %308 = vector.extract_strided_slice %290 {offsets = [0, 1], sizes = [8, 1], strides = [1, 1]} : vector<8x4xf32> to vector<8x1xf32>
    %309 = vector.broadcast %308 : vector<8x1xf32> to vector<8x128xf32>
    %310 = arith.mulf %289, %309 : vector<8x128xf32>
    %311 = arith.addf %307, %310 : vector<8x128xf32>
    %312 = vector.extract_strided_slice %290 {offsets = [0, 3], sizes = [8, 1], strides = [1, 1]} : vector<8x4xf32> to vector<8x1xf32>
    %313 = vector.broadcast %312 : vector<8x1xf32> to vector<8x128xf32>
    %314 = arith.mulf %311, %313 : vector<8x128xf32>
    %315 = arith.addf %303, %314 : vector<8x128xf32>
    %c56 = arith.constant 56 : index
    %c0_79 = arith.constant 0 : index
    %316 = vector.load %arg20[%c56, %c0_79] : memref<64x128xf32, #tpu.memory_space<vmem>>, vector<8x128xf32>
    tpu.vector_store %arg20[%c56, %c0_79], %315 {strides = array<i32>} : memref<64x128xf32, #tpu.memory_space<vmem>>, vector<8x128xf32>,
    %c0_80 = arith.constant 0 : index
    %c0_81 = arith.constant 0 : index
    %317 = vector.load %arg20[%c0_80, %c0_81] : memref<64x128xf32, #tpu.memory_space<vmem>>, vector<64x128xf32>
    %c0_82 = arith.constant 0 : index
    %c0_83 = arith.constant 0 : index
    %c0_84 = arith.constant 0 : index
    %318 = vector.load %arg13[%c0_82, %c0_83, %c0_84] : memref<4x1x128xf32, #tpu.memory_space<vmem>>, vector<1x1x128xf32>
    %319 = vector.shape_cast %318 : vector<1x1x128xf32> to vector<1x128xf32>
    %320 = vector.broadcast %319 : vector<1x128xf32> to vector<64x128xf32>
    %321 = arith.mulf %62, %320 : vector<64x128xf32>
    %322 = arith.addf %317, %321 : vector<64x128xf32>
    %323 = arith.negf %26 : vector<64x128xf32>
    %324 = math.exp %323 : vector<64x128xf32>
    %cst_85 = arith.constant 1.000000e+00 : f32
    %325 = vector.broadcast %cst_85 : f32 to vector<64x128xf32>
    %326 = arith.addf %325, %324 : vector<64x128xf32>
    %327 = arith.divf %325, %326 : vector<64x128xf32>
    %328 = arith.mulf %26, %327 : vector<64x128xf32>
    %329 = arith.mulf %322, %328 : vector<64x128xf32>
    %c0_86 = arith.constant 0 : index
    %c0_87 = arith.constant 0 : index
    %c0_88 = arith.constant 0 : index
    %330 = vector.load %arg14[%c0_86, %c0_87, %c0_88] : memref<4x128x128xf32, #tpu.memory_space<vmem>>, vector<1x128x128xf32>
    %331 = vector.shape_cast %330 : vector<1x128x128xf32> to vector<128x128xf32>
    %cst_89 = arith.constant dense<0.000000e+00> : vector<64x128xf32>
    %332 = tpu.matmul %329, %331, %cst_89 {dimension_numbers = #tpu.dot_dimension_numbers<[1], [0], [0], [1], [0, 0, 1, 1], [], []>} : vector<64x128xf32>, vector<128x128xf32>, vector<64x128xf32> -> vector<64x128xf32>
    %c0_90 = arith.constant 0 : index
    %c0_91 = arith.constant 0 : index
    %333 = vector.load %arg2[%c0_90, %c0_91] : memref<64x64xf32, #tpu.memory_space<vmem>>, vector<64x64xf32>
    %cst_92 = arith.constant dense<0.000000e+00> : vector<64x128xf32>
    %334 = tpu.matmul %333, %332, %cst_92 {dimension_numbers = #tpu.dot_dimension_numbers<[1], [0], [0], [1], [0, 0, 1, 1], [], []>} : vector<64x64xf32>, vector<64x128xf32>, vector<64x128xf32> -> vector<64x128xf32>
    %335 = arith.addf %334, %21 : vector<64x128xf32>
    %c1_93 = arith.constant 1 : index
    %c0_94 = arith.constant 0 : index
    %c0_95 = arith.constant 0 : index
    %336 = vector.load %arg5[%c1_93, %c0_94, %c0_95] : memref<4x1x128xf32, #tpu.memory_space<vmem>>, vector<1x1x128xf32>
    %337 = vector.shape_cast %336 : vector<1x1x128xf32> to vector<1x128xf32>
    %338 = arith.mulf %335, %335 : vector<64x128xf32>
    %cst_96 = arith.constant dense<0.000000e+00> : vector<64xf32>
    %339 = vector.multi_reduction <add>, %338, %cst_96 [1] : vector<64x128xf32> to vector<64xf32>
    %340 = vector.shape_cast %339 : vector<64xf32> to vector<64x1xf32>
    %cst_97 = arith.constant 1.280000e+02 : f32
    %341 = vector.broadcast %cst_97 : f32 to vector<64x1xf32>
    %342 = arith.divf %340, %341 : vector<64x1xf32>
    %cst_98 = arith.constant 9.99999974E-6 : f32
    %343 = vector.broadcast %cst_98 : f32 to vector<64x1xf32>
    %344 = arith.addf %342, %343 : vector<64x1xf32>
    %345 = math.rsqrt %344 : vector<64x1xf32>
    %346 = vector.broadcast %345 : vector<64x1xf32> to vector<64x128xf32>
    %347 = arith.mulf %335, %346 : vector<64x128xf32>
    %348 = vector.broadcast %337 : vector<1x128xf32> to vector<64x128xf32>
    %349 = arith.mulf %347, %348 : vector<64x128xf32>
    %c1_99 = arith.constant 1 : index
    %c0_100 = arith.constant 0 : index
    %c0_101 = arith.constant 0 : index
    %350 = vector.load %arg6[%c1_99, %c0_100, %c0_101] : memref<4x128x256xf32, #tpu.memory_space<vmem>>, vector<1x128x256xf32>
    %351 = vector.shape_cast %350 : vector<1x128x256xf32> to vector<128x256xf32>
    %cst_102 = arith.constant dense<0.000000e+00> : vector<64x256xf32>
    %352 = tpu.matmul %349, %351, %cst_102 {dimension_numbers = #tpu.dot_dimension_numbers<[1], [0], [0], [1], [0, 0, 1, 1], [], []>} : vector<64x128xf32>, vector<128x256xf32>, vector<64x256xf32> -> vector<64x256xf32>
    %353 = vector.extract_strided_slice %352 {offsets = [0, 0], sizes = [64, 128], strides = [1, 1]} : vector<64x256xf32> to vector<64x128xf32>
    %354 = vector.extract_strided_slice %352 {offsets = [0, 128], sizes = [64, 128], strides = [1, 1]} : vector<64x256xf32> to vector<64x128xf32>
    %c24_103 = arith.constant 24 : index
    %c0_104 = arith.constant 0 : index
    %355 = vector.load %arg19[%c24_103, %c0_104] : memref<88x128xf32, #tpu.memory_space<vmem>>, vector<64x128xf32>
    tpu.vector_store %arg19[%c24_103, %c0_104], %353 {strides = array<i32>} : memref<88x128xf32, #tpu.memory_space<vmem>>, vector<64x128xf32>,
    %cst_105 = arith.constant 0.000000e+00 : f32
    %356 = vector.broadcast %cst_105 : f32 to vector<64x128xf32>
    %c1_106 = arith.constant 1 : index
    %c0_107 = arith.constant 0 : index
    %c0_108 = arith.constant 0 : index
    %357 = vector.load %arg8[%c1_106, %c0_107, %c0_108] : memref<4x1x128xf32, #tpu.memory_space<vmem>>, vector<1x1x128xf32>
    %358 = vector.shape_cast %357 : vector<1x1x128xf32> to vector<1x128xf32>
    %359 = vector.broadcast %358 : vector<1x128xf32> to vector<64x128xf32>
    %360 = arith.addf %356, %359 : vector<64x128xf32>
    %c0_109 = arith.constant 0 : index
    %c0_110 = arith.constant 0 : index
    %361 = vector.load %arg19[%c0_109, %c0_110] : memref<88x128xf32, #tpu.memory_space<vmem>>, vector<64x128xf32>
    %c1_111 = arith.constant 1 : index
    %c0_112 = arith.constant 0 : index
    %c0_113 = arith.constant 0 : index
    %362 = vector.load %arg7[%c1_111, %c0_112, %c0_113] : memref<4x4x128xf32, #tpu.memory_space<vmem>>, vector<1x1x128xf32>
    %363 = vector.shape_cast %362 : vector<1x1x128xf32> to vector<1x128xf32>
    %364 = vector.broadcast %363 : vector<1x128xf32> to vector<64x128xf32>
    %365 = arith.mulf %361, %364 : vector<64x128xf32>
    %366 = arith.addf %360, %365 : vector<64x128xf32>
    %c8_114 = arith.constant 8 : index
    %c0_115 = arith.constant 0 : index
    %367 = vector.load %arg19[%c8_114, %c0_115] : memref<88x128xf32, #tpu.memory_space<vmem>>, vector<64x128xf32>
    %c1_116 = arith.constant 1 : index
    %c1_117 = arith.constant 1 : index
    %c0_118 = arith.constant 0 : index
    %368 = vector.load %arg7[%c1_116, %c1_117, %c0_118] : memref<4x4x128xf32, #tpu.memory_space<vmem>>, vector<1x1x128xf32>
    %369 = vector.shape_cast %368 : vector<1x1x128xf32> to vector<1x128xf32>
    %370 = vector.broadcast %369 : vector<1x128xf32> to vector<64x128xf32>
    %371 = arith.mulf %367, %370 : vector<64x128xf32>
    %372 = arith.addf %366, %371 : vector<64x128xf32>
    %c16_119 = arith.constant 16 : index
    %c0_120 = arith.constant 0 : index
    %373 = vector.load %arg19[%c16_119, %c0_120] : memref<88x128xf32, #tpu.memory_space<vmem>>, vector<64x128xf32>
    %c1_121 = arith.constant 1 : index
    %c2_122 = arith.constant 2 : index
    %c0_123 = arith.constant 0 : index
    %374 = vector.load %arg7[%c1_121, %c2_122, %c0_123] : memref<4x4x128xf32, #tpu.memory_space<vmem>>, vector<1x1x128xf32>
    %375 = vector.shape_cast %374 : vector<1x1x128xf32> to vector<1x128xf32>
    %376 = vector.broadcast %375 : vector<1x128xf32> to vector<64x128xf32>
    %377 = arith.mulf %373, %376 : vector<64x128xf32>
    %378 = arith.addf %372, %377 : vector<64x128xf32>
    %c24_124 = arith.constant 24 : index
    %c0_125 = arith.constant 0 : index
    %379 = vector.load %arg19[%c24_124, %c0_125] : memref<88x128xf32, #tpu.memory_space<vmem>>, vector<64x128xf32>
    %c1_126 = arith.constant 1 : index
    %c3_127 = arith.constant 3 : index
    %c0_128 = arith.constant 0 : index
    %380 = vector.load %arg7[%c1_126, %c3_127, %c0_128] : memref<4x4x128xf32, #tpu.memory_space<vmem>>, vector<1x1x128xf32>
    %381 = vector.shape_cast %380 : vector<1x1x128xf32> to vector<1x128xf32>
    %382 = vector.broadcast %381 : vector<1x128xf32> to vector<64x128xf32>
    %383 = arith.mulf %379, %382 : vector<64x128xf32>
    %384 = arith.addf %378, %383 : vector<64x128xf32>
    %385 = arith.negf %384 : vector<64x128xf32>
    %386 = math.exp %385 : vector<64x128xf32>
    %cst_129 = arith.constant 1.000000e+00 : f32
    %387 = vector.broadcast %cst_129 : f32 to vector<64x128xf32>
    %388 = arith.addf %387, %386 : vector<64x128xf32>
    %389 = arith.divf %387, %388 : vector<64x128xf32>
    %390 = arith.mulf %384, %389 : vector<64x128xf32>
    %c1_130 = arith.constant 1 : index
    %c0_131 = arith.constant 0 : index
    %c0_132 = arith.constant 0 : index
    %391 = vector.load %arg10[%c1_130, %c0_131, %c0_132] : memref<4x128x128xf32, #tpu.memory_space<vmem>>, vector<1x128x128xf32>
    %392 = vector.shape_cast %391 : vector<1x128x128xf32> to vector<128x128xf32>
    %cst_133 = arith.constant dense<0.000000e+00> : vector<64x128xf32>
    %393 = tpu.matmul %390, %392, %cst_133 {dimension_numbers = #tpu.dot_dimension_numbers<[1], [0], [0], [1], [0, 0, 1, 1], [], []>} : vector<64x128xf32>, vector<128x128xf32>, vector<64x128xf32> -> vector<64x128xf32>
    %c1_134 = arith.constant 1 : index
    %c0_135 = arith.constant 0 : index
    %c0_136 = arith.constant 0 : index
    %394 = vector.load %arg11[%c1_134, %c0_135, %c0_136] : memref<4x1x128xf32, #tpu.memory_space<vmem>>, vector<1x1x128xf32>
    %395 = vector.shape_cast %394 : vector<1x1x128xf32> to vector<1x128xf32>
    %396 = vector.broadcast %395 : vector<1x128xf32> to vector<64x128xf32>
    %397 = arith.addf %393, %396 : vector<64x128xf32>
    %cst_137 = arith.constant 0.000000e+00 : f32
    %398 = vector.broadcast %cst_137 : f32 to vector<64x128xf32>
    %399 = arith.maximumf %397, %398 : vector<64x128xf32>
    %400 = vector.broadcast %cst_137 : f32 to vector<64x128xf32>
    %401 = arith.subf %397, %400 : vector<64x128xf32>
    %402 = arith.cmpf one, %401, %401 : vector<64x128xf32>
    %403 = vector.broadcast %cst_137 : f32 to vector<64x128xf32>
    %404 = arith.addf %397, %403 : vector<64x128xf32>
    %405 = math.absf %401 : vector<64x128xf32>
    %cst_138 = arith.constant 0.000000e+00 : f32
    %406 = vector.broadcast %cst_138 : f32 to vector<64x128xf32>
    %407 = arith.subf %406, %405 : vector<64x128xf32>
    %408 = math.exp %407 : vector<64x128xf32>
    %409 = math.log1p %408 : vector<64x128xf32>
    %410 = arith.addf %399, %409 : vector<64x128xf32>
    %411 = arith.select %402, %404, %410 : vector<64x128xi1>, vector<64x128xf32>
    %c1_139 = arith.constant 1 : index
    %c0_140 = arith.constant 0 : index
    %c0_141 = arith.constant 0 : index
    %412 = vector.load %arg9[%c1_139, %c0_140, %c0_141] : memref<4x128x4xf32, #tpu.memory_space<vmem>>, vector<1x128x4xf32>
    %413 = vector.shape_cast %412 : vector<1x128x4xf32> to vector<128x4xf32>
    %cst_142 = arith.constant dense<0.000000e+00> : vector<64x4xf32>
    %414 = tpu.matmul %390, %413, %cst_142 {dimension_numbers = #tpu.dot_dimension_numbers<[1], [0], [0], [1], [0, 0, 1, 1], [], []>} : vector<64x128xf32>, vector<128x4xf32>, vector<64x4xf32> -> vector<64x4xf32>
    %c1_143 = arith.constant 1 : index
    %c0_144 = arith.constant 0 : index
    %c0_145 = arith.constant 0 : index
    %415 = vector.load %arg12[%c1_143, %c0_144, %c0_145] : memref<4x2x128xf32, #tpu.memory_space<vmem>>, vector<1x1x128xf32>
    %416 = vector.shape_cast %415 : vector<1x1x128xf32> to vector<1x128xf32>
    %c1_146 = arith.constant 1 : index
    %c1_147 = arith.constant 1 : index
    %c0_148 = arith.constant 0 : index
    %417 = vector.load %arg12[%c1_146, %c1_147, %c0_148] : memref<4x2x128xf32, #tpu.memory_space<vmem>>, vector<1x1x128xf32>
    %418 = vector.shape_cast %417 : vector<1x1x128xf32> to vector<1x128xf32>
    %cst_149 = arith.constant 0.000000e+00 : f32
    %419 = vector.broadcast %cst_149 : f32 to vector<8x128xf32>
    %cst_150 = arith.constant 0.000000e+00 : f32
    %420 = vector.broadcast %cst_150 : f32 to vector<8x128xf32>
    %421 = vector.extract_strided_slice %411 {offsets = [0, 0], sizes = [8, 128], strides = [1, 1]} : vector<64x128xf32> to vector<8x128xf32>
    %422 = vector.extract_strided_slice %414 {offsets = [0, 0], sizes = [8, 4], strides = [1, 1]} : vector<64x4xf32> to vector<8x4xf32>
    %cst_151 = arith.constant 0.000000e+00 : f32
    %423 = vector.broadcast %cst_151 : f32 to vector<8x128xf32>
    %424 = vector.broadcast %416 : vector<1x128xf32> to vector<8x128xf32>
    %425 = arith.mulf %421, %424 : vector<8x128xf32>
    %426 = math.exp %425 : vector<8x128xf32>
    %427 = arith.mulf %426, %419 : vector<8x128xf32>
    %428 = vector.extract_strided_slice %422 {offsets = [0, 0], sizes = [8, 1], strides = [1, 1]} : vector<8x4xf32> to vector<8x1xf32>
    %429 = vector.broadcast %428 : vector<8x1xf32> to vector<8x128xf32>
    %430 = arith.mulf %421, %429 : vector<8x128xf32>
    %431 = arith.addf %427, %430 : vector<8x128xf32>
    %432 = vector.extract_strided_slice %422 {offsets = [0, 2], sizes = [8, 1], strides = [1, 1]} : vector<8x4xf32> to vector<8x1xf32>
    %433 = vector.broadcast %432 : vector<8x1xf32> to vector<8x128xf32>
    %434 = arith.mulf %431, %433 : vector<8x128xf32>
    %435 = arith.addf %423, %434 : vector<8x128xf32>
    %436 = vector.broadcast %418 : vector<1x128xf32> to vector<8x128xf32>
    %437 = arith.mulf %421, %436 : vector<8x128xf32>
    %438 = math.exp %437 : vector<8x128xf32>
    %439 = arith.mulf %438, %420 : vector<8x128xf32>
    %440 = vector.extract_strided_slice %422 {offsets = [0, 1], sizes = [8, 1], strides = [1, 1]} : vector<8x4xf32> to vector<8x1xf32>
    %441 = vector.broadcast %440 : vector<8x1xf32> to vector<8x128xf32>
    %442 = arith.mulf %421, %441 : vector<8x128xf32>
    %443 = arith.addf %439, %442 : vector<8x128xf32>
    %444 = vector.extract_strided_slice %422 {offsets = [0, 3], sizes = [8, 1], strides = [1, 1]} : vector<8x4xf32> to vector<8x1xf32>
    %445 = vector.broadcast %444 : vector<8x1xf32> to vector<8x128xf32>
    %446 = arith.mulf %443, %445 : vector<8x128xf32>
    %447 = arith.addf %435, %446 : vector<8x128xf32>
    %c0_152 = arith.constant 0 : index
    %c0_153 = arith.constant 0 : index
    %448 = vector.load %arg20[%c0_152, %c0_153] : memref<64x128xf32, #tpu.memory_space<vmem>>, vector<8x128xf32>
    tpu.vector_store %arg20[%c0_152, %c0_153], %447 {strides = array<i32>} : memref<64x128xf32, #tpu.memory_space<vmem>>, vector<8x128xf32>,
    %449 = vector.extract_strided_slice %411 {offsets = [8, 0], sizes = [8, 128], strides = [1, 1]} : vector<64x128xf32> to vector<8x128xf32>
    %450 = vector.extract_strided_slice %414 {offsets = [8, 0], sizes = [8, 4], strides = [1, 1]} : vector<64x4xf32> to vector<8x4xf32>
    %cst_154 = arith.constant 0.000000e+00 : f32
    %451 = vector.broadcast %cst_154 : f32 to vector<8x128xf32>
    %452 = vector.broadcast %416 : vector<1x128xf32> to vector<8x128xf32>
    %453 = arith.mulf %449, %452 : vector<8x128xf32>
    %454 = math.exp %453 : vector<8x128xf32>
    %455 = arith.mulf %454, %431 : vector<8x128xf32>
    %456 = vector.extract_strided_slice %450 {offsets = [0, 0], sizes = [8, 1], strides = [1, 1]} : vector<8x4xf32> to vector<8x1xf32>
    %457 = vector.broadcast %456 : vector<8x1xf32> to vector<8x128xf32>
    %458 = arith.mulf %449, %457 : vector<8x128xf32>
    %459 = arith.addf %455, %458 : vector<8x128xf32>
    %460 = vector.extract_strided_slice %450 {offsets = [0, 2], sizes = [8, 1], strides = [1, 1]} : vector<8x4xf32> to vector<8x1xf32>
    %461 = vector.broadcast %460 : vector<8x1xf32> to vector<8x128xf32>
    %462 = arith.mulf %459, %461 : vector<8x128xf32>
    %463 = arith.addf %451, %462 : vector<8x128xf32>
    %464 = vector.broadcast %418 : vector<1x128xf32> to vector<8x128xf32>
    %465 = arith.mulf %449, %464 : vector<8x128xf32>
    %466 = math.exp %465 : vector<8x128xf32>
    %467 = arith.mulf %466, %443 : vector<8x128xf32>
    %468 = vector.extract_strided_slice %450 {offsets = [0, 1], sizes = [8, 1], strides = [1, 1]} : vector<8x4xf32> to vector<8x1xf32>
    %469 = vector.broadcast %468 : vector<8x1xf32> to vector<8x128xf32>
    %470 = arith.mulf %449, %469 : vector<8x128xf32>
    %471 = arith.addf %467, %470 : vector<8x128xf32>
    %472 = vector.extract_strided_slice %450 {offsets = [0, 3], sizes = [8, 1], strides = [1, 1]} : vector<8x4xf32> to vector<8x1xf32>
    %473 = vector.broadcast %472 : vector<8x1xf32> to vector<8x128xf32>
    %474 = arith.mulf %471, %473 : vector<8x128xf32>
    %475 = arith.addf %463, %474 : vector<8x128xf32>
    %c8_155 = arith.constant 8 : index
    %c0_156 = arith.constant 0 : index
    %476 = vector.load %arg20[%c8_155, %c0_156] : memref<64x128xf32, #tpu.memory_space<vmem>>, vector<8x128xf32>
    tpu.vector_store %arg20[%c8_155, %c0_156], %475 {strides = array<i32>} : memref<64x128xf32, #tpu.memory_space<vmem>>, vector<8x128xf32>,
    %477 = vector.extract_strided_slice %411 {offsets = [16, 0], sizes = [8, 128], strides = [1, 1]} : vector<64x128xf32> to vector<8x128xf32>
    %478 = vector.extract_strided_slice %414 {offsets = [16, 0], sizes = [8, 4], strides = [1, 1]} : vector<64x4xf32> to vector<8x4xf32>
    %cst_157 = arith.constant 0.000000e+00 : f32
    %479 = vector.broadcast %cst_157 : f32 to vector<8x128xf32>
    %480 = vector.broadcast %416 : vector<1x128xf32> to vector<8x128xf32>
    %481 = arith.mulf %477, %480 : vector<8x128xf32>
    %482 = math.exp %481 : vector<8x128xf32>
    %483 = arith.mulf %482, %459 : vector<8x128xf32>
    %484 = vector.extract_strided_slice %478 {offsets = [0, 0], sizes = [8, 1], strides = [1, 1]} : vector<8x4xf32> to vector<8x1xf32>
    %485 = vector.broadcast %484 : vector<8x1xf32> to vector<8x128xf32>
    %486 = arith.mulf %477, %485 : vector<8x128xf32>
    %487 = arith.addf %483, %486 : vector<8x128xf32>
    %488 = vector.extract_strided_slice %478 {offsets = [0, 2], sizes = [8, 1], strides = [1, 1]} : vector<8x4xf32> to vector<8x1xf32>
    %489 = vector.broadcast %488 : vector<8x1xf32> to vector<8x128xf32>
    %490 = arith.mulf %487, %489 : vector<8x128xf32>
    %491 = arith.addf %479, %490 : vector<8x128xf32>
    %492 = vector.broadcast %418 : vector<1x128xf32> to vector<8x128xf32>
    %493 = arith.mulf %477, %492 : vector<8x128xf32>
    %494 = math.exp %493 : vector<8x128xf32>
    %495 = arith.mulf %494, %471 : vector<8x128xf32>
    %496 = vector.extract_strided_slice %478 {offsets = [0, 1], sizes = [8, 1], strides = [1, 1]} : vector<8x4xf32> to vector<8x1xf32>
    %497 = vector.broadcast %496 : vector<8x1xf32> to vector<8x128xf32>
    %498 = arith.mulf %477, %497 : vector<8x128xf32>
    %499 = arith.addf %495, %498 : vector<8x128xf32>
    %500 = vector.extract_strided_slice %478 {offsets = [0, 3], sizes = [8, 1], strides = [1, 1]} : vector<8x4xf32> to vector<8x1xf32>
    %501 = vector.broadcast %500 : vector<8x1xf32> to vector<8x128xf32>
    %502 = arith.mulf %499, %501 : vector<8x128xf32>
    %503 = arith.addf %491, %502 : vector<8x128xf32>
    %c16_158 = arith.constant 16 : index
    %c0_159 = arith.constant 0 : index
    %504 = vector.load %arg20[%c16_158, %c0_159] : memref<64x128xf32, #tpu.memory_space<vmem>>, vector<8x128xf32>
    tpu.vector_store %arg20[%c16_158, %c0_159], %503 {strides = array<i32>} : memref<64x128xf32, #tpu.memory_space<vmem>>, vector<8x128xf32>,
    %505 = vector.extract_strided_slice %411 {offsets = [24, 0], sizes = [8, 128], strides = [1, 1]} : vector<64x128xf32> to vector<8x128xf32>
    %506 = vector.extract_strided_slice %414 {offsets = [24, 0], sizes = [8, 4], strides = [1, 1]} : vector<64x4xf32> to vector<8x4xf32>
    %cst_160 = arith.constant 0.000000e+00 : f32
    %507 = vector.broadcast %cst_160 : f32 to vector<8x128xf32>
    %508 = vector.broadcast %416 : vector<1x128xf32> to vector<8x128xf32>
    %509 = arith.mulf %505, %508 : vector<8x128xf32>
    %510 = math.exp %509 : vector<8x128xf32>
    %511 = arith.mulf %510, %487 : vector<8x128xf32>
    %512 = vector.extract_strided_slice %506 {offsets = [0, 0], sizes = [8, 1], strides = [1, 1]} : vector<8x4xf32> to vector<8x1xf32>
    %513 = vector.broadcast %512 : vector<8x1xf32> to vector<8x128xf32>
    %514 = arith.mulf %505, %513 : vector<8x128xf32>
    %515 = arith.addf %511, %514 : vector<8x128xf32>
    %516 = vector.extract_strided_slice %506 {offsets = [0, 2], sizes = [8, 1], strides = [1, 1]} : vector<8x4xf32> to vector<8x1xf32>
    %517 = vector.broadcast %516 : vector<8x1xf32> to vector<8x128xf32>
    %518 = arith.mulf %515, %517 : vector<8x128xf32>
    %519 = arith.addf %507, %518 : vector<8x128xf32>
    %520 = vector.broadcast %418 : vector<1x128xf32> to vector<8x128xf32>
    %521 = arith.mulf %505, %520 : vector<8x128xf32>
    %522 = math.exp %521 : vector<8x128xf32>
    %523 = arith.mulf %522, %499 : vector<8x128xf32>
    %524 = vector.extract_strided_slice %506 {offsets = [0, 1], sizes = [8, 1], strides = [1, 1]} : vector<8x4xf32> to vector<8x1xf32>
    %525 = vector.broadcast %524 : vector<8x1xf32> to vector<8x128xf32>
    %526 = arith.mulf %505, %525 : vector<8x128xf32>
    %527 = arith.addf %523, %526 : vector<8x128xf32>
    %528 = vector.extract_strided_slice %506 {offsets = [0, 3], sizes = [8, 1], strides = [1, 1]} : vector<8x4xf32> to vector<8x1xf32>
    %529 = vector.broadcast %528 : vector<8x1xf32> to vector<8x128xf32>
    %530 = arith.mulf %527, %529 : vector<8x128xf32>
    %531 = arith.addf %519, %530 : vector<8x128xf32>
    %c24_161 = arith.constant 24 : index
    %c0_162 = arith.constant 0 : index
    %532 = vector.load %arg20[%c24_161, %c0_162] : memref<64x128xf32, #tpu.memory_space<vmem>>, vector<8x128xf32>
    tpu.vector_store %arg20[%c24_161, %c0_162], %531 {strides = array<i32>} : memref<64x128xf32, #tpu.memory_space<vmem>>, vector<8x128xf32>,
    %533 = vector.extract_strided_slice %411 {offsets = [32, 0], sizes = [8, 128], strides = [1, 1]} : vector<64x128xf32> to vector<8x128xf32>
    %534 = vector.extract_strided_slice %414 {offsets = [32, 0], sizes = [8, 4], strides = [1, 1]} : vector<64x4xf32> to vector<8x4xf32>
    %cst_163 = arith.constant 0.000000e+00 : f32
    %535 = vector.broadcast %cst_163 : f32 to vector<8x128xf32>
    %536 = vector.broadcast %416 : vector<1x128xf32> to vector<8x128xf32>
    %537 = arith.mulf %533, %536 : vector<8x128xf32>
    %538 = math.exp %537 : vector<8x128xf32>
    %539 = arith.mulf %538, %515 : vector<8x128xf32>
    %540 = vector.extract_strided_slice %534 {offsets = [0, 0], sizes = [8, 1], strides = [1, 1]} : vector<8x4xf32> to vector<8x1xf32>
    %541 = vector.broadcast %540 : vector<8x1xf32> to vector<8x128xf32>
    %542 = arith.mulf %533, %541 : vector<8x128xf32>
    %543 = arith.addf %539, %542 : vector<8x128xf32>
    %544 = vector.extract_strided_slice %534 {offsets = [0, 2], sizes = [8, 1], strides = [1, 1]} : vector<8x4xf32> to vector<8x1xf32>
    %545 = vector.broadcast %544 : vector<8x1xf32> to vector<8x128xf32>
    %546 = arith.mulf %543, %545 : vector<8x128xf32>
    %547 = arith.addf %535, %546 : vector<8x128xf32>
    %548 = vector.broadcast %418 : vector<1x128xf32> to vector<8x128xf32>
    %549 = arith.mulf %533, %548 : vector<8x128xf32>
    %550 = math.exp %549 : vector<8x128xf32>
    %551 = arith.mulf %550, %527 : vector<8x128xf32>
    %552 = vector.extract_strided_slice %534 {offsets = [0, 1], sizes = [8, 1], strides = [1, 1]} : vector<8x4xf32> to vector<8x1xf32>
    %553 = vector.broadcast %552 : vector<8x1xf32> to vector<8x128xf32>
    %554 = arith.mulf %533, %553 : vector<8x128xf32>
    %555 = arith.addf %551, %554 : vector<8x128xf32>
    %556 = vector.extract_strided_slice %534 {offsets = [0, 3], sizes = [8, 1], strides = [1, 1]} : vector<8x4xf32> to vector<8x1xf32>
    %557 = vector.broadcast %556 : vector<8x1xf32> to vector<8x128xf32>
    %558 = arith.mulf %555, %557 : vector<8x128xf32>
    %559 = arith.addf %547, %558 : vector<8x128xf32>
    %c32_164 = arith.constant 32 : index
    %c0_165 = arith.constant 0 : index
    %560 = vector.load %arg20[%c32_164, %c0_165] : memref<64x128xf32, #tpu.memory_space<vmem>>, vector<8x128xf32>
    tpu.vector_store %arg20[%c32_164, %c0_165], %559 {strides = array<i32>} : memref<64x128xf32, #tpu.memory_space<vmem>>, vector<8x128xf32>,
    %561 = vector.extract_strided_slice %411 {offsets = [40, 0], sizes = [8, 128], strides = [1, 1]} : vector<64x128xf32> to vector<8x128xf32>
    %562 = vector.extract_strided_slice %414 {offsets = [40, 0], sizes = [8, 4], strides = [1, 1]} : vector<64x4xf32> to vector<8x4xf32>
    %cst_166 = arith.constant 0.000000e+00 : f32
    %563 = vector.broadcast %cst_166 : f32 to vector<8x128xf32>
    %564 = vector.broadcast %416 : vector<1x128xf32> to vector<8x128xf32>
    %565 = arith.mulf %561, %564 : vector<8x128xf32>
    %566 = math.exp %565 : vector<8x128xf32>
    %567 = arith.mulf %566, %543 : vector<8x128xf32>
    %568 = vector.extract_strided_slice %562 {offsets = [0, 0], sizes = [8, 1], strides = [1, 1]} : vector<8x4xf32> to vector<8x1xf32>
    %569 = vector.broadcast %568 : vector<8x1xf32> to vector<8x128xf32>
    %570 = arith.mulf %561, %569 : vector<8x128xf32>
    %571 = arith.addf %567, %570 : vector<8x128xf32>
    %572 = vector.extract_strided_slice %562 {offsets = [0, 2], sizes = [8, 1], strides = [1, 1]} : vector<8x4xf32> to vector<8x1xf32>
    %573 = vector.broadcast %572 : vector<8x1xf32> to vector<8x128xf32>
    %574 = arith.mulf %571, %573 : vector<8x128xf32>
    %575 = arith.addf %563, %574 : vector<8x128xf32>
    %576 = vector.broadcast %418 : vector<1x128xf32> to vector<8x128xf32>
    %577 = arith.mulf %561, %576 : vector<8x128xf32>
    %578 = math.exp %577 : vector<8x128xf32>
    %579 = arith.mulf %578, %555 : vector<8x128xf32>
    %580 = vector.extract_strided_slice %562 {offsets = [0, 1], sizes = [8, 1], strides = [1, 1]} : vector<8x4xf32> to vector<8x1xf32>
    %581 = vector.broadcast %580 : vector<8x1xf32> to vector<8x128xf32>
    %582 = arith.mulf %561, %581 : vector<8x128xf32>
    %583 = arith.addf %579, %582 : vector<8x128xf32>
    %584 = vector.extract_strided_slice %562 {offsets = [0, 3], sizes = [8, 1], strides = [1, 1]} : vector<8x4xf32> to vector<8x1xf32>
    %585 = vector.broadcast %584 : vector<8x1xf32> to vector<8x128xf32>
    %586 = arith.mulf %583, %585 : vector<8x128xf32>
    %587 = arith.addf %575, %586 : vector<8x128xf32>
    %c40_167 = arith.constant 40 : index
    %c0_168 = arith.constant 0 : index
    %588 = vector.load %arg20[%c40_167, %c0_168] : memref<64x128xf32, #tpu.memory_space<vmem>>, vector<8x128xf32>
    tpu.vector_store %arg20[%c40_167, %c0_168], %587 {strides = array<i32>} : memref<64x128xf32, #tpu.memory_space<vmem>>, vector<8x128xf32>,
    %589 = vector.extract_strided_slice %411 {offsets = [48, 0], sizes = [8, 128], strides = [1, 1]} : vector<64x128xf32> to vector<8x128xf32>
    %590 = vector.extract_strided_slice %414 {offsets = [48, 0], sizes = [8, 4], strides = [1, 1]} : vector<64x4xf32> to vector<8x4xf32>
    %cst_169 = arith.constant 0.000000e+00 : f32
    %591 = vector.broadcast %cst_169 : f32 to vector<8x128xf32>
    %592 = vector.broadcast %416 : vector<1x128xf32> to vector<8x128xf32>
    %593 = arith.mulf %589, %592 : vector<8x128xf32>
    %594 = math.exp %593 : vector<8x128xf32>
    %595 = arith.mulf %594, %571 : vector<8x128xf32>
    %596 = vector.extract_strided_slice %590 {offsets = [0, 0], sizes = [8, 1], strides = [1, 1]} : vector<8x4xf32> to vector<8x1xf32>
    %597 = vector.broadcast %596 : vector<8x1xf32> to vector<8x128xf32>
    %598 = arith.mulf %589, %597 : vector<8x128xf32>
    %599 = arith.addf %595, %598 : vector<8x128xf32>
    %600 = vector.extract_strided_slice %590 {offsets = [0, 2], sizes = [8, 1], strides = [1, 1]} : vector<8x4xf32> to vector<8x1xf32>
    %601 = vector.broadcast %600 : vector<8x1xf32> to vector<8x128xf32>
    %602 = arith.mulf %599, %601 : vector<8x128xf32>
    %603 = arith.addf %591, %602 : vector<8x128xf32>
    %604 = vector.broadcast %418 : vector<1x128xf32> to vector<8x128xf32>
    %605 = arith.mulf %589, %604 : vector<8x128xf32>
    %606 = math.exp %605 : vector<8x128xf32>
    %607 = arith.mulf %606, %583 : vector<8x128xf32>
    %608 = vector.extract_strided_slice %590 {offsets = [0, 1], sizes = [8, 1], strides = [1, 1]} : vector<8x4xf32> to vector<8x1xf32>
    %609 = vector.broadcast %608 : vector<8x1xf32> to vector<8x128xf32>
    %610 = arith.mulf %589, %609 : vector<8x128xf32>
    %611 = arith.addf %607, %610 : vector<8x128xf32>
    %612 = vector.extract_strided_slice %590 {offsets = [0, 3], sizes = [8, 1], strides = [1, 1]} : vector<8x4xf32> to vector<8x1xf32>
    %613 = vector.broadcast %612 : vector<8x1xf32> to vector<8x128xf32>
    %614 = arith.mulf %611, %613 : vector<8x128xf32>
    %615 = arith.addf %603, %614 : vector<8x128xf32>
    %c48_170 = arith.constant 48 : index
    %c0_171 = arith.constant 0 : index
    %616 = vector.load %arg20[%c48_170, %c0_171] : memref<64x128xf32, #tpu.memory_space<vmem>>, vector<8x128xf32>
    tpu.vector_store %arg20[%c48_170, %c0_171], %615 {strides = array<i32>} : memref<64x128xf32, #tpu.memory_space<vmem>>, vector<8x128xf32>,
    %617 = vector.extract_strided_slice %411 {offsets = [56, 0], sizes = [8, 128], strides = [1, 1]} : vector<64x128xf32> to vector<8x128xf32>
    %618 = vector.extract_strided_slice %414 {offsets = [56, 0], sizes = [8, 4], strides = [1, 1]} : vector<64x4xf32> to vector<8x4xf32>
    %cst_172 = arith.constant 0.000000e+00 : f32
    %619 = vector.broadcast %cst_172 : f32 to vector<8x128xf32>
    %620 = vector.broadcast %416 : vector<1x128xf32> to vector<8x128xf32>
    %621 = arith.mulf %617, %620 : vector<8x128xf32>
    %622 = math.exp %621 : vector<8x128xf32>
    %623 = arith.mulf %622, %599 : vector<8x128xf32>
    %624 = vector.extract_strided_slice %618 {offsets = [0, 0], sizes = [8, 1], strides = [1, 1]} : vector<8x4xf32> to vector<8x1xf32>
    %625 = vector.broadcast %624 : vector<8x1xf32> to vector<8x128xf32>
    %626 = arith.mulf %617, %625 : vector<8x128xf32>
    %627 = arith.addf %623, %626 : vector<8x128xf32>
    %628 = vector.extract_strided_slice %618 {offsets = [0, 2], sizes = [8, 1], strides = [1, 1]} : vector<8x4xf32> to vector<8x1xf32>
    %629 = vector.broadcast %628 : vector<8x1xf32> to vector<8x128xf32>
    %630 = arith.mulf %627, %629 : vector<8x128xf32>
    %631 = arith.addf %619, %630 : vector<8x128xf32>
    %632 = vector.broadcast %418 : vector<1x128xf32> to vector<8x128xf32>
    %633 = arith.mulf %617, %632 : vector<8x128xf32>
    %634 = math.exp %633 : vector<8x128xf32>
    %635 = arith.mulf %634, %611 : vector<8x128xf32>
    %636 = vector.extract_strided_slice %618 {offsets = [0, 1], sizes = [8, 1], strides = [1, 1]} : vector<8x4xf32> to vector<8x1xf32>
    %637 = vector.broadcast %636 : vector<8x1xf32> to vector<8x128xf32>
    %638 = arith.mulf %617, %637 : vector<8x128xf32>
    %639 = arith.addf %635, %638 : vector<8x128xf32>
    %640 = vector.extract_strided_slice %618 {offsets = [0, 3], sizes = [8, 1], strides = [1, 1]} : vector<8x4xf32> to vector<8x1xf32>
    %641 = vector.broadcast %640 : vector<8x1xf32> to vector<8x128xf32>
    %642 = arith.mulf %639, %641 : vector<8x128xf32>
    %643 = arith.addf %631, %642 : vector<8x128xf32>
    %c56_173 = arith.constant 56 : index
    %c0_174 = arith.constant 0 : index
    %644 = vector.load %arg20[%c56_173, %c0_174] : memref<64x128xf32, #tpu.memory_space<vmem>>, vector<8x128xf32>
    tpu.vector_store %arg20[%c56_173, %c0_174], %643 {strides = array<i32>} : memref<64x128xf32, #tpu.memory_space<vmem>>, vector<8x128xf32>,
    %c0_175 = arith.constant 0 : index
    %c0_176 = arith.constant 0 : index
    %645 = vector.load %arg20[%c0_175, %c0_176] : memref<64x128xf32, #tpu.memory_space<vmem>>, vector<64x128xf32>
    %c1_177 = arith.constant 1 : index
    %c0_178 = arith.constant 0 : index
    %c0_179 = arith.constant 0 : index
    %646 = vector.load %arg13[%c1_177, %c0_178, %c0_179] : memref<4x1x128xf32, #tpu.memory_space<vmem>>, vector<1x1x128xf32>
    %647 = vector.shape_cast %646 : vector<1x1x128xf32> to vector<1x128xf32>
    %648 = vector.broadcast %647 : vector<1x128xf32> to vector<64x128xf32>
    %649 = arith.mulf %390, %648 : vector<64x128xf32>
    %650 = arith.addf %645, %649 : vector<64x128xf32>
    %651 = arith.negf %354 : vector<64x128xf32>
    %652 = math.exp %651 : vector<64x128xf32>
    %cst_180 = arith.constant 1.000000e+00 : f32
    %653 = vector.broadcast %cst_180 : f32 to vector<64x128xf32>
    %654 = arith.addf %653, %652 : vector<64x128xf32>
    %655 = arith.divf %653, %654 : vector<64x128xf32>
    %656 = arith.mulf %354, %655 : vector<64x128xf32>
    %657 = arith.mulf %650, %656 : vector<64x128xf32>
    %c1_181 = arith.constant 1 : index
    %c0_182 = arith.constant 0 : index
    %c0_183 = arith.constant 0 : index
    %658 = vector.load %arg14[%c1_181, %c0_182, %c0_183] : memref<4x128x128xf32, #tpu.memory_space<vmem>>, vector<1x128x128xf32>
    %659 = vector.shape_cast %658 : vector<1x128x128xf32> to vector<128x128xf32>
    %cst_184 = arith.constant dense<0.000000e+00> : vector<64x128xf32>
    %660 = tpu.matmul %657, %659, %cst_184 {dimension_numbers = #tpu.dot_dimension_numbers<[1], [0], [0], [1], [0, 0, 1, 1], [], []>} : vector<64x128xf32>, vector<128x128xf32>, vector<64x128xf32> -> vector<64x128xf32>
    %c0_185 = arith.constant 0 : index
    %c0_186 = arith.constant 0 : index
    %661 = vector.load %arg2[%c0_185, %c0_186] : memref<64x64xf32, #tpu.memory_space<vmem>>, vector<64x64xf32>
    %cst_187 = arith.constant dense<0.000000e+00> : vector<64x128xf32>
    %662 = tpu.matmul %661, %660, %cst_187 {dimension_numbers = #tpu.dot_dimension_numbers<[1], [0], [0], [1], [0, 0, 1, 1], [], []>} : vector<64x64xf32>, vector<64x128xf32>, vector<64x128xf32> -> vector<64x128xf32>
    %663 = arith.addf %662, %349 : vector<64x128xf32>
    %c2_188 = arith.constant 2 : index
    %c0_189 = arith.constant 0 : index
    %c0_190 = arith.constant 0 : index
    %664 = vector.load %arg5[%c2_188, %c0_189, %c0_190] : memref<4x1x128xf32, #tpu.memory_space<vmem>>, vector<1x1x128xf32>
    %665 = vector.shape_cast %664 : vector<1x1x128xf32> to vector<1x128xf32>
    %666 = arith.mulf %663, %663 : vector<64x128xf32>
    %cst_191 = arith.constant dense<0.000000e+00> : vector<64xf32>
    %667 = vector.multi_reduction <add>, %666, %cst_191 [1] : vector<64x128xf32> to vector<64xf32>
    %668 = vector.shape_cast %667 : vector<64xf32> to vector<64x1xf32>
    %cst_192 = arith.constant 1.280000e+02 : f32
    %669 = vector.broadcast %cst_192 : f32 to vector<64x1xf32>
    %670 = arith.divf %668, %669 : vector<64x1xf32>
    %cst_193 = arith.constant 9.99999974E-6 : f32
    %671 = vector.broadcast %cst_193 : f32 to vector<64x1xf32>
    %672 = arith.addf %670, %671 : vector<64x1xf32>
    %673 = math.rsqrt %672 : vector<64x1xf32>
    %674 = vector.broadcast %673 : vector<64x1xf32> to vector<64x128xf32>
    %675 = arith.mulf %663, %674 : vector<64x128xf32>
    %676 = vector.broadcast %665 : vector<1x128xf32> to vector<64x128xf32>
    %677 = arith.mulf %675, %676 : vector<64x128xf32>
    %c2_194 = arith.constant 2 : index
    %c0_195 = arith.constant 0 : index
    %c0_196 = arith.constant 0 : index
    %678 = vector.load %arg6[%c2_194, %c0_195, %c0_196] : memref<4x128x256xf32, #tpu.memory_space<vmem>>, vector<1x128x256xf32>
    %679 = vector.shape_cast %678 : vector<1x128x256xf32> to vector<128x256xf32>
    %cst_197 = arith.constant dense<0.000000e+00> : vector<64x256xf32>
    %680 = tpu.matmul %677, %679, %cst_197 {dimension_numbers = #tpu.dot_dimension_numbers<[1], [0], [0], [1], [0, 0, 1, 1], [], []>} : vector<64x128xf32>, vector<128x256xf32>, vector<64x256xf32> -> vector<64x256xf32>
    %681 = vector.extract_strided_slice %680 {offsets = [0, 0], sizes = [64, 128], strides = [1, 1]} : vector<64x256xf32> to vector<64x128xf32>
    %682 = vector.extract_strided_slice %680 {offsets = [0, 128], sizes = [64, 128], strides = [1, 1]} : vector<64x256xf32> to vector<64x128xf32>
    %c24_198 = arith.constant 24 : index
    %c0_199 = arith.constant 0 : index
    %683 = vector.load %arg19[%c24_198, %c0_199] : memref<88x128xf32, #tpu.memory_space<vmem>>, vector<64x128xf32>
    tpu.vector_store %arg19[%c24_198, %c0_199], %681 {strides = array<i32>} : memref<88x128xf32, #tpu.memory_space<vmem>>, vector<64x128xf32>,
    %cst_200 = arith.constant 0.000000e+00 : f32
    %684 = vector.broadcast %cst_200 : f32 to vector<64x128xf32>
    %c2_201 = arith.constant 2 : index
    %c0_202 = arith.constant 0 : index
    %c0_203 = arith.constant 0 : index
    %685 = vector.load %arg8[%c2_201, %c0_202, %c0_203] : memref<4x1x128xf32, #tpu.memory_space<vmem>>, vector<1x1x128xf32>
    %686 = vector.shape_cast %685 : vector<1x1x128xf32> to vector<1x128xf32>
    %687 = vector.broadcast %686 : vector<1x128xf32> to vector<64x128xf32>
    %688 = arith.addf %684, %687 : vector<64x128xf32>
    %c0_204 = arith.constant 0 : index
    %c0_205 = arith.constant 0 : index
    %689 = vector.load %arg19[%c0_204, %c0_205] : memref<88x128xf32, #tpu.memory_space<vmem>>, vector<64x128xf32>
    %c2_206 = arith.constant 2 : index
    %c0_207 = arith.constant 0 : index
    %c0_208 = arith.constant 0 : index
    %690 = vector.load %arg7[%c2_206, %c0_207, %c0_208] : memref<4x4x128xf32, #tpu.memory_space<vmem>>, vector<1x1x128xf32>
    %691 = vector.shape_cast %690 : vector<1x1x128xf32> to vector<1x128xf32>
    %692 = vector.broadcast %691 : vector<1x128xf32> to vector<64x128xf32>
    %693 = arith.mulf %689, %692 : vector<64x128xf32>
    %694 = arith.addf %688, %693 : vector<64x128xf32>
    %c8_209 = arith.constant 8 : index
    %c0_210 = arith.constant 0 : index
    %695 = vector.load %arg19[%c8_209, %c0_210] : memref<88x128xf32, #tpu.memory_space<vmem>>, vector<64x128xf32>
    %c2_211 = arith.constant 2 : index
    %c1_212 = arith.constant 1 : index
    %c0_213 = arith.constant 0 : index
    %696 = vector.load %arg7[%c2_211, %c1_212, %c0_213] : memref<4x4x128xf32, #tpu.memory_space<vmem>>, vector<1x1x128xf32>
    %697 = vector.shape_cast %696 : vector<1x1x128xf32> to vector<1x128xf32>
    %698 = vector.broadcast %697 : vector<1x128xf32> to vector<64x128xf32>
    %699 = arith.mulf %695, %698 : vector<64x128xf32>
    %700 = arith.addf %694, %699 : vector<64x128xf32>
    %c16_214 = arith.constant 16 : index
    %c0_215 = arith.constant 0 : index
    %701 = vector.load %arg19[%c16_214, %c0_215] : memref<88x128xf32, #tpu.memory_space<vmem>>, vector<64x128xf32>
    %c2_216 = arith.constant 2 : index
    %c2_217 = arith.constant 2 : index
    %c0_218 = arith.constant 0 : index
    %702 = vector.load %arg7[%c2_216, %c2_217, %c0_218] : memref<4x4x128xf32, #tpu.memory_space<vmem>>, vector<1x1x128xf32>
    %703 = vector.shape_cast %702 : vector<1x1x128xf32> to vector<1x128xf32>
    %704 = vector.broadcast %703 : vector<1x128xf32> to vector<64x128xf32>
    %705 = arith.mulf %701, %704 : vector<64x128xf32>
    %706 = arith.addf %700, %705 : vector<64x128xf32>
    %c24_219 = arith.constant 24 : index
    %c0_220 = arith.constant 0 : index
    %707 = vector.load %arg19[%c24_219, %c0_220] : memref<88x128xf32, #tpu.memory_space<vmem>>, vector<64x128xf32>
    %c2_221 = arith.constant 2 : index
    %c3_222 = arith.constant 3 : index
    %c0_223 = arith.constant 0 : index
    %708 = vector.load %arg7[%c2_221, %c3_222, %c0_223] : memref<4x4x128xf32, #tpu.memory_space<vmem>>, vector<1x1x128xf32>
    %709 = vector.shape_cast %708 : vector<1x1x128xf32> to vector<1x128xf32>
    %710 = vector.broadcast %709 : vector<1x128xf32> to vector<64x128xf32>
    %711 = arith.mulf %707, %710 : vector<64x128xf32>
    %712 = arith.addf %706, %711 : vector<64x128xf32>
    %713 = arith.negf %712 : vector<64x128xf32>
    %714 = math.exp %713 : vector<64x128xf32>
    %cst_224 = arith.constant 1.000000e+00 : f32
    %715 = vector.broadcast %cst_224 : f32 to vector<64x128xf32>
    %716 = arith.addf %715, %714 : vector<64x128xf32>
    %717 = arith.divf %715, %716 : vector<64x128xf32>
    %718 = arith.mulf %712, %717 : vector<64x128xf32>
    %c2_225 = arith.constant 2 : index
    %c0_226 = arith.constant 0 : index
    %c0_227 = arith.constant 0 : index
    %719 = vector.load %arg10[%c2_225, %c0_226, %c0_227] : memref<4x128x128xf32, #tpu.memory_space<vmem>>, vector<1x128x128xf32>
    %720 = vector.shape_cast %719 : vector<1x128x128xf32> to vector<128x128xf32>
    %cst_228 = arith.constant dense<0.000000e+00> : vector<64x128xf32>
    %721 = tpu.matmul %718, %720, %cst_228 {dimension_numbers = #tpu.dot_dimension_numbers<[1], [0], [0], [1], [0, 0, 1, 1], [], []>} : vector<64x128xf32>, vector<128x128xf32>, vector<64x128xf32> -> vector<64x128xf32>
    %c2_229 = arith.constant 2 : index
    %c0_230 = arith.constant 0 : index
    %c0_231 = arith.constant 0 : index
    %722 = vector.load %arg11[%c2_229, %c0_230, %c0_231] : memref<4x1x128xf32, #tpu.memory_space<vmem>>, vector<1x1x128xf32>
    %723 = vector.shape_cast %722 : vector<1x1x128xf32> to vector<1x128xf32>
    %724 = vector.broadcast %723 : vector<1x128xf32> to vector<64x128xf32>
    %725 = arith.addf %721, %724 : vector<64x128xf32>
    %cst_232 = arith.constant 0.000000e+00 : f32
    %726 = vector.broadcast %cst_232 : f32 to vector<64x128xf32>
    %727 = arith.maximumf %725, %726 : vector<64x128xf32>
    %728 = vector.broadcast %cst_232 : f32 to vector<64x128xf32>
    %729 = arith.subf %725, %728 : vector<64x128xf32>
    %730 = arith.cmpf one, %729, %729 : vector<64x128xf32>
    %731 = vector.broadcast %cst_232 : f32 to vector<64x128xf32>
    %732 = arith.addf %725, %731 : vector<64x128xf32>
    %733 = math.absf %729 : vector<64x128xf32>
    %cst_233 = arith.constant 0.000000e+00 : f32
    %734 = vector.broadcast %cst_233 : f32 to vector<64x128xf32>
    %735 = arith.subf %734, %733 : vector<64x128xf32>
    %736 = math.exp %735 : vector<64x128xf32>
    %737 = math.log1p %736 : vector<64x128xf32>
    %738 = arith.addf %727, %737 : vector<64x128xf32>
    %739 = arith.select %730, %732, %738 : vector<64x128xi1>, vector<64x128xf32>
    %c2_234 = arith.constant 2 : index
    %c0_235 = arith.constant 0 : index
    %c0_236 = arith.constant 0 : index
    %740 = vector.load %arg9[%c2_234, %c0_235, %c0_236] : memref<4x128x4xf32, #tpu.memory_space<vmem>>, vector<1x128x4xf32>
    %741 = vector.shape_cast %740 : vector<1x128x4xf32> to vector<128x4xf32>
    %cst_237 = arith.constant dense<0.000000e+00> : vector<64x4xf32>
    %742 = tpu.matmul %718, %741, %cst_237 {dimension_numbers = #tpu.dot_dimension_numbers<[1], [0], [0], [1], [0, 0, 1, 1], [], []>} : vector<64x128xf32>, vector<128x4xf32>, vector<64x4xf32> -> vector<64x4xf32>
    %c2_238 = arith.constant 2 : index
    %c0_239 = arith.constant 0 : index
    %c0_240 = arith.constant 0 : index
    %743 = vector.load %arg12[%c2_238, %c0_239, %c0_240] : memref<4x2x128xf32, #tpu.memory_space<vmem>>, vector<1x1x128xf32>
    %744 = vector.shape_cast %743 : vector<1x1x128xf32> to vector<1x128xf32>
    %c2_241 = arith.constant 2 : index
    %c1_242 = arith.constant 1 : index
    %c0_243 = arith.constant 0 : index
    %745 = vector.load %arg12[%c2_241, %c1_242, %c0_243] : memref<4x2x128xf32, #tpu.memory_space<vmem>>, vector<1x1x128xf32>
    %746 = vector.shape_cast %745 : vector<1x1x128xf32> to vector<1x128xf32>
    %cst_244 = arith.constant 0.000000e+00 : f32
    %747 = vector.broadcast %cst_244 : f32 to vector<8x128xf32>
    %cst_245 = arith.constant 0.000000e+00 : f32
    %748 = vector.broadcast %cst_245 : f32 to vector<8x128xf32>
    %749 = vector.extract_strided_slice %739 {offsets = [0, 0], sizes = [8, 128], strides = [1, 1]} : vector<64x128xf32> to vector<8x128xf32>
    %750 = vector.extract_strided_slice %742 {offsets = [0, 0], sizes = [8, 4], strides = [1, 1]} : vector<64x4xf32> to vector<8x4xf32>
    %cst_246 = arith.constant 0.000000e+00 : f32
    %751 = vector.broadcast %cst_246 : f32 to vector<8x128xf32>
    %752 = vector.broadcast %744 : vector<1x128xf32> to vector<8x128xf32>
    %753 = arith.mulf %749, %752 : vector<8x128xf32>
    %754 = math.exp %753 : vector<8x128xf32>
    %755 = arith.mulf %754, %747 : vector<8x128xf32>
    %756 = vector.extract_strided_slice %750 {offsets = [0, 0], sizes = [8, 1], strides = [1, 1]} : vector<8x4xf32> to vector<8x1xf32>
    %757 = vector.broadcast %756 : vector<8x1xf32> to vector<8x128xf32>
    %758 = arith.mulf %749, %757 : vector<8x128xf32>
    %759 = arith.addf %755, %758 : vector<8x128xf32>
    %760 = vector.extract_strided_slice %750 {offsets = [0, 2], sizes = [8, 1], strides = [1, 1]} : vector<8x4xf32> to vector<8x1xf32>
    %761 = vector.broadcast %760 : vector<8x1xf32> to vector<8x128xf32>
    %762 = arith.mulf %759, %761 : vector<8x128xf32>
    %763 = arith.addf %751, %762 : vector<8x128xf32>
    %764 = vector.broadcast %746 : vector<1x128xf32> to vector<8x128xf32>
    %765 = arith.mulf %749, %764 : vector<8x128xf32>
    %766 = math.exp %765 : vector<8x128xf32>
    %767 = arith.mulf %766, %748 : vector<8x128xf32>
    %768 = vector.extract_strided_slice %750 {offsets = [0, 1], sizes = [8, 1], strides = [1, 1]} : vector<8x4xf32> to vector<8x1xf32>
    %769 = vector.broadcast %768 : vector<8x1xf32> to vector<8x128xf32>
    %770 = arith.mulf %749, %769 : vector<8x128xf32>
    %771 = arith.addf %767, %770 : vector<8x128xf32>
    %772 = vector.extract_strided_slice %750 {offsets = [0, 3], sizes = [8, 1], strides = [1, 1]} : vector<8x4xf32> to vector<8x1xf32>
    %773 = vector.broadcast %772 : vector<8x1xf32> to vector<8x128xf32>
    %774 = arith.mulf %771, %773 : vector<8x128xf32>
    %775 = arith.addf %763, %774 : vector<8x128xf32>
    %c0_247 = arith.constant 0 : index
    %c0_248 = arith.constant 0 : index
    %776 = vector.load %arg20[%c0_247, %c0_248] : memref<64x128xf32, #tpu.memory_space<vmem>>, vector<8x128xf32>
    tpu.vector_store %arg20[%c0_247, %c0_248], %775 {strides = array<i32>} : memref<64x128xf32, #tpu.memory_space<vmem>>, vector<8x128xf32>,
    %777 = vector.extract_strided_slice %739 {offsets = [8, 0], sizes = [8, 128], strides = [1, 1]} : vector<64x128xf32> to vector<8x128xf32>
    %778 = vector.extract_strided_slice %742 {offsets = [8, 0], sizes = [8, 4], strides = [1, 1]} : vector<64x4xf32> to vector<8x4xf32>
    %cst_249 = arith.constant 0.000000e+00 : f32
    %779 = vector.broadcast %cst_249 : f32 to vector<8x128xf32>
    %780 = vector.broadcast %744 : vector<1x128xf32> to vector<8x128xf32>
    %781 = arith.mulf %777, %780 : vector<8x128xf32>
    %782 = math.exp %781 : vector<8x128xf32>
    %783 = arith.mulf %782, %759 : vector<8x128xf32>
    %784 = vector.extract_strided_slice %778 {offsets = [0, 0], sizes = [8, 1], strides = [1, 1]} : vector<8x4xf32> to vector<8x1xf32>
    %785 = vector.broadcast %784 : vector<8x1xf32> to vector<8x128xf32>
    %786 = arith.mulf %777, %785 : vector<8x128xf32>
    %787 = arith.addf %783, %786 : vector<8x128xf32>
    %788 = vector.extract_strided_slice %778 {offsets = [0, 2], sizes = [8, 1], strides = [1, 1]} : vector<8x4xf32> to vector<8x1xf32>
    %789 = vector.broadcast %788 : vector<8x1xf32> to vector<8x128xf32>
    %790 = arith.mulf %787, %789 : vector<8x128xf32>
    %791 = arith.addf %779, %790 : vector<8x128xf32>
    %792 = vector.broadcast %746 : vector<1x128xf32> to vector<8x128xf32>
    %793 = arith.mulf %777, %792 : vector<8x128xf32>
    %794 = math.exp %793 : vector<8x128xf32>
    %795 = arith.mulf %794, %771 : vector<8x128xf32>
    %796 = vector.extract_strided_slice %778 {offsets = [0, 1], sizes = [8, 1], strides = [1, 1]} : vector<8x4xf32> to vector<8x1xf32>
    %797 = vector.broadcast %796 : vector<8x1xf32> to vector<8x128xf32>
    %798 = arith.mulf %777, %797 : vector<8x128xf32>
    %799 = arith.addf %795, %798 : vector<8x128xf32>
    %800 = vector.extract_strided_slice %778 {offsets = [0, 3], sizes = [8, 1], strides = [1, 1]} : vector<8x4xf32> to vector<8x1xf32>
    %801 = vector.broadcast %800 : vector<8x1xf32> to vector<8x128xf32>
    %802 = arith.mulf %799, %801 : vector<8x128xf32>
    %803 = arith.addf %791, %802 : vector<8x128xf32>
    %c8_250 = arith.constant 8 : index
    %c0_251 = arith.constant 0 : index
    %804 = vector.load %arg20[%c8_250, %c0_251] : memref<64x128xf32, #tpu.memory_space<vmem>>, vector<8x128xf32>
    tpu.vector_store %arg20[%c8_250, %c0_251], %803 {strides = array<i32>} : memref<64x128xf32, #tpu.memory_space<vmem>>, vector<8x128xf32>,
    %805 = vector.extract_strided_slice %739 {offsets = [16, 0], sizes = [8, 128], strides = [1, 1]} : vector<64x128xf32> to vector<8x128xf32>
    %806 = vector.extract_strided_slice %742 {offsets = [16, 0], sizes = [8, 4], strides = [1, 1]} : vector<64x4xf32> to vector<8x4xf32>
    %cst_252 = arith.constant 0.000000e+00 : f32
    %807 = vector.broadcast %cst_252 : f32 to vector<8x128xf32>
    %808 = vector.broadcast %744 : vector<1x128xf32> to vector<8x128xf32>
    %809 = arith.mulf %805, %808 : vector<8x128xf32>
    %810 = math.exp %809 : vector<8x128xf32>
    %811 = arith.mulf %810, %787 : vector<8x128xf32>
    %812 = vector.extract_strided_slice %806 {offsets = [0, 0], sizes = [8, 1], strides = [1, 1]} : vector<8x4xf32> to vector<8x1xf32>
    %813 = vector.broadcast %812 : vector<8x1xf32> to vector<8x128xf32>
    %814 = arith.mulf %805, %813 : vector<8x128xf32>
    %815 = arith.addf %811, %814 : vector<8x128xf32>
    %816 = vector.extract_strided_slice %806 {offsets = [0, 2], sizes = [8, 1], strides = [1, 1]} : vector<8x4xf32> to vector<8x1xf32>
    %817 = vector.broadcast %816 : vector<8x1xf32> to vector<8x128xf32>
    %818 = arith.mulf %815, %817 : vector<8x128xf32>
    %819 = arith.addf %807, %818 : vector<8x128xf32>
    %820 = vector.broadcast %746 : vector<1x128xf32> to vector<8x128xf32>
    %821 = arith.mulf %805, %820 : vector<8x128xf32>
    %822 = math.exp %821 : vector<8x128xf32>
    %823 = arith.mulf %822, %799 : vector<8x128xf32>
    %824 = vector.extract_strided_slice %806 {offsets = [0, 1], sizes = [8, 1], strides = [1, 1]} : vector<8x4xf32> to vector<8x1xf32>
    %825 = vector.broadcast %824 : vector<8x1xf32> to vector<8x128xf32>
    %826 = arith.mulf %805, %825 : vector<8x128xf32>
    %827 = arith.addf %823, %826 : vector<8x128xf32>
    %828 = vector.extract_strided_slice %806 {offsets = [0, 3], sizes = [8, 1], strides = [1, 1]} : vector<8x4xf32> to vector<8x1xf32>
    %829 = vector.broadcast %828 : vector<8x1xf32> to vector<8x128xf32>
    %830 = arith.mulf %827, %829 : vector<8x128xf32>
    %831 = arith.addf %819, %830 : vector<8x128xf32>
    %c16_253 = arith.constant 16 : index
    %c0_254 = arith.constant 0 : index
    %832 = vector.load %arg20[%c16_253, %c0_254] : memref<64x128xf32, #tpu.memory_space<vmem>>, vector<8x128xf32>
    tpu.vector_store %arg20[%c16_253, %c0_254], %831 {strides = array<i32>} : memref<64x128xf32, #tpu.memory_space<vmem>>, vector<8x128xf32>,
    %833 = vector.extract_strided_slice %739 {offsets = [24, 0], sizes = [8, 128], strides = [1, 1]} : vector<64x128xf32> to vector<8x128xf32>
    %834 = vector.extract_strided_slice %742 {offsets = [24, 0], sizes = [8, 4], strides = [1, 1]} : vector<64x4xf32> to vector<8x4xf32>
    %cst_255 = arith.constant 0.000000e+00 : f32
    %835 = vector.broadcast %cst_255 : f32 to vector<8x128xf32>
    %836 = vector.broadcast %744 : vector<1x128xf32> to vector<8x128xf32>
    %837 = arith.mulf %833, %836 : vector<8x128xf32>
    %838 = math.exp %837 : vector<8x128xf32>
    %839 = arith.mulf %838, %815 : vector<8x128xf32>
    %840 = vector.extract_strided_slice %834 {offsets = [0, 0], sizes = [8, 1], strides = [1, 1]} : vector<8x4xf32> to vector<8x1xf32>
    %841 = vector.broadcast %840 : vector<8x1xf32> to vector<8x128xf32>
    %842 = arith.mulf %833, %841 : vector<8x128xf32>
    %843 = arith.addf %839, %842 : vector<8x128xf32>
    %844 = vector.extract_strided_slice %834 {offsets = [0, 2], sizes = [8, 1], strides = [1, 1]} : vector<8x4xf32> to vector<8x1xf32>
    %845 = vector.broadcast %844 : vector<8x1xf32> to vector<8x128xf32>
    %846 = arith.mulf %843, %845 : vector<8x128xf32>
    %847 = arith.addf %835, %846 : vector<8x128xf32>
    %848 = vector.broadcast %746 : vector<1x128xf32> to vector<8x128xf32>
    %849 = arith.mulf %833, %848 : vector<8x128xf32>
    %850 = math.exp %849 : vector<8x128xf32>
    %851 = arith.mulf %850, %827 : vector<8x128xf32>
    %852 = vector.extract_strided_slice %834 {offsets = [0, 1], sizes = [8, 1], strides = [1, 1]} : vector<8x4xf32> to vector<8x1xf32>
    %853 = vector.broadcast %852 : vector<8x1xf32> to vector<8x128xf32>
    %854 = arith.mulf %833, %853 : vector<8x128xf32>
    %855 = arith.addf %851, %854 : vector<8x128xf32>
    %856 = vector.extract_strided_slice %834 {offsets = [0, 3], sizes = [8, 1], strides = [1, 1]} : vector<8x4xf32> to vector<8x1xf32>
    %857 = vector.broadcast %856 : vector<8x1xf32> to vector<8x128xf32>
    %858 = arith.mulf %855, %857 : vector<8x128xf32>
    %859 = arith.addf %847, %858 : vector<8x128xf32>
    %c24_256 = arith.constant 24 : index
    %c0_257 = arith.constant 0 : index
    %860 = vector.load %arg20[%c24_256, %c0_257] : memref<64x128xf32, #tpu.memory_space<vmem>>, vector<8x128xf32>
    tpu.vector_store %arg20[%c24_256, %c0_257], %859 {strides = array<i32>} : memref<64x128xf32, #tpu.memory_space<vmem>>, vector<8x128xf32>,
    %861 = vector.extract_strided_slice %739 {offsets = [32, 0], sizes = [8, 128], strides = [1, 1]} : vector<64x128xf32> to vector<8x128xf32>
    %862 = vector.extract_strided_slice %742 {offsets = [32, 0], sizes = [8, 4], strides = [1, 1]} : vector<64x4xf32> to vector<8x4xf32>
    %cst_258 = arith.constant 0.000000e+00 : f32
    %863 = vector.broadcast %cst_258 : f32 to vector<8x128xf32>
    %864 = vector.broadcast %744 : vector<1x128xf32> to vector<8x128xf32>
    %865 = arith.mulf %861, %864 : vector<8x128xf32>
    %866 = math.exp %865 : vector<8x128xf32>
    %867 = arith.mulf %866, %843 : vector<8x128xf32>
    %868 = vector.extract_strided_slice %862 {offsets = [0, 0], sizes = [8, 1], strides = [1, 1]} : vector<8x4xf32> to vector<8x1xf32>
    %869 = vector.broadcast %868 : vector<8x1xf32> to vector<8x128xf32>
    %870 = arith.mulf %861, %869 : vector<8x128xf32>
    %871 = arith.addf %867, %870 : vector<8x128xf32>
    %872 = vector.extract_strided_slice %862 {offsets = [0, 2], sizes = [8, 1], strides = [1, 1]} : vector<8x4xf32> to vector<8x1xf32>
    %873 = vector.broadcast %872 : vector<8x1xf32> to vector<8x128xf32>
    %874 = arith.mulf %871, %873 : vector<8x128xf32>
    %875 = arith.addf %863, %874 : vector<8x128xf32>
    %876 = vector.broadcast %746 : vector<1x128xf32> to vector<8x128xf32>
    %877 = arith.mulf %861, %876 : vector<8x128xf32>
    %878 = math.exp %877 : vector<8x128xf32>
    %879 = arith.mulf %878, %855 : vector<8x128xf32>
    %880 = vector.extract_strided_slice %862 {offsets = [0, 1], sizes = [8, 1], strides = [1, 1]} : vector<8x4xf32> to vector<8x1xf32>
    %881 = vector.broadcast %880 : vector<8x1xf32> to vector<8x128xf32>
    %882 = arith.mulf %861, %881 : vector<8x128xf32>
    %883 = arith.addf %879, %882 : vector<8x128xf32>
    %884 = vector.extract_strided_slice %862 {offsets = [0, 3], sizes = [8, 1], strides = [1, 1]} : vector<8x4xf32> to vector<8x1xf32>
    %885 = vector.broadcast %884 : vector<8x1xf32> to vector<8x128xf32>
    %886 = arith.mulf %883, %885 : vector<8x128xf32>
    %887 = arith.addf %875, %886 : vector<8x128xf32>
    %c32_259 = arith.constant 32 : index
    %c0_260 = arith.constant 0 : index
    %888 = vector.load %arg20[%c32_259, %c0_260] : memref<64x128xf32, #tpu.memory_space<vmem>>, vector<8x128xf32>
    tpu.vector_store %arg20[%c32_259, %c0_260], %887 {strides = array<i32>} : memref<64x128xf32, #tpu.memory_space<vmem>>, vector<8x128xf32>,
    %889 = vector.extract_strided_slice %739 {offsets = [40, 0], sizes = [8, 128], strides = [1, 1]} : vector<64x128xf32> to vector<8x128xf32>
    %890 = vector.extract_strided_slice %742 {offsets = [40, 0], sizes = [8, 4], strides = [1, 1]} : vector<64x4xf32> to vector<8x4xf32>
    %cst_261 = arith.constant 0.000000e+00 : f32
    %891 = vector.broadcast %cst_261 : f32 to vector<8x128xf32>
    %892 = vector.broadcast %744 : vector<1x128xf32> to vector<8x128xf32>
    %893 = arith.mulf %889, %892 : vector<8x128xf32>
    %894 = math.exp %893 : vector<8x128xf32>
    %895 = arith.mulf %894, %871 : vector<8x128xf32>
    %896 = vector.extract_strided_slice %890 {offsets = [0, 0], sizes = [8, 1], strides = [1, 1]} : vector<8x4xf32> to vector<8x1xf32>
    %897 = vector.broadcast %896 : vector<8x1xf32> to vector<8x128xf32>
    %898 = arith.mulf %889, %897 : vector<8x128xf32>
    %899 = arith.addf %895, %898 : vector<8x128xf32>
    %900 = vector.extract_strided_slice %890 {offsets = [0, 2], sizes = [8, 1], strides = [1, 1]} : vector<8x4xf32> to vector<8x1xf32>
    %901 = vector.broadcast %900 : vector<8x1xf32> to vector<8x128xf32>
    %902 = arith.mulf %899, %901 : vector<8x128xf32>
    %903 = arith.addf %891, %902 : vector<8x128xf32>
    %904 = vector.broadcast %746 : vector<1x128xf32> to vector<8x128xf32>
    %905 = arith.mulf %889, %904 : vector<8x128xf32>
    %906 = math.exp %905 : vector<8x128xf32>
    %907 = arith.mulf %906, %883 : vector<8x128xf32>
    %908 = vector.extract_strided_slice %890 {offsets = [0, 1], sizes = [8, 1], strides = [1, 1]} : vector<8x4xf32> to vector<8x1xf32>
    %909 = vector.broadcast %908 : vector<8x1xf32> to vector<8x128xf32>
    %910 = arith.mulf %889, %909 : vector<8x128xf32>
    %911 = arith.addf %907, %910 : vector<8x128xf32>
    %912 = vector.extract_strided_slice %890 {offsets = [0, 3], sizes = [8, 1], strides = [1, 1]} : vector<8x4xf32> to vector<8x1xf32>
    %913 = vector.broadcast %912 : vector<8x1xf32> to vector<8x128xf32>
    %914 = arith.mulf %911, %913 : vector<8x128xf32>
    %915 = arith.addf %903, %914 : vector<8x128xf32>
    %c40_262 = arith.constant 40 : index
    %c0_263 = arith.constant 0 : index
    %916 = vector.load %arg20[%c40_262, %c0_263] : memref<64x128xf32, #tpu.memory_space<vmem>>, vector<8x128xf32>
    tpu.vector_store %arg20[%c40_262, %c0_263], %915 {strides = array<i32>} : memref<64x128xf32, #tpu.memory_space<vmem>>, vector<8x128xf32>,
    %917 = vector.extract_strided_slice %739 {offsets = [48, 0], sizes = [8, 128], strides = [1, 1]} : vector<64x128xf32> to vector<8x128xf32>
    %918 = vector.extract_strided_slice %742 {offsets = [48, 0], sizes = [8, 4], strides = [1, 1]} : vector<64x4xf32> to vector<8x4xf32>
    %cst_264 = arith.constant 0.000000e+00 : f32
    %919 = vector.broadcast %cst_264 : f32 to vector<8x128xf32>
    %920 = vector.broadcast %744 : vector<1x128xf32> to vector<8x128xf32>
    %921 = arith.mulf %917, %920 : vector<8x128xf32>
    %922 = math.exp %921 : vector<8x128xf32>
    %923 = arith.mulf %922, %899 : vector<8x128xf32>
    %924 = vector.extract_strided_slice %918 {offsets = [0, 0], sizes = [8, 1], strides = [1, 1]} : vector<8x4xf32> to vector<8x1xf32>
    %925 = vector.broadcast %924 : vector<8x1xf32> to vector<8x128xf32>
    %926 = arith.mulf %917, %925 : vector<8x128xf32>
    %927 = arith.addf %923, %926 : vector<8x128xf32>
    %928 = vector.extract_strided_slice %918 {offsets = [0, 2], sizes = [8, 1], strides = [1, 1]} : vector<8x4xf32> to vector<8x1xf32>
    %929 = vector.broadcast %928 : vector<8x1xf32> to vector<8x128xf32>
    %930 = arith.mulf %927, %929 : vector<8x128xf32>
    %931 = arith.addf %919, %930 : vector<8x128xf32>
    %932 = vector.broadcast %746 : vector<1x128xf32> to vector<8x128xf32>
    %933 = arith.mulf %917, %932 : vector<8x128xf32>
    %934 = math.exp %933 : vector<8x128xf32>
    %935 = arith.mulf %934, %911 : vector<8x128xf32>
    %936 = vector.extract_strided_slice %918 {offsets = [0, 1], sizes = [8, 1], strides = [1, 1]} : vector<8x4xf32> to vector<8x1xf32>
    %937 = vector.broadcast %936 : vector<8x1xf32> to vector<8x128xf32>
    %938 = arith.mulf %917, %937 : vector<8x128xf32>
    %939 = arith.addf %935, %938 : vector<8x128xf32>
    %940 = vector.extract_strided_slice %918 {offsets = [0, 3], sizes = [8, 1], strides = [1, 1]} : vector<8x4xf32> to vector<8x1xf32>
    %941 = vector.broadcast %940 : vector<8x1xf32> to vector<8x128xf32>
    %942 = arith.mulf %939, %941 : vector<8x128xf32>
    %943 = arith.addf %931, %942 : vector<8x128xf32>
    %c48_265 = arith.constant 48 : index
    %c0_266 = arith.constant 0 : index
    %944 = vector.load %arg20[%c48_265, %c0_266] : memref<64x128xf32, #tpu.memory_space<vmem>>, vector<8x128xf32>
    tpu.vector_store %arg20[%c48_265, %c0_266], %943 {strides = array<i32>} : memref<64x128xf32, #tpu.memory_space<vmem>>, vector<8x128xf32>,
    %945 = vector.extract_strided_slice %739 {offsets = [56, 0], sizes = [8, 128], strides = [1, 1]} : vector<64x128xf32> to vector<8x128xf32>
    %946 = vector.extract_strided_slice %742 {offsets = [56, 0], sizes = [8, 4], strides = [1, 1]} : vector<64x4xf32> to vector<8x4xf32>
    %cst_267 = arith.constant 0.000000e+00 : f32
    %947 = vector.broadcast %cst_267 : f32 to vector<8x128xf32>
    %948 = vector.broadcast %744 : vector<1x128xf32> to vector<8x128xf32>
    %949 = arith.mulf %945, %948 : vector<8x128xf32>
    %950 = math.exp %949 : vector<8x128xf32>
    %951 = arith.mulf %950, %927 : vector<8x128xf32>
    %952 = vector.extract_strided_slice %946 {offsets = [0, 0], sizes = [8, 1], strides = [1, 1]} : vector<8x4xf32> to vector<8x1xf32>
    %953 = vector.broadcast %952 : vector<8x1xf32> to vector<8x128xf32>
    %954 = arith.mulf %945, %953 : vector<8x128xf32>
    %955 = arith.addf %951, %954 : vector<8x128xf32>
    %956 = vector.extract_strided_slice %946 {offsets = [0, 2], sizes = [8, 1], strides = [1, 1]} : vector<8x4xf32> to vector<8x1xf32>
    %957 = vector.broadcast %956 : vector<8x1xf32> to vector<8x128xf32>
    %958 = arith.mulf %955, %957 : vector<8x128xf32>
    %959 = arith.addf %947, %958 : vector<8x128xf32>
    %960 = vector.broadcast %746 : vector<1x128xf32> to vector<8x128xf32>
    %961 = arith.mulf %945, %960 : vector<8x128xf32>
    %962 = math.exp %961 : vector<8x128xf32>
    %963 = arith.mulf %962, %939 : vector<8x128xf32>
    %964 = vector.extract_strided_slice %946 {offsets = [0, 1], sizes = [8, 1], strides = [1, 1]} : vector<8x4xf32> to vector<8x1xf32>
    %965 = vector.broadcast %964 : vector<8x1xf32> to vector<8x128xf32>
    %966 = arith.mulf %945, %965 : vector<8x128xf32>
    %967 = arith.addf %963, %966 : vector<8x128xf32>
    %968 = vector.extract_strided_slice %946 {offsets = [0, 3], sizes = [8, 1], strides = [1, 1]} : vector<8x4xf32> to vector<8x1xf32>
    %969 = vector.broadcast %968 : vector<8x1xf32> to vector<8x128xf32>
    %970 = arith.mulf %967, %969 : vector<8x128xf32>
    %971 = arith.addf %959, %970 : vector<8x128xf32>
    %c56_268 = arith.constant 56 : index
    %c0_269 = arith.constant 0 : index
    %972 = vector.load %arg20[%c56_268, %c0_269] : memref<64x128xf32, #tpu.memory_space<vmem>>, vector<8x128xf32>
    tpu.vector_store %arg20[%c56_268, %c0_269], %971 {strides = array<i32>} : memref<64x128xf32, #tpu.memory_space<vmem>>, vector<8x128xf32>,
    %c0_270 = arith.constant 0 : index
    %c0_271 = arith.constant 0 : index
    %973 = vector.load %arg20[%c0_270, %c0_271] : memref<64x128xf32, #tpu.memory_space<vmem>>, vector<64x128xf32>
    %c2_272 = arith.constant 2 : index
    %c0_273 = arith.constant 0 : index
    %c0_274 = arith.constant 0 : index
    %974 = vector.load %arg13[%c2_272, %c0_273, %c0_274] : memref<4x1x128xf32, #tpu.memory_space<vmem>>, vector<1x1x128xf32>
    %975 = vector.shape_cast %974 : vector<1x1x128xf32> to vector<1x128xf32>
    %976 = vector.broadcast %975 : vector<1x128xf32> to vector<64x128xf32>
    %977 = arith.mulf %718, %976 : vector<64x128xf32>
    %978 = arith.addf %973, %977 : vector<64x128xf32>
    %979 = arith.negf %682 : vector<64x128xf32>
    %980 = math.exp %979 : vector<64x128xf32>
    %cst_275 = arith.constant 1.000000e+00 : f32
    %981 = vector.broadcast %cst_275 : f32 to vector<64x128xf32>
    %982 = arith.addf %981, %980 : vector<64x128xf32>
    %983 = arith.divf %981, %982 : vector<64x128xf32>
    %984 = arith.mulf %682, %983 : vector<64x128xf32>
    %985 = arith.mulf %978, %984 : vector<64x128xf32>
    %c2_276 = arith.constant 2 : index
    %c0_277 = arith.constant 0 : index
    %c0_278 = arith.constant 0 : index
    %986 = vector.load %arg14[%c2_276, %c0_277, %c0_278] : memref<4x128x128xf32, #tpu.memory_space<vmem>>, vector<1x128x128xf32>
    %987 = vector.shape_cast %986 : vector<1x128x128xf32> to vector<128x128xf32>
    %cst_279 = arith.constant dense<0.000000e+00> : vector<64x128xf32>
    %988 = tpu.matmul %985, %987, %cst_279 {dimension_numbers = #tpu.dot_dimension_numbers<[1], [0], [0], [1], [0, 0, 1, 1], [], []>} : vector<64x128xf32>, vector<128x128xf32>, vector<64x128xf32> -> vector<64x128xf32>
    %c0_280 = arith.constant 0 : index
    %c0_281 = arith.constant 0 : index
    %989 = vector.load %arg2[%c0_280, %c0_281] : memref<64x64xf32, #tpu.memory_space<vmem>>, vector<64x64xf32>
    %cst_282 = arith.constant dense<0.000000e+00> : vector<64x128xf32>
    %990 = tpu.matmul %989, %988, %cst_282 {dimension_numbers = #tpu.dot_dimension_numbers<[1], [0], [0], [1], [0, 0, 1, 1], [], []>} : vector<64x64xf32>, vector<64x128xf32>, vector<64x128xf32> -> vector<64x128xf32>
    %991 = arith.addf %990, %677 : vector<64x128xf32>
    %c3_283 = arith.constant 3 : index
    %c0_284 = arith.constant 0 : index
    %c0_285 = arith.constant 0 : index
    %992 = vector.load %arg5[%c3_283, %c0_284, %c0_285] : memref<4x1x128xf32, #tpu.memory_space<vmem>>, vector<1x1x128xf32>
    %993 = vector.shape_cast %992 : vector<1x1x128xf32> to vector<1x128xf32>
    %994 = arith.mulf %991, %991 : vector<64x128xf32>
    %cst_286 = arith.constant dense<0.000000e+00> : vector<64xf32>
    %995 = vector.multi_reduction <add>, %994, %cst_286 [1] : vector<64x128xf32> to vector<64xf32>
    %996 = vector.shape_cast %995 : vector<64xf32> to vector<64x1xf32>
    %cst_287 = arith.constant 1.280000e+02 : f32
    %997 = vector.broadcast %cst_287 : f32 to vector<64x1xf32>
    %998 = arith.divf %996, %997 : vector<64x1xf32>
    %cst_288 = arith.constant 9.99999974E-6 : f32
    %999 = vector.broadcast %cst_288 : f32 to vector<64x1xf32>
    %1000 = arith.addf %998, %999 : vector<64x1xf32>
    %1001 = math.rsqrt %1000 : vector<64x1xf32>
    %1002 = vector.broadcast %1001 : vector<64x1xf32> to vector<64x128xf32>
    %1003 = arith.mulf %991, %1002 : vector<64x128xf32>
    %1004 = vector.broadcast %993 : vector<1x128xf32> to vector<64x128xf32>
    %1005 = arith.mulf %1003, %1004 : vector<64x128xf32>
    %c3_289 = arith.constant 3 : index
    %c0_290 = arith.constant 0 : index
    %c0_291 = arith.constant 0 : index
    %1006 = vector.load %arg6[%c3_289, %c0_290, %c0_291] : memref<4x128x256xf32, #tpu.memory_space<vmem>>, vector<1x128x256xf32>
    %1007 = vector.shape_cast %1006 : vector<1x128x256xf32> to vector<128x256xf32>
    %cst_292 = arith.constant dense<0.000000e+00> : vector<64x256xf32>
    %1008 = tpu.matmul %1005, %1007, %cst_292 {dimension_numbers = #tpu.dot_dimension_numbers<[1], [0], [0], [1], [0, 0, 1, 1], [], []>} : vector<64x128xf32>, vector<128x256xf32>, vector<64x256xf32> -> vector<64x256xf32>
    %1009 = vector.extract_strided_slice %1008 {offsets = [0, 0], sizes = [64, 128], strides = [1, 1]} : vector<64x256xf32> to vector<64x128xf32>
    %1010 = vector.extract_strided_slice %1008 {offsets = [0, 128], sizes = [64, 128], strides = [1, 1]} : vector<64x256xf32> to vector<64x128xf32>
    %c24_293 = arith.constant 24 : index
    %c0_294 = arith.constant 0 : index
    %1011 = vector.load %arg19[%c24_293, %c0_294] : memref<88x128xf32, #tpu.memory_space<vmem>>, vector<64x128xf32>
    tpu.vector_store %arg19[%c24_293, %c0_294], %1009 {strides = array<i32>} : memref<88x128xf32, #tpu.memory_space<vmem>>, vector<64x128xf32>,
    %cst_295 = arith.constant 0.000000e+00 : f32
    %1012 = vector.broadcast %cst_295 : f32 to vector<64x128xf32>
    %c3_296 = arith.constant 3 : index
    %c0_297 = arith.constant 0 : index
    %c0_298 = arith.constant 0 : index
    %1013 = vector.load %arg8[%c3_296, %c0_297, %c0_298] : memref<4x1x128xf32, #tpu.memory_space<vmem>>, vector<1x1x128xf32>
    %1014 = vector.shape_cast %1013 : vector<1x1x128xf32> to vector<1x128xf32>
    %1015 = vector.broadcast %1014 : vector<1x128xf32> to vector<64x128xf32>
    %1016 = arith.addf %1012, %1015 : vector<64x128xf32>
    %c0_299 = arith.constant 0 : index
    %c0_300 = arith.constant 0 : index
    %1017 = vector.load %arg19[%c0_299, %c0_300] : memref<88x128xf32, #tpu.memory_space<vmem>>, vector<64x128xf32>
    %c3_301 = arith.constant 3 : index
    %c0_302 = arith.constant 0 : index
    %c0_303 = arith.constant 0 : index
    %1018 = vector.load %arg7[%c3_301, %c0_302, %c0_303] : memref<4x4x128xf32, #tpu.memory_space<vmem>>, vector<1x1x128xf32>
    %1019 = vector.shape_cast %1018 : vector<1x1x128xf32> to vector<1x128xf32>
    %1020 = vector.broadcast %1019 : vector<1x128xf32> to vector<64x128xf32>
    %1021 = arith.mulf %1017, %1020 : vector<64x128xf32>
    %1022 = arith.addf %1016, %1021 : vector<64x128xf32>
    %c8_304 = arith.constant 8 : index
    %c0_305 = arith.constant 0 : index
    %1023 = vector.load %arg19[%c8_304, %c0_305] : memref<88x128xf32, #tpu.memory_space<vmem>>, vector<64x128xf32>
    %c3_306 = arith.constant 3 : index
    %c1_307 = arith.constant 1 : index
    %c0_308 = arith.constant 0 : index
    %1024 = vector.load %arg7[%c3_306, %c1_307, %c0_308] : memref<4x4x128xf32, #tpu.memory_space<vmem>>, vector<1x1x128xf32>
    %1025 = vector.shape_cast %1024 : vector<1x1x128xf32> to vector<1x128xf32>
    %1026 = vector.broadcast %1025 : vector<1x128xf32> to vector<64x128xf32>
    %1027 = arith.mulf %1023, %1026 : vector<64x128xf32>
    %1028 = arith.addf %1022, %1027 : vector<64x128xf32>
    %c16_309 = arith.constant 16 : index
    %c0_310 = arith.constant 0 : index
    %1029 = vector.load %arg19[%c16_309, %c0_310] : memref<88x128xf32, #tpu.memory_space<vmem>>, vector<64x128xf32>
    %c3_311 = arith.constant 3 : index
    %c2_312 = arith.constant 2 : index
    %c0_313 = arith.constant 0 : index
    %1030 = vector.load %arg7[%c3_311, %c2_312, %c0_313] : memref<4x4x128xf32, #tpu.memory_space<vmem>>, vector<1x1x128xf32>
    %1031 = vector.shape_cast %1030 : vector<1x1x128xf32> to vector<1x128xf32>
    %1032 = vector.broadcast %1031 : vector<1x128xf32> to vector<64x128xf32>
    %1033 = arith.mulf %1029, %1032 : vector<64x128xf32>
    %1034 = arith.addf %1028, %1033 : vector<64x128xf32>
    %c24_314 = arith.constant 24 : index
    %c0_315 = arith.constant 0 : index
    %1035 = vector.load %arg19[%c24_314, %c0_315] : memref<88x128xf32, #tpu.memory_space<vmem>>, vector<64x128xf32>
    %c3_316 = arith.constant 3 : index
    %c3_317 = arith.constant 3 : index
    %c0_318 = arith.constant 0 : index
    %1036 = vector.load %arg7[%c3_316, %c3_317, %c0_318] : memref<4x4x128xf32, #tpu.memory_space<vmem>>, vector<1x1x128xf32>
    %1037 = vector.shape_cast %1036 : vector<1x1x128xf32> to vector<1x128xf32>
    %1038 = vector.broadcast %1037 : vector<1x128xf32> to vector<64x128xf32>
    %1039 = arith.mulf %1035, %1038 : vector<64x128xf32>
    %1040 = arith.addf %1034, %1039 : vector<64x128xf32>
    %1041 = arith.negf %1040 : vector<64x128xf32>
    %1042 = math.exp %1041 : vector<64x128xf32>
    %cst_319 = arith.constant 1.000000e+00 : f32
    %1043 = vector.broadcast %cst_319 : f32 to vector<64x128xf32>
    %1044 = arith.addf %1043, %1042 : vector<64x128xf32>
    %1045 = arith.divf %1043, %1044 : vector<64x128xf32>
    %1046 = arith.mulf %1040, %1045 : vector<64x128xf32>
    %c3_320 = arith.constant 3 : index
    %c0_321 = arith.constant 0 : index
    %c0_322 = arith.constant 0 : index
    %1047 = vector.load %arg10[%c3_320, %c0_321, %c0_322] : memref<4x128x128xf32, #tpu.memory_space<vmem>>, vector<1x128x128xf32>
    %1048 = vector.shape_cast %1047 : vector<1x128x128xf32> to vector<128x128xf32>
    %cst_323 = arith.constant dense<0.000000e+00> : vector<64x128xf32>
    %1049 = tpu.matmul %1046, %1048, %cst_323 {dimension_numbers = #tpu.dot_dimension_numbers<[1], [0], [0], [1], [0, 0, 1, 1], [], []>} : vector<64x128xf32>, vector<128x128xf32>, vector<64x128xf32> -> vector<64x128xf32>
    %c3_324 = arith.constant 3 : index
    %c0_325 = arith.constant 0 : index
    %c0_326 = arith.constant 0 : index
    %1050 = vector.load %arg11[%c3_324, %c0_325, %c0_326] : memref<4x1x128xf32, #tpu.memory_space<vmem>>, vector<1x1x128xf32>
    %1051 = vector.shape_cast %1050 : vector<1x1x128xf32> to vector<1x128xf32>
    %1052 = vector.broadcast %1051 : vector<1x128xf32> to vector<64x128xf32>
    %1053 = arith.addf %1049, %1052 : vector<64x128xf32>
    %cst_327 = arith.constant 0.000000e+00 : f32
    %1054 = vector.broadcast %cst_327 : f32 to vector<64x128xf32>
    %1055 = arith.maximumf %1053, %1054 : vector<64x128xf32>
    %1056 = vector.broadcast %cst_327 : f32 to vector<64x128xf32>
    %1057 = arith.subf %1053, %1056 : vector<64x128xf32>
    %1058 = arith.cmpf one, %1057, %1057 : vector<64x128xf32>
    %1059 = vector.broadcast %cst_327 : f32 to vector<64x128xf32>
    %1060 = arith.addf %1053, %1059 : vector<64x128xf32>
    %1061 = math.absf %1057 : vector<64x128xf32>
    %cst_328 = arith.constant 0.000000e+00 : f32
    %1062 = vector.broadcast %cst_328 : f32 to vector<64x128xf32>
    %1063 = arith.subf %1062, %1061 : vector<64x128xf32>
    %1064 = math.exp %1063 : vector<64x128xf32>
    %1065 = math.log1p %1064 : vector<64x128xf32>
    %1066 = arith.addf %1055, %1065 : vector<64x128xf32>
    %1067 = arith.select %1058, %1060, %1066 : vector<64x128xi1>, vector<64x128xf32>
    %c3_329 = arith.constant 3 : index
    %c0_330 = arith.constant 0 : index
    %c0_331 = arith.constant 0 : index
    %1068 = vector.load %arg9[%c3_329, %c0_330, %c0_331] : memref<4x128x4xf32, #tpu.memory_space<vmem>>, vector<1x128x4xf32>
    %1069 = vector.shape_cast %1068 : vector<1x128x4xf32> to vector<128x4xf32>
    %cst_332 = arith.constant dense<0.000000e+00> : vector<64x4xf32>
    %1070 = tpu.matmul %1046, %1069, %cst_332 {dimension_numbers = #tpu.dot_dimension_numbers<[1], [0], [0], [1], [0, 0, 1, 1], [], []>} : vector<64x128xf32>, vector<128x4xf32>, vector<64x4xf32> -> vector<64x4xf32>
    %c3_333 = arith.constant 3 : index
    %c0_334 = arith.constant 0 : index
    %c0_335 = arith.constant 0 : index
    %1071 = vector.load %arg12[%c3_333, %c0_334, %c0_335] : memref<4x2x128xf32, #tpu.memory_space<vmem>>, vector<1x1x128xf32>
    %1072 = vector.shape_cast %1071 : vector<1x1x128xf32> to vector<1x128xf32>
    %c3_336 = arith.constant 3 : index
    %c1_337 = arith.constant 1 : index
    %c0_338 = arith.constant 0 : index
    %1073 = vector.load %arg12[%c3_336, %c1_337, %c0_338] : memref<4x2x128xf32, #tpu.memory_space<vmem>>, vector<1x1x128xf32>
    %1074 = vector.shape_cast %1073 : vector<1x1x128xf32> to vector<1x128xf32>
    %cst_339 = arith.constant 0.000000e+00 : f32
    %1075 = vector.broadcast %cst_339 : f32 to vector<8x128xf32>
    %cst_340 = arith.constant 0.000000e+00 : f32
    %1076 = vector.broadcast %cst_340 : f32 to vector<8x128xf32>
    %1077 = vector.extract_strided_slice %1067 {offsets = [0, 0], sizes = [8, 128], strides = [1, 1]} : vector<64x128xf32> to vector<8x128xf32>
    %1078 = vector.extract_strided_slice %1070 {offsets = [0, 0], sizes = [8, 4], strides = [1, 1]} : vector<64x4xf32> to vector<8x4xf32>
    %cst_341 = arith.constant 0.000000e+00 : f32
    %1079 = vector.broadcast %cst_341 : f32 to vector<8x128xf32>
    %1080 = vector.broadcast %1072 : vector<1x128xf32> to vector<8x128xf32>
    %1081 = arith.mulf %1077, %1080 : vector<8x128xf32>
    %1082 = math.exp %1081 : vector<8x128xf32>
    %1083 = arith.mulf %1082, %1075 : vector<8x128xf32>
    %1084 = vector.extract_strided_slice %1078 {offsets = [0, 0], sizes = [8, 1], strides = [1, 1]} : vector<8x4xf32> to vector<8x1xf32>
    %1085 = vector.broadcast %1084 : vector<8x1xf32> to vector<8x128xf32>
    %1086 = arith.mulf %1077, %1085 : vector<8x128xf32>
    %1087 = arith.addf %1083, %1086 : vector<8x128xf32>
    %1088 = vector.extract_strided_slice %1078 {offsets = [0, 2], sizes = [8, 1], strides = [1, 1]} : vector<8x4xf32> to vector<8x1xf32>
    %1089 = vector.broadcast %1088 : vector<8x1xf32> to vector<8x128xf32>
    %1090 = arith.mulf %1087, %1089 : vector<8x128xf32>
    %1091 = arith.addf %1079, %1090 : vector<8x128xf32>
    %1092 = vector.broadcast %1074 : vector<1x128xf32> to vector<8x128xf32>
    %1093 = arith.mulf %1077, %1092 : vector<8x128xf32>
    %1094 = math.exp %1093 : vector<8x128xf32>
    %1095 = arith.mulf %1094, %1076 : vector<8x128xf32>
    %1096 = vector.extract_strided_slice %1078 {offsets = [0, 1], sizes = [8, 1], strides = [1, 1]} : vector<8x4xf32> to vector<8x1xf32>
    %1097 = vector.broadcast %1096 : vector<8x1xf32> to vector<8x128xf32>
    %1098 = arith.mulf %1077, %1097 : vector<8x128xf32>
    %1099 = arith.addf %1095, %1098 : vector<8x128xf32>
    %1100 = vector.extract_strided_slice %1078 {offsets = [0, 3], sizes = [8, 1], strides = [1, 1]} : vector<8x4xf32> to vector<8x1xf32>
    %1101 = vector.broadcast %1100 : vector<8x1xf32> to vector<8x128xf32>
    %1102 = arith.mulf %1099, %1101 : vector<8x128xf32>
    %1103 = arith.addf %1091, %1102 : vector<8x128xf32>
    %c0_342 = arith.constant 0 : index
    %c0_343 = arith.constant 0 : index
    %1104 = vector.load %arg20[%c0_342, %c0_343] : memref<64x128xf32, #tpu.memory_space<vmem>>, vector<8x128xf32>
    tpu.vector_store %arg20[%c0_342, %c0_343], %1103 {strides = array<i32>} : memref<64x128xf32, #tpu.memory_space<vmem>>, vector<8x128xf32>,
    %1105 = vector.extract_strided_slice %1067 {offsets = [8, 0], sizes = [8, 128], strides = [1, 1]} : vector<64x128xf32> to vector<8x128xf32>
    %1106 = vector.extract_strided_slice %1070 {offsets = [8, 0], sizes = [8, 4], strides = [1, 1]} : vector<64x4xf32> to vector<8x4xf32>
    %cst_344 = arith.constant 0.000000e+00 : f32
    %1107 = vector.broadcast %cst_344 : f32 to vector<8x128xf32>
    %1108 = vector.broadcast %1072 : vector<1x128xf32> to vector<8x128xf32>
    %1109 = arith.mulf %1105, %1108 : vector<8x128xf32>
    %1110 = math.exp %1109 : vector<8x128xf32>
    %1111 = arith.mulf %1110, %1087 : vector<8x128xf32>
    %1112 = vector.extract_strided_slice %1106 {offsets = [0, 0], sizes = [8, 1], strides = [1, 1]} : vector<8x4xf32> to vector<8x1xf32>
    %1113 = vector.broadcast %1112 : vector<8x1xf32> to vector<8x128xf32>
    %1114 = arith.mulf %1105, %1113 : vector<8x128xf32>
    %1115 = arith.addf %1111, %1114 : vector<8x128xf32>
    %1116 = vector.extract_strided_slice %1106 {offsets = [0, 2], sizes = [8, 1], strides = [1, 1]} : vector<8x4xf32> to vector<8x1xf32>
    %1117 = vector.broadcast %1116 : vector<8x1xf32> to vector<8x128xf32>
    %1118 = arith.mulf %1115, %1117 : vector<8x128xf32>
    %1119 = arith.addf %1107, %1118 : vector<8x128xf32>
    %1120 = vector.broadcast %1074 : vector<1x128xf32> to vector<8x128xf32>
    %1121 = arith.mulf %1105, %1120 : vector<8x128xf32>
    %1122 = math.exp %1121 : vector<8x128xf32>
    %1123 = arith.mulf %1122, %1099 : vector<8x128xf32>
    %1124 = vector.extract_strided_slice %1106 {offsets = [0, 1], sizes = [8, 1], strides = [1, 1]} : vector<8x4xf32> to vector<8x1xf32>
    %1125 = vector.broadcast %1124 : vector<8x1xf32> to vector<8x128xf32>
    %1126 = arith.mulf %1105, %1125 : vector<8x128xf32>
    %1127 = arith.addf %1123, %1126 : vector<8x128xf32>
    %1128 = vector.extract_strided_slice %1106 {offsets = [0, 3], sizes = [8, 1], strides = [1, 1]} : vector<8x4xf32> to vector<8x1xf32>
    %1129 = vector.broadcast %1128 : vector<8x1xf32> to vector<8x128xf32>
    %1130 = arith.mulf %1127, %1129 : vector<8x128xf32>
    %1131 = arith.addf %1119, %1130 : vector<8x128xf32>
    %c8_345 = arith.constant 8 : index
    %c0_346 = arith.constant 0 : index
    %1132 = vector.load %arg20[%c8_345, %c0_346] : memref<64x128xf32, #tpu.memory_space<vmem>>, vector<8x128xf32>
    tpu.vector_store %arg20[%c8_345, %c0_346], %1131 {strides = array<i32>} : memref<64x128xf32, #tpu.memory_space<vmem>>, vector<8x128xf32>,
    %1133 = vector.extract_strided_slice %1067 {offsets = [16, 0], sizes = [8, 128], strides = [1, 1]} : vector<64x128xf32> to vector<8x128xf32>
    %1134 = vector.extract_strided_slice %1070 {offsets = [16, 0], sizes = [8, 4], strides = [1, 1]} : vector<64x4xf32> to vector<8x4xf32>
    %cst_347 = arith.constant 0.000000e+00 : f32
    %1135 = vector.broadcast %cst_347 : f32 to vector<8x128xf32>
    %1136 = vector.broadcast %1072 : vector<1x128xf32> to vector<8x128xf32>
    %1137 = arith.mulf %1133, %1136 : vector<8x128xf32>
    %1138 = math.exp %1137 : vector<8x128xf32>
    %1139 = arith.mulf %1138, %1115 : vector<8x128xf32>
    %1140 = vector.extract_strided_slice %1134 {offsets = [0, 0], sizes = [8, 1], strides = [1, 1]} : vector<8x4xf32> to vector<8x1xf32>
    %1141 = vector.broadcast %1140 : vector<8x1xf32> to vector<8x128xf32>
    %1142 = arith.mulf %1133, %1141 : vector<8x128xf32>
    %1143 = arith.addf %1139, %1142 : vector<8x128xf32>
    %1144 = vector.extract_strided_slice %1134 {offsets = [0, 2], sizes = [8, 1], strides = [1, 1]} : vector<8x4xf32> to vector<8x1xf32>
    %1145 = vector.broadcast %1144 : vector<8x1xf32> to vector<8x128xf32>
    %1146 = arith.mulf %1143, %1145 : vector<8x128xf32>
    %1147 = arith.addf %1135, %1146 : vector<8x128xf32>
    %1148 = vector.broadcast %1074 : vector<1x128xf32> to vector<8x128xf32>
    %1149 = arith.mulf %1133, %1148 : vector<8x128xf32>
    %1150 = math.exp %1149 : vector<8x128xf32>
    %1151 = arith.mulf %1150, %1127 : vector<8x128xf32>
    %1152 = vector.extract_strided_slice %1134 {offsets = [0, 1], sizes = [8, 1], strides = [1, 1]} : vector<8x4xf32> to vector<8x1xf32>
    %1153 = vector.broadcast %1152 : vector<8x1xf32> to vector<8x128xf32>
    %1154 = arith.mulf %1133, %1153 : vector<8x128xf32>
    %1155 = arith.addf %1151, %1154 : vector<8x128xf32>
    %1156 = vector.extract_strided_slice %1134 {offsets = [0, 3], sizes = [8, 1], strides = [1, 1]} : vector<8x4xf32> to vector<8x1xf32>
    %1157 = vector.broadcast %1156 : vector<8x1xf32> to vector<8x128xf32>
    %1158 = arith.mulf %1155, %1157 : vector<8x128xf32>
    %1159 = arith.addf %1147, %1158 : vector<8x128xf32>
    %c16_348 = arith.constant 16 : index
    %c0_349 = arith.constant 0 : index
    %1160 = vector.load %arg20[%c16_348, %c0_349] : memref<64x128xf32, #tpu.memory_space<vmem>>, vector<8x128xf32>
    tpu.vector_store %arg20[%c16_348, %c0_349], %1159 {strides = array<i32>} : memref<64x128xf32, #tpu.memory_space<vmem>>, vector<8x128xf32>,
    %1161 = vector.extract_strided_slice %1067 {offsets = [24, 0], sizes = [8, 128], strides = [1, 1]} : vector<64x128xf32> to vector<8x128xf32>
    %1162 = vector.extract_strided_slice %1070 {offsets = [24, 0], sizes = [8, 4], strides = [1, 1]} : vector<64x4xf32> to vector<8x4xf32>
    %cst_350 = arith.constant 0.000000e+00 : f32
    %1163 = vector.broadcast %cst_350 : f32 to vector<8x128xf32>
    %1164 = vector.broadcast %1072 : vector<1x128xf32> to vector<8x128xf32>
    %1165 = arith.mulf %1161, %1164 : vector<8x128xf32>
    %1166 = math.exp %1165 : vector<8x128xf32>
    %1167 = arith.mulf %1166, %1143 : vector<8x128xf32>
    %1168 = vector.extract_strided_slice %1162 {offsets = [0, 0], sizes = [8, 1], strides = [1, 1]} : vector<8x4xf32> to vector<8x1xf32>
    %1169 = vector.broadcast %1168 : vector<8x1xf32> to vector<8x128xf32>
    %1170 = arith.mulf %1161, %1169 : vector<8x128xf32>
    %1171 = arith.addf %1167, %1170 : vector<8x128xf32>
    %1172 = vector.extract_strided_slice %1162 {offsets = [0, 2], sizes = [8, 1], strides = [1, 1]} : vector<8x4xf32> to vector<8x1xf32>
    %1173 = vector.broadcast %1172 : vector<8x1xf32> to vector<8x128xf32>
    %1174 = arith.mulf %1171, %1173 : vector<8x128xf32>
    %1175 = arith.addf %1163, %1174 : vector<8x128xf32>
    %1176 = vector.broadcast %1074 : vector<1x128xf32> to vector<8x128xf32>
    %1177 = arith.mulf %1161, %1176 : vector<8x128xf32>
    %1178 = math.exp %1177 : vector<8x128xf32>
    %1179 = arith.mulf %1178, %1155 : vector<8x128xf32>
    %1180 = vector.extract_strided_slice %1162 {offsets = [0, 1], sizes = [8, 1], strides = [1, 1]} : vector<8x4xf32> to vector<8x1xf32>
    %1181 = vector.broadcast %1180 : vector<8x1xf32> to vector<8x128xf32>
    %1182 = arith.mulf %1161, %1181 : vector<8x128xf32>
    %1183 = arith.addf %1179, %1182 : vector<8x128xf32>
    %1184 = vector.extract_strided_slice %1162 {offsets = [0, 3], sizes = [8, 1], strides = [1, 1]} : vector<8x4xf32> to vector<8x1xf32>
    %1185 = vector.broadcast %1184 : vector<8x1xf32> to vector<8x128xf32>
    %1186 = arith.mulf %1183, %1185 : vector<8x128xf32>
    %1187 = arith.addf %1175, %1186 : vector<8x128xf32>
    %c24_351 = arith.constant 24 : index
    %c0_352 = arith.constant 0 : index
    %1188 = vector.load %arg20[%c24_351, %c0_352] : memref<64x128xf32, #tpu.memory_space<vmem>>, vector<8x128xf32>
    tpu.vector_store %arg20[%c24_351, %c0_352], %1187 {strides = array<i32>} : memref<64x128xf32, #tpu.memory_space<vmem>>, vector<8x128xf32>,
    %1189 = vector.extract_strided_slice %1067 {offsets = [32, 0], sizes = [8, 128], strides = [1, 1]} : vector<64x128xf32> to vector<8x128xf32>
    %1190 = vector.extract_strided_slice %1070 {offsets = [32, 0], sizes = [8, 4], strides = [1, 1]} : vector<64x4xf32> to vector<8x4xf32>
    %cst_353 = arith.constant 0.000000e+00 : f32
    %1191 = vector.broadcast %cst_353 : f32 to vector<8x128xf32>
    %1192 = vector.broadcast %1072 : vector<1x128xf32> to vector<8x128xf32>
    %1193 = arith.mulf %1189, %1192 : vector<8x128xf32>
    %1194 = math.exp %1193 : vector<8x128xf32>
    %1195 = arith.mulf %1194, %1171 : vector<8x128xf32>
    %1196 = vector.extract_strided_slice %1190 {offsets = [0, 0], sizes = [8, 1], strides = [1, 1]} : vector<8x4xf32> to vector<8x1xf32>
    %1197 = vector.broadcast %1196 : vector<8x1xf32> to vector<8x128xf32>
    %1198 = arith.mulf %1189, %1197 : vector<8x128xf32>
    %1199 = arith.addf %1195, %1198 : vector<8x128xf32>
    %1200 = vector.extract_strided_slice %1190 {offsets = [0, 2], sizes = [8, 1], strides = [1, 1]} : vector<8x4xf32> to vector<8x1xf32>
    %1201 = vector.broadcast %1200 : vector<8x1xf32> to vector<8x128xf32>
    %1202 = arith.mulf %1199, %1201 : vector<8x128xf32>
    %1203 = arith.addf %1191, %1202 : vector<8x128xf32>
    %1204 = vector.broadcast %1074 : vector<1x128xf32> to vector<8x128xf32>
    %1205 = arith.mulf %1189, %1204 : vector<8x128xf32>
    %1206 = math.exp %1205 : vector<8x128xf32>
    %1207 = arith.mulf %1206, %1183 : vector<8x128xf32>
    %1208 = vector.extract_strided_slice %1190 {offsets = [0, 1], sizes = [8, 1], strides = [1, 1]} : vector<8x4xf32> to vector<8x1xf32>
    %1209 = vector.broadcast %1208 : vector<8x1xf32> to vector<8x128xf32>
    %1210 = arith.mulf %1189, %1209 : vector<8x128xf32>
    %1211 = arith.addf %1207, %1210 : vector<8x128xf32>
    %1212 = vector.extract_strided_slice %1190 {offsets = [0, 3], sizes = [8, 1], strides = [1, 1]} : vector<8x4xf32> to vector<8x1xf32>
    %1213 = vector.broadcast %1212 : vector<8x1xf32> to vector<8x128xf32>
    %1214 = arith.mulf %1211, %1213 : vector<8x128xf32>
    %1215 = arith.addf %1203, %1214 : vector<8x128xf32>
    %c32_354 = arith.constant 32 : index
    %c0_355 = arith.constant 0 : index
    %1216 = vector.load %arg20[%c32_354, %c0_355] : memref<64x128xf32, #tpu.memory_space<vmem>>, vector<8x128xf32>
    tpu.vector_store %arg20[%c32_354, %c0_355], %1215 {strides = array<i32>} : memref<64x128xf32, #tpu.memory_space<vmem>>, vector<8x128xf32>,
    %1217 = vector.extract_strided_slice %1067 {offsets = [40, 0], sizes = [8, 128], strides = [1, 1]} : vector<64x128xf32> to vector<8x128xf32>
    %1218 = vector.extract_strided_slice %1070 {offsets = [40, 0], sizes = [8, 4], strides = [1, 1]} : vector<64x4xf32> to vector<8x4xf32>
    %cst_356 = arith.constant 0.000000e+00 : f32
    %1219 = vector.broadcast %cst_356 : f32 to vector<8x128xf32>
    %1220 = vector.broadcast %1072 : vector<1x128xf32> to vector<8x128xf32>
    %1221 = arith.mulf %1217, %1220 : vector<8x128xf32>
    %1222 = math.exp %1221 : vector<8x128xf32>
    %1223 = arith.mulf %1222, %1199 : vector<8x128xf32>
    %1224 = vector.extract_strided_slice %1218 {offsets = [0, 0], sizes = [8, 1], strides = [1, 1]} : vector<8x4xf32> to vector<8x1xf32>
    %1225 = vector.broadcast %1224 : vector<8x1xf32> to vector<8x128xf32>
    %1226 = arith.mulf %1217, %1225 : vector<8x128xf32>
    %1227 = arith.addf %1223, %1226 : vector<8x128xf32>
    %1228 = vector.extract_strided_slice %1218 {offsets = [0, 2], sizes = [8, 1], strides = [1, 1]} : vector<8x4xf32> to vector<8x1xf32>
    %1229 = vector.broadcast %1228 : vector<8x1xf32> to vector<8x128xf32>
    %1230 = arith.mulf %1227, %1229 : vector<8x128xf32>
    %1231 = arith.addf %1219, %1230 : vector<8x128xf32>
    %1232 = vector.broadcast %1074 : vector<1x128xf32> to vector<8x128xf32>
    %1233 = arith.mulf %1217, %1232 : vector<8x128xf32>
    %1234 = math.exp %1233 : vector<8x128xf32>
    %1235 = arith.mulf %1234, %1211 : vector<8x128xf32>
    %1236 = vector.extract_strided_slice %1218 {offsets = [0, 1], sizes = [8, 1], strides = [1, 1]} : vector<8x4xf32> to vector<8x1xf32>
    %1237 = vector.broadcast %1236 : vector<8x1xf32> to vector<8x128xf32>
    %1238 = arith.mulf %1217, %1237 : vector<8x128xf32>
    %1239 = arith.addf %1235, %1238 : vector<8x128xf32>
    %1240 = vector.extract_strided_slice %1218 {offsets = [0, 3], sizes = [8, 1], strides = [1, 1]} : vector<8x4xf32> to vector<8x1xf32>
    %1241 = vector.broadcast %1240 : vector<8x1xf32> to vector<8x128xf32>
    %1242 = arith.mulf %1239, %1241 : vector<8x128xf32>
    %1243 = arith.addf %1231, %1242 : vector<8x128xf32>
    %c40_357 = arith.constant 40 : index
    %c0_358 = arith.constant 0 : index
    %1244 = vector.load %arg20[%c40_357, %c0_358] : memref<64x128xf32, #tpu.memory_space<vmem>>, vector<8x128xf32>
    tpu.vector_store %arg20[%c40_357, %c0_358], %1243 {strides = array<i32>} : memref<64x128xf32, #tpu.memory_space<vmem>>, vector<8x128xf32>,
    %1245 = vector.extract_strided_slice %1067 {offsets = [48, 0], sizes = [8, 128], strides = [1, 1]} : vector<64x128xf32> to vector<8x128xf32>
    %1246 = vector.extract_strided_slice %1070 {offsets = [48, 0], sizes = [8, 4], strides = [1, 1]} : vector<64x4xf32> to vector<8x4xf32>
    %cst_359 = arith.constant 0.000000e+00 : f32
    %1247 = vector.broadcast %cst_359 : f32 to vector<8x128xf32>
    %1248 = vector.broadcast %1072 : vector<1x128xf32> to vector<8x128xf32>
    %1249 = arith.mulf %1245, %1248 : vector<8x128xf32>
    %1250 = math.exp %1249 : vector<8x128xf32>
    %1251 = arith.mulf %1250, %1227 : vector<8x128xf32>
    %1252 = vector.extract_strided_slice %1246 {offsets = [0, 0], sizes = [8, 1], strides = [1, 1]} : vector<8x4xf32> to vector<8x1xf32>
    %1253 = vector.broadcast %1252 : vector<8x1xf32> to vector<8x128xf32>
    %1254 = arith.mulf %1245, %1253 : vector<8x128xf32>
    %1255 = arith.addf %1251, %1254 : vector<8x128xf32>
    %1256 = vector.extract_strided_slice %1246 {offsets = [0, 2], sizes = [8, 1], strides = [1, 1]} : vector<8x4xf32> to vector<8x1xf32>
    %1257 = vector.broadcast %1256 : vector<8x1xf32> to vector<8x128xf32>
    %1258 = arith.mulf %1255, %1257 : vector<8x128xf32>
    %1259 = arith.addf %1247, %1258 : vector<8x128xf32>
    %1260 = vector.broadcast %1074 : vector<1x128xf32> to vector<8x128xf32>
    %1261 = arith.mulf %1245, %1260 : vector<8x128xf32>
    %1262 = math.exp %1261 : vector<8x128xf32>
    %1263 = arith.mulf %1262, %1239 : vector<8x128xf32>
    %1264 = vector.extract_strided_slice %1246 {offsets = [0, 1], sizes = [8, 1], strides = [1, 1]} : vector<8x4xf32> to vector<8x1xf32>
    %1265 = vector.broadcast %1264 : vector<8x1xf32> to vector<8x128xf32>
    %1266 = arith.mulf %1245, %1265 : vector<8x128xf32>
    %1267 = arith.addf %1263, %1266 : vector<8x128xf32>
    %1268 = vector.extract_strided_slice %1246 {offsets = [0, 3], sizes = [8, 1], strides = [1, 1]} : vector<8x4xf32> to vector<8x1xf32>
    %1269 = vector.broadcast %1268 : vector<8x1xf32> to vector<8x128xf32>
    %1270 = arith.mulf %1267, %1269 : vector<8x128xf32>
    %1271 = arith.addf %1259, %1270 : vector<8x128xf32>
    %c48_360 = arith.constant 48 : index
    %c0_361 = arith.constant 0 : index
    %1272 = vector.load %arg20[%c48_360, %c0_361] : memref<64x128xf32, #tpu.memory_space<vmem>>, vector<8x128xf32>
    tpu.vector_store %arg20[%c48_360, %c0_361], %1271 {strides = array<i32>} : memref<64x128xf32, #tpu.memory_space<vmem>>, vector<8x128xf32>,
    %1273 = vector.extract_strided_slice %1067 {offsets = [56, 0], sizes = [8, 128], strides = [1, 1]} : vector<64x128xf32> to vector<8x128xf32>
    %1274 = vector.extract_strided_slice %1070 {offsets = [56, 0], sizes = [8, 4], strides = [1, 1]} : vector<64x4xf32> to vector<8x4xf32>
    %cst_362 = arith.constant 0.000000e+00 : f32
    %1275 = vector.broadcast %cst_362 : f32 to vector<8x128xf32>
    %1276 = vector.broadcast %1072 : vector<1x128xf32> to vector<8x128xf32>
    %1277 = arith.mulf %1273, %1276 : vector<8x128xf32>
    %1278 = math.exp %1277 : vector<8x128xf32>
    %1279 = arith.mulf %1278, %1255 : vector<8x128xf32>
    %1280 = vector.extract_strided_slice %1274 {offsets = [0, 0], sizes = [8, 1], strides = [1, 1]} : vector<8x4xf32> to vector<8x1xf32>
    %1281 = vector.broadcast %1280 : vector<8x1xf32> to vector<8x128xf32>
    %1282 = arith.mulf %1273, %1281 : vector<8x128xf32>
    %1283 = arith.addf %1279, %1282 : vector<8x128xf32>
    %1284 = vector.extract_strided_slice %1274 {offsets = [0, 2], sizes = [8, 1], strides = [1, 1]} : vector<8x4xf32> to vector<8x1xf32>
    %1285 = vector.broadcast %1284 : vector<8x1xf32> to vector<8x128xf32>
    %1286 = arith.mulf %1283, %1285 : vector<8x128xf32>
    %1287 = arith.addf %1275, %1286 : vector<8x128xf32>
    %1288 = vector.broadcast %1074 : vector<1x128xf32> to vector<8x128xf32>
    %1289 = arith.mulf %1273, %1288 : vector<8x128xf32>
    %1290 = math.exp %1289 : vector<8x128xf32>
    %1291 = arith.mulf %1290, %1267 : vector<8x128xf32>
    %1292 = vector.extract_strided_slice %1274 {offsets = [0, 1], sizes = [8, 1], strides = [1, 1]} : vector<8x4xf32> to vector<8x1xf32>
    %1293 = vector.broadcast %1292 : vector<8x1xf32> to vector<8x128xf32>
    %1294 = arith.mulf %1273, %1293 : vector<8x128xf32>
    %1295 = arith.addf %1291, %1294 : vector<8x128xf32>
    %1296 = vector.extract_strided_slice %1274 {offsets = [0, 3], sizes = [8, 1], strides = [1, 1]} : vector<8x4xf32> to vector<8x1xf32>
    %1297 = vector.broadcast %1296 : vector<8x1xf32> to vector<8x128xf32>
    %1298 = arith.mulf %1295, %1297 : vector<8x128xf32>
    %1299 = arith.addf %1287, %1298 : vector<8x128xf32>
    %c56_363 = arith.constant 56 : index
    %c0_364 = arith.constant 0 : index
    %1300 = vector.load %arg20[%c56_363, %c0_364] : memref<64x128xf32, #tpu.memory_space<vmem>>, vector<8x128xf32>
    tpu.vector_store %arg20[%c56_363, %c0_364], %1299 {strides = array<i32>} : memref<64x128xf32, #tpu.memory_space<vmem>>, vector<8x128xf32>,
    %c0_365 = arith.constant 0 : index
    %c0_366 = arith.constant 0 : index
    %1301 = vector.load %arg20[%c0_365, %c0_366] : memref<64x128xf32, #tpu.memory_space<vmem>>, vector<64x128xf32>
    %c3_367 = arith.constant 3 : index
    %c0_368 = arith.constant 0 : index
    %c0_369 = arith.constant 0 : index
    %1302 = vector.load %arg13[%c3_367, %c0_368, %c0_369] : memref<4x1x128xf32, #tpu.memory_space<vmem>>, vector<1x1x128xf32>
    %1303 = vector.shape_cast %1302 : vector<1x1x128xf32> to vector<1x128xf32>
    %1304 = vector.broadcast %1303 : vector<1x128xf32> to vector<64x128xf32>
    %1305 = arith.mulf %1046, %1304 : vector<64x128xf32>
    %1306 = arith.addf %1301, %1305 : vector<64x128xf32>
    %1307 = arith.negf %1010 : vector<64x128xf32>
    %1308 = math.exp %1307 : vector<64x128xf32>
    %cst_370 = arith.constant 1.000000e+00 : f32
    %1309 = vector.broadcast %cst_370 : f32 to vector<64x128xf32>
    %1310 = arith.addf %1309, %1308 : vector<64x128xf32>
    %1311 = arith.divf %1309, %1310 : vector<64x128xf32>
    %1312 = arith.mulf %1010, %1311 : vector<64x128xf32>
    %1313 = arith.mulf %1306, %1312 : vector<64x128xf32>
    %c3_371 = arith.constant 3 : index
    %c0_372 = arith.constant 0 : index
    %c0_373 = arith.constant 0 : index
    %1314 = vector.load %arg14[%c3_371, %c0_372, %c0_373] : memref<4x128x128xf32, #tpu.memory_space<vmem>>, vector<1x128x128xf32>
    %1315 = vector.shape_cast %1314 : vector<1x128x128xf32> to vector<128x128xf32>
    %cst_374 = arith.constant dense<0.000000e+00> : vector<64x128xf32>
    %1316 = tpu.matmul %1313, %1315, %cst_374 {dimension_numbers = #tpu.dot_dimension_numbers<[1], [0], [0], [1], [0, 0, 1, 1], [], []>} : vector<64x128xf32>, vector<128x128xf32>, vector<64x128xf32> -> vector<64x128xf32>
    %c0_375 = arith.constant 0 : index
    %c0_376 = arith.constant 0 : index
    %1317 = vector.load %arg2[%c0_375, %c0_376] : memref<64x64xf32, #tpu.memory_space<vmem>>, vector<64x64xf32>
    %cst_377 = arith.constant dense<0.000000e+00> : vector<64x128xf32>
    %1318 = tpu.matmul %1317, %1316, %cst_377 {dimension_numbers = #tpu.dot_dimension_numbers<[1], [0], [0], [1], [0, 0, 1, 1], [], []>} : vector<64x64xf32>, vector<64x128xf32>, vector<64x128xf32> -> vector<64x128xf32>
    %1319 = arith.addf %1318, %1005 : vector<64x128xf32>
    %c0_378 = arith.constant 0 : index
    %c0_379 = arith.constant 0 : index
    %1320 = vector.load %arg15[%c0_378, %c0_379] : memref<1x128xf32, #tpu.memory_space<vmem>>, vector<1x128xf32>
    %1321 = arith.mulf %1319, %1319 : vector<64x128xf32>
    %cst_380 = arith.constant dense<0.000000e+00> : vector<64xf32>
    %1322 = vector.multi_reduction <add>, %1321, %cst_380 [1] : vector<64x128xf32> to vector<64xf32>
    %1323 = vector.shape_cast %1322 : vector<64xf32> to vector<64x1xf32>
    %cst_381 = arith.constant 1.280000e+02 : f32
    %1324 = vector.broadcast %cst_381 : f32 to vector<64x1xf32>
    %1325 = arith.divf %1323, %1324 : vector<64x1xf32>
    %cst_382 = arith.constant 9.99999974E-6 : f32
    %1326 = vector.broadcast %cst_382 : f32 to vector<64x1xf32>
    %1327 = arith.addf %1325, %1326 : vector<64x1xf32>
    %1328 = math.rsqrt %1327 : vector<64x1xf32>
    %1329 = vector.broadcast %1328 : vector<64x1xf32> to vector<64x128xf32>
    %1330 = arith.mulf %1319, %1329 : vector<64x128xf32>
    %1331 = vector.broadcast %1320 : vector<1x128xf32> to vector<64x128xf32>
    %1332 = arith.mulf %1330, %1331 : vector<64x128xf32>
    %c0_383 = arith.constant 0 : index
    %c0_384 = arith.constant 0 : index
    %1333 = vector.load %arg16[%c0_383, %c0_384] : memref<128x128xf32, #tpu.memory_space<vmem>>, vector<128x128xf32>
    %cst_385 = arith.constant dense<0.000000e+00> : vector<64x128xf32>
    %1334 = tpu.matmul %1332, %1333, %cst_385 {dimension_numbers = #tpu.dot_dimension_numbers<[1], [0], [0], [1], [0, 0, 1, 1], [], []>} : vector<64x128xf32>, vector<128x128xf32>, vector<64x128xf32> -> vector<64x128xf32>
    %c0_386 = arith.constant 0 : index
    %c0_387 = arith.constant 0 : index
    %1335 = vector.load %arg17[%c0_386, %c0_387] : memref<1x128xf32, #tpu.memory_space<vmem>>, vector<1x128xf32>
    %1336 = vector.broadcast %1335 : vector<1x128xf32> to vector<64x128xf32>
    %1337 = arith.addf %1334, %1336 : vector<64x128xf32>
    %c0_388 = arith.constant 0 : index
    %c0_389 = arith.constant 0 : index
    %1338 = vector.load %arg18[%c0_388, %c0_389] : memref<64x128xf32, #tpu.memory_space<vmem>>, vector<64x128xf32>
    tpu.vector_store %arg18[%c0_388, %c0_389], %1337 {strides = array<i32>} : memref<64x128xf32, #tpu.memory_space<vmem>>, vector<64x128xf32>,
    return
  }
  func.func @transform_0(%arg0: i32) -> (i32, i32) {
    %c0_i32 = arith.constant 0 : i32
    %c0_i32_0 = arith.constant 0 : i32
    %c0_i32_1 = arith.constant 0 : i32
    return %c0_i32, %c0_i32_0 : i32, i32
  }
  func.func @transform_1(%arg0: i32) -> (i32, i32) {
    %c0_i32 = arith.constant 0 : i32
    %c0_i32_0 = arith.constant 0 : i32
    %c0_i32_1 = arith.constant 0 : i32
    return %c0_i32, %c0_i32_0 : i32, i32
  }
  func.func @transform_2(%arg0: i32) -> (i32, i32) {
    %c0_i32 = arith.constant 0 : i32
    %c0_i32_0 = arith.constant 0 : i32
    %c0_i32_1 = arith.constant 0 : i32
    return %c0_i32, %c0_i32_0 : i32, i32
  }
  func.func @transform_3(%arg0: i32) -> (i32, i32) {
    %c0_i32 = arith.constant 0 : i32
    %c0_i32_0 = arith.constant 0 : i32
    %c0_i32_1 = arith.constant 0 : i32
    return %c0_i32, %c0_i32_0 : i32, i32
  }
  func.func @transform_4(%arg0: i32) -> (i32, i32, i32) {
    %c0_i32 = arith.constant 0 : i32
    %c0_i32_0 = arith.constant 0 : i32
    %c0_i32_1 = arith.constant 0 : i32
    %c0_i32_2 = arith.constant 0 : i32
    return %c0_i32, %c0_i32_0, %c0_i32_1 : i32, i32, i32
  }
  func.func @transform_5(%arg0: i32) -> (i32, i32, i32) {
    %c0_i32 = arith.constant 0 : i32
    %c0_i32_0 = arith.constant 0 : i32
    %c0_i32_1 = arith.constant 0 : i32
    %c0_i32_2 = arith.constant 0 : i32
    return %c0_i32, %c0_i32_0, %c0_i32_1 : i32, i32, i32
  }
  func.func @transform_6(%arg0: i32) -> (i32, i32, i32) {
    %c0_i32 = arith.constant 0 : i32
    %c0_i32_0 = arith.constant 0 : i32
    %c0_i32_1 = arith.constant 0 : i32
    %c0_i32_2 = arith.constant 0 : i32
    return %c0_i32, %c0_i32_0, %c0_i32_1 : i32, i32, i32
  }
  func.func @transform_7(%arg0: i32) -> (i32, i32, i32) {
    %c0_i32 = arith.constant 0 : i32
    %c0_i32_0 = arith.constant 0 : i32
    %c0_i32_1 = arith.constant 0 : i32
    %c0_i32_2 = arith.constant 0 : i32
    return %c0_i32, %c0_i32_0, %c0_i32_1 : i32, i32, i32
  }
  func.func @transform_8(%arg0: i32) -> (i32, i32, i32) {
    %c0_i32 = arith.constant 0 : i32
    %c0_i32_0 = arith.constant 0 : i32
    %c0_i32_1 = arith.constant 0 : i32
    %c0_i32_2 = arith.constant 0 : i32
    return %c0_i32, %c0_i32_0, %c0_i32_1 : i32, i32, i32
  }
  func.func @transform_9(%arg0: i32) -> (i32, i32, i32) {
    %c0_i32 = arith.constant 0 : i32
    %c0_i32_0 = arith.constant 0 : i32
    %c0_i32_1 = arith.constant 0 : i32
    %c0_i32_2 = arith.constant 0 : i32
    return %c0_i32, %c0_i32_0, %c0_i32_1 : i32, i32, i32
  }
  func.func @transform_10(%arg0: i32) -> (i32, i32, i32) {
    %c0_i32 = arith.constant 0 : i32
    %c0_i32_0 = arith.constant 0 : i32
    %c0_i32_1 = arith.constant 0 : i32
    %c0_i32_2 = arith.constant 0 : i32
    return %c0_i32, %c0_i32_0, %c0_i32_1 : i32, i32, i32
  }
  func.func @transform_11(%arg0: i32) -> (i32, i32, i32) {
    %c0_i32 = arith.constant 0 : i32
    %c0_i32_0 = arith.constant 0 : i32
    %c0_i32_1 = arith.constant 0 : i32
    %c0_i32_2 = arith.constant 0 : i32
    return %c0_i32, %c0_i32_0, %c0_i32_1 : i32, i32, i32
  }
  func.func @transform_12(%arg0: i32) -> (i32, i32, i32) {
    %c0_i32 = arith.constant 0 : i32
    %c0_i32_0 = arith.constant 0 : i32
    %c0_i32_1 = arith.constant 0 : i32
    %c0_i32_2 = arith.constant 0 : i32
    return %c0_i32, %c0_i32_0, %c0_i32_1 : i32, i32, i32
  }
  func.func @transform_13(%arg0: i32) -> (i32, i32, i32) {
    %c0_i32 = arith.constant 0 : i32
    %c0_i32_0 = arith.constant 0 : i32
    %c0_i32_1 = arith.constant 0 : i32
    %c0_i32_2 = arith.constant 0 : i32
    return %c0_i32, %c0_i32_0, %c0_i32_1 : i32, i32, i32
  }
  func.func @transform_14(%arg0: i32) -> (i32, i32) {
    %c0_i32 = arith.constant 0 : i32
    %c0_i32_0 = arith.constant 0 : i32
    %c0_i32_1 = arith.constant 0 : i32
    return %c0_i32, %c0_i32_0 : i32, i32
  }
  func.func @transform_15(%arg0: i32) -> (i32, i32) {
    %c0_i32 = arith.constant 0 : i32
    %c0_i32_0 = arith.constant 0 : i32
    %c0_i32_1 = arith.constant 0 : i32
    return %c0_i32, %c0_i32_0 : i32, i32
  }
  func.func @transform_16(%arg0: i32) -> (i32, i32) {
    %c0_i32 = arith.constant 0 : i32
    %c0_i32_0 = arith.constant 0 : i32
    %c0_i32_1 = arith.constant 0 : i32
    return %c0_i32, %c0_i32_0 : i32, i32
  }
  func.func @transform_17(%arg0: i32) -> (i32, i32) {
    %c0_i32 = arith.constant 0 : i32
    %c0_i32_0 = arith.constant 0 : i32
    %c0_i32_1 = arith.constant 0 : i32
    return %c0_i32, %c0_i32_0 : i32, i32
  }
}

</mosaic_0001>

<llo_original>
// kernel: mamba_forward.1
$region0: #{mamba_forward.1}
  #allocation0 [shape = 'u32[]', space=smem, size = 0x4, offset = 0x4, fixed_abs, tag = 'smem constant byte address 0x4 - core index']
  #allocation1 [shape = 'u32[144,128]{1,0:T(1,128)}', space=vmem, size = 0x12000, scoped, tag = 'internal scratch']
  #allocation2 [shape = 'f32[88,128]{1,0:T(8,128)}', space=vmem, size = 0xb000, scoped, tag = 'scratch operand']
  #allocation3 [shape = 'f32[64,128]{1,0:T(8,128)}', space=vmem, size = 0x8000, scoped, tag = 'scratch operand']
  %s0 = inlined_call_operand.vmem [shape: f32[64,2], index: 0, kind: input, shape index: {}]
  %s1 = inlined_call_operand.vmem [shape: f32[64,64], index: 1, kind: input, shape index: {}]
  %s2 = inlined_call_operand.vmem [shape: f32[2,128], index: 2, kind: input, shape index: {}]
  %s3 = inlined_call_operand.vmem [shape: f32[1,128], index: 3, kind: input, shape index: {}]
  %s4 = inlined_call_operand.vmem [shape: f32[4,1,128], index: 4, kind: input, shape index: {}]
  %s5 = inlined_call_operand.vmem [shape: f32[4,128,256], index: 5, kind: input, shape index: {}]
  %s6 = inlined_call_operand.vmem [shape: f32[4,4,128], index: 6, kind: input, shape index: {}]
  %s7 = inlined_call_operand.vmem [shape: f32[4,1,128], index: 7, kind: input, shape index: {}]
  %s8 = inlined_call_operand.vmem [shape: f32[4,128,4], index: 8, kind: input, shape index: {}]
  %s9 = inlined_call_operand.hbm [shape: f32[4,128,128], index: 9, kind: input, shape index: {}]
  %s10 = inlined_call_operand.vmem [shape: f32[4,1,128], index: 10, kind: input, shape index: {}]
  %s11 = inlined_call_operand.vmem [shape: f32[4,2,128], index: 11, kind: input, shape index: {}]
  %s12 = inlined_call_operand.vmem [shape: f32[4,1,128], index: 12, kind: input, shape index: {}]
  %s13 = inlined_call_operand.hbm [shape: f32[4,128,128], index: 13, kind: input, shape index: {}]
  %s14 = inlined_call_operand.vmem [shape: f32[1,128], index: 14, kind: input, shape index: {}]
  %s15 = inlined_call_operand.vmem [shape: f32[128,128], index: 15, kind: input, shape index: {}]
  %s16 = inlined_call_operand.vmem [shape: f32[1,128], index: 16, kind: input, shape index: {}]
  %s17 = inlined_call_operand.hbm [shape: f32[64,128], index: 17, kind: output, shape index: {}]
  %s18 = sld [smem:[#allocation0]]
  $region86: #{mamba_forward.1} parent=0
    _
  %s20 = ssub.s32 1, %s18
  %s21 = scalar_select 0, %s20, %s18
  $region1: #{mamba_forward.1} parent=0
    #allocation4 [shape = 'u8[262144]{0}', space=vmem, size = 0x40000, scoped, tag = 'input window, operand 9, single buffered']
    #allocation5 [shape = 's32[1]{0}', space=sflag, size = 0x4, scoped, tag = 'scoped memory for mamba_forward.1']
    #allocation6 [shape = 's32[1]{0}', space=sflag, size = 0x4, scoped, tag = 'scoped memory for mamba_forward.1']
    #allocation7 [shape = 'u8[262144]{0}', space=vmem, size = 0x40000, scoped, tag = 'input window, operand 13, single buffered']
    #allocation8 [shape = 's32[1]{0}', space=sflag, size = 0x4, scoped, tag = 'scoped memory for mamba_forward.1']
    #allocation9 [shape = 'u8[32768]{0}', space=vmem, size = 0x8000, scoped, tag = 'output window, operand 0, single buffered']
    %22 = vsyncpa [#allocation5], 0
    %23 = vsyncpa [#allocation8], 0
    %24 = vsyncpa [#allocation6], 0
    // Predicated region
    $region2: #{mamba_forward.1} parent=1 // pred_check
      _
    $region3: #{mamba_forward.1} parent=1 // pred_check_branch
      %26 = sbr.rel (0) target = $region5
    $region4: #{mamba_forward.1} parent=1 // pred_region
      _
    $region5: #{mamba_forward.1} parent=1 // pred_fallthru
      _
    // Predicated region
    $region6: #{mamba_forward.1} parent=1 // pred_check
      _
    $region7: #{mamba_forward.1} parent=1 // pred_check_branch
      %28 = sbr.rel (0) target = $region9
    $region8: #{mamba_forward.1} parent=1 // pred_region
      _
    $region9: #{mamba_forward.1} parent=1 // pred_fallthru
      _
    // Predicated region
    $region10: #{mamba_forward.1} parent=1 // pred_check
      _
    $region11: #{mamba_forward.1} parent=1 // pred_check_branch
      %30 = sbr.rel (0) target = $region13
    $region12: #{mamba_forward.1} parent=1 // pred_region
      _
    $region13: #{mamba_forward.1} parent=1 // pred_fallthru
      _
    // Predicated region
    $region14: #{mamba_forward.1} parent=1 // pred_check
      _
    $region15: #{mamba_forward.1} parent=1 // pred_check_branch
      %32 = sbr.rel (0) target = $region17
    $region16: #{mamba_forward.1} parent=1 // pred_region
      _
    $region17: #{mamba_forward.1} parent=1 // pred_fallthru
      _
    // Predicated region
    $region18: #{mamba_forward.1} parent=1 // pred_check
      _
    $region19: #{mamba_forward.1} parent=1 // pred_check_branch
      %34 = sbr.rel (0) target = $region21
    $region20: #{mamba_forward.1} parent=1 // pred_region
      _
    $region21: #{mamba_forward.1} parent=1 // pred_fallthru
      _
    // Predicated region
    $region22: #{mamba_forward.1} parent=1 // pred_check
      _
    $region23: #{mamba_forward.1} parent=1 // pred_check_branch
      %36 = sbr.rel (0) target = $region25
    $region24: #{mamba_forward.1} parent=1 // pred_region
      _
    $region25: #{mamba_forward.1} parent=1 // pred_fallthru
      _
    // Predicated region
    $region26: #{mamba_forward.1} parent=1 // pred_check
      _
    $region27: #{mamba_forward.1} parent=1 // pred_check_branch
      %38 = sbr.rel (0) target = $region29
    $region28: #{mamba_forward.1} parent=1 // pred_region
      _
    $region29: #{mamba_forward.1} parent=1 // pred_fallthru
      _
    // Predicated region
    $region30: #{mamba_forward.1} parent=1 // pred_check
      _
    $region31: #{mamba_forward.1} parent=1 // pred_check_branch
      %40 = sbr.rel (0) target = $region33
    $region32: #{mamba_forward.1} parent=1 // pred_region
      _
    $region33: #{mamba_forward.1} parent=1 // pred_fallthru
      _
    // Predicated region
    $region34: #{mamba_forward.1} parent=1 // pred_check
      _
    $region35: #{mamba_forward.1} parent=1 // pred_check_branch
      %42 = sbr.rel (0) target = $region37
    $region36: #{mamba_forward.1} parent=1 // pred_region
      _
    $region37: #{mamba_forward.1} parent=1 // pred_fallthru
      _
    // Predicated region
    $region38: #{mamba_forward.1} parent=1 // pred_check
      _
    $region39: #{mamba_forward.1} parent=1 // pred_check_branch
      %44 = sbr.rel (0) target = $region41
    $region40: #{mamba_forward.1} parent=1 // pred_region
      %s46 = ssub.s32 8192, 8192
      %47 = vsyncadd [#allocation5], %s46
      %s48 = sshll.u32 [#allocation4], 4
      %s49 = int_to_ptr.vmem [resolvable:$true] %s48
      %54 = dma.hbm_to_vmem [thread:$0]  %s9, 8192, %s49, [#allocation5], 128, 128, 8
    $region41: #{mamba_forward.1} parent=1 // pred_fallthru
      _
    // Predicated region
    $region42: #{mamba_forward.1} parent=1 // pred_check
      _
    $region43: #{mamba_forward.1} parent=1 // pred_check_branch
      %56 = sbr.rel (0) target = $region45
    $region44: #{mamba_forward.1} parent=1 // pred_region
      _
    $region45: #{mamba_forward.1} parent=1 // pred_fallthru
      _
    // Predicated region
    $region46: #{mamba_forward.1} parent=1 // pred_check
      _
    $region47: #{mamba_forward.1} parent=1 // pred_check_branch
      %58 = sbr.rel (0) target = $region49
    $region48: #{mamba_forward.1} parent=1 // pred_region
      _
    $region49: #{mamba_forward.1} parent=1 // pred_fallthru
      _
    // Predicated region
    $region50: #{mamba_forward.1} parent=1 // pred_check
      _
    $region51: #{mamba_forward.1} parent=1 // pred_check_branch
      %60 = sbr.rel (0) target = $region53
    $region52: #{mamba_forward.1} parent=1 // pred_region
      _
    $region53: #{mamba_forward.1} parent=1 // pred_fallthru
      _
    // Predicated region
    $region54: #{mamba_forward.1} parent=1 // pred_check
      _
    $region55: #{mamba_forward.1} parent=1 // pred_check_branch
      %62 = sbr.rel (0) target = $region57
    $region56: #{mamba_forward.1} parent=1 // pred_region
      %s64 = ssub.s32 8192, 8192
      %65 = vsyncadd [#allocation8], %s64
      %s66 = sshll.u32 [#allocation7], 4
      %s67 = int_to_ptr.vmem [resolvable:$true] %s66
      %72 = dma.hbm_to_vmem [thread:$0]  %s13, 8192, %s67, [#allocation8], 128, 128, 8
    $region57: #{mamba_forward.1} parent=1 // pred_fallthru
      _
    // Predicated region
    $region58: #{mamba_forward.1} parent=1 // pred_check
      _
    $region59: #{mamba_forward.1} parent=1 // pred_check_branch
      %74 = sbr.rel (0) target = $region61
    $region60: #{mamba_forward.1} parent=1 // pred_region
      _
    $region61: #{mamba_forward.1} parent=1 // pred_fallthru
      _
    // Predicated region
    $region62: #{mamba_forward.1} parent=1 // pred_check
      _
    $region63: #{mamba_forward.1} parent=1 // pred_check_branch
      %76 = sbr.rel (0) target = $region65
    $region64: #{mamba_forward.1} parent=1 // pred_region
      _
    $region65: #{mamba_forward.1} parent=1 // pred_fallthru
      _
    // Predicated region
    $region66: #{mamba_forward.1} parent=1 // pred_check
      _
    $region67: #{mamba_forward.1} parent=1 // pred_check_branch
      %78 = sbr.rel (0) target = $region69
    $region68: #{mamba_forward.1} parent=1 // pred_region
      _
    $region69: #{mamba_forward.1} parent=1 // pred_fallthru
      _
    // Predicated region
    $region70: #{mamba_forward.1} parent=1 // pred_check
      _
    $region71: #{mamba_forward.1} parent=1 // pred_check_branch
      %80 = sbr.rel (0) target = $region73
    $region72: #{mamba_forward.1} parent=1 // pred_region
      %81 = dma.done [#allocation5], 8192
    $region73: #{mamba_forward.1} parent=1 // pred_fallthru
      _
    // Predicated region
    $region74: #{mamba_forward.1} parent=1 // pred_check
      _
    $region75: #{mamba_forward.1} parent=1 // pred_check_branch
      %83 = sbr.rel (0) target = $region77
    $region76: #{mamba_forward.1} parent=1 // pred_region
      %84 = dma.done [#allocation8], 8192
    $region77: #{mamba_forward.1} parent=1 // pred_fallthru
      _
    %v85 = vld [vmem:[%s0] sm:$0xff]
    %v86 = vld [vmem:[%s0 + $0x8] sm:$0xff]
    %v87 = vld [vmem:[%s0 + $0x10] sm:$0xff]
    %v88 = vld [vmem:[%s0 + $0x18] sm:$0xff]
    %v89 = vld [vmem:[%s0 + $0x20] sm:$0xff]
    %v90 = vld [vmem:[%s0 + $0x28] sm:$0xff]
    %v91 = vld [vmem:[%s0 + $0x30] sm:$0xff]
    %v92 = vld [vmem:[%s0 + $0x38] sm:$0xff]
    %v93 = vld [vmem:[%s2] sm:$0x3]
    %v94 = vld [vmem:[%s3] sm:$0x1]
    %v96 = vlaneseq
    %v97 = vshrl.u32 %v96, 7
    %v98 = vsub.s32 0, %v97
    %v99 = vrot.slane %v94, %v98
    %vm101 = vcmask 15360
    %v103 = vsel %vm101, %v85, 0
    %v106 = vsel %vm101, %v86, 0
    %v109 = vsel %vm101, %v87, 0
    %v112 = vsel %vm101, %v88, 0
    %v115 = vsel %vm101, %v89, 0
    %v118 = vsel %vm101, %v90, 0
    %v121 = vsel %vm101, %v91, 0
    %v124 = vsel %vm101, %v92, 0
    %vm126 = vcmask 1041408
    %v128 = vsel %vm126, %v93, 0
    %130 = vmatprep.subr.mxu0 0.0
    %131 = vmatpush1.msra.mxu0 0.0
    %132 = vmatprep.subr.mxu0 0.0
    %133 = vmatpush1.msra.mxu0 0.0
    %134 = vmatprep.subr.mxu0 0.0
    %135 = vmatpush1.msra.mxu0 0.0
    %136 = vmatprep.subr.mxu0 0.0
    %137 = vmatpush1.msra.mxu0 0.0
    %138 = vmatprep.subr.mxu0 0.0
    %139 = vmatpush1.msra.mxu0 0.0
    %140 = vmatprep.subr.mxu0 0.0
    %141 = vmatpush1.msra.mxu0 0.0
    %142 = vmatprep.subr.mxu0 0.0
    %143 = vmatpush1.msra.mxu0 0.0
    %144 = vmatprep.subr.mxu0 0.0
    %145 = vmatpush1.msra.mxu0 0.0
    %146 = vmatprep.subr.mxu0 0.0
    %147 = vmatpush1.msra.mxu0 0.0
    %148 = vmatprep.subr.mxu0 0.0
    %149 = vmatpush1.msra.mxu0 0.0
    %150 = vmatprep.subr.mxu0 0.0
    %151 = vmatpush1.msra.mxu0 0.0
    %152 = vmatprep.subr.mxu0 0.0
    %153 = vmatpush1.msra.mxu0 0.0
    %154 = vmatprep.subr.mxu0 0.0
    %155 = vmatpush1.msra.mxu0 0.0
    %156 = vmatprep.subr.mxu0 0.0
    %157 = vmatpush1.msra.mxu0 0.0
    %158 = vmatprep.subr.mxu0 0.0
    %159 = vmatpush1.msra.mxu0 0.0
    %160 = vmatprep.subr.mxu0 0.0
    %161 = vmatpush1.msra.mxu0 %v128
    %162 = vmatprep.subr.mxu0 0.0
    %163 = vmatpush2.msra.mxu0 0.0
    %164 = vmatprep.subr.mxu0 0.0
    %165 = vmatpush2.msra.mxu0 0.0
    %166 = vmatprep.subr.mxu0 0.0
    %167 = vmatpush2.msra.mxu0 0.0
    %168 = vmatprep.subr.mxu0 0.0
    %169 = vmatpush2.msra.mxu0 0.0
    %170 = vmatprep.subr.mxu0 0.0
    %171 = vmatpush2.msra.mxu0 0.0
    %172 = vmatprep.subr.mxu0 0.0
    %173 = vmatpush2.msra.mxu0 0.0
    %174 = vmatprep.subr.mxu0 0.0
    %175 = vmatpush2.msra.mxu0 0.0
    %176 = vmatprep.subr.mxu0 0.0
    %177 = vmatpush2.msra.mxu0 0.0
    %178 = vmatprep.subr.mxu0 0.0
    %179 = vmatpush2.msra.mxu0 0.0
    %180 = vmatprep.subr.mxu0 0.0
    %181 = vmatpush2.msra.mxu0 0.0
    %182 = vmatprep.subr.mxu0 0.0
    %183 = vmatpush2.msra.mxu0 0.0
    %184 = vmatprep.subr.mxu0 0.0
    %185 = vmatpush2.msra.mxu0 0.0
    %186 = vmatprep.subr.mxu0 0.0
    %187 = vmatpush2.msra.mxu0 0.0
    %188 = vmatprep.subr.mxu0 0.0
    %189 = vmatpush2.msra.mxu0 0.0
    %190 = vmatprep.subr.mxu0 0.0
    %191 = vmatpush2.msra.mxu0 0.0
    %192 = vmatprep.subr.mxu0 0.0
    %193 = vmatpush2.msra.mxu0 0.0
    %194 = vmatprep.mubr.f32.mxu0 0.0
    %195 = vmatmul.mubr.f32.gmra.mxu0 %v103
    %v196 = vpop.f32.mrf.mxu0
    %v197 = vadd.f32 %v99, %v196
    %v198 = vpop.f32.mrf.mxu0
    %199 = vmatprep.mubr.f32.mxu0 0.0
    %200 = vmatmul.mubr.f32.gmra.mxu0 %v106
    %v201 = vpop.f32.mrf.mxu0
    %v202 = vadd.f32 %v99, %v201
    %v203 = vpop.f32.mrf.mxu0
    %204 = vmatprep.mubr.f32.mxu0 0.0
    %205 = vmatmul.mubr.f32.gmra.mxu0 %v109
    %v206 = vpop.f32.mrf.mxu0
    %v207 = vadd.f32 %v99, %v206
    %v208 = vpop.f32.mrf.mxu0
    %209 = vmatprep.mubr.f32.mxu0 0.0
    %210 = vmatmul.mubr.f32.gmra.mxu0 %v112
    %v211 = vpop.f32.mrf.mxu0
    %v212 = vadd.f32 %v99, %v211
    %v213 = vpop.f32.mrf.mxu0
    %214 = vmatprep.mubr.f32.mxu0 0.0
    %215 = vmatmul.mubr.f32.gmra.mxu0 %v115
    %v216 = vpop.f32.mrf.mxu0
    %v217 = vadd.f32 %v99, %v216
    %v218 = vpop.f32.mrf.mxu0
    %219 = vmatprep.mubr.f32.mxu0 0.0
    %220 = vmatmul.mubr.f32.gmra.mxu0 %v118
    %v221 = vpop.f32.mrf.mxu0
    %v222 = vadd.f32 %v99, %v221
    %v223 = vpop.f32.mrf.mxu0
    %224 = vmatprep.mubr.f32.mxu0 0.0
    %225 = vmatmul.mubr.f32.gmra.mxu0 %v121
    %v226 = vpop.f32.mrf.mxu0
    %v227 = vadd.f32 %v99, %v226
    %v228 = vpop.f32.mrf.mxu0
    %229 = vmatprep.mubr.f32.mxu0 0.0
    %230 = vmatmul.mubr.f32.gmra.mxu0 %v124
    %v231 = vpop.f32.mrf.mxu0
    %v232 = vadd.f32 %v99, %v231
    %v233 = vpop.f32.mrf.mxu0
    %234 = vdwg.mxu0
    %235 = vst [vmem:[#allocation2] sm:$0xff] 0.0
    %236 = vst [vmem:[#allocation2 + $0x8] sm:$0xff] 0.0
    %237 = vst [vmem:[#allocation2 + $0x10] sm:$0xff] 0.0
    %v238 = vld [vmem:[%s4] sm:$0x1]
    %v239 = vmul.f32 %v197, %v197
    %v240 = vmul.f32 %v202, %v202
    %v241 = vmul.f32 %v207, %v207
    %v242 = vmul.f32 %v212, %v212
    %v243 = vmul.f32 %v217, %v217
    %v244 = vmul.f32 %v222, %v222
    %v245 = vmul.f32 %v227, %v227
    %v246 = vmul.f32 %v232, %v232
    %247 = vadd.xlane.f32.xlu0 %v239
    %v248 = vpop.xlane.xlu0 %247
    %249 = vadd.xlane.f32.xlu0 %v240
    %v250 = vpop.xlane.xlu0 %249
    %251 = vadd.xlane.f32.xlu0 %v241
    %v252 = vpop.xlane.xlu0 %251
    %253 = vadd.xlane.f32.xlu0 %v242
    %v254 = vpop.xlane.xlu0 %253
    %255 = vadd.xlane.f32.xlu0 %v243
    %v256 = vpop.xlane.xlu0 %255
    %257 = vadd.xlane.f32.xlu0 %v244
    %v258 = vpop.xlane.xlu0 %257
    %259 = vadd.xlane.f32.xlu0 %v245
    %v260 = vpop.xlane.xlu0 %259
    %261 = vadd.xlane.f32.xlu0 %v246
    %v262 = vpop.xlane.xlu0 %261
    %v263 = vrcp.pop 128.0
    %v264 = vmul.f32 %v248, %v263
    %v265 = vmul.f32 %v250, %v263
    %v266 = vmul.f32 %v252, %v263
    %v267 = vmul.f32 %v254, %v263
    %v268 = vmul.f32 %v256, %v263
    %v269 = vmul.f32 %v258, %v263
    %v270 = vmul.f32 %v260, %v263
    %v271 = vmul.f32 %v262, %v263
    %v272 = vadd.f32 %v264, 1e-05
    %v273 = vadd.f32 %v265, 1e-05
    %v274 = vadd.f32 %v266, 1e-05
    %v275 = vadd.f32 %v267, 1e-05
    %v276 = vadd.f32 %v268, 1e-05
    %v277 = vadd.f32 %v269, 1e-05
    %v278 = vadd.f32 %v270, 1e-05
    %v279 = vadd.f32 %v271, 1e-05
    %v280 = vrsqrt.pop %v272
    %v281 = vrsqrt.pop %v273
    %v282 = vrsqrt.pop %v274
    %v283 = vrsqrt.pop %v275
    %v284 = vrsqrt.pop %v276
    %v285 = vrsqrt.pop %v277
    %v286 = vrsqrt.pop %v278
    %v287 = vrsqrt.pop %v279
    %v288 = vmul.f32 %v197, %v280
    %v289 = vmul.f32 %v202, %v281
    %v290 = vmul.f32 %v207, %v282
    %v291 = vmul.f32 %v212, %v283
    %v292 = vmul.f32 %v217, %v284
    %v293 = vmul.f32 %v222, %v285
    %v294 = vmul.f32 %v227, %v286
    %v295 = vmul.f32 %v232, %v287
    %v297 = vlaneseq
    %v298 = vshrl.u32 %v297, 7
    %v299 = vsub.s32 0, %v298
    %v300 = vrot.slane %v238, %v299
    %v302 = vmul.f32 %v288, %v300
    %v303 = vmul.f32 %v289, %v300
    %v304 = vmul.f32 %v290, %v300
    %v305 = vmul.f32 %v291, %v300
    %v306 = vmul.f32 %v292, %v300
    %v307 = vmul.f32 %v293, %v300
    %v308 = vmul.f32 %v294, %v300
    %v309 = vmul.f32 %v295, %v300
    %v310 = vld [vmem:[%s5] sm:$0xff]
    %v311 = vld [vmem:[%s5 + $0x8] sm:$0xff]
    %v312 = vld [vmem:[%s5 + $0x10] sm:$0xff]
    %v313 = vld [vmem:[%s5 + $0x18] sm:$0xff]
    %v314 = vld [vmem:[%s5 + $0x20] sm:$0xff]
    %v315 = vld [vmem:[%s5 + $0x28] sm:$0xff]
    %v316 = vld [vmem:[%s5 + $0x30] sm:$0xff]
    %v317 = vld [vmem:[%s5 + $0x38] sm:$0xff]
    %v318 = vld [vmem:[%s5 + $0x40] sm:$0xff]
    %v319 = vld [vmem:[%s5 + $0x48] sm:$0xff]
    %v320 = vld [vmem:[%s5 + $0x50] sm:$0xff]
    %v321 = vld [vmem:[%s5 + $0x58] sm:$0xff]
    %v322 = vld [vmem:[%s5 + $0x60] sm:$0xff]
    %v323 = vld [vmem:[%s5 + $0x68] sm:$0xff]
    %v324 = vld [vmem:[%s5 + $0x70] sm:$0xff]
    %v325 = vld [vmem:[%s5 + $0x78] sm:$0xff]
    %v326 = vld [vmem:[%s5 + $0x80] sm:$0xff]
    %v327 = vld [vmem:[%s5 + $0x88] sm:$0xff]
    %v328 = vld [vmem:[%s5 + $0x90] sm:$0xff]
    %v329 = vld [vmem:[%s5 + $0x98] sm:$0xff]
    %v330 = vld [vmem:[%s5 + $0xa0] sm:$0xff]
    %v331 = vld [vmem:[%s5 + $0xa8] sm:$0xff]
    %v332 = vld [vmem:[%s5 + $0xb0] sm:$0xff]
    %v333 = vld [vmem:[%s5 + $0xb8] sm:$0xff]
    %v334 = vld [vmem:[%s5 + $0xc0] sm:$0xff]
    %v335 = vld [vmem:[%s5 + $0xc8] sm:$0xff]
    %v336 = vld [vmem:[%s5 + $0xd0] sm:$0xff]
    %v337 = vld [vmem:[%s5 + $0xd8] sm:$0xff]
    %v338 = vld [vmem:[%s5 + $0xe0] sm:$0xff]
    %v339 = vld [vmem:[%s5 + $0xe8] sm:$0xff]
    %v340 = vld [vmem:[%s5 + $0xf0] sm:$0xff]
    %v341 = vld [vmem:[%s5 + $0xf8] sm:$0xff]
    %342 = vmatprep.subr.mxu0 %v341
    %343 = vmatpush1.msra.mxu0 %v340
    %344 = vmatprep.subr.mxu0 %v339
    %345 = vmatpush1.msra.mxu0 %v338
    %346 = vmatprep.subr.mxu0 %v337
    %347 = vmatpush1.msra.mxu0 %v336
    %348 = vmatprep.subr.mxu0 %v335
    %349 = vmatpush1.msra.mxu0 %v334
    %350 = vmatprep.subr.mxu0 %v333
    %351 = vmatpush1.msra.mxu0 %v332
    %352 = vmatprep.subr.mxu0 %v331
    %353 = vmatpush1.msra.mxu0 %v330
    %354 = vmatprep.subr.mxu0 %v329
    %355 = vmatpush1.msra.mxu0 %v328
    %356 = vmatprep.subr.mxu0 %v327
    %357 = vmatpush1.msra.mxu0 %v326
    %358 = vmatprep.subr.mxu0 %v325
    %359 = vmatpush1.msra.mxu0 %v324
    %360 = vmatprep.subr.mxu0 %v323
    %361 = vmatpush1.msra.mxu0 %v322
    %362 = vmatprep.subr.mxu0 %v321
    %363 = vmatpush1.msra.mxu0 %v320
    %364 = vmatprep.subr.mxu0 %v319
    %365 = vmatpush1.msra.mxu0 %v318
    %366 = vmatprep.subr.mxu0 %v317
    %367 = vmatpush1.msra.mxu0 %v316
    %368 = vmatprep.subr.mxu0 %v315
    %369 = vmatpush1.msra.mxu0 %v314
    %370 = vmatprep.subr.mxu0 %v313
    %371 = vmatpush1.msra.mxu0 %v312
    %372 = vmatprep.subr.mxu0 %v311
    %373 = vmatpush1.msra.mxu0 %v310
    %374 = vmatprep.subr.mxu0 0.0
    %375 = vmatpush2.msra.mxu0 0.0
    %376 = vmatprep.subr.mxu0 0.0
    %377 = vmatpush2.msra.mxu0 0.0
    %378 = vmatprep.subr.mxu0 0.0
    %379 = vmatpush2.msra.mxu0 0.0
    %380 = vmatprep.subr.mxu0 0.0
    %381 = vmatpush2.msra.mxu0 0.0
    %382 = vmatprep.subr.mxu0 0.0
    %383 = vmatpush2.msra.mxu0 0.0
    %384 = vmatprep.subr.mxu0 0.0
    %385 = vmatpush2.msra.mxu0 0.0
    %386 = vmatprep.subr.mxu0 0.0
    %387 = vmatpush2.msra.mxu0 0.0
    %388 = vmatprep.subr.mxu0 0.0
    %389 = vmatpush2.msra.mxu0 0.0
    %390 = vmatprep.subr.mxu0 0.0
    %391 = vmatpush2.msra.mxu0 0.0
    %392 = vmatprep.subr.mxu0 0.0
    %393 = vmatpush2.msra.mxu0 0.0
    %394 = vmatprep.subr.mxu0 0.0
    %395 = vmatpush2.msra.mxu0 0.0
    %396 = vmatprep.subr.mxu0 0.0
    %397 = vmatpush2.msra.mxu0 0.0
    %398 = vmatprep.subr.mxu0 0.0
    %399 = vmatpush2.msra.mxu0 0.0
    %400 = vmatprep.subr.mxu0 0.0
    %401 = vmatpush2.msra.mxu0 0.0
    %402 = vmatprep.subr.mxu0 0.0
    %403 = vmatpush2.msra.mxu0 0.0
    %404 = vmatprep.subr.mxu0 0.0
    %405 = vmatpush2.msra.mxu0 0.0
    %406 = vmatprep.mubr.f32.mxu0 0.0
    %407 = vmatmul.mubr.f32.gmra.mxu0 %v302
    %v408 = vpop.f32.mrf.mxu0
    %v409 = vadd.f32 0.0, %v408
    %v410 = vpop.f32.mrf.mxu0
    %v411 = vadd.f32 0.0, %v410
    %412 = vmatprep.mubr.f32.mxu0 0.0
    %413 = vmatmul.mubr.f32.gmra.mxu0 %v303
    %v414 = vpop.f32.mrf.mxu0
    %v415 = vadd.f32 0.0, %v414
    %v416 = vpop.f32.mrf.mxu0
    %v417 = vadd.f32 0.0, %v416
    %418 = vmatprep.mubr.f32.mxu0 0.0
    %419 = vmatmul.mubr.f32.gmra.mxu0 %v304
    %v420 = vpop.f32.mrf.mxu0
    %v421 = vadd.f32 0.0, %v420
    %v422 = vpop.f32.mrf.mxu0
    %v423 = vadd.f32 0.0, %v422
    %424 = vmatprep.mubr.f32.mxu0 0.0
    %425 = vmatmul.mubr.f32.gmra.mxu0 %v305
    %v426 = vpop.f32.mrf.mxu0
    %v427 = vadd.f32 0.0, %v426
    %v428 = vpop.f32.mrf.mxu0
    %v429 = vadd.f32 0.0, %v428
    %430 = vmatprep.mubr.f32.mxu0 0.0
    %431 = vmatmul.mubr.f32.gmra.mxu0 %v306
    %v432 = vpop.f32.mrf.mxu0
    %v433 = vadd.f32 0.0, %v432
    %v434 = vpop.f32.mrf.mxu0
    %v435 = vadd.f32 0.0, %v434
    %436 = vmatprep.mubr.f32.mxu0 0.0
    %437 = vmatmul.mubr.f32.gmra.mxu0 %v307
    %v438 = vpop.f32.mrf.mxu0
    %v439 = vadd.f32 0.0, %v438
    %v440 = vpop.f32.mrf.mxu0
    %v441 = vadd.f32 0.0, %v440
    %442 = vmatprep.mubr.f32.mxu0 0.0
    %443 = vmatmul.mubr.f32.gmra.mxu0 %v308
    %v444 = vpop.f32.mrf.mxu0
    %v445 = vadd.f32 0.0, %v444
    %v446 = vpop.f32.mrf.mxu0
    %v447 = vadd.f32 0.0, %v446
    %448 = vmatprep.mubr.f32.mxu0 0.0
    %449 = vmatmul.mubr.f32.gmra.mxu0 %v309
    %v450 = vpop.f32.mrf.mxu0
    %v451 = vadd.f32 0.0, %v450
    %v452 = vpop.f32.mrf.mxu0
    %v453 = vadd.f32 0.0, %v452
    %454 = vdwg.mxu0
    %455 = vst [vmem:[#allocation2 + $0x18] sm:$0xff] %v409
    %456 = vst [vmem:[#allocation2 + $0x20] sm:$0xff] %v415
    %457 = vst [vmem:[#allocation2 + $0x28] sm:$0xff] %v421
    %458 = vst [vmem:[#allocation2 + $0x30] sm:$0xff] %v427
    %459 = vst [vmem:[#allocation2 + $0x38] sm:$0xff] %v433
    %460 = vst [vmem:[#allocation2 + $0x40] sm:$0xff] %v439
    %461 = vst [vmem:[#allocation2 + $0x48] sm:$0xff] %v445
    %462 = vst [vmem:[#allocation2 + $0x50] sm:$0xff] %v451
    %v463 = vld [vmem:[%s7] sm:$0x1]
    %v465 = vlaneseq
    %v466 = vshrl.u32 %v465, 7
    %v467 = vsub.s32 0, %v466
    %v468 = vrot.slane %v463, %v467
    %v470 = vadd.f32 %v468, 0.0
    %v471 = vld [vmem:[#allocation2] sm:$0xff]
    %v472 = vld [vmem:[#allocation2 + $0x8] sm:$0xff]
    %v473 = vld [vmem:[#allocation2 + $0x10] sm:$0xff]
    %v474 = vld [vmem:[#allocation2 + $0x18] sm:$0xff]
    %v475 = vld [vmem:[#allocation2 + $0x20] sm:$0xff]
    %v476 = vld [vmem:[#allocation2 + $0x28] sm:$0xff]
    %v477 = vld [vmem:[#allocation2 + $0x30] sm:$0xff]
    %v478 = vld [vmem:[#allocation2 + $0x38] sm:$0xff]
    %v479 = vld [vmem:[%s6] sm:$0x1]
    %v480 = vlaneseq
    %v481 = vshrl.u32 %v480, 7
    %v482 = vsub.s32 0, %v481
    %v483 = vrot.slane %v479, %v482
    %v484 = vmul.f32 %v471, %v483
    %v485 = vmul.f32 %v472, %v483
    %v486 = vmul.f32 %v473, %v483
    %v487 = vmul.f32 %v474, %v483
    %v488 = vmul.f32 %v475, %v483
    %v489 = vmul.f32 %v476, %v483
    %v490 = vmul.f32 %v477, %v483
    %v491 = vmul.f32 %v478, %v483
    %v492 = vadd.f32 %v470, %v484
    %v493 = vadd.f32 %v470, %v485
    %v494 = vadd.f32 %v470, %v486
    %v495 = vadd.f32 %v470, %v487
    %v496 = vadd.f32 %v470, %v488
    %v497 = vadd.f32 %v470, %v489
    %v498 = vadd.f32 %v470, %v490
    %v499 = vadd.f32 %v470, %v491
    %v500 = vld [vmem:[#allocation2 + $0x40] sm:$0xff]
    %v501 = vld [vmem:[%s6 + $0x1] sm:$0x1]
    %v502 = vlaneseq
    %v503 = vshrl.u32 %v502, 7
    %v504 = vsub.s32 0, %v503
    %v505 = vrot.slane %v501, %v504
    %v506 = vmul.f32 %v472, %v505
    %v507 = vmul.f32 %v473, %v505
    %v508 = vmul.f32 %v474, %v505
    %v509 = vmul.f32 %v475, %v505
    %v510 = vmul.f32 %v476, %v505
    %v511 = vmul.f32 %v477, %v505
    %v512 = vmul.f32 %v478, %v505
    %v513 = vmul.f32 %v500, %v505
    %v514 = vadd.f32 %v492, %v506
    %v515 = vadd.f32 %v493, %v507
    %v516 = vadd.f32 %v494, %v508
    %v517 = vadd.f32 %v495, %v509
    %v518 = vadd.f32 %v496, %v510
    %v519 = vadd.f32 %v497, %v511
    %v520 = vadd.f32 %v498, %v512
    %v521 = vadd.f32 %v499, %v513
    %v522 = vld [vmem:[#allocation2 + $0x48] sm:$0xff]
    %v523 = vld [vmem:[%s6 + $0x2] sm:$0x1]
    %v524 = vlaneseq
    %v525 = vshrl.u32 %v524, 7
    %v526 = vsub.s32 0, %v525
    %v527 = vrot.slane %v523, %v526
    %v528 = vmul.f32 %v473, %v527
    %v529 = vmul.f32 %v474, %v527
    %v530 = vmul.f32 %v475, %v527
    %v531 = vmul.f32 %v476, %v527
    %v532 = vmul.f32 %v477, %v527
    %v533 = vmul.f32 %v478, %v527
    %v534 = vmul.f32 %v500, %v527
    %v535 = vmul.f32 %v522, %v527
    %v536 = vadd.f32 %v514, %v528
    %v537 = vadd.f32 %v515, %v529
    %v538 = vadd.f32 %v516, %v530
    %v539 = vadd.f32 %v517, %v531
    %v540 = vadd.f32 %v518, %v532
    %v541 = vadd.f32 %v519, %v533
    %v542 = vadd.f32 %v520, %v534
    %v543 = vadd.f32 %v521, %v535
    %v544 = vld [vmem:[#allocation2 + $0x18] sm:$0xff]
    %v545 = vld [vmem:[#allocation2 + $0x20] sm:$0xff]
    %v546 = vld [vmem:[#allocation2 + $0x28] sm:$0xff]
    %v547 = vld [vmem:[#allocation2 + $0x30] sm:$0xff]
    %v548 = vld [vmem:[#allocation2 + $0x38] sm:$0xff]
    %v549 = vld [vmem:[#allocation2 + $0x40] sm:$0xff]
    %v550 = vld [vmem:[#allocation2 + $0x48] sm:$0xff]
    %v551 = vld [vmem:[#allocation2 + $0x50] sm:$0xff]
    %v552 = vld [vmem:[%s6 + $0x3] sm:$0x1]
    %v553 = vlaneseq
    %v554 = vshrl.u32 %v553, 7
    %v555 = vsub.s32 0, %v554
    %v556 = vrot.slane %v552, %v555
    %v557 = vmul.f32 %v544, %v556
    %v558 = vmul.f32 %v545, %v556
    %v559 = vmul.f32 %v546, %v556
    %v560 = vmul.f32 %v547, %v556
    %v561 = vmul.f32 %v548, %v556
    %v562 = vmul.f32 %v549, %v556
    %v563 = vmul.f32 %v550, %v556
    %v564 = vmul.f32 %v551, %v556
    %v565 = vadd.f32 %v536, %v557
    %v566 = vadd.f32 %v537, %v558
    %v567 = vadd.f32 %v538, %v559
    %v568 = vadd.f32 %v539, %v560
    %v569 = vadd.f32 %v540, %v561
    %v570 = vadd.f32 %v541, %v562
    %v571 = vadd.f32 %v542, %v563
    %v572 = vadd.f32 %v543, %v564
    %v573 = vxor.u32 %v565, 2147483648
    %v574 = vxor.u32 %v566, 2147483648
    %v575 = vxor.u32 %v567, 2147483648
    %v576 = vxor.u32 %v568, 2147483648
    %v577 = vxor.u32 %v569, 2147483648
    %v578 = vxor.u32 %v570, 2147483648
    %v579 = vxor.u32 %v571, 2147483648
    %v580 = vxor.u32 %v572, 2147483648
    %v581 = vmul.f32 %v573, 1.442695
    %v582 = vpow.pop %v581
    %v583 = vmul.f32 %v574, 1.442695
    %v584 = vpow.pop %v583
    %v585 = vmul.f32 %v575, 1.442695
    %v586 = vpow.pop %v585
    %v587 = vmul.f32 %v576, 1.442695
    %v588 = vpow.pop %v587
    %v589 = vmul.f32 %v577, 1.442695
    %v590 = vpow.pop %v589
    %v591 = vmul.f32 %v578, 1.442695
    %v592 = vpow.pop %v591
    %v593 = vmul.f32 %v579, 1.442695
    %v594 = vpow.pop %v593
    %v595 = vmul.f32 %v580, 1.442695
    %v596 = vpow.pop %v595
    %v597 = vadd.f32 %v582, 1.0
    %v598 = vadd.f32 %v584, 1.0
    %v599 = vadd.f32 %v586, 1.0
    %v600 = vadd.f32 %v588, 1.0
    %v601 = vadd.f32 %v590, 1.0
    %v602 = vadd.f32 %v592, 1.0
    %v603 = vadd.f32 %v594, 1.0
    %v604 = vadd.f32 %v596, 1.0
    %v605 = vrcp.pop %v597
    %v606 = vmul.f32 1.0, %v605
    %v607 = vrcp.pop %v598
    %v608 = vmul.f32 1.0, %v607
    %v609 = vrcp.pop %v599
    %v610 = vmul.f32 1.0, %v609
    %v611 = vrcp.pop %v600
    %v612 = vmul.f32 1.0, %v611
    %v613 = vrcp.pop %v601
    %v614 = vmul.f32 1.0, %v613
    %v615 = vrcp.pop %v602
    %v616 = vmul.f32 1.0, %v615
    %v617 = vrcp.pop %v603
    %v618 = vmul.f32 1.0, %v617
    %v619 = vrcp.pop %v604
    %v620 = vmul.f32 1.0, %v619
    %v621 = vmul.f32 %v565, %v606
    %v622 = vmul.f32 %v566, %v608
    %v623 = vmul.f32 %v567, %v610
    %v624 = vmul.f32 %v568, %v612
    %v625 = vmul.f32 %v569, %v614
    %v626 = vmul.f32 %v570, %v616
    %v627 = vmul.f32 %v571, %v618
    %v628 = vmul.f32 %v572, %v620
    %v629 = vld [vmem:[#allocation4] sm:$0xff]
    %v630 = vld [vmem:[#allocation4 + $0x8] sm:$0xff]
    %v631 = vld [vmem:[#allocation4 + $0x10] sm:$0xff]
    %v632 = vld [vmem:[#allocation4 + $0x18] sm:$0xff]
    %v633 = vld [vmem:[#allocation4 + $0x20] sm:$0xff]
    %v634 = vld [vmem:[#allocation4 + $0x28] sm:$0xff]
    %v635 = vld [vmem:[#allocation4 + $0x30] sm:$0xff]
    %v636 = vld [vmem:[#allocation4 + $0x38] sm:$0xff]
    %v637 = vld [vmem:[#allocation4 + $0x40] sm:$0xff]
    %v638 = vld [vmem:[#allocation4 + $0x48] sm:$0xff]
    %v639 = vld [vmem:[#allocation4 + $0x50] sm:$0xff]
    %v640 = vld [vmem:[#allocation4 + $0x58] sm:$0xff]
    %v641 = vld [vmem:[#allocation4 + $0x60] sm:$0xff]
    %v642 = vld [vmem:[#allocation4 + $0x68] sm:$0xff]
    %v643 = vld [vmem:[#allocation4 + $0x70] sm:$0xff]
    %v644 = vld [vmem:[#allocation4 + $0x78] sm:$0xff]
    %v645 = vld [vmem:[%s10] sm:$0x1]
    %v647 = vlaneseq
    %v648 = vshrl.u32 %v647, 7
    %v649 = vsub.s32 0, %v648
    %v650 = vrot.slane %v645, %v649
    %652 = vmatprep.subr.mxu0 0.0
    %653 = vmatpush1.msra.mxu0 %v644
    %654 = vmatprep.subr.mxu0 0.0
    %655 = vmatpush1.msra.mxu0 %v643
    %656 = vmatprep.subr.mxu0 0.0
    %657 = vmatpush1.msra.mxu0 %v642
    %658 = vmatprep.subr.mxu0 0.0
    %659 = vmatpush1.msra.mxu0 %v641
    %660 = vmatprep.subr.mxu0 0.0
    %661 = vmatpush1.msra.mxu0 %v640
    %662 = vmatprep.subr.mxu0 0.0
    %663 = vmatpush1.msra.mxu0 %v639
    %664 = vmatprep.subr.mxu0 0.0
    %665 = vmatpush1.msra.mxu0 %v638
    %666 = vmatprep.subr.mxu0 0.0
    %667 = vmatpush1.msra.mxu0 %v637
    %668 = vmatprep.subr.mxu0 0.0
    %669 = vmatpush1.msra.mxu0 %v636
    %670 = vmatprep.subr.mxu0 0.0
    %671 = vmatpush1.msra.mxu0 %v635
    %672 = vmatprep.subr.mxu0 0.0
    %673 = vmatpush1.msra.mxu0 %v634
    %674 = vmatprep.subr.mxu0 0.0
    %675 = vmatpush1.msra.mxu0 %v633
    %676 = vmatprep.subr.mxu0 0.0
    %677 = vmatpush1.msra.mxu0 %v632
    %678 = vmatprep.subr.mxu0 0.0
    %679 = vmatpush1.msra.mxu0 %v631
    %680 = vmatprep.subr.mxu0 0.0
    %681 = vmatpush1.msra.mxu0 %v630
    %682 = vmatprep.subr.mxu0 0.0
    %683 = vmatpush1.msra.mxu0 %v629
    %684 = vmatprep.subr.mxu0 0.0
    %685 = vmatpush2.msra.mxu0 0.0
    %686 = vmatprep.subr.mxu0 0.0
    %687 = vmatpush2.msra.mxu0 0.0
    %688 = vmatprep.subr.mxu0 0.0
    %689 = vmatpush2.msra.mxu0 0.0
    %690 = vmatprep.subr.mxu0 0.0
    %691 = vmatpush2.msra.mxu0 0.0
    %692 = vmatprep.subr.mxu0 0.0
    %693 = vmatpush2.msra.mxu0 0.0
    %694 = vmatprep.subr.mxu0 0.0
    %695 = vmatpush2.msra.mxu0 0.0
    %696 = vmatprep.subr.mxu0 0.0
    %697 = vmatpush2.msra.mxu0 0.0
    %698 = vmatprep.subr.mxu0 0.0
    %699 = vmatpush2.msra.mxu0 0.0
    %700 = vmatprep.subr.mxu0 0.0
    %701 = vmatpush2.msra.mxu0 0.0
    %702 = vmatprep.subr.mxu0 0.0
    %703 = vmatpush2.msra.mxu0 0.0
    %704 = vmatprep.subr.mxu0 0.0
    %705 = vmatpush2.msra.mxu0 0.0
    %706 = vmatprep.subr.mxu0 0.0
    %707 = vmatpush2.msra.mxu0 0.0
    %708 = vmatprep.subr.mxu0 0.0
    %709 = vmatpush2.msra.mxu0 0.0
    %710 = vmatprep.subr.mxu0 0.0
    %711 = vmatpush2.msra.mxu0 0.0
    %712 = vmatprep.subr.mxu0 0.0
    %713 = vmatpush2.msra.mxu0 0.0
    %714 = vmatprep.subr.mxu0 0.0
    %715 = vmatpush2.msra.mxu0 0.0
    %716 = vmatprep.mubr.f32.mxu0 0.0
    %717 = vmatmul.mubr.f32.gmra.mxu0 %v621
    %v718 = vpop.f32.mrf.mxu0
    %v719 = vadd.f32 %v650, %v718
    %v720 = vpop.f32.mrf.mxu0
    %721 = vmatprep.mubr.f32.mxu0 0.0
    %722 = vmatmul.mubr.f32.gmra.mxu0 %v622
    %v723 = vpop.f32.mrf.mxu0
    %v724 = vadd.f32 %v650, %v723
    %v725 = vpop.f32.mrf.mxu0
    %726 = vmatprep.mubr.f32.mxu0 0.0
    %727 = vmatmul.mubr.f32.gmra.mxu0 %v623
    %v728 = vpop.f32.mrf.mxu0
    %v729 = vadd.f32 %v650, %v728
    %v730 = vpop.f32.mrf.mxu0
    %731 = vmatprep.mubr.f32.mxu0 0.0
    %732 = vmatmul.mubr.f32.gmra.mxu0 %v624
    %v733 = vpop.f32.mrf.mxu0
    %v734 = vadd.f32 %v650, %v733
    %v735 = vpop.f32.mrf.mxu0
    %736 = vmatprep.mubr.f32.mxu0 0.0
    %737 = vmatmul.mubr.f32.gmra.mxu0 %v625
    %v738 = vpop.f32.mrf.mxu0
    %v739 = vadd.f32 %v650, %v738
    %v740 = vpop.f32.mrf.mxu0
    %741 = vmatprep.mubr.f32.mxu0 0.0
    %742 = vmatmul.mubr.f32.gmra.mxu0 %v626
    %v743 = vpop.f32.mrf.mxu0
    %v744 = vadd.f32 %v650, %v743
    %v745 = vpop.f32.mrf.mxu0
    %746 = vmatprep.mubr.f32.mxu0 0.0
    %747 = vmatmul.mubr.f32.gmra.mxu0 %v627
    %v748 = vpop.f32.mrf.mxu0
    %v749 = vadd.f32 %v650, %v748
    %v750 = vpop.f32.mrf.mxu0
    %751 = vmatprep.mubr.f32.mxu0 0.0
    %752 = vmatmul.mubr.f32.gmra.mxu0 %v628
    %v753 = vpop.f32.mrf.mxu0
    %v754 = vadd.f32 %v650, %v753
    %v755 = vpop.f32.mrf.mxu0
    %756 = vdwg.mxu0
    %v757 = vmax.f32 %v719, 0.0
    %v758 = vmax.f32 %v724, 0.0
    %v759 = vmax.f32 %v729, 0.0
    %v760 = vmax.f32 %v734, 0.0
    %v761 = vmax.f32 %v739, 0.0
    %v762 = vmax.f32 %v744, 0.0
    %v763 = vmax.f32 %v749, 0.0
    %v764 = vmax.f32 %v754, 0.0
    %vm765 = vcmp.ne.f32.partialorder %v719, %v719
    %vm766 = vcmp.ne.f32.partialorder %v724, %v724
    %vm767 = vcmp.ne.f32.partialorder %v729, %v729
    %vm768 = vcmp.ne.f32.partialorder %v734, %v734
    %vm769 = vcmp.ne.f32.partialorder %v739, %v739
    %vm770 = vcmp.ne.f32.partialorder %v744, %v744
    %vm771 = vcmp.ne.f32.partialorder %v749, %v749
    %vm772 = vcmp.ne.f32.partialorder %v754, %v754
    %v773 = vadd.f32 %v719, 0.0
    %v774 = vadd.f32 %v724, 0.0
    %v775 = vadd.f32 %v729, 0.0
    %v776 = vadd.f32 %v734, 0.0
    %v777 = vadd.f32 %v739, 0.0
    %v778 = vadd.f32 %v744, 0.0
    %v779 = vadd.f32 %v749, 0.0
    %v780 = vadd.f32 %v754, 0.0
    %v781 = vand.u32 2147483647, %v719
    %v782 = vand.u32 2147483647, %v724
    %v783 = vand.u32 2147483647, %v729
    %v784 = vand.u32 2147483647, %v734
    %v785 = vand.u32 2147483647, %v739
    %v786 = vand.u32 2147483647, %v744
    %v787 = vand.u32 2147483647, %v749
    %v788 = vand.u32 2147483647, %v754
    %v789 = vsub.f32 0.0, %v781
    %v790 = vsub.f32 0.0, %v782
    %v791 = vsub.f32 0.0, %v783
    %v792 = vsub.f32 0.0, %v784
    %v793 = vsub.f32 0.0, %v785
    %v794 = vsub.f32 0.0, %v786
    %v795 = vsub.f32 0.0, %v787
    %v796 = vsub.f32 0.0, %v788
    %v797 = vmul.f32 %v789, 1.442695
    %v798 = vpow.pop %v797
    %v799 = vmul.f32 %v790, 1.442695
    %v800 = vpow.pop %v799
    %v801 = vmul.f32 %v791, 1.442695
    %v802 = vpow.pop %v801
    %v803 = vmul.f32 %v792, 1.442695
    %v804 = vpow.pop %v803
    %v805 = vmul.f32 %v793, 1.442695
    %v806 = vpow.pop %v805
    %v807 = vmul.f32 %v794, 1.442695
    %v808 = vpow.pop %v807
    %v809 = vmul.f32 %v795, 1.442695
    %v810 = vpow.pop %v809
    %v811 = vmul.f32 %v796, 1.442695
    %v812 = vpow.pop %v811
    %v813 = vadd.f32 %v798, 1.0
    %v814 = vlog2.pop %v813
    %v815 = vmul.f32 %v814, 0.6931472
    %v816 = vmul.f32 -0.5, %v798
    %v817 = vadd.f32 %v816, 1.0
    %v818 = vmul.f32 %v817, %v798
    %v819 = vand.u32 2147483647, %v798
    %vm820 = vcmp.lt.f32.partialorder %v819, 0.0004427343
    %v821 = vsel %vm820, %v818, %v815
    %v822 = vadd.f32 %v800, 1.0
    %v823 = vlog2.pop %v822
    %v824 = vmul.f32 %v823, 0.6931472
    %v825 = vmul.f32 -0.5, %v800
    %v826 = vadd.f32 %v825, 1.0
    %v827 = vmul.f32 %v826, %v800
    %v828 = vand.u32 2147483647, %v800
    %vm829 = vcmp.lt.f32.partialorder %v828, 0.0004427343
    %v830 = vsel %vm829, %v827, %v824
    %v831 = vadd.f32 %v802, 1.0
    %v832 = vlog2.pop %v831
    %v833 = vmul.f32 %v832, 0.6931472
    %v834 = vmul.f32 -0.5, %v802
    %v835 = vadd.f32 %v834, 1.0
    %v836 = vmul.f32 %v835, %v802
    %v837 = vand.u32 2147483647, %v802
    %vm838 = vcmp.lt.f32.partialorder %v837, 0.0004427343
    %v839 = vsel %vm838, %v836, %v833
    %v840 = vadd.f32 %v804, 1.0
    %v841 = vlog2.pop %v840
    %v842 = vmul.f32 %v841, 0.6931472
    %v843 = vmul.f32 -0.5, %v804
    %v844 = vadd.f32 %v843, 1.0
    %v845 = vmul.f32 %v844, %v804
    %v846 = vand.u32 2147483647, %v804
    %vm847 = vcmp.lt.f32.partialorder %v846, 0.0004427343
    %v848 = vsel %vm847, %v845, %v842
    %v849 = vadd.f32 %v806, 1.0
    %v850 = vlog2.pop %v849
    %v851 = vmul.f32 %v850, 0.6931472
    %v852 = vmul.f32 -0.5, %v806
    %v853 = vadd.f32 %v852, 1.0
    %v854 = vmul.f32 %v853, %v806
    %v855 = vand.u32 2147483647, %v806
    %vm856 = vcmp.lt.f32.partialorder %v855, 0.0004427343
    %v857 = vsel %vm856, %v854, %v851
    %v858 = vadd.f32 %v808, 1.0
    %v859 = vlog2.pop %v858
    %v860 = vmul.f32 %v859, 0.6931472
    %v861 = vmul.f32 -0.5, %v808
    %v862 = vadd.f32 %v861, 1.0
    %v863 = vmul.f32 %v862, %v808
    %v864 = vand.u32 2147483647, %v808
    %vm865 = vcmp.lt.f32.partialorder %v864, 0.0004427343
    %v866 = vsel %vm865, %v863, %v860
    %v867 = vadd.f32 %v810, 1.0
    %v868 = vlog2.pop %v867
    %v869 = vmul.f32 %v868, 0.6931472
    %v870 = vmul.f32 -0.5, %v810
    %v871 = vadd.f32 %v870, 1.0
    %v872 = vmul.f32 %v871, %v810
    %v873 = vand.u32 2147483647, %v810
    %vm874 = vcmp.lt.f32.partialorder %v873, 0.0004427343
    %v875 = vsel %vm874, %v872, %v869
    %v876 = vadd.f32 %v812, 1.0
    %v877 = vlog2.pop %v876
    %v878 = vmul.f32 %v877, 0.6931472
    %v879 = vmul.f32 -0.5, %v812
    %v880 = vadd.f32 %v879, 1.0
    %v881 = vmul.f32 %v880, %v812
    %v882 = vand.u32 2147483647, %v812
    %vm883 = vcmp.lt.f32.partialorder %v882, 0.0004427343
    %v884 = vsel %vm883, %v881, %v878
    %v885 = vadd.f32 %v757, %v821
    %v886 = vadd.f32 %v758, %v830
    %v887 = vadd.f32 %v759, %v839
    %v888 = vadd.f32 %v760, %v848
    %v889 = vadd.f32 %v761, %v857
    %v890 = vadd.f32 %v762, %v866
    %v891 = vadd.f32 %v763, %v875
    %v892 = vadd.f32 %v764, %v884
    %v893 = vsel %vm765, %v773, %v885
    %v894 = vsel %vm766, %v774, %v886
    %v895 = vsel %vm767, %v775, %v887
    %v896 = vsel %vm768, %v776, %v888
    %v897 = vsel %vm769, %v777, %v889
    %v898 = vsel %vm770, %v778, %v890
    %v899 = vsel %vm771, %v779, %v891
    %v900 = vsel %vm772, %v780, %v892
    %v901 = vld [vmem:[%s8] sm:$0xff]
    %v902 = vld [vmem:[%s8 + $0x8] sm:$0xff]
    %v903 = vld [vmem:[%s8 + $0x10] sm:$0xff]
    %v904 = vld [vmem:[%s8 + $0x18] sm:$0xff]
    %v905 = vld [vmem:[%s8 + $0x20] sm:$0xff]
    %v906 = vld [vmem:[%s8 + $0x28] sm:$0xff]
    %v907 = vld [vmem:[%s8 + $0x30] sm:$0xff]
    %v908 = vld [vmem:[%s8 + $0x38] sm:$0xff]
    %v909 = vld [vmem:[%s8 + $0x40] sm:$0xff]
    %v910 = vld [vmem:[%s8 + $0x48] sm:$0xff]
    %v911 = vld [vmem:[%s8 + $0x50] sm:$0xff]
    %v912 = vld [vmem:[%s8 + $0x58] sm:$0xff]
    %v913 = vld [vmem:[%s8 + $0x60] sm:$0xff]
    %v914 = vld [vmem:[%s8 + $0x68] sm:$0xff]
    %v915 = vld [vmem:[%s8 + $0x70] sm:$0xff]
    %v916 = vld [vmem:[%s8 + $0x78] sm:$0xff]
    %917 = vmatprep.subr.mxu0 0.0
    %918 = vmatpush1.msra.mxu0 %v916
    %919 = vmatprep.subr.mxu0 0.0
    %920 = vmatpush1.msra.mxu0 %v915
    %921 = vmatprep.subr.mxu0 0.0
    %922 = vmatpush1.msra.mxu0 %v914
    %923 = vmatprep.subr.mxu0 0.0
    %924 = vmatpush1.msra.mxu0 %v913
    %925 = vmatprep.subr.mxu0 0.0
    %926 = vmatpush1.msra.mxu0 %v912
    %927 = vmatprep.subr.mxu0 0.0
    %928 = vmatpush1.msra.mxu0 %v911
    %929 = vmatprep.subr.mxu0 0.0
    %930 = vmatpush1.msra.mxu0 %v910
    %931 = vmatprep.subr.mxu0 0.0
    %932 = vmatpush1.msra.mxu0 %v909
    %933 = vmatprep.subr.mxu0 0.0
    %934 = vmatpush1.msra.mxu0 %v908
    %935 = vmatprep.subr.mxu0 0.0
    %936 = vmatpush1.msra.mxu0 %v907
    %937 = vmatprep.subr.mxu0 0.0
    %938 = vmatpush1.msra.mxu0 %v906
    %939 = vmatprep.subr.mxu0 0.0
    %940 = vmatpush1.msra.mxu0 %v905
    %941 = vmatprep.subr.mxu0 0.0
    %942 = vmatpush1.msra.mxu0 %v904
    %943 = vmatprep.subr.mxu0 0.0
    %944 = vmatpush1.msra.mxu0 %v903
    %945 = vmatprep.subr.mxu0 0.0
    %946 = vmatpush1.msra.mxu0 %v902
    %947 = vmatprep.subr.mxu0 0.0
    %948 = vmatpush1.msra.mxu0 %v901
    %949 = vmatprep.subr.mxu0 0.0
    %950 = vmatpush2.msra.mxu0 0.0
    %951 = vmatprep.subr.mxu0 0.0
    %952 = vmatpush2.msra.mxu0 0.0
    %953 = vmatprep.subr.mxu0 0.0
    %954 = vmatpush2.msra.mxu0 0.0
    %955 = vmatprep.subr.mxu0 0.0
    %956 = vmatpush2.msra.mxu0 0.0
    %957 = vmatprep.subr.mxu0 0.0
    %958 = vmatpush2.msra.mxu0 0.0
    %959 = vmatprep.subr.mxu0 0.0
    %960 = vmatpush2.msra.mxu0 0.0
    %961 = vmatprep.subr.mxu0 0.0
    %962 = vmatpush2.msra.mxu0 0.0
    %963 = vmatprep.subr.mxu0 0.0
    %964 = vmatpush2.msra.mxu0 0.0
    %965 = vmatprep.subr.mxu0 0.0
    %966 = vmatpush2.msra.mxu0 0.0
    %967 = vmatprep.subr.mxu0 0.0
    %968 = vmatpush2.msra.mxu0 0.0
    %969 = vmatprep.subr.mxu0 0.0
    %970 = vmatpush2.msra.mxu0 0.0
    %971 = vmatprep.subr.mxu0 0.0
    %972 = vmatpush2.msra.mxu0 0.0
    %973 = vmatprep.subr.mxu0 0.0
    %974 = vmatpush2.msra.mxu0 0.0
    %975 = vmatprep.subr.mxu0 0.0
    %976 = vmatpush2.msra.mxu0 0.0
    %977 = vmatprep.subr.mxu0 0.0
    %978 = vmatpush2.msra.mxu0 0.0
    %979 = vmatprep.subr.mxu0 0.0
    %980 = vmatpush2.msra.mxu0 0.0
    %981 = vmatprep.mubr.f32.mxu0 0.0
    %982 = vmatmul.mubr.f32.gmra.mxu0 %v621
    %v983 = vpop.f32.mrf.mxu0
    %v984 = vadd.f32 0.0, %v983
    %v985 = vpop.f32.mrf.mxu0
    %986 = vmatprep.mubr.f32.mxu0 0.0
    %987 = vmatmul.mubr.f32.gmra.mxu0 %v622
    %v988 = vpop.f32.mrf.mxu0
    %v989 = vadd.f32 0.0, %v988
    %v990 = vpop.f32.mrf.mxu0
    %991 = vmatprep.mubr.f32.mxu0 0.0
    %992 = vmatmul.mubr.f32.gmra.mxu0 %v623
    %v993 = vpop.f32.mrf.mxu0
    %v994 = vadd.f32 0.0, %v993
    %v995 = vpop.f32.mrf.mxu0
    %996 = vmatprep.mubr.f32.mxu0 0.0
    %997 = vmatmul.mubr.f32.gmra.mxu0 %v624
    %v998 = vpop.f32.mrf.mxu0
    %v999 = vadd.f32 0.0, %v998
    %v1000 = vpop.f32.mrf.mxu0
    %1001 = vmatprep.mubr.f32.mxu0 0.0
    %1002 = vmatmul.mubr.f32.gmra.mxu0 %v625
    %v1003 = vpop.f32.mrf.mxu0
    %v1004 = vadd.f32 0.0, %v1003
    %v1005 = vpop.f32.mrf.mxu0
    %1006 = vmatprep.mubr.f32.mxu0 0.0
    %1007 = vmatmul.mubr.f32.gmra.mxu0 %v626
    %v1008 = vpop.f32.mrf.mxu0
    %v1009 = vadd.f32 0.0, %v1008
    %v1010 = vpop.f32.mrf.mxu0
    %1011 = vmatprep.mubr.f32.mxu0 0.0
    %1012 = vmatmul.mubr.f32.gmra.mxu0 %v627
    %v1013 = vpop.f32.mrf.mxu0
    %v1014 = vadd.f32 0.0, %v1013
    %v1015 = vpop.f32.mrf.mxu0
    %1016 = vmatprep.mubr.f32.mxu0 0.0
    %1017 = vmatmul.mubr.f32.gmra.mxu0 %v628
    %v1018 = vpop.f32.mrf.mxu0
    %v1019 = vadd.f32 0.0, %v1018
    %v1020 = vpop.f32.mrf.mxu0
    %1021 = vdwg.mxu0
    %v1022 = vld [vmem:[%s11] sm:$0x1]
    %v1023 = vld [vmem:[%s11 + $0x1] sm:$0x1]
    %v1024 = vlaneseq
    %v1025 = vshrl.u32 %v1024, 7
    %v1026 = vsub.s32 0, %v1025
    %v1027 = vrot.slane %v1022, %v1026
    %v1028 = vmul.f32 %v893, %v1027
    %v1029 = vmul.f32 %v1028, 1.442695
    %v1030 = vpow.pop %v1029
    %v1031 = vmul.f32 %v1030, 0.0
    %1033 = vset.pattern.permute.xlu0 0
    %1034 = vperm.xlu0 %1033, %v984
    %v1035 = vpop.permute.xlu0 %1034
    %v1037 = vmul.f32 %v893, %v1035
    %v1038 = vadd.f32 %v1031, %v1037
    %1039 = vset.pattern.permute.xlu0 2
    %1040 = vperm.xlu0 %1039, %v984
    %v1041 = vpop.permute.xlu0 %1040
    %v1043 = vmul.f32 %v1038, %v1041
    %v1044 = vadd.f32 %v1043, 0.0
    %v1045 = vlaneseq
    %v1046 = vshrl.u32 %v1045, 7
    %v1047 = vsub.s32 0, %v1046
    %v1048 = vrot.slane %v1023, %v1047
    %v1049 = vmul.f32 %v893, %v1048
    %v1050 = vmul.f32 %v1049, 1.442695
    %v1051 = vpow.pop %v1050
    %v1052 = vmul.f32 %v1051, 0.0
    %1053 = vset.pattern.permute.xlu0 1
    %1054 = vperm.xlu0 %1053, %v984
    %v1055 = vpop.permute.xlu0 %1054
    %v1057 = vmul.f32 %v893, %v1055
    %v1058 = vadd.f32 %v1052, %v1057
    %1059 = vset.pattern.permute.xlu0 3
    %1060 = vperm.xlu0 %1059, %v984
    %v1061 = vpop.permute.xlu0 %1060
    %v1063 = vmul.f32 %v1058, %v1061
    %v1064 = vadd.f32 %v1044, %v1063
    %1065 = vst [vmem:[#allocation3] sm:$0xff] %v1064
    %v1066 = vmul.f32 %v894, %v1027
    %v1067 = vmul.f32 %v1066, 1.442695
    %v1068 = vpow.pop %v1067
    %v1069 = vmul.f32 %v1068, %v1038
    %1071 = vset.pattern.permute.xlu0 0
    %1072 = vperm.xlu0 %1071, %v989
    %v1073 = vpop.permute.xlu0 %1072
    %v1075 = vmul.f32 %v894, %v1073
    %v1076 = vadd.f32 %v1069, %v1075
    %1077 = vset.pattern.permute.xlu0 2
    %1078 = vperm.xlu0 %1077, %v989
    %v1079 = vpop.permute.xlu0 %1078
    %v1081 = vmul.f32 %v1076, %v1079
    %v1082 = vadd.f32 %v1081, 0.0
    %v1083 = vmul.f32 %v894, %v1048
    %v1084 = vmul.f32 %v1083, 1.442695
    %v1085 = vpow.pop %v1084
    %v1086 = vmul.f32 %v1085, %v1058
    %1087 = vset.pattern.permute.xlu0 1
    %1088 = vperm.xlu0 %1087, %v989
    %v1089 = vpop.permute.xlu0 %1088
    %v1091 = vmul.f32 %v894, %v1089
    %v1092 = vadd.f32 %v1086, %v1091
    %1093 = vset.pattern.permute.xlu0 3
    %1094 = vperm.xlu0 %1093, %v989
    %v1095 = vpop.permute.xlu0 %1094
    %v1097 = vmul.f32 %v1092, %v1095
    %v1098 = vadd.f32 %v1082, %v1097
    %1099 = vst [vmem:[#allocation3 + $0x8] sm:$0xff] %v1098
    %v1100 = vmul.f32 %v895, %v1027
    %v1101 = vmul.f32 %v1100, 1.442695
    %v1102 = vpow.pop %v1101
    %v1103 = vmul.f32 %v1102, %v1076
    %1105 = vset.pattern.permute.xlu0 0
    %1106 = vperm.xlu0 %1105, %v994
    %v1107 = vpop.permute.xlu0 %1106
    %v1109 = vmul.f32 %v895, %v1107
    %v1110 = vadd.f32 %v1103, %v1109
    %1111 = vset.pattern.permute.xlu0 2
    %1112 = vperm.xlu0 %1111, %v994
    %v1113 = vpop.permute.xlu0 %1112
    %v1115 = vmul.f32 %v1110, %v1113
    %v1116 = vadd.f32 %v1115, 0.0
    %v1117 = vmul.f32 %v895, %v1048
    %v1118 = vmul.f32 %v1117, 1.442695
    %v1119 = vpow.pop %v1118
    %v1120 = vmul.f32 %v1119, %v1092
    %1121 = vset.pattern.permute.xlu0 1
    %1122 = vperm.xlu0 %1121, %v994
    %v1123 = vpop.permute.xlu0 %1122
    %v1125 = vmul.f32 %v895, %v1123
    %v1126 = vadd.f32 %v1120, %v1125
    %1127 = vset.pattern.permute.xlu0 3
    %1128 = vperm.xlu0 %1127, %v994
    %v1129 = vpop.permute.xlu0 %1128
    %v1131 = vmul.f32 %v1126, %v1129
    %v1132 = vadd.f32 %v1116, %v1131
    %1133 = vst [vmem:[#allocation3 + $0x10] sm:$0xff] %v1132
    %v1134 = vmul.f32 %v896, %v1027
    %v1135 = vmul.f32 %v1134, 1.442695
    %v1136 = vpow.pop %v1135
    %v1137 = vmul.f32 %v1136, %v1110
    %1139 = vset.pattern.permute.xlu0 0
    %1140 = vperm.xlu0 %1139, %v999
    %v1141 = vpop.permute.xlu0 %1140
    %v1143 = vmul.f32 %v896, %v1141
    %v1144 = vadd.f32 %v1137, %v1143
    %1145 = vset.pattern.permute.xlu0 2
    %1146 = vperm.xlu0 %1145, %v999
    %v1147 = vpop.permute.xlu0 %1146
    %v1149 = vmul.f32 %v1144, %v1147
    %v1150 = vadd.f32 %v1149, 0.0
    %v1151 = vmul.f32 %v896, %v1048
    %v1152 = vmul.f32 %v1151, 1.442695
    %v1153 = vpow.pop %v1152
    %v1154 = vmul.f32 %v1153, %v1126
    %1155 = vset.pattern.permute.xlu0 1
    %1156 = vperm.xlu0 %1155, %v999
    %v1157 = vpop.permute.xlu0 %1156
    %v1159 = vmul.f32 %v896, %v1157
    %v1160 = vadd.f32 %v1154, %v1159
    %1161 = vset.pattern.permute.xlu0 3
    %1162 = vperm.xlu0 %1161, %v999
    %v1163 = vpop.permute.xlu0 %1162
    %v1165 = vmul.f32 %v1160, %v1163
    %v1166 = vadd.f32 %v1150, %v1165
    %1167 = vst [vmem:[#allocation3 + $0x18] sm:$0xff] %v1166
    %v1168 = vmul.f32 %v897, %v1027
    %v1169 = vmul.f32 %v1168, 1.442695
    %v1170 = vpow.pop %v1169
    %v1171 = vmul.f32 %v1170, %v1144
    %1173 = vset.pattern.permute.xlu0 0
    %1174 = vperm.xlu0 %1173, %v1004
    %v1175 = vpop.permute.xlu0 %1174
    %v1177 = vmul.f32 %v897, %v1175
    %v1178 = vadd.f32 %v1171, %v1177
    %1179 = vset.pattern.permute.xlu0 2
    %1180 = vperm.xlu0 %1179, %v1004
    %v1181 = vpop.permute.xlu0 %1180
    %v1183 = vmul.f32 %v1178, %v1181
    %v1184 = vadd.f32 %v1183, 0.0
    %v1185 = vmul.f32 %v897, %v1048
    %v1186 = vmul.f32 %v1185, 1.442695
    %v1187 = vpow.pop %v1186
    %v1188 = vmul.f32 %v1187, %v1160
    %1189 = vset.pattern.permute.xlu0 1
    %1190 = vperm.xlu0 %1189, %v1004
    %v1191 = vpop.permute.xlu0 %1190
    %v1193 = vmul.f32 %v897, %v1191
    %v1194 = vadd.f32 %v1188, %v1193
    %1195 = vset.pattern.permute.xlu0 3
    %1196 = vperm.xlu0 %1195, %v1004
    %v1197 = vpop.permute.xlu0 %1196
    %v1199 = vmul.f32 %v1194, %v1197
    %v1200 = vadd.f32 %v1184, %v1199
    %1201 = vst [vmem:[#allocation3 + $0x20] sm:$0xff] %v1200
    %v1202 = vmul.f32 %v898, %v1027
    %v1203 = vmul.f32 %v1202, 1.442695
    %v1204 = vpow.pop %v1203
    %v1205 = vmul.f32 %v1204, %v1178
    %1207 = vset.pattern.permute.xlu0 0
    %1208 = vperm.xlu0 %1207, %v1009
    %v1209 = vpop.permute.xlu0 %1208
    %v1211 = vmul.f32 %v898, %v1209
    %v1212 = vadd.f32 %v1205, %v1211
    %1213 = vset.pattern.permute.xlu0 2
    %1214 = vperm.xlu0 %1213, %v1009
    %v1215 = vpop.permute.xlu0 %1214
    %v1217 = vmul.f32 %v1212, %v1215
    %v1218 = vadd.f32 %v1217, 0.0
    %v1219 = vmul.f32 %v898, %v1048
    %v1220 = vmul.f32 %v1219, 1.442695
    %v1221 = vpow.pop %v1220
    %v1222 = vmul.f32 %v1221, %v1194
    %1223 = vset.pattern.permute.xlu0 1
    %1224 = vperm.xlu0 %1223, %v1009
    %v1225 = vpop.permute.xlu0 %1224
    %v1227 = vmul.f32 %v898, %v1225
    %v1228 = vadd.f32 %v1222, %v1227
    %1229 = vset.pattern.permute.xlu0 3
    %1230 = vperm.xlu0 %1229, %v1009
    %v1231 = vpop.permute.xlu0 %1230
    %v1233 = vmul.f32 %v1228, %v1231
    %v1234 = vadd.f32 %v1218, %v1233
    %1235 = vst [vmem:[#allocation3 + $0x28] sm:$0xff] %v1234
    %v1236 = vmul.f32 %v899, %v1027
    %v1237 = vmul.f32 %v1236, 1.442695
    %v1238 = vpow.pop %v1237
    %v1239 = vmul.f32 %v1238, %v1212
    %1241 = vset.pattern.permute.xlu0 0
    %1242 = vperm.xlu0 %1241, %v1014
    %v1243 = vpop.permute.xlu0 %1242
    %v1245 = vmul.f32 %v899, %v1243
    %v1246 = vadd.f32 %v1239, %v1245
    %1247 = vset.pattern.permute.xlu0 2
    %1248 = vperm.xlu0 %1247, %v1014
    %v1249 = vpop.permute.xlu0 %1248
    %v1251 = vmul.f32 %v1246, %v1249
    %v1252 = vadd.f32 %v1251, 0.0
    %v1253 = vmul.f32 %v899, %v1048
    %v1254 = vmul.f32 %v1253, 1.442695
    %v1255 = vpow.pop %v1254
    %v1256 = vmul.f32 %v1255, %v1228
    %1257 = vset.pattern.permute.xlu0 1
    %1258 = vperm.xlu0 %1257, %v1014
    %v1259 = vpop.permute.xlu0 %1258
    %v1261 = vmul.f32 %v899, %v1259
    %v1262 = vadd.f32 %v1256, %v1261
    %1263 = vset.pattern.permute.xlu0 3
    %1264 = vperm.xlu0 %1263, %v1014
    %v1265 = vpop.permute.xlu0 %1264
    %v1267 = vmul.f32 %v1262, %v1265
    %v1268 = vadd.f32 %v1252, %v1267
    %1269 = vst [vmem:[#allocation3 + $0x30] sm:$0xff] %v1268
    %v1270 = vmul.f32 %v900, %v1027
    %v1271 = vmul.f32 %v1270, 1.442695
    %v1272 = vpow.pop %v1271
    %v1273 = vmul.f32 %v1272, %v1246
    %1275 = vset.pattern.permute.xlu0 0
    %1276 = vperm.xlu0 %1275, %v1019
    %v1277 = vpop.permute.xlu0 %1276
    %v1279 = vmul.f32 %v900, %v1277
    %v1280 = vadd.f32 %v1273, %v1279
    %1281 = vset.pattern.permute.xlu0 2
    %1282 = vperm.xlu0 %1281, %v1019
    %v1283 = vpop.permute.xlu0 %1282
    %v1285 = vmul.f32 %v1280, %v1283
    %v1286 = vadd.f32 %v1285, 0.0
    %v1287 = vmul.f32 %v900, %v1048
    %v1288 = vmul.f32 %v1287, 1.442695
    %v1289 = vpow.pop %v1288
    %v1290 = vmul.f32 %v1289, %v1262
    %1291 = vset.pattern.permute.xlu0 1
    %1292 = vperm.xlu0 %1291, %v1019
    %v1293 = vpop.permute.xlu0 %1292
    %v1295 = vmul.f32 %v900, %v1293
    %v1296 = vadd.f32 %v1290, %v1295
    %1297 = vset.pattern.permute.xlu0 3
    %1298 = vperm.xlu0 %1297, %v1019
    %v1299 = vpop.permute.xlu0 %1298
    %v1301 = vmul.f32 %v1296, %v1299
    %v1302 = vadd.f32 %v1286, %v1301
    %1303 = vst [vmem:[#allocation3 + $0x38] sm:$0xff] %v1302
    %v1304 = vld [vmem:[#allocation3] sm:$0xff]
    %v1305 = vld [vmem:[#allocation3 + $0x8] sm:$0xff]
    %v1306 = vld [vmem:[#allocation3 + $0x10] sm:$0xff]
    %v1307 = vld [vmem:[#allocation3 + $0x18] sm:$0xff]
    %v1308 = vld [vmem:[#allocation3 + $0x20] sm:$0xff]
    %v1309 = vld [vmem:[#allocation3 + $0x28] sm:$0xff]
    %v1310 = vld [vmem:[#allocation3 + $0x30] sm:$0xff]
    %v1311 = vld [vmem:[#allocation3 + $0x38] sm:$0xff]
    %v1312 = vld [vmem:[%s12] sm:$0x1]
    %v1314 = vlaneseq
    %v1315 = vshrl.u32 %v1314, 7
    %v1316 = vsub.s32 0, %v1315
    %v1317 = vrot.slane %v1312, %v1316
    %v1319 = vmul.f32 %v621, %v1317
    %v1320 = vmul.f32 %v622, %v1317
    %v1321 = vmul.f32 %v623, %v1317
    %v1322 = vmul.f32 %v624, %v1317
    %v1323 = vmul.f32 %v625, %v1317
    %v1324 = vmul.f32 %v626, %v1317
    %v1325 = vmul.f32 %v627, %v1317
    %v1326 = vmul.f32 %v628, %v1317
    %v1327 = vadd.f32 %v1304, %v1319
    %v1328 = vadd.f32 %v1305, %v1320
    %v1329 = vadd.f32 %v1306, %v1321
    %v1330 = vadd.f32 %v1307, %v1322
    %v1331 = vadd.f32 %v1308, %v1323
    %v1332 = vadd.f32 %v1309, %v1324
    %v1333 = vadd.f32 %v1310, %v1325
    %v1334 = vadd.f32 %v1311, %v1326
    %v1335 = vxor.u32 %v411, 2147483648
    %v1336 = vxor.u32 %v417, 2147483648
    %v1337 = vxor.u32 %v423, 2147483648
    %v1338 = vxor.u32 %v429, 2147483648
    %v1339 = vxor.u32 %v435, 2147483648
    %v1340 = vxor.u32 %v441, 2147483648
    %v1341 = vxor.u32 %v447, 2147483648
    %v1342 = vxor.u32 %v453, 2147483648
    %v1343 = vmul.f32 %v1335, 1.442695
    %v1344 = vpow.pop %v1343
    %v1345 = vmul.f32 %v1336, 1.442695
    %v1346 = vpow.pop %v1345
    %v1347 = vmul.f32 %v1337, 1.442695
    %v1348 = vpow.pop %v1347
    %v1349 = vmul.f32 %v1338, 1.442695
    %v1350 = vpow.pop %v1349
    %v1351 = vmul.f32 %v1339, 1.442695
    %v1352 = vpow.pop %v1351
    %v1353 = vmul.f32 %v1340, 1.442695
    %v1354 = vpow.pop %v1353
    %v1355 = vmul.f32 %v1341, 1.442695
    %v1356 = vpow.pop %v1355
    %v1357 = vmul.f32 %v1342, 1.442695
    %v1358 = vpow.pop %v1357
    %v1359 = vadd.f32 %v1344, 1.0
    %v1360 = vadd.f32 %v1346, 1.0
    %v1361 = vadd.f32 %v1348, 1.0
    %v1362 = vadd.f32 %v1350, 1.0
    %v1363 = vadd.f32 %v1352, 1.0
    %v1364 = vadd.f32 %v1354, 1.0
    %v1365 = vadd.f32 %v1356, 1.0
    %v1366 = vadd.f32 %v1358, 1.0
    %v1367 = vrcp.pop %v1359
    %v1368 = vmul.f32 1.0, %v1367
    %v1369 = vrcp.pop %v1360
    %v1370 = vmul.f32 1.0, %v1369
    %v1371 = vrcp.pop %v1361
    %v1372 = vmul.f32 1.0, %v1371
    %v1373 = vrcp.pop %v1362
    %v1374 = vmul.f32 1.0, %v1373
    %v1375 = vrcp.pop %v1363
    %v1376 = vmul.f32 1.0, %v1375
    %v1377 = vrcp.pop %v1364
    %v1378 = vmul.f32 1.0, %v1377
    %v1379 = vrcp.pop %v1365
    %v1380 = vmul.f32 1.0, %v1379
    %v1381 = vrcp.pop %v1366
    %v1382 = vmul.f32 1.0, %v1381
    %v1383 = vmul.f32 %v411, %v1368
    %v1384 = vmul.f32 %v417, %v1370
    %v1385 = vmul.f32 %v423, %v1372
    %v1386 = vmul.f32 %v429, %v1374
    %v1387 = vmul.f32 %v435, %v1376
    %v1388 = vmul.f32 %v441, %v1378
    %v1389 = vmul.f32 %v447, %v1380
    %v1390 = vmul.f32 %v453, %v1382
    %v1391 = vmul.f32 %v1327, %v1383
    %v1392 = vmul.f32 %v1328, %v1384
    %v1393 = vmul.f32 %v1329, %v1385
    %v1394 = vmul.f32 %v1330, %v1386
    %v1395 = vmul.f32 %v1331, %v1387
    %v1396 = vmul.f32 %v1332, %v1388
    %v1397 = vmul.f32 %v1333, %v1389
    %v1398 = vmul.f32 %v1334, %v1390
    %v1399 = vld [vmem:[#allocation7] sm:$0xff]
    %v1400 = vld [vmem:[#allocation7 + $0x8] sm:$0xff]
    %v1401 = vld [vmem:[#allocation7 + $0x10] sm:$0xff]
    %v1402 = vld [vmem:[#allocation7 + $0x18] sm:$0xff]
    %v1403 = vld [vmem:[#allocation7 + $0x20] sm:$0xff]
    %v1404 = vld [vmem:[#allocation7 + $0x28] sm:$0xff]
    %v1405 = vld [vmem:[#allocation7 + $0x30] sm:$0xff]
    %v1406 = vld [vmem:[#allocation7 + $0x38] sm:$0xff]
    %v1407 = vld [vmem:[#allocation7 + $0x40] sm:$0xff]
    %v1408 = vld [vmem:[#allocation7 + $0x48] sm:$0xff]
    %v1409 = vld [vmem:[#allocation7 + $0x50] sm:$0xff]
    %v1410 = vld [vmem:[#allocation7 + $0x58] sm:$0xff]
    %v1411 = vld [vmem:[#allocation7 + $0x60] sm:$0xff]
    %v1412 = vld [vmem:[#allocation7 + $0x68] sm:$0xff]
    %v1413 = vld [vmem:[#allocation7 + $0x70] sm:$0xff]
    %v1414 = vld [vmem:[#allocation7 + $0x78] sm:$0xff]
    %1415 = vmatprep.subr.mxu0 0.0
    %1416 = vmatpush1.msra.mxu0 %v1414
    %1417 = vmatprep.subr.mxu0 0.0
    %1418 = vmatpush1.msra.mxu0 %v1413
    %1419 = vmatprep.subr.mxu0 0.0
    %1420 = vmatpush1.msra.mxu0 %v1412
    %1421 = vmatprep.subr.mxu0 0.0
    %1422 = vmatpush1.msra.mxu0 %v1411
    %1423 = vmatprep.subr.mxu0 0.0
    %1424 = vmatpush1.msra.mxu0 %v1410
    %1425 = vmatprep.subr.mxu0 0.0
    %1426 = vmatpush1.msra.mxu0 %v1409
    %1427 = vmatprep.subr.mxu0 0.0
    %1428 = vmatpush1.msra.mxu0 %v1408
    %1429 = vmatprep.subr.mxu0 0.0
    %1430 = vmatpush1.msra.mxu0 %v1407
    %1431 = vmatprep.subr.mxu0 0.0
    %1432 = vmatpush1.msra.mxu0 %v1406
    %1433 = vmatprep.subr.mxu0 0.0
    %1434 = vmatpush1.msra.mxu0 %v1405
    %1435 = vmatprep.subr.mxu0 0.0
    %1436 = vmatpush1.msra.mxu0 %v1404
    %1437 = vmatprep.subr.mxu0 0.0
    %1438 = vmatpush1.msra.mxu0 %v1403
    %1439 = vmatprep.subr.mxu0 0.0
    %1440 = vmatpush1.msra.mxu0 %v1402
    %1441 = vmatprep.subr.mxu0 0.0
    %1442 = vmatpush1.msra.mxu0 %v1401
    %1443 = vmatprep.subr.mxu0 0.0
    %1444 = vmatpush1.msra.mxu0 %v1400
    %1445 = vmatprep.subr.mxu0 0.0
    %1446 = vmatpush1.msra.mxu0 %v1399
    %1447 = vmatprep.subr.mxu0 0.0
    %1448 = vmatpush2.msra.mxu0 0.0
    %1449 = vmatprep.subr.mxu0 0.0
    %1450 = vmatpush2.msra.mxu0 0.0
    %1451 = vmatprep.subr.mxu0 0.0
    %1452 = vmatpush2.msra.mxu0 0.0
    %1453 = vmatprep.subr.mxu0 0.0
    %1454 = vmatpush2.msra.mxu0 0.0
    %1455 = vmatprep.subr.mxu0 0.0
    %1456 = vmatpush2.msra.mxu0 0.0
    %1457 = vmatprep.subr.mxu0 0.0
    %1458 = vmatpush2.msra.mxu0 0.0
    %1459 = vmatprep.subr.mxu0 0.0
    %1460 = vmatpush2.msra.mxu0 0.0
    %1461 = vmatprep.subr.mxu0 0.0
    %1462 = vmatpush2.msra.mxu0 0.0
    %1463 = vmatprep.subr.mxu0 0.0
    %1464 = vmatpush2.msra.mxu0 0.0
    %1465 = vmatprep.subr.mxu0 0.0
    %1466 = vmatpush2.msra.mxu0 0.0
    %1467 = vmatprep.subr.mxu0 0.0
    %1468 = vmatpush2.msra.mxu0 0.0
    %1469 = vmatprep.subr.mxu0 0.0
    %1470 = vmatpush2.msra.mxu0 0.0
    %1471 = vmatprep.subr.mxu0 0.0
    %1472 = vmatpush2.msra.mxu0 0.0
    %1473 = vmatprep.subr.mxu0 0.0
    %1474 = vmatpush2.msra.mxu0 0.0
    %1475 = vmatprep.subr.mxu0 0.0
    %1476 = vmatpush2.msra.mxu0 0.0
    %1477 = vmatprep.subr.mxu0 0.0
    %1478 = vmatpush2.msra.mxu0 0.0
    %1479 = vmatprep.mubr.f32.mxu0 0.0
    %1480 = vmatmul.mubr.f32.gmra.mxu0 %v1391
    %v1481 = vpop.f32.mrf.mxu0
    %v1482 = vadd.f32 0.0, %v1481
    %v1483 = vpop.f32.mrf.mxu0
    %1484 = vmatprep.mubr.f32.mxu0 0.0
    %1485 = vmatmul.mubr.f32.gmra.mxu0 %v1392
    %v1486 = vpop.f32.mrf.mxu0
    %v1487 = vadd.f32 0.0, %v1486
    %v1488 = vpop.f32.mrf.mxu0
    %1489 = vmatprep.mubr.f32.mxu0 0.0
    %1490 = vmatmul.mubr.f32.gmra.mxu0 %v1393
    %v1491 = vpop.f32.mrf.mxu0
    %v1492 = vadd.f32 0.0, %v1491
    %v1493 = vpop.f32.mrf.mxu0
    %1494 = vmatprep.mubr.f32.mxu0 0.0
    %1495 = vmatmul.mubr.f32.gmra.mxu0 %v1394
    %v1496 = vpop.f32.mrf.mxu0
    %v1497 = vadd.f32 0.0, %v1496
    %v1498 = vpop.f32.mrf.mxu0
    %1499 = vmatprep.mubr.f32.mxu0 0.0
    %1500 = vmatmul.mubr.f32.gmra.mxu0 %v1395
    %v1501 = vpop.f32.mrf.mxu0
    %v1502 = vadd.f32 0.0, %v1501
    %v1503 = vpop.f32.mrf.mxu0
    %1504 = vmatprep.mubr.f32.mxu0 0.0
    %1505 = vmatmul.mubr.f32.gmra.mxu0 %v1396
    %v1506 = vpop.f32.mrf.mxu0
    %v1507 = vadd.f32 0.0, %v1506
    %v1508 = vpop.f32.mrf.mxu0
    %1509 = vmatprep.mubr.f32.mxu0 0.0
    %1510 = vmatmul.mubr.f32.gmra.mxu0 %v1397
    %v1511 = vpop.f32.mrf.mxu0
    %v1512 = vadd.f32 0.0, %v1511
    %v1513 = vpop.f32.mrf.mxu0
    %1514 = vmatprep.mubr.f32.mxu0 0.0
    %1515 = vmatmul.mubr.f32.gmra.mxu0 %v1398
    %v1516 = vpop.f32.mrf.mxu0
    %v1517 = vadd.f32 0.0, %v1516
    %v1518 = vpop.f32.mrf.mxu0
    %1519 = vdwg.mxu0
    %v1520 = vld [vmem:[%s1] sm:$0xff]
    %v1521 = vld [vmem:[%s1 + $0x8] sm:$0xff]
    %v1522 = vld [vmem:[%s1 + $0x10] sm:$0xff]
    %v1523 = vld [vmem:[%s1 + $0x18] sm:$0xff]
    %v1524 = vld [vmem:[%s1 + $0x20] sm:$0xff]
    %v1525 = vld [vmem:[%s1 + $0x28] sm:$0xff]
    %v1526 = vld [vmem:[%s1 + $0x30] sm:$0xff]
    %v1527 = vld [vmem:[%s1 + $0x38] sm:$0xff]
    %vm1528 = vcmask 523264
    %v1530 = vsel %vm1528, %v1520, 0
    %v1533 = vsel %vm1528, %v1521, 0
    %v1536 = vsel %vm1528, %v1522, 0
    %v1539 = vsel %vm1528, %v1523, 0
    %v1542 = vsel %vm1528, %v1524, 0
    %v1545 = vsel %vm1528, %v1525, 0
    %v1548 = vsel %vm1528, %v1526, 0
    %v1551 = vsel %vm1528, %v1527, 0
    %1553 = vmatprep.subr.mxu0 0.0
    %1554 = vmatpush1.msra.mxu0 0.0
    %1555 = vmatprep.subr.mxu0 0.0
    %1556 = vmatpush1.msra.mxu0 0.0
    %1557 = vmatprep.subr.mxu0 0.0
    %1558 = vmatpush1.msra.mxu0 0.0
    %1559 = vmatprep.subr.mxu0 0.0
    %1560 = vmatpush1.msra.mxu0 0.0
    %1561 = vmatprep.subr.mxu0 0.0
    %1562 = vmatpush1.msra.mxu0 0.0
    %1563 = vmatprep.subr.mxu0 0.0
    %1564 = vmatpush1.msra.mxu0 0.0
    %1565 = vmatprep.subr.mxu0 0.0
    %1566 = vmatpush1.msra.mxu0 0.0
    %1567 = vmatprep.subr.mxu0 0.0
    %1568 = vmatpush1.msra.mxu0 0.0
    %1569 = vmatprep.subr.mxu0 0.0
    %1570 = vmatpush1.msra.mxu0 %v1517
    %1571 = vmatprep.subr.mxu0 0.0
    %1572 = vmatpush1.msra.mxu0 %v1512
    %1573 = vmatprep.subr.mxu0 0.0
    %1574 = vmatpush1.msra.mxu0 %v1507
    %1575 = vmatprep.subr.mxu0 0.0
    %1576 = vmatpush1.msra.mxu0 %v1502
    %1577 = vmatprep.subr.mxu0 0.0
    %1578 = vmatpush1.msra.mxu0 %v1497
    %1579 = vmatprep.subr.mxu0 0.0
    %1580 = vmatpush1.msra.mxu0 %v1492
    %1581 = vmatprep.subr.mxu0 0.0
    %1582 = vmatpush1.msra.mxu0 %v1487
    %1583 = vmatprep.subr.mxu0 0.0
    %1584 = vmatpush1.msra.mxu0 %v1482
    %1585 = vmatprep.subr.mxu0 0.0
    %1586 = vmatpush2.msra.mxu0 0.0
    %1587 = vmatprep.subr.mxu0 0.0
    %1588 = vmatpush2.msra.mxu0 0.0
    %1589 = vmatprep.subr.mxu0 0.0
    %1590 = vmatpush2.msra.mxu0 0.0
    %1591 = vmatprep.subr.mxu0 0.0
    %1592 = vmatpush2.msra.mxu0 0.0
    %1593 = vmatprep.subr.mxu0 0.0
    %1594 = vmatpush2.msra.mxu0 0.0
    %1595 = vmatprep.subr.mxu0 0.0
    %1596 = vmatpush2.msra.mxu0 0.0
    %1597 = vmatprep.subr.mxu0 0.0
    %1598 = vmatpush2.msra.mxu0 0.0
    %1599 = vmatprep.subr.mxu0 0.0
    %1600 = vmatpush2.msra.mxu0 0.0
    %1601 = vmatprep.subr.mxu0 0.0
    %1602 = vmatpush2.msra.mxu0 0.0
    %1603 = vmatprep.subr.mxu0 0.0
    %1604 = vmatpush2.msra.mxu0 0.0
    %1605 = vmatprep.subr.mxu0 0.0
    %1606 = vmatpush2.msra.mxu0 0.0
    %1607 = vmatprep.subr.mxu0 0.0
    %1608 = vmatpush2.msra.mxu0 0.0
    %1609 = vmatprep.subr.mxu0 0.0
    %1610 = vmatpush2.msra.mxu0 0.0
    %1611 = vmatprep.subr.mxu0 0.0
    %1612 = vmatpush2.msra.mxu0 0.0
    %1613 = vmatprep.subr.mxu0 0.0
    %1614 = vmatpush2.msra.mxu0 0.0
    %1615 = vmatprep.subr.mxu0 0.0
    %1616 = vmatpush2.msra.mxu0 0.0
    %1617 = vmatprep.mubr.f32.mxu0 0.0
    %1618 = vmatmul.mubr.f32.gmra.mxu0 %v1530
    %v1619 = vpop.f32.mrf.mxu0
    %v1620 = vadd.f32 %v302, %v1619
    %v1621 = vpop.f32.mrf.mxu0
    %1622 = vmatprep.mubr.f32.mxu0 0.0
    %1623 = vmatmul.mubr.f32.gmra.mxu0 %v1533
    %v1624 = vpop.f32.mrf.mxu0
    %v1625 = vadd.f32 %v303, %v1624
    %v1626 = vpop.f32.mrf.mxu0
    %1627 = vmatprep.mubr.f32.mxu0 0.0
    %1628 = vmatmul.mubr.f32.gmra.mxu0 %v1536
    %v1629 = vpop.f32.mrf.mxu0
    %v1630 = vadd.f32 %v304, %v1629
    %v1631 = vpop.f32.mrf.mxu0
    %1632 = vmatprep.mubr.f32.mxu0 0.0
    %1633 = vmatmul.mubr.f32.gmra.mxu0 %v1539
    %v1634 = vpop.f32.mrf.mxu0
    %v1635 = vadd.f32 %v305, %v1634
    %v1636 = vpop.f32.mrf.mxu0
    %1637 = vmatprep.mubr.f32.mxu0 0.0
    %1638 = vmatmul.mubr.f32.gmra.mxu0 %v1542
    %v1639 = vpop.f32.mrf.mxu0
    %v1640 = vadd.f32 %v306, %v1639
    %v1641 = vpop.f32.mrf.mxu0
    %1642 = vmatprep.mubr.f32.mxu0 0.0
    %1643 = vmatmul.mubr.f32.gmra.mxu0 %v1545
    %v1644 = vpop.f32.mrf.mxu0
    %v1645 = vadd.f32 %v307, %v1644
    %v1646 = vpop.f32.mrf.mxu0
    %1647 = vmatprep.mubr.f32.mxu0 0.0
    %1648 = vmatmul.mubr.f32.gmra.mxu0 %v1548
    %v1649 = vpop.f32.mrf.mxu0
    %v1650 = vadd.f32 %v308, %v1649
    %v1651 = vpop.f32.mrf.mxu0
    %1652 = vmatprep.mubr.f32.mxu0 0.0
    %1653 = vmatmul.mubr.f32.gmra.mxu0 %v1551
    %v1654 = vpop.f32.mrf.mxu0
    %v1655 = vadd.f32 %v309, %v1654
    %v1656 = vpop.f32.mrf.mxu0
    %1657 = vdwg.mxu0
    %s1658 = scalar_lea.vmem %s4, 1
    %v1659 = vld [vmem:[%s1658] sm:$0x1]
    %v1660 = vmul.f32 %v1620, %v1620
    %v1661 = vmul.f32 %v1625, %v1625
    %v1662 = vmul.f32 %v1630, %v1630
    %v1663 = vmul.f32 %v1635, %v1635
    %v1664 = vmul.f32 %v1640, %v1640
    %v1665 = vmul.f32 %v1645, %v1645
    %v1666 = vmul.f32 %v1650, %v1650
    %v1667 = vmul.f32 %v1655, %v1655
    %1668 = vadd.xlane.f32.xlu0 %v1660
    %v1669 = vpop.xlane.xlu0 %1668
    %1670 = vadd.xlane.f32.xlu0 %v1661
    %v1671 = vpop.xlane.xlu0 %1670
    %1672 = vadd.xlane.f32.xlu0 %v1662
    %v1673 = vpop.xlane.xlu0 %1672
    %1674 = vadd.xlane.f32.xlu0 %v1663
    %v1675 = vpop.xlane.xlu0 %1674
    %1676 = vadd.xlane.f32.xlu0 %v1664
    %v1677 = vpop.xlane.xlu0 %1676
    %1678 = vadd.xlane.f32.xlu0 %v1665
    %v1679 = vpop.xlane.xlu0 %1678
    %1680 = vadd.xlane.f32.xlu0 %v1666
    %v1681 = vpop.xlane.xlu0 %1680
    %1682 = vadd.xlane.f32.xlu0 %v1667
    %v1683 = vpop.xlane.xlu0 %1682
    %v1684 = vmul.f32 %v1669, %v263
    %v1685 = vmul.f32 %v1671, %v263
    %v1686 = vmul.f32 %v1673, %v263
    %v1687 = vmul.f32 %v1675, %v263
    %v1688 = vmul.f32 %v1677, %v263
    %v1689 = vmul.f32 %v1679, %v263
    %v1690 = vmul.f32 %v1681, %v263
    %v1691 = vmul.f32 %v1683, %v263
    %v1692 = vadd.f32 %v1684, 1e-05
    %v1693 = vadd.f32 %v1685, 1e-05
    %v1694 = vadd.f32 %v1686, 1e-05
    %v1695 = vadd.f32 %v1687, 1e-05
    %v1696 = vadd.f32 %v1688, 1e-05
    %v1697 = vadd.f32 %v1689, 1e-05
    %v1698 = vadd.f32 %v1690, 1e-05
    %v1699 = vadd.f32 %v1691, 1e-05
    %v1700 = vrsqrt.pop %v1692
    %v1701 = vrsqrt.pop %v1693
    %v1702 = vrsqrt.pop %v1694
    %v1703 = vrsqrt.pop %v1695
    %v1704 = vrsqrt.pop %v1696
    %v1705 = vrsqrt.pop %v1697
    %v1706 = vrsqrt.pop %v1698
    %v1707 = vrsqrt.pop %v1699
    %v1708 = vmul.f32 %v1620, %v1700
    %v1709 = vmul.f32 %v1625, %v1701
    %v1710 = vmul.f32 %v1630, %v1702
    %v1711 = vmul.f32 %v1635, %v1703
    %v1712 = vmul.f32 %v1640, %v1704
    %v1713 = vmul.f32 %v1645, %v1705
    %v1714 = vmul.f32 %v1650, %v1706
    %v1715 = vmul.f32 %v1655, %v1707
    %v1717 = vlaneseq
    %v1718 = vshrl.u32 %v1717, 7
    %v1719 = vsub.s32 0, %v1718
    %v1720 = vrot.slane %v1659, %v1719
    %v1722 = vmul.f32 %v1708, %v1720
    %v1723 = vmul.f32 %v1709, %v1720
    %v1724 = vmul.f32 %v1710, %v1720
    %v1725 = vmul.f32 %v1711, %v1720
    %v1726 = vmul.f32 %v1712, %v1720
    %v1727 = vmul.f32 %v1713, %v1720
    %v1728 = vmul.f32 %v1714, %v1720
    %v1729 = vmul.f32 %v1715, %v1720
    %s1730 = scalar_lea.vmem %s5, 256
    %v1731 = vld [vmem:[%s1730] sm:$0xff]
    %v1732 = vld [vmem:[%s1730 + $0x8] sm:$0xff]
    %v1733 = vld [vmem:[%s1730 + $0x10] sm:$0xff]
    %v1734 = vld [vmem:[%s1730 + $0x18] sm:$0xff]
    %v1735 = vld [vmem:[%s1730 + $0x20] sm:$0xff]
    %v1736 = vld [vmem:[%s1730 + $0x28] sm:$0xff]
    %v1737 = vld [vmem:[%s1730 + $0x30] sm:$0xff]
    %v1738 = vld [vmem:[%s1730 + $0x38] sm:$0xff]
    %v1739 = vld [vmem:[%s1730 + $0x40] sm:$0xff]
    %v1740 = vld [vmem:[%s1730 + $0x48] sm:$0xff]
    %v1741 = vld [vmem:[%s1730 + $0x50] sm:$0xff]
    %v1742 = vld [vmem:[%s1730 + $0x58] sm:$0xff]
    %v1743 = vld [vmem:[%s1730 + $0x60] sm:$0xff]
    %v1744 = vld [vmem:[%s1730 + $0x68] sm:$0xff]
    %v1745 = vld [vmem:[%s1730 + $0x70] sm:$0xff]
    %v1746 = vld [vmem:[%s1730 + $0x78] sm:$0xff]
    %v1747 = vld [vmem:[%s1730 + $0x80] sm:$0xff]
    %v1748 = vld [vmem:[%s1730 + $0x88] sm:$0xff]
    %v1749 = vld [vmem:[%s1730 + $0x90] sm:$0xff]
    %v1750 = vld [vmem:[%s1730 + $0x98] sm:$0xff]
    %v1751 = vld [vmem:[%s1730 + $0xa0] sm:$0xff]
    %v1752 = vld [vmem:[%s1730 + $0xa8] sm:$0xff]
    %v1753 = vld [vmem:[%s1730 + $0xb0] sm:$0xff]
    %v1754 = vld [vmem:[%s1730 + $0xb8] sm:$0xff]
    %v1755 = vld [vmem:[%s1730 + $0xc0] sm:$0xff]
    %v1756 = vld [vmem:[%s1730 + $0xc8] sm:$0xff]
    %v1757 = vld [vmem:[%s1730 + $0xd0] sm:$0xff]
    %v1758 = vld [vmem:[%s1730 + $0xd8] sm:$0xff]
    %v1759 = vld [vmem:[%s1730 + $0xe0] sm:$0xff]
    %v1760 = vld [vmem:[%s1730 + $0xe8] sm:$0xff]
    %v1761 = vld [vmem:[%s1730 + $0xf0] sm:$0xff]
    %v1762 = vld [vmem:[%s1730 + $0xf8] sm:$0xff]
    %1763 = vmatprep.subr.mxu0 %v1762
    %1764 = vmatpush1.msra.mxu0 %v1761
    %1765 = vmatprep.subr.mxu0 %v1760
    %1766 = vmatpush1.msra.mxu0 %v1759
    %1767 = vmatprep.subr.mxu0 %v1758
    %1768 = vmatpush1.msra.mxu0 %v1757
    %1769 = vmatprep.subr.mxu0 %v1756
    %1770 = vmatpush1.msra.mxu0 %v1755
    %1771 = vmatprep.subr.mxu0 %v1754
    %1772 = vmatpush1.msra.mxu0 %v1753
    %1773 = vmatprep.subr.mxu0 %v1752
    %1774 = vmatpush1.msra.mxu0 %v1751
    %1775 = vmatprep.subr.mxu0 %v1750
    %1776 = vmatpush1.msra.mxu0 %v1749
    %1777 = vmatprep.subr.mxu0 %v1748
    %1778 = vmatpush1.msra.mxu0 %v1747
    %1779 = vmatprep.subr.mxu0 %v1746
    %1780 = vmatpush1.msra.mxu0 %v1745
    %1781 = vmatprep.subr.mxu0 %v1744
    %1782 = vmatpush1.msra.mxu0 %v1743
    %1783 = vmatprep.subr.mxu0 %v1742
    %1784 = vmatpush1.msra.mxu0 %v1741
    %1785 = vmatprep.subr.mxu0 %v1740
    %1786 = vmatpush1.msra.mxu0 %v1739
    %1787 = vmatprep.subr.mxu0 %v1738
    %1788 = vmatpush1.msra.mxu0 %v1737
    %1789 = vmatprep.subr.mxu0 %v1736
    %1790 = vmatpush1.msra.mxu0 %v1735
    %1791 = vmatprep.subr.mxu0 %v1734
    %1792 = vmatpush1.msra.mxu0 %v1733
    %1793 = vmatprep.subr.mxu0 %v1732
    %1794 = vmatpush1.msra.mxu0 %v1731
    %1795 = vmatprep.subr.mxu0 0.0
    %1796 = vmatpush2.msra.mxu0 0.0
    %1797 = vmatprep.subr.mxu0 0.0
    %1798 = vmatpush2.msra.mxu0 0.0
    %1799 = vmatprep.subr.mxu0 0.0
    %1800 = vmatpush2.msra.mxu0 0.0
    %1801 = vmatprep.subr.mxu0 0.0
    %1802 = vmatpush2.msra.mxu0 0.0
    %1803 = vmatprep.subr.mxu0 0.0
    %1804 = vmatpush2.msra.mxu0 0.0
    %1805 = vmatprep.subr.mxu0 0.0
    %1806 = vmatpush2.msra.mxu0 0.0
    %1807 = vmatprep.subr.mxu0 0.0
    %1808 = vmatpush2.msra.mxu0 0.0
    %1809 = vmatprep.subr.mxu0 0.0
    %1810 = vmatpush2.msra.mxu0 0.0
    %1811 = vmatprep.subr.mxu0 0.0
    %1812 = vmatpush2.msra.mxu0 0.0
    %1813 = vmatprep.subr.mxu0 0.0
    %1814 = vmatpush2.msra.mxu0 0.0
    %1815 = vmatprep.subr.mxu0 0.0
    %1816 = vmatpush2.msra.mxu0 0.0
    %1817 = vmatprep.subr.mxu0 0.0
    %1818 = vmatpush2.msra.mxu0 0.0
    %1819 = vmatprep.subr.mxu0 0.0
    %1820 = vmatpush2.msra.mxu0 0.0
    %1821 = vmatprep.subr.mxu0 0.0
    %1822 = vmatpush2.msra.mxu0 0.0
    %1823 = vmatprep.subr.mxu0 0.0
    %1824 = vmatpush2.msra.mxu0 0.0
    %1825 = vmatprep.subr.mxu0 0.0
    %1826 = vmatpush2.msra.mxu0 0.0
    %1827 = vmatprep.mubr.f32.mxu0 0.0
    %1828 = vmatmul.mubr.f32.gmra.mxu0 %v1722
    %v1829 = vpop.f32.mrf.mxu0
    %v1830 = vadd.f32 0.0, %v1829
    %v1831 = vpop.f32.mrf.mxu0
    %v1832 = vadd.f32 0.0, %v1831
    %1833 = vmatprep.mubr.f32.mxu0 0.0
    %1834 = vmatmul.mubr.f32.gmra.mxu0 %v1723
    %v1835 = vpop.f32.mrf.mxu0
    %v1836 = vadd.f32 0.0, %v1835
    %v1837 = vpop.f32.mrf.mxu0
    %v1838 = vadd.f32 0.0, %v1837
    %1839 = vmatprep.mubr.f32.mxu0 0.0
    %1840 = vmatmul.mubr.f32.gmra.mxu0 %v1724
    %v1841 = vpop.f32.mrf.mxu0
    %v1842 = vadd.f32 0.0, %v1841
    %v1843 = vpop.f32.mrf.mxu0
    %v1844 = vadd.f32 0.0, %v1843
    %1845 = vmatprep.mubr.f32.mxu0 0.0
    %1846 = vmatmul.mubr.f32.gmra.mxu0 %v1725
    %v1847 = vpop.f32.mrf.mxu0
    %v1848 = vadd.f32 0.0, %v1847
    %v1849 = vpop.f32.mrf.mxu0
    %v1850 = vadd.f32 0.0, %v1849
    %1851 = vmatprep.mubr.f32.mxu0 0.0
    %1852 = vmatmul.mubr.f32.gmra.mxu0 %v1726
    %v1853 = vpop.f32.mrf.mxu0
    %v1854 = vadd.f32 0.0, %v1853
    %v1855 = vpop.f32.mrf.mxu0
    %v1856 = vadd.f32 0.0, %v1855
    %1857 = vmatprep.mubr.f32.mxu0 0.0
    %1858 = vmatmul.mubr.f32.gmra.mxu0 %v1727
    %v1859 = vpop.f32.mrf.mxu0
    %v1860 = vadd.f32 0.0, %v1859
    %v1861 = vpop.f32.mrf.mxu0
    %v1862 = vadd.f32 0.0, %v1861
    %1863 = vmatprep.mubr.f32.mxu0 0.0
    %1864 = vmatmul.mubr.f32.gmra.mxu0 %v1728
    %v1865 = vpop.f32.mrf.mxu0
    %v1866 = vadd.f32 0.0, %v1865
    %v1867 = vpop.f32.mrf.mxu0
    %v1868 = vadd.f32 0.0, %v1867
    %1869 = vmatprep.mubr.f32.mxu0 0.0
    %1870 = vmatmul.mubr.f32.gmra.mxu0 %v1729
    %v1871 = vpop.f32.mrf.mxu0
    %v1872 = vadd.f32 0.0, %v1871
    %v1873 = vpop.f32.mrf.mxu0
    %v1874 = vadd.f32 0.0, %v1873
    %1875 = vdwg.mxu0
    %1876 = vst [vmem:[#allocation2 + $0x18] sm:$0xff] %v1830
    %1877 = vst [vmem:[#allocation2 + $0x20] sm:$0xff] %v1836
    %1878 = vst [vmem:[#allocation2 + $0x28] sm:$0xff] %v1842
    %1879 = vst [vmem:[#allocation2 + $0x30] sm:$0xff] %v1848
    %1880 = vst [vmem:[#allocation2 + $0x38] sm:$0xff] %v1854
    %1881 = vst [vmem:[#allocation2 + $0x40] sm:$0xff] %v1860
    %1882 = vst [vmem:[#allocation2 + $0x48] sm:$0xff] %v1866
    %1883 = vst [vmem:[#allocation2 + $0x50] sm:$0xff] %v1872
    %s1884 = scalar_lea.vmem %s7, 1
    %v1885 = vld [vmem:[%s1884] sm:$0x1]
    %v1887 = vlaneseq
    %v1888 = vshrl.u32 %v1887, 7
    %v1889 = vsub.s32 0, %v1888
    %v1890 = vrot.slane %v1885, %v1889
    %v1892 = vadd.f32 %v1890, 0.0
    %v1893 = vld [vmem:[#allocation2] sm:$0xff]
    %v1894 = vld [vmem:[#allocation2 + $0x8] sm:$0xff]
    %v1895 = vld [vmem:[#allocation2 + $0x10] sm:$0xff]
    %v1896 = vld [vmem:[#allocation2 + $0x18] sm:$0xff]
    %v1897 = vld [vmem:[#allocation2 + $0x20] sm:$0xff]
    %v1898 = vld [vmem:[#allocation2 + $0x28] sm:$0xff]
    %v1899 = vld [vmem:[#allocation2 + $0x30] sm:$0xff]
    %v1900 = vld [vmem:[#allocation2 + $0x38] sm:$0xff]
    %s1901 = scalar_lea.vmem %s6, 4
    %v1902 = vld [vmem:[%s1901] sm:$0x1]
    %v1903 = vlaneseq
    %v1904 = vshrl.u32 %v1903, 7
    %v1905 = vsub.s32 0, %v1904
    %v1906 = vrot.slane %v1902, %v1905
    %v1907 = vmul.f32 %v1893, %v1906
    %v1908 = vmul.f32 %v1894, %v1906
    %v1909 = vmul.f32 %v1895, %v1906
    %v1910 = vmul.f32 %v1896, %v1906
    %v1911 = vmul.f32 %v1897, %v1906
    %v1912 = vmul.f32 %v1898, %v1906
    %v1913 = vmul.f32 %v1899, %v1906
    %v1914 = vmul.f32 %v1900, %v1906
    %v1915 = vadd.f32 %v1892, %v1907
    %v1916 = vadd.f32 %v1892, %v1908
    %v1917 = vadd.f32 %v1892, %v1909
    %v1918 = vadd.f32 %v1892, %v1910
    %v1919 = vadd.f32 %v1892, %v1911
    %v1920 = vadd.f32 %v1892, %v1912
    %v1921 = vadd.f32 %v1892, %v1913
    %v1922 = vadd.f32 %v1892, %v1914
    %v1923 = vld [vmem:[#allocation2 + $0x40] sm:$0xff]
    %v1924 = vld [vmem:[%s1901 + $0x1] sm:$0x1]
    %v1925 = vlaneseq
    %v1926 = vshrl.u32 %v1925, 7
    %v1927 = vsub.s32 0, %v1926
    %v1928 = vrot.slane %v1924, %v1927
    %v1929 = vmul.f32 %v1894, %v1928
    %v1930 = vmul.f32 %v1895, %v1928
    %v1931 = vmul.f32 %v1896, %v1928
    %v1932 = vmul.f32 %v1897, %v1928
    %v1933 = vmul.f32 %v1898, %v1928
    %v1934 = vmul.f32 %v1899, %v1928
    %v1935 = vmul.f32 %v1900, %v1928
    %v1936 = vmul.f32 %v1923, %v1928
    %v1937 = vadd.f32 %v1915, %v1929
    %v1938 = vadd.f32 %v1916, %v1930
    %v1939 = vadd.f32 %v1917, %v1931
    %v1940 = vadd.f32 %v1918, %v1932
    %v1941 = vadd.f32 %v1919, %v1933
    %v1942 = vadd.f32 %v1920, %v1934
    %v1943 = vadd.f32 %v1921, %v1935
    %v1944 = vadd.f32 %v1922, %v1936
    %v1945 = vld [vmem:[#allocation2 + $0x48] sm:$0xff]
    %v1946 = vld [vmem:[%s1901 + $0x2] sm:$0x1]
    %v1947 = vlaneseq
    %v1948 = vshrl.u32 %v1947, 7
    %v1949 = vsub.s32 0, %v1948
    %v1950 = vrot.slane %v1946, %v1949
    %v1951 = vmul.f32 %v1895, %v1950
    %v1952 = vmul.f32 %v1896, %v1950
    %v1953 = vmul.f32 %v1897, %v1950
    %v1954 = vmul.f32 %v1898, %v1950
    %v1955 = vmul.f32 %v1899, %v1950
    %v1956 = vmul.f32 %v1900, %v1950
    %v1957 = vmul.f32 %v1923, %v1950
    %v1958 = vmul.f32 %v1945, %v1950
    %v1959 = vadd.f32 %v1937, %v1951
    %v1960 = vadd.f32 %v1938, %v1952
    %v1961 = vadd.f32 %v1939, %v1953
    %v1962 = vadd.f32 %v1940, %v1954
    %v1963 = vadd.f32 %v1941, %v1955
    %v1964 = vadd.f32 %v1942, %v1956
    %v1965 = vadd.f32 %v1943, %v1957
    %v1966 = vadd.f32 %v1944, %v1958
    %v1967 = vld [vmem:[#allocation2 + $0x18] sm:$0xff]
    %v1968 = vld [vmem:[#allocation2 + $0x20] sm:$0xff]
    %v1969 = vld [vmem:[#allocation2 + $0x28] sm:$0xff]
    %v1970 = vld [vmem:[#allocation2 + $0x30] sm:$0xff]
    %v1971 = vld [vmem:[#allocation2 + $0x38] sm:$0xff]
    %v1972 = vld [vmem:[#allocation2 + $0x40] sm:$0xff]
    %v1973 = vld [vmem:[#allocation2 + $0x48] sm:$0xff]
    %v1974 = vld [vmem:[#allocation2 + $0x50] sm:$0xff]
    %v1975 = vld [vmem:[%s1901 + $0x3] sm:$0x1]
    %v1976 = vlaneseq
    %v1977 = vshrl.u32 %v1976, 7
    %v1978 = vsub.s32 0, %v1977
    %v1979 = vrot.slane %v1975, %v1978
    %v1980 = vmul.f32 %v1967, %v1979
    %v1981 = vmul.f32 %v1968, %v1979
    %v1982 = vmul.f32 %v1969, %v1979
    %v1983 = vmul.f32 %v1970, %v1979
    %v1984 = vmul.f32 %v1971, %v1979
    %v1985 = vmul.f32 %v1972, %v1979
    %v1986 = vmul.f32 %v1973, %v1979
    %v1987 = vmul.f32 %v1974, %v1979
    %v1988 = vadd.f32 %v1959, %v1980
    %v1989 = vadd.f32 %v1960, %v1981
    %v1990 = vadd.f32 %v1961, %v1982
    %v1991 = vadd.f32 %v1962, %v1983
    %v1992 = vadd.f32 %v1963, %v1984
    %v1993 = vadd.f32 %v1964, %v1985
    %v1994 = vadd.f32 %v1965, %v1986
    %v1995 = vadd.f32 %v1966, %v1987
    %v1996 = vxor.u32 %v1988, 2147483648
    %v1997 = vxor.u32 %v1989, 2147483648
    %v1998 = vxor.u32 %v1990, 2147483648
    %v1999 = vxor.u32 %v1991, 2147483648
    %v2000 = vxor.u32 %v1992, 2147483648
    %v2001 = vxor.u32 %v1993, 2147483648
    %v2002 = vxor.u32 %v1994, 2147483648
    %v2003 = vxor.u32 %v1995, 2147483648
    %v2004 = vmul.f32 %v1996, 1.442695
    %v2005 = vpow.pop %v2004
    %v2006 = vmul.f32 %v1997, 1.442695
    %v2007 = vpow.pop %v2006
    %v2008 = vmul.f32 %v1998, 1.442695
    %v2009 = vpow.pop %v2008
    %v2010 = vmul.f32 %v1999, 1.442695
    %v2011 = vpow.pop %v2010
    %v2012 = vmul.f32 %v2000, 1.442695
    %v2013 = vpow.pop %v2012
    %v2014 = vmul.f32 %v2001, 1.442695
    %v2015 = vpow.pop %v2014
    %v2016 = vmul.f32 %v2002, 1.442695
    %v2017 = vpow.pop %v2016
    %v2018 = vmul.f32 %v2003, 1.442695
    %v2019 = vpow.pop %v2018
    %v2020 = vadd.f32 %v2005, 1.0
    %v2021 = vadd.f32 %v2007, 1.0
    %v2022 = vadd.f32 %v2009, 1.0
    %v2023 = vadd.f32 %v2011, 1.0
    %v2024 = vadd.f32 %v2013, 1.0
    %v2025 = vadd.f32 %v2015, 1.0
    %v2026 = vadd.f32 %v2017, 1.0
    %v2027 = vadd.f32 %v2019, 1.0
    %v2028 = vrcp.pop %v2020
    %v2029 = vmul.f32 1.0, %v2028
    %v2030 = vrcp.pop %v2021
    %v2031 = vmul.f32 1.0, %v2030
    %v2032 = vrcp.pop %v2022
    %v2033 = vmul.f32 1.0, %v2032
    %v2034 = vrcp.pop %v2023
    %v2035 = vmul.f32 1.0, %v2034
    %v2036 = vrcp.pop %v2024
    %v2037 = vmul.f32 1.0, %v2036
    %v2038 = vrcp.pop %v2025
    %v2039 = vmul.f32 1.0, %v2038
    %v2040 = vrcp.pop %v2026
    %v2041 = vmul.f32 1.0, %v2040
    %v2042 = vrcp.pop %v2027
    %v2043 = vmul.f32 1.0, %v2042
    %v2044 = vmul.f32 %v1988, %v2029
    %v2045 = vmul.f32 %v1989, %v2031
    %v2046 = vmul.f32 %v1990, %v2033
    %v2047 = vmul.f32 %v1991, %v2035
    %v2048 = vmul.f32 %v1992, %v2037
    %v2049 = vmul.f32 %v1993, %v2039
    %v2050 = vmul.f32 %v1994, %v2041
    %v2051 = vmul.f32 %v1995, %v2043
    %s2052 = scalar_lea.vmem [#allocation4], 128
    %v2053 = vld [vmem:[%s2052] sm:$0xff]
    %v2054 = vld [vmem:[%s2052 + $0x8] sm:$0xff]
    %v2055 = vld [vmem:[%s2052 + $0x10] sm:$0xff]
    %v2056 = vld [vmem:[%s2052 + $0x18] sm:$0xff]
    %v2057 = vld [vmem:[%s2052 + $0x20] sm:$0xff]
    %v2058 = vld [vmem:[%s2052 + $0x28] sm:$0xff]
    %v2059 = vld [vmem:[%s2052 + $0x30] sm:$0xff]
    %v2060 = vld [vmem:[%s2052 + $0x38] sm:$0xff]
    %v2061 = vld [vmem:[%s2052 + $0x40] sm:$0xff]
    %v2062 = vld [vmem:[%s2052 + $0x48] sm:$0xff]
    %v2063 = vld [vmem:[%s2052 + $0x50] sm:$0xff]
    %v2064 = vld [vmem:[%s2052 + $0x58] sm:$0xff]
    %v2065 = vld [vmem:[%s2052 + $0x60] sm:$0xff]
    %v2066 = vld [vmem:[%s2052 + $0x68] sm:$0xff]
    %v2067 = vld [vmem:[%s2052 + $0x70] sm:$0xff]
    %v2068 = vld [vmem:[%s2052 + $0x78] sm:$0xff]
    %s2069 = scalar_lea.vmem %s10, 1
    %v2070 = vld [vmem:[%s2069] sm:$0x1]
    %v2072 = vlaneseq
    %v2073 = vshrl.u32 %v2072, 7
    %v2074 = vsub.s32 0, %v2073
    %v2075 = vrot.slane %v2070, %v2074
    %2077 = vmatprep.subr.mxu0 0.0
    %2078 = vmatpush1.msra.mxu0 %v2068
    %2079 = vmatprep.subr.mxu0 0.0
    %2080 = vmatpush1.msra.mxu0 %v2067
    %2081 = vmatprep.subr.mxu0 0.0
    %2082 = vmatpush1.msra.mxu0 %v2066
    %2083 = vmatprep.subr.mxu0 0.0
    %2084 = vmatpush1.msra.mxu0 %v2065
    %2085 = vmatprep.subr.mxu0 0.0
    %2086 = vmatpush1.msra.mxu0 %v2064
    %2087 = vmatprep.subr.mxu0 0.0
    %2088 = vmatpush1.msra.mxu0 %v2063
    %2089 = vmatprep.subr.mxu0 0.0
    %2090 = vmatpush1.msra.mxu0 %v2062
    %2091 = vmatprep.subr.mxu0 0.0
    %2092 = vmatpush1.msra.mxu0 %v2061
    %2093 = vmatprep.subr.mxu0 0.0
    %2094 = vmatpush1.msra.mxu0 %v2060
    %2095 = vmatprep.subr.mxu0 0.0
    %2096 = vmatpush1.msra.mxu0 %v2059
    %2097 = vmatprep.subr.mxu0 0.0
    %2098 = vmatpush1.msra.mxu0 %v2058
    %2099 = vmatprep.subr.mxu0 0.0
    %2100 = vmatpush1.msra.mxu0 %v2057
    %2101 = vmatprep.subr.mxu0 0.0
    %2102 = vmatpush1.msra.mxu0 %v2056
    %2103 = vmatprep.subr.mxu0 0.0
    %2104 = vmatpush1.msra.mxu0 %v2055
    %2105 = vmatprep.subr.mxu0 0.0
    %2106 = vmatpush1.msra.mxu0 %v2054
    %2107 = vmatprep.subr.mxu0 0.0
    %2108 = vmatpush1.msra.mxu0 %v2053
    %2109 = vmatprep.subr.mxu0 0.0
    %2110 = vmatpush2.msra.mxu0 0.0
    %2111 = vmatprep.subr.mxu0 0.0
    %2112 = vmatpush2.msra.mxu0 0.0
    %2113 = vmatprep.subr.mxu0 0.0
    %2114 = vmatpush2.msra.mxu0 0.0
    %2115 = vmatprep.subr.mxu0 0.0
    %2116 = vmatpush2.msra.mxu0 0.0
    %2117 = vmatprep.subr.mxu0 0.0
    %2118 = vmatpush2.msra.mxu0 0.0
    %2119 = vmatprep.subr.mxu0 0.0
    %2120 = vmatpush2.msra.mxu0 0.0
    %2121 = vmatprep.subr.mxu0 0.0
    %2122 = vmatpush2.msra.mxu0 0.0
    %2123 = vmatprep.subr.mxu0 0.0
    %2124 = vmatpush2.msra.mxu0 0.0
    %2125 = vmatprep.subr.mxu0 0.0
    %2126 = vmatpush2.msra.mxu0 0.0
    %2127 = vmatprep.subr.mxu0 0.0
    %2128 = vmatpush2.msra.mxu0 0.0
    %2129 = vmatprep.subr.mxu0 0.0
    %2130 = vmatpush2.msra.mxu0 0.0
    %2131 = vmatprep.subr.mxu0 0.0
    %2132 = vmatpush2.msra.mxu0 0.0
    %2133 = vmatprep.subr.mxu0 0.0
    %2134 = vmatpush2.msra.mxu0 0.0
    %2135 = vmatprep.subr.mxu0 0.0
    %2136 = vmatpush2.msra.mxu0 0.0
    %2137 = vmatprep.subr.mxu0 0.0
    %2138 = vmatpush2.msra.mxu0 0.0
    %2139 = vmatprep.subr.mxu0 0.0
    %2140 = vmatpush2.msra.mxu0 0.0
    %2141 = vmatprep.mubr.f32.mxu0 0.0
    %2142 = vmatmul.mubr.f32.gmra.mxu0 %v2044
    %v2143 = vpop.f32.mrf.mxu0
    %v2144 = vadd.f32 %v2075, %v2143
    %v2145 = vpop.f32.mrf.mxu0
    %2146 = vmatprep.mubr.f32.mxu0 0.0
    %2147 = vmatmul.mubr.f32.gmra.mxu0 %v2045
    %v2148 = vpop.f32.mrf.mxu0
    %v2149 = vadd.f32 %v2075, %v2148
    %v2150 = vpop.f32.mrf.mxu0
    %2151 = vmatprep.mubr.f32.mxu0 0.0
    %2152 = vmatmul.mubr.f32.gmra.mxu0 %v2046
    %v2153 = vpop.f32.mrf.mxu0
    %v2154 = vadd.f32 %v2075, %v2153
    %v2155 = vpop.f32.mrf.mxu0
    %2156 = vmatprep.mubr.f32.mxu0 0.0
    %2157 = vmatmul.mubr.f32.gmra.mxu0 %v2047
    %v2158 = vpop.f32.mrf.mxu0
    %v2159 = vadd.f32 %v2075, %v2158
    %v2160 = vpop.f32.mrf.mxu0
    %2161 = vmatprep.mubr.f32.mxu0 0.0
    %2162 = vmatmul.mubr.f32.gmra.mxu0 %v2048
    %v2163 = vpop.f32.mrf.mxu0
    %v2164 = vadd.f32 %v2075, %v2163
    %v2165 = vpop.f32.mrf.mxu0
    %2166 = vmatprep.mubr.f32.mxu0 0.0
    %2167 = vmatmul.mubr.f32.gmra.mxu0 %v2049
    %v2168 = vpop.f32.mrf.mxu0
    %v2169 = vadd.f32 %v2075, %v2168
    %v2170 = vpop.f32.mrf.mxu0
    %2171 = vmatprep.mubr.f32.mxu0 0.0
    %2172 = vmatmul.mubr.f32.gmra.mxu0 %v2050
    %v2173 = vpop.f32.mrf.mxu0
    %v2174 = vadd.f32 %v2075, %v2173
    %v2175 = vpop.f32.mrf.mxu0
    %2176 = vmatprep.mubr.f32.mxu0 0.0
    %2177 = vmatmul.mubr.f32.gmra.mxu0 %v2051
    %v2178 = vpop.f32.mrf.mxu0
    %v2179 = vadd.f32 %v2075, %v2178
    %v2180 = vpop.f32.mrf.mxu0
    %2181 = vdwg.mxu0
    %v2182 = vmax.f32 %v2144, 0.0
    %v2183 = vmax.f32 %v2149, 0.0
    %v2184 = vmax.f32 %v2154, 0.0
    %v2185 = vmax.f32 %v2159, 0.0
    %v2186 = vmax.f32 %v2164, 0.0
    %v2187 = vmax.f32 %v2169, 0.0
    %v2188 = vmax.f32 %v2174, 0.0
    %v2189 = vmax.f32 %v2179, 0.0
    %vm2190 = vcmp.ne.f32.partialorder %v2144, %v2144
    %vm2191 = vcmp.ne.f32.partialorder %v2149, %v2149
    %vm2192 = vcmp.ne.f32.partialorder %v2154, %v2154
    %vm2193 = vcmp.ne.f32.partialorder %v2159, %v2159
    %vm2194 = vcmp.ne.f32.partialorder %v2164, %v2164
    %vm2195 = vcmp.ne.f32.partialorder %v2169, %v2169
    %vm2196 = vcmp.ne.f32.partialorder %v2174, %v2174
    %vm2197 = vcmp.ne.f32.partialorder %v2179, %v2179
    %v2198 = vadd.f32 %v2144, 0.0
    %v2199 = vadd.f32 %v2149, 0.0
    %v2200 = vadd.f32 %v2154, 0.0
    %v2201 = vadd.f32 %v2159, 0.0
    %v2202 = vadd.f32 %v2164, 0.0
    %v2203 = vadd.f32 %v2169, 0.0
    %v2204 = vadd.f32 %v2174, 0.0
    %v2205 = vadd.f32 %v2179, 0.0
    %v2206 = vand.u32 2147483647, %v2144
    %v2207 = vand.u32 2147483647, %v2149
    %v2208 = vand.u32 2147483647, %v2154
    %v2209 = vand.u32 2147483647, %v2159
    %v2210 = vand.u32 2147483647, %v2164
    %v2211 = vand.u32 2147483647, %v2169
    %v2212 = vand.u32 2147483647, %v2174
    %v2213 = vand.u32 2147483647, %v2179
    %v2214 = vsub.f32 0.0, %v2206
    %v2215 = vsub.f32 0.0, %v2207
    %v2216 = vsub.f32 0.0, %v2208
    %v2217 = vsub.f32 0.0, %v2209
    %v2218 = vsub.f32 0.0, %v2210
    %v2219 = vsub.f32 0.0, %v2211
    %v2220 = vsub.f32 0.0, %v2212
    %v2221 = vsub.f32 0.0, %v2213
    %v2222 = vmul.f32 %v2214, 1.442695
    %v2223 = vpow.pop %v2222
    %v2224 = vmul.f32 %v2215, 1.442695
    %v2225 = vpow.pop %v2224
    %v2226 = vmul.f32 %v2216, 1.442695
    %v2227 = vpow.pop %v2226
    %v2228 = vmul.f32 %v2217, 1.442695
    %v2229 = vpow.pop %v2228
    %v2230 = vmul.f32 %v2218, 1.442695
    %v2231 = vpow.pop %v2230
    %v2232 = vmul.f32 %v2219, 1.442695
    %v2233 = vpow.pop %v2232
    %v2234 = vmul.f32 %v2220, 1.442695
    %v2235 = vpow.pop %v2234
    %v2236 = vmul.f32 %v2221, 1.442695
    %v2237 = vpow.pop %v2236
    %v2238 = vadd.f32 %v2223, 1.0
    %v2239 = vlog2.pop %v2238
    %v2240 = vmul.f32 %v2239, 0.6931472
    %v2241 = vmul.f32 -0.5, %v2223
    %v2242 = vadd.f32 %v2241, 1.0
    %v2243 = vmul.f32 %v2242, %v2223
    %v2244 = vand.u32 2147483647, %v2223
    %vm2245 = vcmp.lt.f32.partialorder %v2244, 0.0004427343
    %v2246 = vsel %vm2245, %v2243, %v2240
    %v2247 = vadd.f32 %v2225, 1.0
    %v2248 = vlog2.pop %v2247
    %v2249 = vmul.f32 %v2248, 0.6931472
    %v2250 = vmul.f32 -0.5, %v2225
    %v2251 = vadd.f32 %v2250, 1.0
    %v2252 = vmul.f32 %v2251, %v2225
    %v2253 = vand.u32 2147483647, %v2225
    %vm2254 = vcmp.lt.f32.partialorder %v2253, 0.0004427343
    %v2255 = vsel %vm2254, %v2252, %v2249
    %v2256 = vadd.f32 %v2227, 1.0
    %v2257 = vlog2.pop %v2256
    %v2258 = vmul.f32 %v2257, 0.6931472
    %v2259 = vmul.f32 -0.5, %v2227
    %v2260 = vadd.f32 %v2259, 1.0
    %v2261 = vmul.f32 %v2260, %v2227
    %v2262 = vand.u32 2147483647, %v2227
    %vm2263 = vcmp.lt.f32.partialorder %v2262, 0.0004427343
    %v2264 = vsel %vm2263, %v2261, %v2258
    %v2265 = vadd.f32 %v2229, 1.0
    %v2266 = vlog2.pop %v2265
    %v2267 = vmul.f32 %v2266, 0.6931472
    %v2268 = vmul.f32 -0.5, %v2229
    %v2269 = vadd.f32 %v2268, 1.0
    %v2270 = vmul.f32 %v2269, %v2229
    %v2271 = vand.u32 2147483647, %v2229
    %vm2272 = vcmp.lt.f32.partialorder %v2271, 0.0004427343
    %v2273 = vsel %vm2272, %v2270, %v2267
    %v2274 = vadd.f32 %v2231, 1.0
    %v2275 = vlog2.pop %v2274
    %v2276 = vmul.f32 %v2275, 0.6931472
    %v2277 = vmul.f32 -0.5, %v2231
    %v2278 = vadd.f32 %v2277, 1.0
    %v2279 = vmul.f32 %v2278, %v2231
    %v2280 = vand.u32 2147483647, %v2231
    %vm2281 = vcmp.lt.f32.partialorder %v2280, 0.0004427343
    %v2282 = vsel %vm2281, %v2279, %v2276
    %v2283 = vadd.f32 %v2233, 1.0
    %v2284 = vlog2.pop %v2283
    %v2285 = vmul.f32 %v2284, 0.6931472
    %v2286 = vmul.f32 -0.5, %v2233
    %v2287 = vadd.f32 %v2286, 1.0
    %v2288 = vmul.f32 %v2287, %v2233
    %v2289 = vand.u32 2147483647, %v2233
    %vm2290 = vcmp.lt.f32.partialorder %v2289, 0.0004427343
    %v2291 = vsel %vm2290, %v2288, %v2285
    %v2292 = vadd.f32 %v2235, 1.0
    %v2293 = vlog2.pop %v2292
    %v2294 = vmul.f32 %v2293, 0.6931472
    %v2295 = vmul.f32 -0.5, %v2235
    %v2296 = vadd.f32 %v2295, 1.0
    %v2297 = vmul.f32 %v2296, %v2235
    %v2298 = vand.u32 2147483647, %v2235
    %vm2299 = vcmp.lt.f32.partialorder %v2298, 0.0004427343
    %v2300 = vsel %vm2299, %v2297, %v2294
    %v2301 = vadd.f32 %v2237, 1.0
    %v2302 = vlog2.pop %v2301
    %v2303 = vmul.f32 %v2302, 0.6931472
    %v2304 = vmul.f32 -0.5, %v2237
    %v2305 = vadd.f32 %v2304, 1.0
    %v2306 = vmul.f32 %v2305, %v2237
    %v2307 = vand.u32 2147483647, %v2237
    %vm2308 = vcmp.lt.f32.partialorder %v2307, 0.0004427343
    %v2309 = vsel %vm2308, %v2306, %v2303
    %v2310 = vadd.f32 %v2182, %v2246
    %v2311 = vadd.f32 %v2183, %v2255
    %v2312 = vadd.f32 %v2184, %v2264
    %v2313 = vadd.f32 %v2185, %v2273
    %v2314 = vadd.f32 %v2186, %v2282
    %v2315 = vadd.f32 %v2187, %v2291
    %v2316 = vadd.f32 %v2188, %v2300
    %v2317 = vadd.f32 %v2189, %v2309
    %v2318 = vsel %vm2190, %v2198, %v2310
    %v2319 = vsel %vm2191, %v2199, %v2311
    %v2320 = vsel %vm2192, %v2200, %v2312
    %v2321 = vsel %vm2193, %v2201, %v2313
    %v2322 = vsel %vm2194, %v2202, %v2314
    %v2323 = vsel %vm2195, %v2203, %v2315
    %v2324 = vsel %vm2196, %v2204, %v2316
    %v2325 = vsel %vm2197, %v2205, %v2317
    %s2326 = scalar_lea.vmem %s8, 128
    %v2327 = vld [vmem:[%s2326] sm:$0xff]
    %v2328 = vld [vmem:[%s2326 + $0x8] sm:$0xff]
    %v2329 = vld [vmem:[%s2326 + $0x10] sm:$0xff]
    %v2330 = vld [vmem:[%s2326 + $0x18] sm:$0xff]
    %v2331 = vld [vmem:[%s2326 + $0x20] sm:$0xff]
    %v2332 = vld [vmem:[%s2326 + $0x28] sm:$0xff]
    %v2333 = vld [vmem:[%s2326 + $0x30] sm:$0xff]
    %v2334 = vld [vmem:[%s2326 + $0x38] sm:$0xff]
    %v2335 = vld [vmem:[%s2326 + $0x40] sm:$0xff]
    %v2336 = vld [vmem:[%s2326 + $0x48] sm:$0xff]
    %v2337 = vld [vmem:[%s2326 + $0x50] sm:$0xff]
    %v2338 = vld [vmem:[%s2326 + $0x58] sm:$0xff]
    %v2339 = vld [vmem:[%s2326 + $0x60] sm:$0xff]
    %v2340 = vld [vmem:[%s2326 + $0x68] sm:$0xff]
    %v2341 = vld [vmem:[%s2326 + $0x70] sm:$0xff]
    %v2342 = vld [vmem:[%s2326 + $0x78] sm:$0xff]
    %2343 = vmatprep.subr.mxu0 0.0
    %2344 = vmatpush1.msra.mxu0 %v2342
    %2345 = vmatprep.subr.mxu0 0.0
    %2346 = vmatpush1.msra.mxu0 %v2341
    %2347 = vmatprep.subr.mxu0 0.0
    %2348 = vmatpush1.msra.mxu0 %v2340
    %2349 = vmatprep.subr.mxu0 0.0
    %2350 = vmatpush1.msra.mxu0 %v2339
    %2351 = vmatprep.subr.mxu0 0.0
    %2352 = vmatpush1.msra.mxu0 %v2338
    %2353 = vmatprep.subr.mxu0 0.0
    %2354 = vmatpush1.msra.mxu0 %v2337
    %2355 = vmatprep.subr.mxu0 0.0
    %2356 = vmatpush1.msra.mxu0 %v2336
    %2357 = vmatprep.subr.mxu0 0.0
    %2358 = vmatpush1.msra.mxu0 %v2335
    %2359 = vmatprep.subr.mxu0 0.0
    %2360 = vmatpush1.msra.mxu0 %v2334
    %2361 = vmatprep.subr.mxu0 0.0
    %2362 = vmatpush1.msra.mxu0 %v2333
    %2363 = vmatprep.subr.mxu0 0.0
    %2364 = vmatpush1.msra.mxu0 %v2332
    %2365 = vmatprep.subr.mxu0 0.0
    %2366 = vmatpush1.msra.mxu0 %v2331
    %2367 = vmatprep.subr.mxu0 0.0
    %2368 = vmatpush1.msra.mxu0 %v2330
    %2369 = vmatprep.subr.mxu0 0.0
    %2370 = vmatpush1.msra.mxu0 %v2329
    %2371 = vmatprep.subr.mxu0 0.0
    %2372 = vmatpush1.msra.mxu0 %v2328
    %2373 = vmatprep.subr.mxu0 0.0
    %2374 = vmatpush1.msra.mxu0 %v2327
    %2375 = vmatprep.subr.mxu0 0.0
    %2376 = vmatpush2.msra.mxu0 0.0
    %2377 = vmatprep.subr.mxu0 0.0
    %2378 = vmatpush2.msra.mxu0 0.0
    %2379 = vmatprep.subr.mxu0 0.0
    %2380 = vmatpush2.msra.mxu0 0.0
    %2381 = vmatprep.subr.mxu0 0.0
    %2382 = vmatpush2.msra.mxu0 0.0
    %2383 = vmatprep.subr.mxu0 0.0
    %2384 = vmatpush2.msra.mxu0 0.0
    %2385 = vmatprep.subr.mxu0 0.0
    %2386 = vmatpush2.msra.mxu0 0.0
    %2387 = vmatprep.subr.mxu0 0.0
    %2388 = vmatpush2.msra.mxu0 0.0
    %2389 = vmatprep.subr.mxu0 0.0
    %2390 = vmatpush2.msra.mxu0 0.0
    %2391 = vmatprep.subr.mxu0 0.0
    %2392 = vmatpush2.msra.mxu0 0.0
    %2393 = vmatprep.subr.mxu0 0.0
    %2394 = vmatpush2.msra.mxu0 0.0
    %2395 = vmatprep.subr.mxu0 0.0
    %2396 = vmatpush2.msra.mxu0 0.0
    %2397 = vmatprep.subr.mxu0 0.0
    %2398 = vmatpush2.msra.mxu0 0.0
    %2399 = vmatprep.subr.mxu0 0.0
    %2400 = vmatpush2.msra.mxu0 0.0
    %2401 = vmatprep.subr.mxu0 0.0
    %2402 = vmatpush2.msra.mxu0 0.0
    %2403 = vmatprep.subr.mxu0 0.0
    %2404 = vmatpush2.msra.mxu0 0.0
    %2405 = vmatprep.subr.mxu0 0.0
    %2406 = vmatpush2.msra.mxu0 0.0
    %2407 = vmatprep.mubr.f32.mxu0 0.0
    %2408 = vmatmul.mubr.f32.gmra.mxu0 %v2044
    %v2409 = vpop.f32.mrf.mxu0
    %v2410 = vadd.f32 0.0, %v2409
    %v2411 = vpop.f32.mrf.mxu0
    %2412 = vmatprep.mubr.f32.mxu0 0.0
    %2413 = vmatmul.mubr.f32.gmra.mxu0 %v2045
    %v2414 = vpop.f32.mrf.mxu0
    %v2415 = vadd.f32 0.0, %v2414
    %v2416 = vpop.f32.mrf.mxu0
    %2417 = vmatprep.mubr.f32.mxu0 0.0
    %2418 = vmatmul.mubr.f32.gmra.mxu0 %v2046
    %v2419 = vpop.f32.mrf.mxu0
    %v2420 = vadd.f32 0.0, %v2419
    %v2421 = vpop.f32.mrf.mxu0
    %2422 = vmatprep.mubr.f32.mxu0 0.0
    %2423 = vmatmul.mubr.f32.gmra.mxu0 %v2047
    %v2424 = vpop.f32.mrf.mxu0
    %v2425 = vadd.f32 0.0, %v2424
    %v2426 = vpop.f32.mrf.mxu0
    %2427 = vmatprep.mubr.f32.mxu0 0.0
    %2428 = vmatmul.mubr.f32.gmra.mxu0 %v2048
    %v2429 = vpop.f32.mrf.mxu0
    %v2430 = vadd.f32 0.0, %v2429
    %v2431 = vpop.f32.mrf.mxu0
    %2432 = vmatprep.mubr.f32.mxu0 0.0
    %2433 = vmatmul.mubr.f32.gmra.mxu0 %v2049
    %v2434 = vpop.f32.mrf.mxu0
    %v2435 = vadd.f32 0.0, %v2434
    %v2436 = vpop.f32.mrf.mxu0
    %2437 = vmatprep.mubr.f32.mxu0 0.0
    %2438 = vmatmul.mubr.f32.gmra.mxu0 %v2050
    %v2439 = vpop.f32.mrf.mxu0
    %v2440 = vadd.f32 0.0, %v2439
    %v2441 = vpop.f32.mrf.mxu0
    %2442 = vmatprep.mubr.f32.mxu0 0.0
    %2443 = vmatmul.mubr.f32.gmra.mxu0 %v2051
    %v2444 = vpop.f32.mrf.mxu0
    %v2445 = vadd.f32 0.0, %v2444
    %v2446 = vpop.f32.mrf.mxu0
    %2447 = vdwg.mxu0
    %s2448 = scalar_lea.vmem %s11, 2
    %v2449 = vld [vmem:[%s2448] sm:$0x1]
    %v2450 = vld [vmem:[%s2448 + $0x1] sm:$0x1]
    %v2451 = vlaneseq
    %v2452 = vshrl.u32 %v2451, 7
    %v2453 = vsub.s32 0, %v2452
    %v2454 = vrot.slane %v2449, %v2453
    %v2455 = vmul.f32 %v2318, %v2454
    %v2456 = vmul.f32 %v2455, 1.442695
    %v2457 = vpow.pop %v2456
    %v2458 = vmul.f32 %v2457, 0.0
    %2460 = vset.pattern.permute.xlu0 0
    %2461 = vperm.xlu0 %2460, %v2410
    %v2462 = vpop.permute.xlu0 %2461
    %v2464 = vmul.f32 %v2318, %v2462
    %v2465 = vadd.f32 %v2458, %v2464
    %2466 = vset.pattern.permute.xlu0 2
    %2467 = vperm.xlu0 %2466, %v2410
    %v2468 = vpop.permute.xlu0 %2467
    %v2470 = vmul.f32 %v2465, %v2468
    %v2471 = vadd.f32 %v2470, 0.0
    %v2472 = vlaneseq
    %v2473 = vshrl.u32 %v2472, 7
    %v2474 = vsub.s32 0, %v2473
    %v2475 = vrot.slane %v2450, %v2474
    %v2476 = vmul.f32 %v2318, %v2475
    %v2477 = vmul.f32 %v2476, 1.442695
    %v2478 = vpow.pop %v2477
    %v2479 = vmul.f32 %v2478, 0.0
    %2480 = vset.pattern.permute.xlu0 1
    %2481 = vperm.xlu0 %2480, %v2410
    %v2482 = vpop.permute.xlu0 %2481
    %v2484 = vmul.f32 %v2318, %v2482
    %v2485 = vadd.f32 %v2479, %v2484
    %2486 = vset.pattern.permute.xlu0 3
    %2487 = vperm.xlu0 %2486, %v2410
    %v2488 = vpop.permute.xlu0 %2487
    %v2490 = vmul.f32 %v2485, %v2488
    %v2491 = vadd.f32 %v2471, %v2490
    %2492 = vst [vmem:[#allocation3] sm:$0xff] %v2491
    %v2493 = vmul.f32 %v2319, %v2454
    %v2494 = vmul.f32 %v2493, 1.442695
    %v2495 = vpow.pop %v2494
    %v2496 = vmul.f32 %v2495, %v2465
    %2498 = vset.pattern.permute.xlu0 0
    %2499 = vperm.xlu0 %2498, %v2415
    %v2500 = vpop.permute.xlu0 %2499
    %v2502 = vmul.f32 %v2319, %v2500
    %v2503 = vadd.f32 %v2496, %v2502
    %2504 = vset.pattern.permute.xlu0 2
    %2505 = vperm.xlu0 %2504, %v2415
    %v2506 = vpop.permute.xlu0 %2505
    %v2508 = vmul.f32 %v2503, %v2506
    %v2509 = vadd.f32 %v2508, 0.0
    %v2510 = vmul.f32 %v2319, %v2475
    %v2511 = vmul.f32 %v2510, 1.442695
    %v2512 = vpow.pop %v2511
    %v2513 = vmul.f32 %v2512, %v2485
    %2514 = vset.pattern.permute.xlu0 1
    %2515 = vperm.xlu0 %2514, %v2415
    %v2516 = vpop.permute.xlu0 %2515
    %v2518 = vmul.f32 %v2319, %v2516
    %v2519 = vadd.f32 %v2513, %v2518
    %2520 = vset.pattern.permute.xlu0 3
    %2521 = vperm.xlu0 %2520, %v2415
    %v2522 = vpop.permute.xlu0 %2521
    %v2524 = vmul.f32 %v2519, %v2522
    %v2525 = vadd.f32 %v2509, %v2524
    %2526 = vst [vmem:[#allocation3 + $0x8] sm:$0xff] %v2525
    %v2527 = vmul.f32 %v2320, %v2454
    %v2528 = vmul.f32 %v2527, 1.442695
    %v2529 = vpow.pop %v2528
    %v2530 = vmul.f32 %v2529, %v2503
    %2532 = vset.pattern.permute.xlu0 0
    %2533 = vperm.xlu0 %2532, %v2420
    %v2534 = vpop.permute.xlu0 %2533
    %v2536 = vmul.f32 %v2320, %v2534
    %v2537 = vadd.f32 %v2530, %v2536
    %2538 = vset.pattern.permute.xlu0 2
    %2539 = vperm.xlu0 %2538, %v2420
    %v2540 = vpop.permute.xlu0 %2539
    %v2542 = vmul.f32 %v2537, %v2540
    %v2543 = vadd.f32 %v2542, 0.0
    %v2544 = vmul.f32 %v2320, %v2475
    %v2545 = vmul.f32 %v2544, 1.442695
    %v2546 = vpow.pop %v2545
    %v2547 = vmul.f32 %v2546, %v2519
    %2548 = vset.pattern.permute.xlu0 1
    %2549 = vperm.xlu0 %2548, %v2420
    %v2550 = vpop.permute.xlu0 %2549
    %v2552 = vmul.f32 %v2320, %v2550
    %v2553 = vadd.f32 %v2547, %v2552
    %2554 = vset.pattern.permute.xlu0 3
    %2555 = vperm.xlu0 %2554, %v2420
    %v2556 = vpop.permute.xlu0 %2555
    %v2558 = vmul.f32 %v2553, %v2556
    %v2559 = vadd.f32 %v2543, %v2558
    %2560 = vst [vmem:[#allocation3 + $0x10] sm:$0xff] %v2559
    %v2561 = vmul.f32 %v2321, %v2454
    %v2562 = vmul.f32 %v2561, 1.442695
    %v2563 = vpow.pop %v2562
    %v2564 = vmul.f32 %v2563, %v2537
    %2566 = vset.pattern.permute.xlu0 0
    %2567 = vperm.xlu0 %2566, %v2425
    %v2568 = vpop.permute.xlu0 %2567
    %v2570 = vmul.f32 %v2321, %v2568
    %v2571 = vadd.f32 %v2564, %v2570
    %2572 = vset.pattern.permute.xlu0 2
    %2573 = vperm.xlu0 %2572, %v2425
    %v2574 = vpop.permute.xlu0 %2573
    %v2576 = vmul.f32 %v2571, %v2574
    %v2577 = vadd.f32 %v2576, 0.0
    %v2578 = vmul.f32 %v2321, %v2475
    %v2579 = vmul.f32 %v2578, 1.442695
    %v2580 = vpow.pop %v2579
    %v2581 = vmul.f32 %v2580, %v2553
    %2582 = vset.pattern.permute.xlu0 1
    %2583 = vperm.xlu0 %2582, %v2425
    %v2584 = vpop.permute.xlu0 %2583
    %v2586 = vmul.f32 %v2321, %v2584
    %v2587 = vadd.f32 %v2581, %v2586
    %2588 = vset.pattern.permute.xlu0 3
    %2589 = vperm.xlu0 %2588, %v2425
    %v2590 = vpop.permute.xlu0 %2589
    %v2592 = vmul.f32 %v2587, %v2590
    %v2593 = vadd.f32 %v2577, %v2592
    %2594 = vst [vmem:[#allocation3 + $0x18] sm:$0xff] %v2593
    %v2595 = vmul.f32 %v2322, %v2454
    %v2596 = vmul.f32 %v2595, 1.442695
    %v2597 = vpow.pop %v2596
    %v2598 = vmul.f32 %v2597, %v2571
    %2600 = vset.pattern.permute.xlu0 0
    %2601 = vperm.xlu0 %2600, %v2430
    %v2602 = vpop.permute.xlu0 %2601
    %v2604 = vmul.f32 %v2322, %v2602
    %v2605 = vadd.f32 %v2598, %v2604
    %2606 = vset.pattern.permute.xlu0 2
    %2607 = vperm.xlu0 %2606, %v2430
    %v2608 = vpop.permute.xlu0 %2607
    %v2610 = vmul.f32 %v2605, %v2608
    %v2611 = vadd.f32 %v2610, 0.0
    %v2612 = vmul.f32 %v2322, %v2475
    %v2613 = vmul.f32 %v2612, 1.442695
    %v2614 = vpow.pop %v2613
    %v2615 = vmul.f32 %v2614, %v2587
    %2616 = vset.pattern.permute.xlu0 1
    %2617 = vperm.xlu0 %2616, %v2430
    %v2618 = vpop.permute.xlu0 %2617
    %v2620 = vmul.f32 %v2322, %v2618
    %v2621 = vadd.f32 %v2615, %v2620
    %2622 = vset.pattern.permute.xlu0 3
    %2623 = vperm.xlu0 %2622, %v2430
    %v2624 = vpop.permute.xlu0 %2623
    %v2626 = vmul.f32 %v2621, %v2624
    %v2627 = vadd.f32 %v2611, %v2626
    %2628 = vst [vmem:[#allocation3 + $0x20] sm:$0xff] %v2627
    %v2629 = vmul.f32 %v2323, %v2454
    %v2630 = vmul.f32 %v2629, 1.442695
    %v2631 = vpow.pop %v2630
    %v2632 = vmul.f32 %v2631, %v2605
    %2634 = vset.pattern.permute.xlu0 0
    %2635 = vperm.xlu0 %2634, %v2435
    %v2636 = vpop.permute.xlu0 %2635
    %v2638 = vmul.f32 %v2323, %v2636
    %v2639 = vadd.f32 %v2632, %v2638
    %2640 = vset.pattern.permute.xlu0 2
    %2641 = vperm.xlu0 %2640, %v2435
    %v2642 = vpop.permute.xlu0 %2641
    %v2644 = vmul.f32 %v2639, %v2642
    %v2645 = vadd.f32 %v2644, 0.0
    %v2646 = vmul.f32 %v2323, %v2475
    %v2647 = vmul.f32 %v2646, 1.442695
    %v2648 = vpow.pop %v2647
    %v2649 = vmul.f32 %v2648, %v2621
    %2650 = vset.pattern.permute.xlu0 1
    %2651 = vperm.xlu0 %2650, %v2435
    %v2652 = vpop.permute.xlu0 %2651
    %v2654 = vmul.f32 %v2323, %v2652
    %v2655 = vadd.f32 %v2649, %v2654
    %2656 = vset.pattern.permute.xlu0 3
    %2657 = vperm.xlu0 %2656, %v2435
    %v2658 = vpop.permute.xlu0 %2657
    %v2660 = vmul.f32 %v2655, %v2658
    %v2661 = vadd.f32 %v2645, %v2660
    %2662 = vst [vmem:[#allocation3 + $0x28] sm:$0xff] %v2661
    %v2663 = vmul.f32 %v2324, %v2454
    %v2664 = vmul.f32 %v2663, 1.442695
    %v2665 = vpow.pop %v2664
    %v2666 = vmul.f32 %v2665, %v2639
    %2668 = vset.pattern.permute.xlu0 0
    %2669 = vperm.xlu0 %2668, %v2440
    %v2670 = vpop.permute.xlu0 %2669
    %v2672 = vmul.f32 %v2324, %v2670
    %v2673 = vadd.f32 %v2666, %v2672
    %2674 = vset.pattern.permute.xlu0 2
    %2675 = vperm.xlu0 %2674, %v2440
    %v2676 = vpop.permute.xlu0 %2675
    %v2678 = vmul.f32 %v2673, %v2676
    %v2679 = vadd.f32 %v2678, 0.0
    %v2680 = vmul.f32 %v2324, %v2475
    %v2681 = vmul.f32 %v2680, 1.442695
    %v2682 = vpow.pop %v2681
    %v2683 = vmul.f32 %v2682, %v2655
    %2684 = vset.pattern.permute.xlu0 1
    %2685 = vperm.xlu0 %2684, %v2440
    %v2686 = vpop.permute.xlu0 %2685
    %v2688 = vmul.f32 %v2324, %v2686
    %v2689 = vadd.f32 %v2683, %v2688
    %2690 = vset.pattern.permute.xlu0 3
    %2691 = vperm.xlu0 %2690, %v2440
    %v2692 = vpop.permute.xlu0 %2691
    %v2694 = vmul.f32 %v2689, %v2692
    %v2695 = vadd.f32 %v2679, %v2694
    %2696 = vst [vmem:[#allocation3 + $0x30] sm:$0xff] %v2695
    %v2697 = vmul.f32 %v2325, %v2454
    %v2698 = vmul.f32 %v2697, 1.442695
    %v2699 = vpow.pop %v2698
    %v2700 = vmul.f32 %v2699, %v2673
    %2702 = vset.pattern.permute.xlu0 0
    %2703 = vperm.xlu0 %2702, %v2445
    %v2704 = vpop.permute.xlu0 %2703
    %v2706 = vmul.f32 %v2325, %v2704
    %v2707 = vadd.f32 %v2700, %v2706
    %2708 = vset.pattern.permute.xlu0 2
    %2709 = vperm.xlu0 %2708, %v2445
    %v2710 = vpop.permute.xlu0 %2709
    %v2712 = vmul.f32 %v2707, %v2710
    %v2713 = vadd.f32 %v2712, 0.0
    %v2714 = vmul.f32 %v2325, %v2475
    %v2715 = vmul.f32 %v2714, 1.442695
    %v2716 = vpow.pop %v2715
    %v2717 = vmul.f32 %v2716, %v2689
    %2718 = vset.pattern.permute.xlu0 1
    %2719 = vperm.xlu0 %2718, %v2445
    %v2720 = vpop.permute.xlu0 %2719
    %v2722 = vmul.f32 %v2325, %v2720
    %v2723 = vadd.f32 %v2717, %v2722
    %2724 = vset.pattern.permute.xlu0 3
    %2725 = vperm.xlu0 %2724, %v2445
    %v2726 = vpop.permute.xlu0 %2725
    %v2728 = vmul.f32 %v2723, %v2726
    %v2729 = vadd.f32 %v2713, %v2728
    %2730 = vst [vmem:[#allocation3 + $0x38] sm:$0xff] %v2729
    %v2731 = vld [vmem:[#allocation3] sm:$0xff]
    %v2732 = vld [vmem:[#allocation3 + $0x8] sm:$0xff]
    %v2733 = vld [vmem:[#allocation3 + $0x10] sm:$0xff]
    %v2734 = vld [vmem:[#allocation3 + $0x18] sm:$0xff]
    %v2735 = vld [vmem:[#allocation3 + $0x20] sm:$0xff]
    %v2736 = vld [vmem:[#allocation3 + $0x28] sm:$0xff]
    %v2737 = vld [vmem:[#allocation3 + $0x30] sm:$0xff]
    %v2738 = vld [vmem:[#allocation3 + $0x38] sm:$0xff]
    %s2739 = scalar_lea.vmem %s12, 1
    %v2740 = vld [vmem:[%s2739] sm:$0x1]
    %v2742 = vlaneseq
    %v2743 = vshrl.u32 %v2742, 7
    %v2744 = vsub.s32 0, %v2743
    %v2745 = vrot.slane %v2740, %v2744
    %v2747 = vmul.f32 %v2044, %v2745
    %v2748 = vmul.f32 %v2045, %v2745
    %v2749 = vmul.f32 %v2046, %v2745
    %v2750 = vmul.f32 %v2047, %v2745
    %v2751 = vmul.f32 %v2048, %v2745
    %v2752 = vmul.f32 %v2049, %v2745
    %v2753 = vmul.f32 %v2050, %v2745
    %v2754 = vmul.f32 %v2051, %v2745
    %v2755 = vadd.f32 %v2731, %v2747
    %v2756 = vadd.f32 %v2732, %v2748
    %v2757 = vadd.f32 %v2733, %v2749
    %v2758 = vadd.f32 %v2734, %v2750
    %v2759 = vadd.f32 %v2735, %v2751
    %v2760 = vadd.f32 %v2736, %v2752
    %v2761 = vadd.f32 %v2737, %v2753
    %v2762 = vadd.f32 %v2738, %v2754
    %v2763 = vxor.u32 %v1832, 2147483648
    %v2764 = vxor.u32 %v1838, 2147483648
    %v2765 = vxor.u32 %v1844, 2147483648
    %v2766 = vxor.u32 %v1850, 2147483648
    %v2767 = vxor.u32 %v1856, 2147483648
    %v2768 = vxor.u32 %v1862, 2147483648
    %v2769 = vxor.u32 %v1868, 2147483648
    %v2770 = vxor.u32 %v1874, 2147483648
    %v2771 = vmul.f32 %v2763, 1.442695
    %v2772 = vpow.pop %v2771
    %v2773 = vmul.f32 %v2764, 1.442695
    %v2774 = vpow.pop %v2773
    %v2775 = vmul.f32 %v2765, 1.442695
    %v2776 = vpow.pop %v2775
    %v2777 = vmul.f32 %v2766, 1.442695
    %v2778 = vpow.pop %v2777
    %v2779 = vmul.f32 %v2767, 1.442695
    %v2780 = vpow.pop %v2779
    %v2781 = vmul.f32 %v2768, 1.442695
    %v2782 = vpow.pop %v2781
    %v2783 = vmul.f32 %v2769, 1.442695
    %v2784 = vpow.pop %v2783
    %v2785 = vmul.f32 %v2770, 1.442695
    %v2786 = vpow.pop %v2785
    %v2787 = vadd.f32 %v2772, 1.0
    %v2788 = vadd.f32 %v2774, 1.0
    %v2789 = vadd.f32 %v2776, 1.0
    %v2790 = vadd.f32 %v2778, 1.0
    %v2791 = vadd.f32 %v2780, 1.0
    %v2792 = vadd.f32 %v2782, 1.0
    %v2793 = vadd.f32 %v2784, 1.0
    %v2794 = vadd.f32 %v2786, 1.0
    %v2795 = vrcp.pop %v2787
    %v2796 = vmul.f32 1.0, %v2795
    %v2797 = vrcp.pop %v2788
    %v2798 = vmul.f32 1.0, %v2797
    %v2799 = vrcp.pop %v2789
    %v2800 = vmul.f32 1.0, %v2799
    %v2801 = vrcp.pop %v2790
    %v2802 = vmul.f32 1.0, %v2801
    %v2803 = vrcp.pop %v2791
    %v2804 = vmul.f32 1.0, %v2803
    %v2805 = vrcp.pop %v2792
    %v2806 = vmul.f32 1.0, %v2805
    %v2807 = vrcp.pop %v2793
    %v2808 = vmul.f32 1.0, %v2807
    %v2809 = vrcp.pop %v2794
    %v2810 = vmul.f32 1.0, %v2809
    %v2811 = vmul.f32 %v1832, %v2796
    %v2812 = vmul.f32 %v1838, %v2798
    %v2813 = vmul.f32 %v1844, %v2800
    %v2814 = vmul.f32 %v1850, %v2802
    %v2815 = vmul.f32 %v1856, %v2804
    %v2816 = vmul.f32 %v1862, %v2806
    %v2817 = vmul.f32 %v1868, %v2808
    %v2818 = vmul.f32 %v1874, %v2810
    %v2819 = vmul.f32 %v2755, %v2811
    %v2820 = vmul.f32 %v2756, %v2812
    %v2821 = vmul.f32 %v2757, %v2813
    %v2822 = vmul.f32 %v2758, %v2814
    %v2823 = vmul.f32 %v2759, %v2815
    %v2824 = vmul.f32 %v2760, %v2816
    %v2825 = vmul.f32 %v2761, %v2817
    %v2826 = vmul.f32 %v2762, %v2818
    %s2827 = scalar_lea.vmem [#allocation7], 128
    %v2828 = vld [vmem:[%s2827] sm:$0xff]
    %v2829 = vld [vmem:[%s2827 + $0x8] sm:$0xff]
    %v2830 = vld [vmem:[%s2827 + $0x10] sm:$0xff]
    %v2831 = vld [vmem:[%s2827 + $0x18] sm:$0xff]
    %v2832 = vld [vmem:[%s2827 + $0x20] sm:$0xff]
    %v2833 = vld [vmem:[%s2827 + $0x28] sm:$0xff]
    %v2834 = vld [vmem:[%s2827 + $0x30] sm:$0xff]
    %v2835 = vld [vmem:[%s2827 + $0x38] sm:$0xff]
    %v2836 = vld [vmem:[%s2827 + $0x40] sm:$0xff]
    %v2837 = vld [vmem:[%s2827 + $0x48] sm:$0xff]
    %v2838 = vld [vmem:[%s2827 + $0x50] sm:$0xff]
    %v2839 = vld [vmem:[%s2827 + $0x58] sm:$0xff]
    %v2840 = vld [vmem:[%s2827 + $0x60] sm:$0xff]
    %v2841 = vld [vmem:[%s2827 + $0x68] sm:$0xff]
    %v2842 = vld [vmem:[%s2827 + $0x70] sm:$0xff]
    %v2843 = vld [vmem:[%s2827 + $0x78] sm:$0xff]
    %2844 = vmatprep.subr.mxu0 0.0
    %2845 = vmatpush1.msra.mxu0 %v2843
    %2846 = vmatprep.subr.mxu0 0.0
    %2847 = vmatpush1.msra.mxu0 %v2842
    %2848 = vmatprep.subr.mxu0 0.0
    %2849 = vmatpush1.msra.mxu0 %v2841
    %2850 = vmatprep.subr.mxu0 0.0
    %2851 = vmatpush1.msra.mxu0 %v2840
    %2852 = vmatprep.subr.mxu0 0.0
    %2853 = vmatpush1.msra.mxu0 %v2839
    %2854 = vmatprep.subr.mxu0 0.0
    %2855 = vmatpush1.msra.mxu0 %v2838
    %2856 = vmatprep.subr.mxu0 0.0
    %2857 = vmatpush1.msra.mxu0 %v2837
    %2858 = vmatprep.subr.mxu0 0.0
    %2859 = vmatpush1.msra.mxu0 %v2836
    %2860 = vmatprep.subr.mxu0 0.0
    %2861 = vmatpush1.msra.mxu0 %v2835
    %2862 = vmatprep.subr.mxu0 0.0
    %2863 = vmatpush1.msra.mxu0 %v2834
    %2864 = vmatprep.subr.mxu0 0.0
    %2865 = vmatpush1.msra.mxu0 %v2833
    %2866 = vmatprep.subr.mxu0 0.0
    %2867 = vmatpush1.msra.mxu0 %v2832
    %2868 = vmatprep.subr.mxu0 0.0
    %2869 = vmatpush1.msra.mxu0 %v2831
    %2870 = vmatprep.subr.mxu0 0.0
    %2871 = vmatpush1.msra.mxu0 %v2830
    %2872 = vmatprep.subr.mxu0 0.0
    %2873 = vmatpush1.msra.mxu0 %v2829
    %2874 = vmatprep.subr.mxu0 0.0
    %2875 = vmatpush1.msra.mxu0 %v2828
    %2876 = vmatprep.subr.mxu0 0.0
    %2877 = vmatpush2.msra.mxu0 0.0
    %2878 = vmatprep.subr.mxu0 0.0
    %2879 = vmatpush2.msra.mxu0 0.0
    %2880 = vmatprep.subr.mxu0 0.0
    %2881 = vmatpush2.msra.mxu0 0.0
    %2882 = vmatprep.subr.mxu0 0.0
    %2883 = vmatpush2.msra.mxu0 0.0
    %2884 = vmatprep.subr.mxu0 0.0
    %2885 = vmatpush2.msra.mxu0 0.0
    %2886 = vmatprep.subr.mxu0 0.0
    %2887 = vmatpush2.msra.mxu0 0.0
    %2888 = vmatprep.subr.mxu0 0.0
    %2889 = vmatpush2.msra.mxu0 0.0
    %2890 = vmatprep.subr.mxu0 0.0
    %2891 = vmatpush2.msra.mxu0 0.0
    %2892 = vmatprep.subr.mxu0 0.0
    %2893 = vmatpush2.msra.mxu0 0.0
    %2894 = vmatprep.subr.mxu0 0.0
    %2895 = vmatpush2.msra.mxu0 0.0
    %2896 = vmatprep.subr.mxu0 0.0
    %2897 = vmatpush2.msra.mxu0 0.0
    %2898 = vmatprep.subr.mxu0 0.0
    %2899 = vmatpush2.msra.mxu0 0.0
    %2900 = vmatprep.subr.mxu0 0.0
    %2901 = vmatpush2.msra.mxu0 0.0
    %2902 = vmatprep.subr.mxu0 0.0
    %2903 = vmatpush2.msra.mxu0 0.0
    %2904 = vmatprep.subr.mxu0 0.0
    %2905 = vmatpush2.msra.mxu0 0.0
    %2906 = vmatprep.subr.mxu0 0.0
    %2907 = vmatpush2.msra.mxu0 0.0
    %2908 = vmatprep.mubr.f32.mxu0 0.0
    %2909 = vmatmul.mubr.f32.gmra.mxu0 %v2819
    %v2910 = vpop.f32.mrf.mxu0
    %v2911 = vadd.f32 0.0, %v2910
    %v2912 = vpop.f32.mrf.mxu0
    %2913 = vmatprep.mubr.f32.mxu0 0.0
    %2914 = vmatmul.mubr.f32.gmra.mxu0 %v2820
    %v2915 = vpop.f32.mrf.mxu0
    %v2916 = vadd.f32 0.0, %v2915
    %v2917 = vpop.f32.mrf.mxu0
    %2918 = vmatprep.mubr.f32.mxu0 0.0
    %2919 = vmatmul.mubr.f32.gmra.mxu0 %v2821
    %v2920 = vpop.f32.mrf.mxu0
    %v2921 = vadd.f32 0.0, %v2920
    %v2922 = vpop.f32.mrf.mxu0
    %2923 = vmatprep.mubr.f32.mxu0 0.0
    %2924 = vmatmul.mubr.f32.gmra.mxu0 %v2822
    %v2925 = vpop.f32.mrf.mxu0
    %v2926 = vadd.f32 0.0, %v2925
    %v2927 = vpop.f32.mrf.mxu0
    %2928 = vmatprep.mubr.f32.mxu0 0.0
    %2929 = vmatmul.mubr.f32.gmra.mxu0 %v2823
    %v2930 = vpop.f32.mrf.mxu0
    %v2931 = vadd.f32 0.0, %v2930
    %v2932 = vpop.f32.mrf.mxu0
    %2933 = vmatprep.mubr.f32.mxu0 0.0
    %2934 = vmatmul.mubr.f32.gmra.mxu0 %v2824
    %v2935 = vpop.f32.mrf.mxu0
    %v2936 = vadd.f32 0.0, %v2935
    %v2937 = vpop.f32.mrf.mxu0
    %2938 = vmatprep.mubr.f32.mxu0 0.0
    %2939 = vmatmul.mubr.f32.gmra.mxu0 %v2825
    %v2940 = vpop.f32.mrf.mxu0
    %v2941 = vadd.f32 0.0, %v2940
    %v2942 = vpop.f32.mrf.mxu0
    %2943 = vmatprep.mubr.f32.mxu0 0.0
    %2944 = vmatmul.mubr.f32.gmra.mxu0 %v2826
    %v2945 = vpop.f32.mrf.mxu0
    %v2946 = vadd.f32 0.0, %v2945
    %v2947 = vpop.f32.mrf.mxu0
    %2948 = vdwg.mxu0
    %v2949 = vld [vmem:[%s1] sm:$0xff]
    %v2950 = vld [vmem:[%s1 + $0x8] sm:$0xff]
    %v2951 = vld [vmem:[%s1 + $0x10] sm:$0xff]
    %v2952 = vld [vmem:[%s1 + $0x18] sm:$0xff]
    %v2953 = vld [vmem:[%s1 + $0x20] sm:$0xff]
    %v2954 = vld [vmem:[%s1 + $0x28] sm:$0xff]
    %v2955 = vld [vmem:[%s1 + $0x30] sm:$0xff]
    %v2956 = vld [vmem:[%s1 + $0x38] sm:$0xff]
    %v2958 = vsel %vm1528, %v2949, 0
    %v2961 = vsel %vm1528, %v2950, 0
    %v2964 = vsel %vm1528, %v2951, 0
    %v2967 = vsel %vm1528, %v2952, 0
    %v2970 = vsel %vm1528, %v2953, 0
    %v2973 = vsel %vm1528, %v2954, 0
    %v2976 = vsel %vm1528, %v2955, 0
    %v2979 = vsel %vm1528, %v2956, 0
    %2981 = vmatprep.subr.mxu0 0.0
    %2982 = vmatpush1.msra.mxu0 0.0
    %2983 = vmatprep.subr.mxu0 0.0
    %2984 = vmatpush1.msra.mxu0 0.0
    %2985 = vmatprep.subr.mxu0 0.0
    %2986 = vmatpush1.msra.mxu0 0.0
    %2987 = vmatprep.subr.mxu0 0.0
    %2988 = vmatpush1.msra.mxu0 0.0
    %2989 = vmatprep.subr.mxu0 0.0
    %2990 = vmatpush1.msra.mxu0 0.0
    %2991 = vmatprep.subr.mxu0 0.0
    %2992 = vmatpush1.msra.mxu0 0.0
    %2993 = vmatprep.subr.mxu0 0.0
    %2994 = vmatpush1.msra.mxu0 0.0
    %2995 = vmatprep.subr.mxu0 0.0
    %2996 = vmatpush1.msra.mxu0 0.0
    %2997 = vmatprep.subr.mxu0 0.0
    %2998 = vmatpush1.msra.mxu0 %v2946
    %2999 = vmatprep.subr.mxu0 0.0
    %3000 = vmatpush1.msra.mxu0 %v2941
    %3001 = vmatprep.subr.mxu0 0.0
    %3002 = vmatpush1.msra.mxu0 %v2936
    %3003 = vmatprep.subr.mxu0 0.0
    %3004 = vmatpush1.msra.mxu0 %v2931
    %3005 = vmatprep.subr.mxu0 0.0
    %3006 = vmatpush1.msra.mxu0 %v2926
    %3007 = vmatprep.subr.mxu0 0.0
    %3008 = vmatpush1.msra.mxu0 %v2921
    %3009 = vmatprep.subr.mxu0 0.0
    %3010 = vmatpush1.msra.mxu0 %v2916
    %3011 = vmatprep.subr.mxu0 0.0
    %3012 = vmatpush1.msra.mxu0 %v2911
    %3013 = vmatprep.subr.mxu0 0.0
    %3014 = vmatpush2.msra.mxu0 0.0
    %3015 = vmatprep.subr.mxu0 0.0
    %3016 = vmatpush2.msra.mxu0 0.0
    %3017 = vmatprep.subr.mxu0 0.0
    %3018 = vmatpush2.msra.mxu0 0.0
    %3019 = vmatprep.subr.mxu0 0.0
    %3020 = vmatpush2.msra.mxu0 0.0
    %3021 = vmatprep.subr.mxu0 0.0
    %3022 = vmatpush2.msra.mxu0 0.0
    %3023 = vmatprep.subr.mxu0 0.0
    %3024 = vmatpush2.msra.mxu0 0.0
    %3025 = vmatprep.subr.mxu0 0.0
    %3026 = vmatpush2.msra.mxu0 0.0
    %3027 = vmatprep.subr.mxu0 0.0
    %3028 = vmatpush2.msra.mxu0 0.0
    %3029 = vmatprep.subr.mxu0 0.0
    %3030 = vmatpush2.msra.mxu0 0.0
    %3031 = vmatprep.subr.mxu0 0.0
    %3032 = vmatpush2.msra.mxu0 0.0
    %3033 = vmatprep.subr.mxu0 0.0
    %3034 = vmatpush2.msra.mxu0 0.0
    %3035 = vmatprep.subr.mxu0 0.0
    %3036 = vmatpush2.msra.mxu0 0.0
    %3037 = vmatprep.subr.mxu0 0.0
    %3038 = vmatpush2.msra.mxu0 0.0
    %3039 = vmatprep.subr.mxu0 0.0
    %3040 = vmatpush2.msra.mxu0 0.0
    %3041 = vmatprep.subr.mxu0 0.0
    %3042 = vmatpush2.msra.mxu0 0.0
    %3043 = vmatprep.subr.mxu0 0.0
    %3044 = vmatpush2.msra.mxu0 0.0
    %3045 = vmatprep.mubr.f32.mxu0 0.0
    %3046 = vmatmul.mubr.f32.gmra.mxu0 %v2958
    %v3047 = vpop.f32.mrf.mxu0
    %v3048 = vadd.f32 %v1722, %v3047
    %v3049 = vpop.f32.mrf.mxu0
    %3050 = vmatprep.mubr.f32.mxu0 0.0
    %3051 = vmatmul.mubr.f32.gmra.mxu0 %v2961
    %v3052 = vpop.f32.mrf.mxu0
    %v3053 = vadd.f32 %v1723, %v3052
    %v3054 = vpop.f32.mrf.mxu0
    %3055 = vmatprep.mubr.f32.mxu0 0.0
    %3056 = vmatmul.mubr.f32.gmra.mxu0 %v2964
    %v3057 = vpop.f32.mrf.mxu0
    %v3058 = vadd.f32 %v1724, %v3057
    %v3059 = vpop.f32.mrf.mxu0
    %3060 = vmatprep.mubr.f32.mxu0 0.0
    %3061 = vmatmul.mubr.f32.gmra.mxu0 %v2967
    %v3062 = vpop.f32.mrf.mxu0
    %v3063 = vadd.f32 %v1725, %v3062
    %v3064 = vpop.f32.mrf.mxu0
    %3065 = vmatprep.mubr.f32.mxu0 0.0
    %3066 = vmatmul.mubr.f32.gmra.mxu0 %v2970
    %v3067 = vpop.f32.mrf.mxu0
    %v3068 = vadd.f32 %v1726, %v3067
    %v3069 = vpop.f32.mrf.mxu0
    %3070 = vmatprep.mubr.f32.mxu0 0.0
    %3071 = vmatmul.mubr.f32.gmra.mxu0 %v2973
    %v3072 = vpop.f32.mrf.mxu0
    %v3073 = vadd.f32 %v1727, %v3072
    %v3074 = vpop.f32.mrf.mxu0
    %3075 = vmatprep.mubr.f32.mxu0 0.0
    %3076 = vmatmul.mubr.f32.gmra.mxu0 %v2976
    %v3077 = vpop.f32.mrf.mxu0
    %v3078 = vadd.f32 %v1728, %v3077
    %v3079 = vpop.f32.mrf.mxu0
    %3080 = vmatprep.mubr.f32.mxu0 0.0
    %3081 = vmatmul.mubr.f32.gmra.mxu0 %v2979
    %v3082 = vpop.f32.mrf.mxu0
    %v3083 = vadd.f32 %v1729, %v3082
    %v3084 = vpop.f32.mrf.mxu0
    %3085 = vdwg.mxu0
    %s3086 = scalar_lea.vmem %s4, 2
    %v3087 = vld [vmem:[%s3086] sm:$0x1]
    %v3088 = vmul.f32 %v3048, %v3048
    %v3089 = vmul.f32 %v3053, %v3053
    %v3090 = vmul.f32 %v3058, %v3058
    %v3091 = vmul.f32 %v3063, %v3063
    %v3092 = vmul.f32 %v3068, %v3068
    %v3093 = vmul.f32 %v3073, %v3073
    %v3094 = vmul.f32 %v3078, %v3078
    %v3095 = vmul.f32 %v3083, %v3083
    %3096 = vadd.xlane.f32.xlu0 %v3088
    %v3097 = vpop.xlane.xlu0 %3096
    %3098 = vadd.xlane.f32.xlu0 %v3089
    %v3099 = vpop.xlane.xlu0 %3098
    %3100 = vadd.xlane.f32.xlu0 %v3090
    %v3101 = vpop.xlane.xlu0 %3100
    %3102 = vadd.xlane.f32.xlu0 %v3091
    %v3103 = vpop.xlane.xlu0 %3102
    %3104 = vadd.xlane.f32.xlu0 %v3092
    %v3105 = vpop.xlane.xlu0 %3104
    %3106 = vadd.xlane.f32.xlu0 %v3093
    %v3107 = vpop.xlane.xlu0 %3106
    %3108 = vadd.xlane.f32.xlu0 %v3094
    %v3109 = vpop.xlane.xlu0 %3108
    %3110 = vadd.xlane.f32.xlu0 %v3095
    %v3111 = vpop.xlane.xlu0 %3110
    %v3112 = vmul.f32 %v3097, %v263
    %v3113 = vmul.f32 %v3099, %v263
    %v3114 = vmul.f32 %v3101, %v263
    %v3115 = vmul.f32 %v3103, %v263
    %v3116 = vmul.f32 %v3105, %v263
    %v3117 = vmul.f32 %v3107, %v263
    %v3118 = vmul.f32 %v3109, %v263
    %v3119 = vmul.f32 %v3111, %v263
    %v3120 = vadd.f32 %v3112, 1e-05
    %v3121 = vadd.f32 %v3113, 1e-05
    %v3122 = vadd.f32 %v3114, 1e-05
    %v3123 = vadd.f32 %v3115, 1e-05
    %v3124 = vadd.f32 %v3116, 1e-05
    %v3125 = vadd.f32 %v3117, 1e-05
    %v3126 = vadd.f32 %v3118, 1e-05
    %v3127 = vadd.f32 %v3119, 1e-05
    %v3128 = vrsqrt.pop %v3120
    %v3129 = vrsqrt.pop %v3121
    %v3130 = vrsqrt.pop %v3122
    %v3131 = vrsqrt.pop %v3123
    %v3132 = vrsqrt.pop %v3124
    %v3133 = vrsqrt.pop %v3125
    %v3134 = vrsqrt.pop %v3126
    %v3135 = vrsqrt.pop %v3127
    %v3136 = vmul.f32 %v3048, %v3128
    %v3137 = vmul.f32 %v3053, %v3129
    %v3138 = vmul.f32 %v3058, %v3130
    %v3139 = vmul.f32 %v3063, %v3131
    %v3140 = vmul.f32 %v3068, %v3132
    %v3141 = vmul.f32 %v3073, %v3133
    %v3142 = vmul.f32 %v3078, %v3134
    %v3143 = vmul.f32 %v3083, %v3135
    %v3145 = vlaneseq
    %v3146 = vshrl.u32 %v3145, 7
    %v3147 = vsub.s32 0, %v3146
    %v3148 = vrot.slane %v3087, %v3147
    %v3150 = vmul.f32 %v3136, %v3148
    %v3151 = vmul.f32 %v3137, %v3148
    %v3152 = vmul.f32 %v3138, %v3148
    %v3153 = vmul.f32 %v3139, %v3148
    %v3154 = vmul.f32 %v3140, %v3148
    %v3155 = vmul.f32 %v3141, %v3148
    %v3156 = vmul.f32 %v3142, %v3148
    %v3157 = vmul.f32 %v3143, %v3148
    %s3158 = scalar_lea.vmem %s5, 512
    %v3159 = vld [vmem:[%s3158] sm:$0xff]
    %v3160 = vld [vmem:[%s3158 + $0x8] sm:$0xff]
    %v3161 = vld [vmem:[%s3158 + $0x10] sm:$0xff]
    %v3162 = vld [vmem:[%s3158 + $0x18] sm:$0xff]
    %v3163 = vld [vmem:[%s3158 + $0x20] sm:$0xff]
    %v3164 = vld [vmem:[%s3158 + $0x28] sm:$0xff]
    %v3165 = vld [vmem:[%s3158 + $0x30] sm:$0xff]
    %v3166 = vld [vmem:[%s3158 + $0x38] sm:$0xff]
    %v3167 = vld [vmem:[%s3158 + $0x40] sm:$0xff]
    %v3168 = vld [vmem:[%s3158 + $0x48] sm:$0xff]
    %v3169 = vld [vmem:[%s3158 + $0x50] sm:$0xff]
    %v3170 = vld [vmem:[%s3158 + $0x58] sm:$0xff]
    %v3171 = vld [vmem:[%s3158 + $0x60] sm:$0xff]
    %v3172 = vld [vmem:[%s3158 + $0x68] sm:$0xff]
    %v3173 = vld [vmem:[%s3158 + $0x70] sm:$0xff]
    %v3174 = vld [vmem:[%s3158 + $0x78] sm:$0xff]
    %v3175 = vld [vmem:[%s3158 + $0x80] sm:$0xff]
    %v3176 = vld [vmem:[%s3158 + $0x88] sm:$0xff]
    %v3177 = vld [vmem:[%s3158 + $0x90] sm:$0xff]
    %v3178 = vld [vmem:[%s3158 + $0x98] sm:$0xff]
    %v3179 = vld [vmem:[%s3158 + $0xa0] sm:$0xff]
    %v3180 = vld [vmem:[%s3158 + $0xa8] sm:$0xff]
    %v3181 = vld [vmem:[%s3158 + $0xb0] sm:$0xff]
    %v3182 = vld [vmem:[%s3158 + $0xb8] sm:$0xff]
    %v3183 = vld [vmem:[%s3158 + $0xc0] sm:$0xff]
    %v3184 = vld [vmem:[%s3158 + $0xc8] sm:$0xff]
    %v3185 = vld [vmem:[%s3158 + $0xd0] sm:$0xff]
    %v3186 = vld [vmem:[%s3158 + $0xd8] sm:$0xff]
    %v3187 = vld [vmem:[%s3158 + $0xe0] sm:$0xff]
    %v3188 = vld [vmem:[%s3158 + $0xe8] sm:$0xff]
    %v3189 = vld [vmem:[%s3158 + $0xf0] sm:$0xff]
    %v3190 = vld [vmem:[%s3158 + $0xf8] sm:$0xff]
    %3191 = vmatprep.subr.mxu0 %v3190
    %3192 = vmatpush1.msra.mxu0 %v3189
    %3193 = vmatprep.subr.mxu0 %v3188
    %3194 = vmatpush1.msra.mxu0 %v3187
    %3195 = vmatprep.subr.mxu0 %v3186
    %3196 = vmatpush1.msra.mxu0 %v3185
    %3197 = vmatprep.subr.mxu0 %v3184
    %3198 = vmatpush1.msra.mxu0 %v3183
    %3199 = vmatprep.subr.mxu0 %v3182
    %3200 = vmatpush1.msra.mxu0 %v3181
    %3201 = vmatprep.subr.mxu0 %v3180
    %3202 = vmatpush1.msra.mxu0 %v3179
    %3203 = vmatprep.subr.mxu0 %v3178
    %3204 = vmatpush1.msra.mxu0 %v3177
    %3205 = vmatprep.subr.mxu0 %v3176
    %3206 = vmatpush1.msra.mxu0 %v3175
    %3207 = vmatprep.subr.mxu0 %v3174
    %3208 = vmatpush1.msra.mxu0 %v3173
    %3209 = vmatprep.subr.mxu0 %v3172
    %3210 = vmatpush1.msra.mxu0 %v3171
    %3211 = vmatprep.subr.mxu0 %v3170
    %3212 = vmatpush1.msra.mxu0 %v3169
    %3213 = vmatprep.subr.mxu0 %v3168
    %3214 = vmatpush1.msra.mxu0 %v3167
    %3215 = vmatprep.subr.mxu0 %v3166
    %3216 = vmatpush1.msra.mxu0 %v3165
    %3217 = vmatprep.subr.mxu0 %v3164
    %3218 = vmatpush1.msra.mxu0 %v3163
    %3219 = vmatprep.subr.mxu0 %v3162
    %3220 = vmatpush1.msra.mxu0 %v3161
    %3221 = vmatprep.subr.mxu0 %v3160
    %3222 = vmatpush1.msra.mxu0 %v3159
    %3223 = vmatprep.subr.mxu0 0.0
    %3224 = vmatpush2.msra.mxu0 0.0
    %3225 = vmatprep.subr.mxu0 0.0
    %3226 = vmatpush2.msra.mxu0 0.0
    %3227 = vmatprep.subr.mxu0 0.0
    %3228 = vmatpush2.msra.mxu0 0.0
    %3229 = vmatprep.subr.mxu0 0.0
    %3230 = vmatpush2.msra.mxu0 0.0
    %3231 = vmatprep.subr.mxu0 0.0
    %3232 = vmatpush2.msra.mxu0 0.0
    %3233 = vmatprep.subr.mxu0 0.0
    %3234 = vmatpush2.msra.mxu0 0.0
    %3235 = vmatprep.subr.mxu0 0.0
    %3236 = vmatpush2.msra.mxu0 0.0
    %3237 = vmatprep.subr.mxu0 0.0
    %3238 = vmatpush2.msra.mxu0 0.0
    %3239 = vmatprep.subr.mxu0 0.0
    %3240 = vmatpush2.msra.mxu0 0.0
    %3241 = vmatprep.subr.mxu0 0.0
    %3242 = vmatpush2.msra.mxu0 0.0
    %3243 = vmatprep.subr.mxu0 0.0
    %3244 = vmatpush2.msra.mxu0 0.0
    %3245 = vmatprep.subr.mxu0 0.0
    %3246 = vmatpush2.msra.mxu0 0.0
    %3247 = vmatprep.subr.mxu0 0.0
    %3248 = vmatpush2.msra.mxu0 0.0
    %3249 = vmatprep.subr.mxu0 0.0
    %3250 = vmatpush2.msra.mxu0 0.0
    %3251 = vmatprep.subr.mxu0 0.0
    %3252 = vmatpush2.msra.mxu0 0.0
    %3253 = vmatprep.subr.mxu0 0.0
    %3254 = vmatpush2.msra.mxu0 0.0
    %3255 = vmatprep.mubr.f32.mxu0 0.0
    %3256 = vmatmul.mubr.f32.gmra.mxu0 %v3150
    %v3257 = vpop.f32.mrf.mxu0
    %v3258 = vadd.f32 0.0, %v3257
    %v3259 = vpop.f32.mrf.mxu0
    %v3260 = vadd.f32 0.0, %v3259
    %3261 = vmatprep.mubr.f32.mxu0 0.0
    %3262 = vmatmul.mubr.f32.gmra.mxu0 %v3151
    %v3263 = vpop.f32.mrf.mxu0
    %v3264 = vadd.f32 0.0, %v3263
    %v3265 = vpop.f32.mrf.mxu0
    %v3266 = vadd.f32 0.0, %v3265
    %3267 = vmatprep.mubr.f32.mxu0 0.0
    %3268 = vmatmul.mubr.f32.gmra.mxu0 %v3152
    %v3269 = vpop.f32.mrf.mxu0
    %v3270 = vadd.f32 0.0, %v3269
    %v3271 = vpop.f32.mrf.mxu0
    %v3272 = vadd.f32 0.0, %v3271
    %3273 = vmatprep.mubr.f32.mxu0 0.0
    %3274 = vmatmul.mubr.f32.gmra.mxu0 %v3153
    %v3275 = vpop.f32.mrf.mxu0
    %v3276 = vadd.f32 0.0, %v3275
    %v3277 = vpop.f32.mrf.mxu0
    %v3278 = vadd.f32 0.0, %v3277
    %3279 = vmatprep.mubr.f32.mxu0 0.0
    %3280 = vmatmul.mubr.f32.gmra.mxu0 %v3154
    %v3281 = vpop.f32.mrf.mxu0
    %v3282 = vadd.f32 0.0, %v3281
    %v3283 = vpop.f32.mrf.mxu0
    %v3284 = vadd.f32 0.0, %v3283
    %3285 = vmatprep.mubr.f32.mxu0 0.0
    %3286 = vmatmul.mubr.f32.gmra.mxu0 %v3155
    %v3287 = vpop.f32.mrf.mxu0
    %v3288 = vadd.f32 0.0, %v3287
    %v3289 = vpop.f32.mrf.mxu0
    %v3290 = vadd.f32 0.0, %v3289
    %3291 = vmatprep.mubr.f32.mxu0 0.0
    %3292 = vmatmul.mubr.f32.gmra.mxu0 %v3156
    %v3293 = vpop.f32.mrf.mxu0
    %v3294 = vadd.f32 0.0, %v3293
    %v3295 = vpop.f32.mrf.mxu0
    %v3296 = vadd.f32 0.0, %v3295
    %3297 = vmatprep.mubr.f32.mxu0 0.0
    %3298 = vmatmul.mubr.f32.gmra.mxu0 %v3157
    %v3299 = vpop.f32.mrf.mxu0
    %v3300 = vadd.f32 0.0, %v3299
    %v3301 = vpop.f32.mrf.mxu0
    %v3302 = vadd.f32 0.0, %v3301
    %3303 = vdwg.mxu0
    %3304 = vst [vmem:[#allocation2 + $0x18] sm:$0xff] %v3258
    %3305 = vst [vmem:[#allocation2 + $0x20] sm:$0xff] %v3264
    %3306 = vst [vmem:[#allocation2 + $0x28] sm:$0xff] %v3270
    %3307 = vst [vmem:[#allocation2 + $0x30] sm:$0xff] %v3276
    %3308 = vst [vmem:[#allocation2 + $0x38] sm:$0xff] %v3282
    %3309 = vst [vmem:[#allocation2 + $0x40] sm:$0xff] %v3288
    %3310 = vst [vmem:[#allocation2 + $0x48] sm:$0xff] %v3294
    %3311 = vst [vmem:[#allocation2 + $0x50] sm:$0xff] %v3300
    %s3312 = scalar_lea.vmem %s7, 2
    %v3313 = vld [vmem:[%s3312] sm:$0x1]
    %v3315 = vlaneseq
    %v3316 = vshrl.u32 %v3315, 7
    %v3317 = vsub.s32 0, %v3316
    %v3318 = vrot.slane %v3313, %v3317
    %v3320 = vadd.f32 %v3318, 0.0
    %v3321 = vld [vmem:[#allocation2] sm:$0xff]
    %v3322 = vld [vmem:[#allocation2 + $0x8] sm:$0xff]
    %v3323 = vld [vmem:[#allocation2 + $0x10] sm:$0xff]
    %v3324 = vld [vmem:[#allocation2 + $0x18] sm:$0xff]
    %v3325 = vld [vmem:[#allocation2 + $0x20] sm:$0xff]
    %v3326 = vld [vmem:[#allocation2 + $0x28] sm:$0xff]
    %v3327 = vld [vmem:[#allocation2 + $0x30] sm:$0xff]
    %v3328 = vld [vmem:[#allocation2 + $0x38] sm:$0xff]
    %s3329 = scalar_lea.vmem %s6, 8
    %v3330 = vld [vmem:[%s3329] sm:$0x1]
    %v3331 = vlaneseq
    %v3332 = vshrl.u32 %v3331, 7
    %v3333 = vsub.s32 0, %v3332
    %v3334 = vrot.slane %v3330, %v3333
    %v3335 = vmul.f32 %v3321, %v3334
    %v3336 = vmul.f32 %v3322, %v3334
    %v3337 = vmul.f32 %v3323, %v3334
    %v3338 = vmul.f32 %v3324, %v3334
    %v3339 = vmul.f32 %v3325, %v3334
    %v3340 = vmul.f32 %v3326, %v3334
    %v3341 = vmul.f32 %v3327, %v3334
    %v3342 = vmul.f32 %v3328, %v3334
    %v3343 = vadd.f32 %v3320, %v3335
    %v3344 = vadd.f32 %v3320, %v3336
    %v3345 = vadd.f32 %v3320, %v3337
    %v3346 = vadd.f32 %v3320, %v3338
    %v3347 = vadd.f32 %v3320, %v3339
    %v3348 = vadd.f32 %v3320, %v3340
    %v3349 = vadd.f32 %v3320, %v3341
    %v3350 = vadd.f32 %v3320, %v3342
    %v3351 = vld [vmem:[#allocation2 + $0x40] sm:$0xff]
    %v3352 = vld [vmem:[%s3329 + $0x1] sm:$0x1]
    %v3353 = vlaneseq
    %v3354 = vshrl.u32 %v3353, 7
    %v3355 = vsub.s32 0, %v3354
    %v3356 = vrot.slane %v3352, %v3355
    %v3357 = vmul.f32 %v3322, %v3356
    %v3358 = vmul.f32 %v3323, %v3356
    %v3359 = vmul.f32 %v3324, %v3356
    %v3360 = vmul.f32 %v3325, %v3356
    %v3361 = vmul.f32 %v3326, %v3356
    %v3362 = vmul.f32 %v3327, %v3356
    %v3363 = vmul.f32 %v3328, %v3356
    %v3364 = vmul.f32 %v3351, %v3356
    %v3365 = vadd.f32 %v3343, %v3357
    %v3366 = vadd.f32 %v3344, %v3358
    %v3367 = vadd.f32 %v3345, %v3359
    %v3368 = vadd.f32 %v3346, %v3360
    %v3369 = vadd.f32 %v3347, %v3361
    %v3370 = vadd.f32 %v3348, %v3362
    %v3371 = vadd.f32 %v3349, %v3363
    %v3372 = vadd.f32 %v3350, %v3364
    %v3373 = vld [vmem:[#allocation2 + $0x48] sm:$0xff]
    %v3374 = vld [vmem:[%s3329 + $0x2] sm:$0x1]
    %v3375 = vlaneseq
    %v3376 = vshrl.u32 %v3375, 7
    %v3377 = vsub.s32 0, %v3376
    %v3378 = vrot.slane %v3374, %v3377
    %v3379 = vmul.f32 %v3323, %v3378
    %v3380 = vmul.f32 %v3324, %v3378
    %v3381 = vmul.f32 %v3325, %v3378
    %v3382 = vmul.f32 %v3326, %v3378
    %v3383 = vmul.f32 %v3327, %v3378
    %v3384 = vmul.f32 %v3328, %v3378
    %v3385 = vmul.f32 %v3351, %v3378
    %v3386 = vmul.f32 %v3373, %v3378
    %v3387 = vadd.f32 %v3365, %v3379
    %v3388 = vadd.f32 %v3366, %v3380
    %v3389 = vadd.f32 %v3367, %v3381
    %v3390 = vadd.f32 %v3368, %v3382
    %v3391 = vadd.f32 %v3369, %v3383
    %v3392 = vadd.f32 %v3370, %v3384
    %v3393 = vadd.f32 %v3371, %v3385
    %v3394 = vadd.f32 %v3372, %v3386
    %v3395 = vld [vmem:[#allocation2 + $0x18] sm:$0xff]
    %v3396 = vld [vmem:[#allocation2 + $0x20] sm:$0xff]
    %v3397 = vld [vmem:[#allocation2 + $0x28] sm:$0xff]
    %v3398 = vld [vmem:[#allocation2 + $0x30] sm:$0xff]
    %v3399 = vld [vmem:[#allocation2 + $0x38] sm:$0xff]
    %v3400 = vld [vmem:[#allocation2 + $0x40] sm:$0xff]
    %v3401 = vld [vmem:[#allocation2 + $0x48] sm:$0xff]
    %v3402 = vld [vmem:[#allocation2 + $0x50] sm:$0xff]
    %v3403 = vld [vmem:[%s3329 + $0x3] sm:$0x1]
    %v3404 = vlaneseq
    %v3405 = vshrl.u32 %v3404, 7
    %v3406 = vsub.s32 0, %v3405
    %v3407 = vrot.slane %v3403, %v3406
    %v3408 = vmul.f32 %v3395, %v3407
    %v3409 = vmul.f32 %v3396, %v3407
    %v3410 = vmul.f32 %v3397, %v3407
    %v3411 = vmul.f32 %v3398, %v3407
    %v3412 = vmul.f32 %v3399, %v3407
    %v3413 = vmul.f32 %v3400, %v3407
    %v3414 = vmul.f32 %v3401, %v3407
    %v3415 = vmul.f32 %v3402, %v3407
    %v3416 = vadd.f32 %v3387, %v3408
    %v3417 = vadd.f32 %v3388, %v3409
    %v3418 = vadd.f32 %v3389, %v3410
    %v3419 = vadd.f32 %v3390, %v3411
    %v3420 = vadd.f32 %v3391, %v3412
    %v3421 = vadd.f32 %v3392, %v3413
    %v3422 = vadd.f32 %v3393, %v3414
    %v3423 = vadd.f32 %v3394, %v3415
    %v3424 = vxor.u32 %v3416, 2147483648
    %v3425 = vxor.u32 %v3417, 2147483648
    %v3426 = vxor.u32 %v3418, 2147483648
    %v3427 = vxor.u32 %v3419, 2147483648
    %v3428 = vxor.u32 %v3420, 2147483648
    %v3429 = vxor.u32 %v3421, 2147483648
    %v3430 = vxor.u32 %v3422, 2147483648
    %v3431 = vxor.u32 %v3423, 2147483648
    %v3432 = vmul.f32 %v3424, 1.442695
    %v3433 = vpow.pop %v3432
    %v3434 = vmul.f32 %v3425, 1.442695
    %v3435 = vpow.pop %v3434
    %v3436 = vmul.f32 %v3426, 1.442695
    %v3437 = vpow.pop %v3436
    %v3438 = vmul.f32 %v3427, 1.442695
    %v3439 = vpow.pop %v3438
    %v3440 = vmul.f32 %v3428, 1.442695
    %v3441 = vpow.pop %v3440
    %v3442 = vmul.f32 %v3429, 1.442695
    %v3443 = vpow.pop %v3442
    %v3444 = vmul.f32 %v3430, 1.442695
    %v3445 = vpow.pop %v3444
    %v3446 = vmul.f32 %v3431, 1.442695
    %v3447 = vpow.pop %v3446
    %v3448 = vadd.f32 %v3433, 1.0
    %v3449 = vadd.f32 %v3435, 1.0
    %v3450 = vadd.f32 %v3437, 1.0
    %v3451 = vadd.f32 %v3439, 1.0
    %v3452 = vadd.f32 %v3441, 1.0
    %v3453 = vadd.f32 %v3443, 1.0
    %v3454 = vadd.f32 %v3445, 1.0
    %v3455 = vadd.f32 %v3447, 1.0
    %v3456 = vrcp.pop %v3448
    %v3457 = vmul.f32 1.0, %v3456
    %v3458 = vrcp.pop %v3449
    %v3459 = vmul.f32 1.0, %v3458
    %v3460 = vrcp.pop %v3450
    %v3461 = vmul.f32 1.0, %v3460
    %v3462 = vrcp.pop %v3451
    %v3463 = vmul.f32 1.0, %v3462
    %v3464 = vrcp.pop %v3452
    %v3465 = vmul.f32 1.0, %v3464
    %v3466 = vrcp.pop %v3453
    %v3467 = vmul.f32 1.0, %v3466
    %v3468 = vrcp.pop %v3454
    %v3469 = vmul.f32 1.0, %v3468
    %v3470 = vrcp.pop %v3455
    %v3471 = vmul.f32 1.0, %v3470
    %v3472 = vmul.f32 %v3416, %v3457
    %v3473 = vmul.f32 %v3417, %v3459
    %v3474 = vmul.f32 %v3418, %v3461
    %v3475 = vmul.f32 %v3419, %v3463
    %v3476 = vmul.f32 %v3420, %v3465
    %v3477 = vmul.f32 %v3421, %v3467
    %v3478 = vmul.f32 %v3422, %v3469
    %v3479 = vmul.f32 %v3423, %v3471
    %s3480 = scalar_lea.vmem [#allocation4], 256
    %v3481 = vld [vmem:[%s3480] sm:$0xff]
    %v3482 = vld [vmem:[%s3480 + $0x8] sm:$0xff]
    %v3483 = vld [vmem:[%s3480 + $0x10] sm:$0xff]
    %v3484 = vld [vmem:[%s3480 + $0x18] sm:$0xff]
    %v3485 = vld [vmem:[%s3480 + $0x20] sm:$0xff]
    %v3486 = vld [vmem:[%s3480 + $0x28] sm:$0xff]
    %v3487 = vld [vmem:[%s3480 + $0x30] sm:$0xff]
    %v3488 = vld [vmem:[%s3480 + $0x38] sm:$0xff]
    %v3489 = vld [vmem:[%s3480 + $0x40] sm:$0xff]
    %v3490 = vld [vmem:[%s3480 + $0x48] sm:$0xff]
    %v3491 = vld [vmem:[%s3480 + $0x50] sm:$0xff]
    %v3492 = vld [vmem:[%s3480 + $0x58] sm:$0xff]
    %v3493 = vld [vmem:[%s3480 + $0x60] sm:$0xff]
    %v3494 = vld [vmem:[%s3480 + $0x68] sm:$0xff]
    %v3495 = vld [vmem:[%s3480 + $0x70] sm:$0xff]
    %v3496 = vld [vmem:[%s3480 + $0x78] sm:$0xff]
    %s3497 = scalar_lea.vmem %s10, 2
    %v3498 = vld [vmem:[%s3497] sm:$0x1]
    %v3500 = vlaneseq
    %v3501 = vshrl.u32 %v3500, 7
    %v3502 = vsub.s32 0, %v3501
    %v3503 = vrot.slane %v3498, %v3502
    %3505 = vmatprep.subr.mxu0 0.0
    %3506 = vmatpush1.msra.mxu0 %v3496
    %3507 = vmatprep.subr.mxu0 0.0
    %3508 = vmatpush1.msra.mxu0 %v3495
    %3509 = vmatprep.subr.mxu0 0.0
    %3510 = vmatpush1.msra.mxu0 %v3494
    %3511 = vmatprep.subr.mxu0 0.0
    %3512 = vmatpush1.msra.mxu0 %v3493
    %3513 = vmatprep.subr.mxu0 0.0
    %3514 = vmatpush1.msra.mxu0 %v3492
    %3515 = vmatprep.subr.mxu0 0.0
    %3516 = vmatpush1.msra.mxu0 %v3491
    %3517 = vmatprep.subr.mxu0 0.0
    %3518 = vmatpush1.msra.mxu0 %v3490
    %3519 = vmatprep.subr.mxu0 0.0
    %3520 = vmatpush1.msra.mxu0 %v3489
    %3521 = vmatprep.subr.mxu0 0.0
    %3522 = vmatpush1.msra.mxu0 %v3488
    %3523 = vmatprep.subr.mxu0 0.0
    %3524 = vmatpush1.msra.mxu0 %v3487
    %3525 = vmatprep.subr.mxu0 0.0
    %3526 = vmatpush1.msra.mxu0 %v3486
    %3527 = vmatprep.subr.mxu0 0.0
    %3528 = vmatpush1.msra.mxu0 %v3485
    %3529 = vmatprep.subr.mxu0 0.0
    %3530 = vmatpush1.msra.mxu0 %v3484
    %3531 = vmatprep.subr.mxu0 0.0
    %3532 = vmatpush1.msra.mxu0 %v3483
    %3533 = vmatprep.subr.mxu0 0.0
    %3534 = vmatpush1.msra.mxu0 %v3482
    %3535 = vmatprep.subr.mxu0 0.0
    %3536 = vmatpush1.msra.mxu0 %v3481
    %3537 = vmatprep.subr.mxu0 0.0
    %3538 = vmatpush2.msra.mxu0 0.0
    %3539 = vmatprep.subr.mxu0 0.0
    %3540 = vmatpush2.msra.mxu0 0.0
    %3541 = vmatprep.subr.mxu0 0.0
    %3542 = vmatpush2.msra.mxu0 0.0
    %3543 = vmatprep.subr.mxu0 0.0
    %3544 = vmatpush2.msra.mxu0 0.0
    %3545 = vmatprep.subr.mxu0 0.0
    %3546 = vmatpush2.msra.mxu0 0.0
    %3547 = vmatprep.subr.mxu0 0.0
    %3548 = vmatpush2.msra.mxu0 0.0
    %3549 = vmatprep.subr.mxu0 0.0
    %3550 = vmatpush2.msra.mxu0 0.0
    %3551 = vmatprep.subr.mxu0 0.0
    %3552 = vmatpush2.msra.mxu0 0.0
    %3553 = vmatprep.subr.mxu0 0.0
    %3554 = vmatpush2.msra.mxu0 0.0
    %3555 = vmatprep.subr.mxu0 0.0
    %3556 = vmatpush2.msra.mxu0 0.0
    %3557 = vmatprep.subr.mxu0 0.0
    %3558 = vmatpush2.msra.mxu0 0.0
    %3559 = vmatprep.subr.mxu0 0.0
    %3560 = vmatpush2.msra.mxu0 0.0
    %3561 = vmatprep.subr.mxu0 0.0
    %3562 = vmatpush2.msra.mxu0 0.0
    %3563 = vmatprep.subr.mxu0 0.0
    %3564 = vmatpush2.msra.mxu0 0.0
    %3565 = vmatprep.subr.mxu0 0.0
    %3566 = vmatpush2.msra.mxu0 0.0
    %3567 = vmatprep.subr.mxu0 0.0
    %3568 = vmatpush2.msra.mxu0 0.0
    %3569 = vmatprep.mubr.f32.mxu0 0.0
    %3570 = vmatmul.mubr.f32.gmra.mxu0 %v3472
    %v3571 = vpop.f32.mrf.mxu0
    %v3572 = vadd.f32 %v3503, %v3571
    %v3573 = vpop.f32.mrf.mxu0
    %3574 = vmatprep.mubr.f32.mxu0 0.0
    %3575 = vmatmul.mubr.f32.gmra.mxu0 %v3473
    %v3576 = vpop.f32.mrf.mxu0
    %v3577 = vadd.f32 %v3503, %v3576
    %v3578 = vpop.f32.mrf.mxu0
    %3579 = vmatprep.mubr.f32.mxu0 0.0
    %3580 = vmatmul.mubr.f32.gmra.mxu0 %v3474
    %v3581 = vpop.f32.mrf.mxu0
    %v3582 = vadd.f32 %v3503, %v3581
    %v3583 = vpop.f32.mrf.mxu0
    %3584 = vmatprep.mubr.f32.mxu0 0.0
    %3585 = vmatmul.mubr.f32.gmra.mxu0 %v3475
    %v3586 = vpop.f32.mrf.mxu0
    %v3587 = vadd.f32 %v3503, %v3586
    %v3588 = vpop.f32.mrf.mxu0
    %3589 = vmatprep.mubr.f32.mxu0 0.0
    %3590 = vmatmul.mubr.f32.gmra.mxu0 %v3476
    %v3591 = vpop.f32.mrf.mxu0
    %v3592 = vadd.f32 %v3503, %v3591
    %v3593 = vpop.f32.mrf.mxu0
    %3594 = vmatprep.mubr.f32.mxu0 0.0
    %3595 = vmatmul.mubr.f32.gmra.mxu0 %v3477
    %v3596 = vpop.f32.mrf.mxu0
    %v3597 = vadd.f32 %v3503, %v3596
    %v3598 = vpop.f32.mrf.mxu0
    %3599 = vmatprep.mubr.f32.mxu0 0.0
    %3600 = vmatmul.mubr.f32.gmra.mxu0 %v3478
    %v3601 = vpop.f32.mrf.mxu0
    %v3602 = vadd.f32 %v3503, %v3601
    %v3603 = vpop.f32.mrf.mxu0
    %3604 = vmatprep.mubr.f32.mxu0 0.0
    %3605 = vmatmul.mubr.f32.gmra.mxu0 %v3479
    %v3606 = vpop.f32.mrf.mxu0
    %v3607 = vadd.f32 %v3503, %v3606
    %v3608 = vpop.f32.mrf.mxu0
    %3609 = vdwg.mxu0
    %v3610 = vmax.f32 %v3572, 0.0
    %v3611 = vmax.f32 %v3577, 0.0
    %v3612 = vmax.f32 %v3582, 0.0
    %v3613 = vmax.f32 %v3587, 0.0
    %v3614 = vmax.f32 %v3592, 0.0
    %v3615 = vmax.f32 %v3597, 0.0
    %v3616 = vmax.f32 %v3602, 0.0
    %v3617 = vmax.f32 %v3607, 0.0
    %vm3618 = vcmp.ne.f32.partialorder %v3572, %v3572
    %vm3619 = vcmp.ne.f32.partialorder %v3577, %v3577
    %vm3620 = vcmp.ne.f32.partialorder %v3582, %v3582
    %vm3621 = vcmp.ne.f32.partialorder %v3587, %v3587
    %vm3622 = vcmp.ne.f32.partialorder %v3592, %v3592
    %vm3623 = vcmp.ne.f32.partialorder %v3597, %v3597
    %vm3624 = vcmp.ne.f32.partialorder %v3602, %v3602
    %vm3625 = vcmp.ne.f32.partialorder %v3607, %v3607
    %v3626 = vadd.f32 %v3572, 0.0
    %v3627 = vadd.f32 %v3577, 0.0
    %v3628 = vadd.f32 %v3582, 0.0
    %v3629 = vadd.f32 %v3587, 0.0
    %v3630 = vadd.f32 %v3592, 0.0
    %v3631 = vadd.f32 %v3597, 0.0
    %v3632 = vadd.f32 %v3602, 0.0
    %v3633 = vadd.f32 %v3607, 0.0
    %v3634 = vand.u32 2147483647, %v3572
    %v3635 = vand.u32 2147483647, %v3577
    %v3636 = vand.u32 2147483647, %v3582
    %v3637 = vand.u32 2147483647, %v3587
    %v3638 = vand.u32 2147483647, %v3592
    %v3639 = vand.u32 2147483647, %v3597
    %v3640 = vand.u32 2147483647, %v3602
    %v3641 = vand.u32 2147483647, %v3607
    %v3642 = vsub.f32 0.0, %v3634
    %v3643 = vsub.f32 0.0, %v3635
    %v3644 = vsub.f32 0.0, %v3636
    %v3645 = vsub.f32 0.0, %v3637
    %v3646 = vsub.f32 0.0, %v3638
    %v3647 = vsub.f32 0.0, %v3639
    %v3648 = vsub.f32 0.0, %v3640
    %v3649 = vsub.f32 0.0, %v3641
    %v3650 = vmul.f32 %v3642, 1.442695
    %v3651 = vpow.pop %v3650
    %v3652 = vmul.f32 %v3643, 1.442695
    %v3653 = vpow.pop %v3652
    %v3654 = vmul.f32 %v3644, 1.442695
    %v3655 = vpow.pop %v3654
    %v3656 = vmul.f32 %v3645, 1.442695
    %v3657 = vpow.pop %v3656
    %v3658 = vmul.f32 %v3646, 1.442695
    %v3659 = vpow.pop %v3658
    %v3660 = vmul.f32 %v3647, 1.442695
    %v3661 = vpow.pop %v3660
    %v3662 = vmul.f32 %v3648, 1.442695
    %v3663 = vpow.pop %v3662
    %v3664 = vmul.f32 %v3649, 1.442695
    %v3665 = vpow.pop %v3664
    %v3666 = vadd.f32 %v3651, 1.0
    %v3667 = vlog2.pop %v3666
    %v3668 = vmul.f32 %v3667, 0.6931472
    %v3669 = vmul.f32 -0.5, %v3651
    %v3670 = vadd.f32 %v3669, 1.0
    %v3671 = vmul.f32 %v3670, %v3651
    %v3672 = vand.u32 2147483647, %v3651
    %vm3673 = vcmp.lt.f32.partialorder %v3672, 0.0004427343
    %v3674 = vsel %vm3673, %v3671, %v3668
    %v3675 = vadd.f32 %v3653, 1.0
    %v3676 = vlog2.pop %v3675
    %v3677 = vmul.f32 %v3676, 0.6931472
    %v3678 = vmul.f32 -0.5, %v3653
    %v3679 = vadd.f32 %v3678, 1.0
    %v3680 = vmul.f32 %v3679, %v3653
    %v3681 = vand.u32 2147483647, %v3653
    %vm3682 = vcmp.lt.f32.partialorder %v3681, 0.0004427343
    %v3683 = vsel %vm3682, %v3680, %v3677
    %v3684 = vadd.f32 %v3655, 1.0
    %v3685 = vlog2.pop %v3684
    %v3686 = vmul.f32 %v3685, 0.6931472
    %v3687 = vmul.f32 -0.5, %v3655
    %v3688 = vadd.f32 %v3687, 1.0
    %v3689 = vmul.f32 %v3688, %v3655
    %v3690 = vand.u32 2147483647, %v3655
    %vm3691 = vcmp.lt.f32.partialorder %v3690, 0.0004427343
    %v3692 = vsel %vm3691, %v3689, %v3686
    %v3693 = vadd.f32 %v3657, 1.0
    %v3694 = vlog2.pop %v3693
    %v3695 = vmul.f32 %v3694, 0.6931472
    %v3696 = vmul.f32 -0.5, %v3657
    %v3697 = vadd.f32 %v3696, 1.0
    %v3698 = vmul.f32 %v3697, %v3657
    %v3699 = vand.u32 2147483647, %v3657
    %vm3700 = vcmp.lt.f32.partialorder %v3699, 0.0004427343
    %v3701 = vsel %vm3700, %v3698, %v3695
    %v3702 = vadd.f32 %v3659, 1.0
    %v3703 = vlog2.pop %v3702
    %v3704 = vmul.f32 %v3703, 0.6931472
    %v3705 = vmul.f32 -0.5, %v3659
    %v3706 = vadd.f32 %v3705, 1.0
    %v3707 = vmul.f32 %v3706, %v3659
    %v3708 = vand.u32 2147483647, %v3659
    %vm3709 = vcmp.lt.f32.partialorder %v3708, 0.0004427343
    %v3710 = vsel %vm3709, %v3707, %v3704
    %v3711 = vadd.f32 %v3661, 1.0
    %v3712 = vlog2.pop %v3711
    %v3713 = vmul.f32 %v3712, 0.6931472
    %v3714 = vmul.f32 -0.5, %v3661
    %v3715 = vadd.f32 %v3714, 1.0
    %v3716 = vmul.f32 %v3715, %v3661
    %v3717 = vand.u32 2147483647, %v3661
    %vm3718 = vcmp.lt.f32.partialorder %v3717, 0.0004427343
    %v3719 = vsel %vm3718, %v3716, %v3713
    %v3720 = vadd.f32 %v3663, 1.0
    %v3721 = vlog2.pop %v3720
    %v3722 = vmul.f32 %v3721, 0.6931472
    %v3723 = vmul.f32 -0.5, %v3663
    %v3724 = vadd.f32 %v3723, 1.0
    %v3725 = vmul.f32 %v3724, %v3663
    %v3726 = vand.u32 2147483647, %v3663
    %vm3727 = vcmp.lt.f32.partialorder %v3726, 0.0004427343
    %v3728 = vsel %vm3727, %v3725, %v3722
    %v3729 = vadd.f32 %v3665, 1.0
    %v3730 = vlog2.pop %v3729
    %v3731 = vmul.f32 %v3730, 0.6931472
    %v3732 = vmul.f32 -0.5, %v3665
    %v3733 = vadd.f32 %v3732, 1.0
    %v3734 = vmul.f32 %v3733, %v3665
    %v3735 = vand.u32 2147483647, %v3665
    %vm3736 = vcmp.lt.f32.partialorder %v3735, 0.0004427343
    %v3737 = vsel %vm3736, %v3734, %v3731
    %v3738 = vadd.f32 %v3610, %v3674
    %v3739 = vadd.f32 %v3611, %v3683
    %v3740 = vadd.f32 %v3612, %v3692
    %v3741 = vadd.f32 %v3613, %v3701
    %v3742 = vadd.f32 %v3614, %v3710
    %v3743 = vadd.f32 %v3615, %v3719
    %v3744 = vadd.f32 %v3616, %v3728
    %v3745 = vadd.f32 %v3617, %v3737
    %v3746 = vsel %vm3618, %v3626, %v3738
    %v3747 = vsel %vm3619, %v3627, %v3739
    %v3748 = vsel %vm3620, %v3628, %v3740
    %v3749 = vsel %vm3621, %v3629, %v3741
    %v3750 = vsel %vm3622, %v3630, %v3742
    %v3751 = vsel %vm3623, %v3631, %v3743
    %v3752 = vsel %vm3624, %v3632, %v3744
    %v3753 = vsel %vm3625, %v3633, %v3745
    %s3754 = scalar_lea.vmem %s8, 256
    %v3755 = vld [vmem:[%s3754] sm:$0xff]
    %v3756 = vld [vmem:[%s3754 + $0x8] sm:$0xff]
    %v3757 = vld [vmem:[%s3754 + $0x10] sm:$0xff]
    %v3758 = vld [vmem:[%s3754 + $0x18] sm:$0xff]
    %v3759 = vld [vmem:[%s3754 + $0x20] sm:$0xff]
    %v3760 = vld [vmem:[%s3754 + $0x28] sm:$0xff]
    %v3761 = vld [vmem:[%s3754 + $0x30] sm:$0xff]
    %v3762 = vld [vmem:[%s3754 + $0x38] sm:$0xff]
    %v3763 = vld [vmem:[%s3754 + $0x40] sm:$0xff]
    %v3764 = vld [vmem:[%s3754 + $0x48] sm:$0xff]
    %v3765 = vld [vmem:[%s3754 + $0x50] sm:$0xff]
    %v3766 = vld [vmem:[%s3754 + $0x58] sm:$0xff]
    %v3767 = vld [vmem:[%s3754 + $0x60] sm:$0xff]
    %v3768 = vld [vmem:[%s3754 + $0x68] sm:$0xff]
    %v3769 = vld [vmem:[%s3754 + $0x70] sm:$0xff]
    %v3770 = vld [vmem:[%s3754 + $0x78] sm:$0xff]
    %3771 = vmatprep.subr.mxu0 0.0
    %3772 = vmatpush1.msra.mxu0 %v3770
    %3773 = vmatprep.subr.mxu0 0.0
    %3774 = vmatpush1.msra.mxu0 %v3769
    %3775 = vmatprep.subr.mxu0 0.0
    %3776 = vmatpush1.msra.mxu0 %v3768
    %3777 = vmatprep.subr.mxu0 0.0
    %3778 = vmatpush1.msra.mxu0 %v3767
    %3779 = vmatprep.subr.mxu0 0.0
    %3780 = vmatpush1.msra.mxu0 %v3766
    %3781 = vmatprep.subr.mxu0 0.0
    %3782 = vmatpush1.msra.mxu0 %v3765
    %3783 = vmatprep.subr.mxu0 0.0
    %3784 = vmatpush1.msra.mxu0 %v3764
    %3785 = vmatprep.subr.mxu0 0.0
    %3786 = vmatpush1.msra.mxu0 %v3763
    %3787 = vmatprep.subr.mxu0 0.0
    %3788 = vmatpush1.msra.mxu0 %v3762
    %3789 = vmatprep.subr.mxu0 0.0
    %3790 = vmatpush1.msra.mxu0 %v3761
    %3791 = vmatprep.subr.mxu0 0.0
    %3792 = vmatpush1.msra.mxu0 %v3760
    %3793 = vmatprep.subr.mxu0 0.0
    %3794 = vmatpush1.msra.mxu0 %v3759
    %3795 = vmatprep.subr.mxu0 0.0
    %3796 = vmatpush1.msra.mxu0 %v3758
    %3797 = vmatprep.subr.mxu0 0.0
    %3798 = vmatpush1.msra.mxu0 %v3757
    %3799 = vmatprep.subr.mxu0 0.0
    %3800 = vmatpush1.msra.mxu0 %v3756
    %3801 = vmatprep.subr.mxu0 0.0
    %3802 = vmatpush1.msra.mxu0 %v3755
    %3803 = vmatprep.subr.mxu0 0.0
    %3804 = vmatpush2.msra.mxu0 0.0
    %3805 = vmatprep.subr.mxu0 0.0
    %3806 = vmatpush2.msra.mxu0 0.0
    %3807 = vmatprep.subr.mxu0 0.0
    %3808 = vmatpush2.msra.mxu0 0.0
    %3809 = vmatprep.subr.mxu0 0.0
    %3810 = vmatpush2.msra.mxu0 0.0
    %3811 = vmatprep.subr.mxu0 0.0
    %3812 = vmatpush2.msra.mxu0 0.0
    %3813 = vmatprep.subr.mxu0 0.0
    %3814 = vmatpush2.msra.mxu0 0.0
    %3815 = vmatprep.subr.mxu0 0.0
    %3816 = vmatpush2.msra.mxu0 0.0
    %3817 = vmatprep.subr.mxu0 0.0
    %3818 = vmatpush2.msra.mxu0 0.0
    %3819 = vmatprep.subr.mxu0 0.0
    %3820 = vmatpush2.msra.mxu0 0.0
    %3821 = vmatprep.subr.mxu0 0.0
    %3822 = vmatpush2.msra.mxu0 0.0
    %3823 = vmatprep.subr.mxu0 0.0
    %3824 = vmatpush2.msra.mxu0 0.0
    %3825 = vmatprep.subr.mxu0 0.0
    %3826 = vmatpush2.msra.mxu0 0.0
    %3827 = vmatprep.subr.mxu0 0.0
    %3828 = vmatpush2.msra.mxu0 0.0
    %3829 = vmatprep.subr.mxu0 0.0
    %3830 = vmatpush2.msra.mxu0 0.0
    %3831 = vmatprep.subr.mxu0 0.0
    %3832 = vmatpush2.msra.mxu0 0.0
    %3833 = vmatprep.subr.mxu0 0.0
    %3834 = vmatpush2.msra.mxu0 0.0
    %3835 = vmatprep.mubr.f32.mxu0 0.0
    %3836 = vmatmul.mubr.f32.gmra.mxu0 %v3472
    %v3837 = vpop.f32.mrf.mxu0
    %v3838 = vadd.f32 0.0, %v3837
    %v3839 = vpop.f32.mrf.mxu0
    %3840 = vmatprep.mubr.f32.mxu0 0.0
    %3841 = vmatmul.mubr.f32.gmra.mxu0 %v3473
    %v3842 = vpop.f32.mrf.mxu0
    %v3843 = vadd.f32 0.0, %v3842
    %v3844 = vpop.f32.mrf.mxu0
    %3845 = vmatprep.mubr.f32.mxu0 0.0
    %3846 = vmatmul.mubr.f32.gmra.mxu0 %v3474
    %v3847 = vpop.f32.mrf.mxu0
    %v3848 = vadd.f32 0.0, %v3847
    %v3849 = vpop.f32.mrf.mxu0
    %3850 = vmatprep.mubr.f32.mxu0 0.0
    %3851 = vmatmul.mubr.f32.gmra.mxu0 %v3475
    %v3852 = vpop.f32.mrf.mxu0
    %v3853 = vadd.f32 0.0, %v3852
    %v3854 = vpop.f32.mrf.mxu0
    %3855 = vmatprep.mubr.f32.mxu0 0.0
    %3856 = vmatmul.mubr.f32.gmra.mxu0 %v3476
    %v3857 = vpop.f32.mrf.mxu0
    %v3858 = vadd.f32 0.0, %v3857
    %v3859 = vpop.f32.mrf.mxu0
    %3860 = vmatprep.mubr.f32.mxu0 0.0
    %3861 = vmatmul.mubr.f32.gmra.mxu0 %v3477
    %v3862 = vpop.f32.mrf.mxu0
    %v3863 = vadd.f32 0.0, %v3862
    %v3864 = vpop.f32.mrf.mxu0
    %3865 = vmatprep.mubr.f32.mxu0 0.0
    %3866 = vmatmul.mubr.f32.gmra.mxu0 %v3478
    %v3867 = vpop.f32.mrf.mxu0
    %v3868 = vadd.f32 0.0, %v3867
    %v3869 = vpop.f32.mrf.mxu0
    %3870 = vmatprep.mubr.f32.mxu0 0.0
    %3871 = vmatmul.mubr.f32.gmra.mxu0 %v3479
    %v3872 = vpop.f32.mrf.mxu0
    %v3873 = vadd.f32 0.0, %v3872
    %v3874 = vpop.f32.mrf.mxu0
    %3875 = vdwg.mxu0
    %s3876 = scalar_lea.vmem %s11, 4
    %v3877 = vld [vmem:[%s3876] sm:$0x1]
    %v3878 = vld [vmem:[%s3876 + $0x1] sm:$0x1]
    %v3879 = vlaneseq
    %v3880 = vshrl.u32 %v3879, 7
    %v3881 = vsub.s32 0, %v3880
    %v3882 = vrot.slane %v3877, %v3881
    %v3883 = vmul.f32 %v3746, %v3882
    %v3884 = vmul.f32 %v3883, 1.442695
    %v3885 = vpow.pop %v3884
    %v3886 = vmul.f32 %v3885, 0.0
    %3888 = vset.pattern.permute.xlu0 0
    %3889 = vperm.xlu0 %3888, %v3838
    %v3890 = vpop.permute.xlu0 %3889
    %v3892 = vmul.f32 %v3746, %v3890
    %v3893 = vadd.f32 %v3886, %v3892
    %3894 = vset.pattern.permute.xlu0 2
    %3895 = vperm.xlu0 %3894, %v3838
    %v3896 = vpop.permute.xlu0 %3895
    %v3898 = vmul.f32 %v3893, %v3896
    %v3899 = vadd.f32 %v3898, 0.0
    %v3900 = vlaneseq
    %v3901 = vshrl.u32 %v3900, 7
    %v3902 = vsub.s32 0, %v3901
    %v3903 = vrot.slane %v3878, %v3902
    %v3904 = vmul.f32 %v3746, %v3903
    %v3905 = vmul.f32 %v3904, 1.442695
    %v3906 = vpow.pop %v3905
    %v3907 = vmul.f32 %v3906, 0.0
    %3908 = vset.pattern.permute.xlu0 1
    %3909 = vperm.xlu0 %3908, %v3838
    %v3910 = vpop.permute.xlu0 %3909
    %v3912 = vmul.f32 %v3746, %v3910
    %v3913 = vadd.f32 %v3907, %v3912
    %3914 = vset.pattern.permute.xlu0 3
    %3915 = vperm.xlu0 %3914, %v3838
    %v3916 = vpop.permute.xlu0 %3915
    %v3918 = vmul.f32 %v3913, %v3916
    %v3919 = vadd.f32 %v3899, %v3918
    %3920 = vst [vmem:[#allocation3] sm:$0xff] %v3919
    %v3921 = vmul.f32 %v3747, %v3882
    %v3922 = vmul.f32 %v3921, 1.442695
    %v3923 = vpow.pop %v3922
    %v3924 = vmul.f32 %v3923, %v3893
    %3926 = vset.pattern.permute.xlu0 0
    %3927 = vperm.xlu0 %3926, %v3843
    %v3928 = vpop.permute.xlu0 %3927
    %v3930 = vmul.f32 %v3747, %v3928
    %v3931 = vadd.f32 %v3924, %v3930
    %3932 = vset.pattern.permute.xlu0 2
    %3933 = vperm.xlu0 %3932, %v3843
    %v3934 = vpop.permute.xlu0 %3933
    %v3936 = vmul.f32 %v3931, %v3934
    %v3937 = vadd.f32 %v3936, 0.0
    %v3938 = vmul.f32 %v3747, %v3903
    %v3939 = vmul.f32 %v3938, 1.442695
    %v3940 = vpow.pop %v3939
    %v3941 = vmul.f32 %v3940, %v3913
    %3942 = vset.pattern.permute.xlu0 1
    %3943 = vperm.xlu0 %3942, %v3843
    %v3944 = vpop.permute.xlu0 %3943
    %v3946 = vmul.f32 %v3747, %v3944
    %v3947 = vadd.f32 %v3941, %v3946
    %3948 = vset.pattern.permute.xlu0 3
    %3949 = vperm.xlu0 %3948, %v3843
    %v3950 = vpop.permute.xlu0 %3949
    %v3952 = vmul.f32 %v3947, %v3950
    %v3953 = vadd.f32 %v3937, %v3952
    %3954 = vst [vmem:[#allocation3 + $0x8] sm:$0xff] %v3953
    %v3955 = vmul.f32 %v3748, %v3882
    %v3956 = vmul.f32 %v3955, 1.442695
    %v3957 = vpow.pop %v3956
    %v3958 = vmul.f32 %v3957, %v3931
    %3960 = vset.pattern.permute.xlu0 0
    %3961 = vperm.xlu0 %3960, %v3848
    %v3962 = vpop.permute.xlu0 %3961
    %v3964 = vmul.f32 %v3748, %v3962
    %v3965 = vadd.f32 %v3958, %v3964
    %3966 = vset.pattern.permute.xlu0 2
    %3967 = vperm.xlu0 %3966, %v3848
    %v3968 = vpop.permute.xlu0 %3967
    %v3970 = vmul.f32 %v3965, %v3968
    %v3971 = vadd.f32 %v3970, 0.0
    %v3972 = vmul.f32 %v3748, %v3903
    %v3973 = vmul.f32 %v3972, 1.442695
    %v3974 = vpow.pop %v3973
    %v3975 = vmul.f32 %v3974, %v3947
    %3976 = vset.pattern.permute.xlu0 1
    %3977 = vperm.xlu0 %3976, %v3848
    %v3978 = vpop.permute.xlu0 %3977
    %v3980 = vmul.f32 %v3748, %v3978
    %v3981 = vadd.f32 %v3975, %v3980
    %3982 = vset.pattern.permute.xlu0 3
    %3983 = vperm.xlu0 %3982, %v3848
    %v3984 = vpop.permute.xlu0 %3983
    %v3986 = vmul.f32 %v3981, %v3984
    %v3987 = vadd.f32 %v3971, %v3986
    %3988 = vst [vmem:[#allocation3 + $0x10] sm:$0xff] %v3987
    %v3989 = vmul.f32 %v3749, %v3882
    %v3990 = vmul.f32 %v3989, 1.442695
    %v3991 = vpow.pop %v3990
    %v3992 = vmul.f32 %v3991, %v3965
    %3994 = vset.pattern.permute.xlu0 0
    %3995 = vperm.xlu0 %3994, %v3853
    %v3996 = vpop.permute.xlu0 %3995
    %v3998 = vmul.f32 %v3749, %v3996
    %v3999 = vadd.f32 %v3992, %v3998
    %4000 = vset.pattern.permute.xlu0 2
    %4001 = vperm.xlu0 %4000, %v3853
    %v4002 = vpop.permute.xlu0 %4001
    %v4004 = vmul.f32 %v3999, %v4002
    %v4005 = vadd.f32 %v4004, 0.0
    %v4006 = vmul.f32 %v3749, %v3903
    %v4007 = vmul.f32 %v4006, 1.442695
    %v4008 = vpow.pop %v4007
    %v4009 = vmul.f32 %v4008, %v3981
    %4010 = vset.pattern.permute.xlu0 1
    %4011 = vperm.xlu0 %4010, %v3853
    %v4012 = vpop.permute.xlu0 %4011
    %v4014 = vmul.f32 %v3749, %v4012
    %v4015 = vadd.f32 %v4009, %v4014
    %4016 = vset.pattern.permute.xlu0 3
    %4017 = vperm.xlu0 %4016, %v3853
    %v4018 = vpop.permute.xlu0 %4017
    %v4020 = vmul.f32 %v4015, %v4018
    %v4021 = vadd.f32 %v4005, %v4020
    %4022 = vst [vmem:[#allocation3 + $0x18] sm:$0xff] %v4021
    %v4023 = vmul.f32 %v3750, %v3882
    %v4024 = vmul.f32 %v4023, 1.442695
    %v4025 = vpow.pop %v4024
    %v4026 = vmul.f32 %v4025, %v3999
    %4028 = vset.pattern.permute.xlu0 0
    %4029 = vperm.xlu0 %4028, %v3858
    %v4030 = vpop.permute.xlu0 %4029
    %v4032 = vmul.f32 %v3750, %v4030
    %v4033 = vadd.f32 %v4026, %v4032
    %4034 = vset.pattern.permute.xlu0 2
    %4035 = vperm.xlu0 %4034, %v3858
    %v4036 = vpop.permute.xlu0 %4035
    %v4038 = vmul.f32 %v4033, %v4036
    %v4039 = vadd.f32 %v4038, 0.0
    %v4040 = vmul.f32 %v3750, %v3903
    %v4041 = vmul.f32 %v4040, 1.442695
    %v4042 = vpow.pop %v4041
    %v4043 = vmul.f32 %v4042, %v4015
    %4044 = vset.pattern.permute.xlu0 1
    %4045 = vperm.xlu0 %4044, %v3858
    %v4046 = vpop.permute.xlu0 %4045
    %v4048 = vmul.f32 %v3750, %v4046
    %v4049 = vadd.f32 %v4043, %v4048
    %4050 = vset.pattern.permute.xlu0 3
    %4051 = vperm.xlu0 %4050, %v3858
    %v4052 = vpop.permute.xlu0 %4051
    %v4054 = vmul.f32 %v4049, %v4052
    %v4055 = vadd.f32 %v4039, %v4054
    %4056 = vst [vmem:[#allocation3 + $0x20] sm:$0xff] %v4055
    %v4057 = vmul.f32 %v3751, %v3882
    %v4058 = vmul.f32 %v4057, 1.442695
    %v4059 = vpow.pop %v4058
    %v4060 = vmul.f32 %v4059, %v4033
    %4062 = vset.pattern.permute.xlu0 0
    %4063 = vperm.xlu0 %4062, %v3863
    %v4064 = vpop.permute.xlu0 %4063
    %v4066 = vmul.f32 %v3751, %v4064
    %v4067 = vadd.f32 %v4060, %v4066
    %4068 = vset.pattern.permute.xlu0 2
    %4069 = vperm.xlu0 %4068, %v3863
    %v4070 = vpop.permute.xlu0 %4069
    %v4072 = vmul.f32 %v4067, %v4070
    %v4073 = vadd.f32 %v4072, 0.0
    %v4074 = vmul.f32 %v3751, %v3903
    %v4075 = vmul.f32 %v4074, 1.442695
    %v4076 = vpow.pop %v4075
    %v4077 = vmul.f32 %v4076, %v4049
    %4078 = vset.pattern.permute.xlu0 1
    %4079 = vperm.xlu0 %4078, %v3863
    %v4080 = vpop.permute.xlu0 %4079
    %v4082 = vmul.f32 %v3751, %v4080
    %v4083 = vadd.f32 %v4077, %v4082
    %4084 = vset.pattern.permute.xlu0 3
    %4085 = vperm.xlu0 %4084, %v3863
    %v4086 = vpop.permute.xlu0 %4085
    %v4088 = vmul.f32 %v4083, %v4086
    %v4089 = vadd.f32 %v4073, %v4088
    %4090 = vst [vmem:[#allocation3 + $0x28] sm:$0xff] %v4089
    %v4091 = vmul.f32 %v3752, %v3882
    %v4092 = vmul.f32 %v4091, 1.442695
    %v4093 = vpow.pop %v4092
    %v4094 = vmul.f32 %v4093, %v4067
    %4096 = vset.pattern.permute.xlu0 0
    %4097 = vperm.xlu0 %4096, %v3868
    %v4098 = vpop.permute.xlu0 %4097
    %v4100 = vmul.f32 %v3752, %v4098
    %v4101 = vadd.f32 %v4094, %v4100
    %4102 = vset.pattern.permute.xlu0 2
    %4103 = vperm.xlu0 %4102, %v3868
    %v4104 = vpop.permute.xlu0 %4103
    %v4106 = vmul.f32 %v4101, %v4104
    %v4107 = vadd.f32 %v4106, 0.0
    %v4108 = vmul.f32 %v3752, %v3903
    %v4109 = vmul.f32 %v4108, 1.442695
    %v4110 = vpow.pop %v4109
    %v4111 = vmul.f32 %v4110, %v4083
    %4112 = vset.pattern.permute.xlu0 1
    %4113 = vperm.xlu0 %4112, %v3868
    %v4114 = vpop.permute.xlu0 %4113
    %v4116 = vmul.f32 %v3752, %v4114
    %v4117 = vadd.f32 %v4111, %v4116
    %4118 = vset.pattern.permute.xlu0 3
    %4119 = vperm.xlu0 %4118, %v3868
    %v4120 = vpop.permute.xlu0 %4119
    %v4122 = vmul.f32 %v4117, %v4120
    %v4123 = vadd.f32 %v4107, %v4122
    %4124 = vst [vmem:[#allocation3 + $0x30] sm:$0xff] %v4123
    %v4125 = vmul.f32 %v3753, %v3882
    %v4126 = vmul.f32 %v4125, 1.442695
    %v4127 = vpow.pop %v4126
    %v4128 = vmul.f32 %v4127, %v4101
    %4130 = vset.pattern.permute.xlu0 0
    %4131 = vperm.xlu0 %4130, %v3873
    %v4132 = vpop.permute.xlu0 %4131
    %v4134 = vmul.f32 %v3753, %v4132
    %v4135 = vadd.f32 %v4128, %v4134
    %4136 = vset.pattern.permute.xlu0 2
    %4137 = vperm.xlu0 %4136, %v3873
    %v4138 = vpop.permute.xlu0 %4137
    %v4140 = vmul.f32 %v4135, %v4138
    %v4141 = vadd.f32 %v4140, 0.0
    %v4142 = vmul.f32 %v3753, %v3903
    %v4143 = vmul.f32 %v4142, 1.442695
    %v4144 = vpow.pop %v4143
    %v4145 = vmul.f32 %v4144, %v4117
    %4146 = vset.pattern.permute.xlu0 1
    %4147 = vperm.xlu0 %4146, %v3873
    %v4148 = vpop.permute.xlu0 %4147
    %v4150 = vmul.f32 %v3753, %v4148
    %v4151 = vadd.f32 %v4145, %v4150
    %4152 = vset.pattern.permute.xlu0 3
    %4153 = vperm.xlu0 %4152, %v3873
    %v4154 = vpop.permute.xlu0 %4153
    %v4156 = vmul.f32 %v4151, %v4154
    %v4157 = vadd.f32 %v4141, %v4156
    %4158 = vst [vmem:[#allocation3 + $0x38] sm:$0xff] %v4157
    %v4159 = vld [vmem:[#allocation3] sm:$0xff]
    %v4160 = vld [vmem:[#allocation3 + $0x8] sm:$0xff]
    %v4161 = vld [vmem:[#allocation3 + $0x10] sm:$0xff]
    %v4162 = vld [vmem:[#allocation3 + $0x18] sm:$0xff]
    %v4163 = vld [vmem:[#allocation3 + $0x20] sm:$0xff]
    %v4164 = vld [vmem:[#allocation3 + $0x28] sm:$0xff]
    %v4165 = vld [vmem:[#allocation3 + $0x30] sm:$0xff]
    %v4166 = vld [vmem:[#allocation3 + $0x38] sm:$0xff]
    %s4167 = scalar_lea.vmem %s12, 2
    %v4168 = vld [vmem:[%s4167] sm:$0x1]
    %v4170 = vlaneseq
    %v4171 = vshrl.u32 %v4170, 7
    %v4172 = vsub.s32 0, %v4171
    %v4173 = vrot.slane %v4168, %v4172
    %v4175 = vmul.f32 %v3472, %v4173
    %v4176 = vmul.f32 %v3473, %v4173
    %v4177 = vmul.f32 %v3474, %v4173
    %v4178 = vmul.f32 %v3475, %v4173
    %v4179 = vmul.f32 %v3476, %v4173
    %v4180 = vmul.f32 %v3477, %v4173
    %v4181 = vmul.f32 %v3478, %v4173
    %v4182 = vmul.f32 %v3479, %v4173
    %v4183 = vadd.f32 %v4159, %v4175
    %v4184 = vadd.f32 %v4160, %v4176
    %v4185 = vadd.f32 %v4161, %v4177
    %v4186 = vadd.f32 %v4162, %v4178
    %v4187 = vadd.f32 %v4163, %v4179
    %v4188 = vadd.f32 %v4164, %v4180
    %v4189 = vadd.f32 %v4165, %v4181
    %v4190 = vadd.f32 %v4166, %v4182
    %v4191 = vxor.u32 %v3260, 2147483648
    %v4192 = vxor.u32 %v3266, 2147483648
    %v4193 = vxor.u32 %v3272, 2147483648
    %v4194 = vxor.u32 %v3278, 2147483648
    %v4195 = vxor.u32 %v3284, 2147483648
    %v4196 = vxor.u32 %v3290, 2147483648
    %v4197 = vxor.u32 %v3296, 2147483648
    %v4198 = vxor.u32 %v3302, 2147483648
    %v4199 = vmul.f32 %v4191, 1.442695
    %v4200 = vpow.pop %v4199
    %v4201 = vmul.f32 %v4192, 1.442695
    %v4202 = vpow.pop %v4201
    %v4203 = vmul.f32 %v4193, 1.442695
    %v4204 = vpow.pop %v4203
    %v4205 = vmul.f32 %v4194, 1.442695
    %v4206 = vpow.pop %v4205
    %v4207 = vmul.f32 %v4195, 1.442695
    %v4208 = vpow.pop %v4207
    %v4209 = vmul.f32 %v4196, 1.442695
    %v4210 = vpow.pop %v4209
    %v4211 = vmul.f32 %v4197, 1.442695
    %v4212 = vpow.pop %v4211
    %v4213 = vmul.f32 %v4198, 1.442695
    %v4214 = vpow.pop %v4213
    %v4215 = vadd.f32 %v4200, 1.0
    %v4216 = vadd.f32 %v4202, 1.0
    %v4217 = vadd.f32 %v4204, 1.0
    %v4218 = vadd.f32 %v4206, 1.0
    %v4219 = vadd.f32 %v4208, 1.0
    %v4220 = vadd.f32 %v4210, 1.0
    %v4221 = vadd.f32 %v4212, 1.0
    %v4222 = vadd.f32 %v4214, 1.0
    %v4223 = vrcp.pop %v4215
    %v4224 = vmul.f32 1.0, %v4223
    %v4225 = vrcp.pop %v4216
    %v4226 = vmul.f32 1.0, %v4225
    %v4227 = vrcp.pop %v4217
    %v4228 = vmul.f32 1.0, %v4227
    %v4229 = vrcp.pop %v4218
    %v4230 = vmul.f32 1.0, %v4229
    %v4231 = vrcp.pop %v4219
    %v4232 = vmul.f32 1.0, %v4231
    %v4233 = vrcp.pop %v4220
    %v4234 = vmul.f32 1.0, %v4233
    %v4235 = vrcp.pop %v4221
    %v4236 = vmul.f32 1.0, %v4235
    %v4237 = vrcp.pop %v4222
    %v4238 = vmul.f32 1.0, %v4237
    %v4239 = vmul.f32 %v3260, %v4224
    %v4240 = vmul.f32 %v3266, %v4226
    %v4241 = vmul.f32 %v3272, %v4228
    %v4242 = vmul.f32 %v3278, %v4230
    %v4243 = vmul.f32 %v3284, %v4232
    %v4244 = vmul.f32 %v3290, %v4234
    %v4245 = vmul.f32 %v3296, %v4236
    %v4246 = vmul.f32 %v3302, %v4238
    %v4247 = vmul.f32 %v4183, %v4239
    %v4248 = vmul.f32 %v4184, %v4240
    %v4249 = vmul.f32 %v4185, %v4241
    %v4250 = vmul.f32 %v4186, %v4242
    %v4251 = vmul.f32 %v4187, %v4243
    %v4252 = vmul.f32 %v4188, %v4244
    %v4253 = vmul.f32 %v4189, %v4245
    %v4254 = vmul.f32 %v4190, %v4246
    %s4255 = scalar_lea.vmem [#allocation7], 256
    %v4256 = vld [vmem:[%s4255] sm:$0xff]
    %v4257 = vld [vmem:[%s4255 + $0x8] sm:$0xff]
    %v4258 = vld [vmem:[%s4255 + $0x10] sm:$0xff]
    %v4259 = vld [vmem:[%s4255 + $0x18] sm:$0xff]
    %v4260 = vld [vmem:[%s4255 + $0x20] sm:$0xff]
    %v4261 = vld [vmem:[%s4255 + $0x28] sm:$0xff]
    %v4262 = vld [vmem:[%s4255 + $0x30] sm:$0xff]
    %v4263 = vld [vmem:[%s4255 + $0x38] sm:$0xff]
    %v4264 = vld [vmem:[%s4255 + $0x40] sm:$0xff]
    %v4265 = vld [vmem:[%s4255 + $0x48] sm:$0xff]
    %v4266 = vld [vmem:[%s4255 + $0x50] sm:$0xff]
    %v4267 = vld [vmem:[%s4255 + $0x58] sm:$0xff]
    %v4268 = vld [vmem:[%s4255 + $0x60] sm:$0xff]
    %v4269 = vld [vmem:[%s4255 + $0x68] sm:$0xff]
    %v4270 = vld [vmem:[%s4255 + $0x70] sm:$0xff]
    %v4271 = vld [vmem:[%s4255 + $0x78] sm:$0xff]
    %4272 = vmatprep.subr.mxu0 0.0
    %4273 = vmatpush1.msra.mxu0 %v4271
    %4274 = vmatprep.subr.mxu0 0.0
    %4275 = vmatpush1.msra.mxu0 %v4270
    %4276 = vmatprep.subr.mxu0 0.0
    %4277 = vmatpush1.msra.mxu0 %v4269
    %4278 = vmatprep.subr.mxu0 0.0
    %4279 = vmatpush1.msra.mxu0 %v4268
    %4280 = vmatprep.subr.mxu0 0.0
    %4281 = vmatpush1.msra.mxu0 %v4267
    %4282 = vmatprep.subr.mxu0 0.0
    %4283 = vmatpush1.msra.mxu0 %v4266
    %4284 = vmatprep.subr.mxu0 0.0
    %4285 = vmatpush1.msra.mxu0 %v4265
    %4286 = vmatprep.subr.mxu0 0.0
    %4287 = vmatpush1.msra.mxu0 %v4264
    %4288 = vmatprep.subr.mxu0 0.0
    %4289 = vmatpush1.msra.mxu0 %v4263
    %4290 = vmatprep.subr.mxu0 0.0
    %4291 = vmatpush1.msra.mxu0 %v4262
    %4292 = vmatprep.subr.mxu0 0.0
    %4293 = vmatpush1.msra.mxu0 %v4261
    %4294 = vmatprep.subr.mxu0 0.0
    %4295 = vmatpush1.msra.mxu0 %v4260
    %4296 = vmatprep.subr.mxu0 0.0
    %4297 = vmatpush1.msra.mxu0 %v4259
    %4298 = vmatprep.subr.mxu0 0.0
    %4299 = vmatpush1.msra.mxu0 %v4258
    %4300 = vmatprep.subr.mxu0 0.0
    %4301 = vmatpush1.msra.mxu0 %v4257
    %4302 = vmatprep.subr.mxu0 0.0
    %4303 = vmatpush1.msra.mxu0 %v4256
    %4304 = vmatprep.subr.mxu0 0.0
    %4305 = vmatpush2.msra.mxu0 0.0
    %4306 = vmatprep.subr.mxu0 0.0
    %4307 = vmatpush2.msra.mxu0 0.0
    %4308 = vmatprep.subr.mxu0 0.0
    %4309 = vmatpush2.msra.mxu0 0.0
    %4310 = vmatprep.subr.mxu0 0.0
    %4311 = vmatpush2.msra.mxu0 0.0
    %4312 = vmatprep.subr.mxu0 0.0
    %4313 = vmatpush2.msra.mxu0 0.0
    %4314 = vmatprep.subr.mxu0 0.0
    %4315 = vmatpush2.msra.mxu0 0.0
    %4316 = vmatprep.subr.mxu0 0.0
    %4317 = vmatpush2.msra.mxu0 0.0
    %4318 = vmatprep.subr.mxu0 0.0
    %4319 = vmatpush2.msra.mxu0 0.0
    %4320 = vmatprep.subr.mxu0 0.0
    %4321 = vmatpush2.msra.mxu0 0.0
    %4322 = vmatprep.subr.mxu0 0.0
    %4323 = vmatpush2.msra.mxu0 0.0
    %4324 = vmatprep.subr.mxu0 0.0
    %4325 = vmatpush2.msra.mxu0 0.0
    %4326 = vmatprep.subr.mxu0 0.0
    %4327 = vmatpush2.msra.mxu0 0.0
    %4328 = vmatprep.subr.mxu0 0.0
    %4329 = vmatpush2.msra.mxu0 0.0
    %4330 = vmatprep.subr.mxu0 0.0
    %4331 = vmatpush2.msra.mxu0 0.0
    %4332 = vmatprep.subr.mxu0 0.0
    %4333 = vmatpush2.msra.mxu0 0.0
    %4334 = vmatprep.subr.mxu0 0.0
    %4335 = vmatpush2.msra.mxu0 0.0
    %4336 = vmatprep.mubr.f32.mxu0 0.0
    %4337 = vmatmul.mubr.f32.gmra.mxu0 %v4247
    %v4338 = vpop.f32.mrf.mxu0
    %v4339 = vadd.f32 0.0, %v4338
    %v4340 = vpop.f32.mrf.mxu0
    %4341 = vmatprep.mubr.f32.mxu0 0.0
    %4342 = vmatmul.mubr.f32.gmra.mxu0 %v4248
    %v4343 = vpop.f32.mrf.mxu0
    %v4344 = vadd.f32 0.0, %v4343
    %v4345 = vpop.f32.mrf.mxu0
    %4346 = vmatprep.mubr.f32.mxu0 0.0
    %4347 = vmatmul.mubr.f32.gmra.mxu0 %v4249
    %v4348 = vpop.f32.mrf.mxu0
    %v4349 = vadd.f32 0.0, %v4348
    %v4350 = vpop.f32.mrf.mxu0
    %4351 = vmatprep.mubr.f32.mxu0 0.0
    %4352 = vmatmul.mubr.f32.gmra.mxu0 %v4250
    %v4353 = vpop.f32.mrf.mxu0
    %v4354 = vadd.f32 0.0, %v4353
    %v4355 = vpop.f32.mrf.mxu0
    %4356 = vmatprep.mubr.f32.mxu0 0.0
    %4357 = vmatmul.mubr.f32.gmra.mxu0 %v4251
    %v4358 = vpop.f32.mrf.mxu0
    %v4359 = vadd.f32 0.0, %v4358
    %v4360 = vpop.f32.mrf.mxu0
    %4361 = vmatprep.mubr.f32.mxu0 0.0
    %4362 = vmatmul.mubr.f32.gmra.mxu0 %v4252
    %v4363 = vpop.f32.mrf.mxu0
    %v4364 = vadd.f32 0.0, %v4363
    %v4365 = vpop.f32.mrf.mxu0
    %4366 = vmatprep.mubr.f32.mxu0 0.0
    %4367 = vmatmul.mubr.f32.gmra.mxu0 %v4253
    %v4368 = vpop.f32.mrf.mxu0
    %v4369 = vadd.f32 0.0, %v4368
    %v4370 = vpop.f32.mrf.mxu0
    %4371 = vmatprep.mubr.f32.mxu0 0.0
    %4372 = vmatmul.mubr.f32.gmra.mxu0 %v4254
    %v4373 = vpop.f32.mrf.mxu0
    %v4374 = vadd.f32 0.0, %v4373
    %v4375 = vpop.f32.mrf.mxu0
    %4376 = vdwg.mxu0
    %v4377 = vld [vmem:[%s1] sm:$0xff]
    %v4378 = vld [vmem:[%s1 + $0x8] sm:$0xff]
    %v4379 = vld [vmem:[%s1 + $0x10] sm:$0xff]
    %v4380 = vld [vmem:[%s1 + $0x18] sm:$0xff]
    %v4381 = vld [vmem:[%s1 + $0x20] sm:$0xff]
    %v4382 = vld [vmem:[%s1 + $0x28] sm:$0xff]
    %v4383 = vld [vmem:[%s1 + $0x30] sm:$0xff]
    %v4384 = vld [vmem:[%s1 + $0x38] sm:$0xff]
    %v4386 = vsel %vm1528, %v4377, 0
    %v4389 = vsel %vm1528, %v4378, 0
    %v4392 = vsel %vm1528, %v4379, 0
    %v4395 = vsel %vm1528, %v4380, 0
    %v4398 = vsel %vm1528, %v4381, 0
    %v4401 = vsel %vm1528, %v4382, 0
    %v4404 = vsel %vm1528, %v4383, 0
    %v4407 = vsel %vm1528, %v4384, 0
    %4409 = vmatprep.subr.mxu0 0.0
    %4410 = vmatpush1.msra.mxu0 0.0
    %4411 = vmatprep.subr.mxu0 0.0
    %4412 = vmatpush1.msra.mxu0 0.0
    %4413 = vmatprep.subr.mxu0 0.0
    %4414 = vmatpush1.msra.mxu0 0.0
    %4415 = vmatprep.subr.mxu0 0.0
    %4416 = vmatpush1.msra.mxu0 0.0
    %4417 = vmatprep.subr.mxu0 0.0
    %4418 = vmatpush1.msra.mxu0 0.0
    %4419 = vmatprep.subr.mxu0 0.0
    %4420 = vmatpush1.msra.mxu0 0.0
    %4421 = vmatprep.subr.mxu0 0.0
    %4422 = vmatpush1.msra.mxu0 0.0
    %4423 = vmatprep.subr.mxu0 0.0
    %4424 = vmatpush1.msra.mxu0 0.0
    %4425 = vmatprep.subr.mxu0 0.0
    %4426 = vmatpush1.msra.mxu0 %v4374
    %4427 = vmatprep.subr.mxu0 0.0
    %4428 = vmatpush1.msra.mxu0 %v4369
    %4429 = vmatprep.subr.mxu0 0.0
    %4430 = vmatpush1.msra.mxu0 %v4364
    %4431 = vmatprep.subr.mxu0 0.0
    %4432 = vmatpush1.msra.mxu0 %v4359
    %4433 = vmatprep.subr.mxu0 0.0
    %4434 = vmatpush1.msra.mxu0 %v4354
    %4435 = vmatprep.subr.mxu0 0.0
    %4436 = vmatpush1.msra.mxu0 %v4349
    %4437 = vmatprep.subr.mxu0 0.0
    %4438 = vmatpush1.msra.mxu0 %v4344
    %4439 = vmatprep.subr.mxu0 0.0
    %4440 = vmatpush1.msra.mxu0 %v4339
    %4441 = vmatprep.subr.mxu0 0.0
    %4442 = vmatpush2.msra.mxu0 0.0
    %4443 = vmatprep.subr.mxu0 0.0
    %4444 = vmatpush2.msra.mxu0 0.0
    %4445 = vmatprep.subr.mxu0 0.0
    %4446 = vmatpush2.msra.mxu0 0.0
    %4447 = vmatprep.subr.mxu0 0.0
    %4448 = vmatpush2.msra.mxu0 0.0
    %4449 = vmatprep.subr.mxu0 0.0
    %4450 = vmatpush2.msra.mxu0 0.0
    %4451 = vmatprep.subr.mxu0 0.0
    %4452 = vmatpush2.msra.mxu0 0.0
    %4453 = vmatprep.subr.mxu0 0.0
    %4454 = vmatpush2.msra.mxu0 0.0
    %4455 = vmatprep.subr.mxu0 0.0
    %4456 = vmatpush2.msra.mxu0 0.0
    %4457 = vmatprep.subr.mxu0 0.0
    %4458 = vmatpush2.msra.mxu0 0.0
    %4459 = vmatprep.subr.mxu0 0.0
    %4460 = vmatpush2.msra.mxu0 0.0
    %4461 = vmatprep.subr.mxu0 0.0
    %4462 = vmatpush2.msra.mxu0 0.0
    %4463 = vmatprep.subr.mxu0 0.0
    %4464 = vmatpush2.msra.mxu0 0.0
    %4465 = vmatprep.subr.mxu0 0.0
    %4466 = vmatpush2.msra.mxu0 0.0
    %4467 = vmatprep.subr.mxu0 0.0
    %4468 = vmatpush2.msra.mxu0 0.0
    %4469 = vmatprep.subr.mxu0 0.0
    %4470 = vmatpush2.msra.mxu0 0.0
    %4471 = vmatprep.subr.mxu0 0.0
    %4472 = vmatpush2.msra.mxu0 0.0
    %4473 = vmatprep.mubr.f32.mxu0 0.0
    %4474 = vmatmul.mubr.f32.gmra.mxu0 %v4386
    %v4475 = vpop.f32.mrf.mxu0
    %v4476 = vadd.f32 %v3150, %v4475
    %v4477 = vpop.f32.mrf.mxu0
    %4478 = vmatprep.mubr.f32.mxu0 0.0
    %4479 = vmatmul.mubr.f32.gmra.mxu0 %v4389
    %v4480 = vpop.f32.mrf.mxu0
    %v4481 = vadd.f32 %v3151, %v4480
    %v4482 = vpop.f32.mrf.mxu0
    %4483 = vmatprep.mubr.f32.mxu0 0.0
    %4484 = vmatmul.mubr.f32.gmra.mxu0 %v4392
    %v4485 = vpop.f32.mrf.mxu0
    %v4486 = vadd.f32 %v3152, %v4485
    %v4487 = vpop.f32.mrf.mxu0
    %4488 = vmatprep.mubr.f32.mxu0 0.0
    %4489 = vmatmul.mubr.f32.gmra.mxu0 %v4395
    %v4490 = vpop.f32.mrf.mxu0
    %v4491 = vadd.f32 %v3153, %v4490
    %v4492 = vpop.f32.mrf.mxu0
    %4493 = vmatprep.mubr.f32.mxu0 0.0
    %4494 = vmatmul.mubr.f32.gmra.mxu0 %v4398
    %v4495 = vpop.f32.mrf.mxu0
    %v4496 = vadd.f32 %v3154, %v4495
    %v4497 = vpop.f32.mrf.mxu0
    %4498 = vmatprep.mubr.f32.mxu0 0.0
    %4499 = vmatmul.mubr.f32.gmra.mxu0 %v4401
    %v4500 = vpop.f32.mrf.mxu0
    %v4501 = vadd.f32 %v3155, %v4500
    %v4502 = vpop.f32.mrf.mxu0
    %4503 = vmatprep.mubr.f32.mxu0 0.0
    %4504 = vmatmul.mubr.f32.gmra.mxu0 %v4404
    %v4505 = vpop.f32.mrf.mxu0
    %v4506 = vadd.f32 %v3156, %v4505
    %v4507 = vpop.f32.mrf.mxu0
    %4508 = vmatprep.mubr.f32.mxu0 0.0
    %4509 = vmatmul.mubr.f32.gmra.mxu0 %v4407
    %v4510 = vpop.f32.mrf.mxu0
    %v4511 = vadd.f32 %v3157, %v4510
    %v4512 = vpop.f32.mrf.mxu0
    %4513 = vdwg.mxu0
    %s4514 = scalar_lea.vmem %s4, 3
    %v4515 = vld [vmem:[%s4514] sm:$0x1]
    %v4516 = vmul.f32 %v4476, %v4476
    %v4517 = vmul.f32 %v4481, %v4481
    %v4518 = vmul.f32 %v4486, %v4486
    %v4519 = vmul.f32 %v4491, %v4491
    %v4520 = vmul.f32 %v4496, %v4496
    %v4521 = vmul.f32 %v4501, %v4501
    %v4522 = vmul.f32 %v4506, %v4506
    %v4523 = vmul.f32 %v4511, %v4511
    %4524 = vadd.xlane.f32.xlu0 %v4516
    %v4525 = vpop.xlane.xlu0 %4524
    %4526 = vadd.xlane.f32.xlu0 %v4517
    %v4527 = vpop.xlane.xlu0 %4526
    %4528 = vadd.xlane.f32.xlu0 %v4518
    %v4529 = vpop.xlane.xlu0 %4528
    %4530 = vadd.xlane.f32.xlu0 %v4519
    %v4531 = vpop.xlane.xlu0 %4530
    %4532 = vadd.xlane.f32.xlu0 %v4520
    %v4533 = vpop.xlane.xlu0 %4532
    %4534 = vadd.xlane.f32.xlu0 %v4521
    %v4535 = vpop.xlane.xlu0 %4534
    %4536 = vadd.xlane.f32.xlu0 %v4522
    %v4537 = vpop.xlane.xlu0 %4536
    %4538 = vadd.xlane.f32.xlu0 %v4523
    %v4539 = vpop.xlane.xlu0 %4538
    %v4540 = vmul.f32 %v4525, %v263
    %v4541 = vmul.f32 %v4527, %v263
    %v4542 = vmul.f32 %v4529, %v263
    %v4543 = vmul.f32 %v4531, %v263
    %v4544 = vmul.f32 %v4533, %v263
    %v4545 = vmul.f32 %v4535, %v263
    %v4546 = vmul.f32 %v4537, %v263
    %v4547 = vmul.f32 %v4539, %v263
    %v4548 = vadd.f32 %v4540, 1e-05
    %v4549 = vadd.f32 %v4541, 1e-05
    %v4550 = vadd.f32 %v4542, 1e-05
    %v4551 = vadd.f32 %v4543, 1e-05
    %v4552 = vadd.f32 %v4544, 1e-05
    %v4553 = vadd.f32 %v4545, 1e-05
    %v4554 = vadd.f32 %v4546, 1e-05
    %v4555 = vadd.f32 %v4547, 1e-05
    %v4556 = vrsqrt.pop %v4548
    %v4557 = vrsqrt.pop %v4549
    %v4558 = vrsqrt.pop %v4550
    %v4559 = vrsqrt.pop %v4551
    %v4560 = vrsqrt.pop %v4552
    %v4561 = vrsqrt.pop %v4553
    %v4562 = vrsqrt.pop %v4554
    %v4563 = vrsqrt.pop %v4555
    %v4564 = vmul.f32 %v4476, %v4556
    %v4565 = vmul.f32 %v4481, %v4557
    %v4566 = vmul.f32 %v4486, %v4558
    %v4567 = vmul.f32 %v4491, %v4559
    %v4568 = vmul.f32 %v4496, %v4560
    %v4569 = vmul.f32 %v4501, %v4561
    %v4570 = vmul.f32 %v4506, %v4562
    %v4571 = vmul.f32 %v4511, %v4563
    %v4573 = vlaneseq
    %v4574 = vshrl.u32 %v4573, 7
    %v4575 = vsub.s32 0, %v4574
    %v4576 = vrot.slane %v4515, %v4575
    %v4578 = vmul.f32 %v4564, %v4576
    %v4579 = vmul.f32 %v4565, %v4576
    %v4580 = vmul.f32 %v4566, %v4576
    %v4581 = vmul.f32 %v4567, %v4576
    %v4582 = vmul.f32 %v4568, %v4576
    %v4583 = vmul.f32 %v4569, %v4576
    %v4584 = vmul.f32 %v4570, %v4576
    %v4585 = vmul.f32 %v4571, %v4576
    %s4586 = scalar_lea.vmem %s5, 768
    %v4587 = vld [vmem:[%s4586] sm:$0xff]
    %v4588 = vld [vmem:[%s4586 + $0x8] sm:$0xff]
    %v4589 = vld [vmem:[%s4586 + $0x10] sm:$0xff]
    %v4590 = vld [vmem:[%s4586 + $0x18] sm:$0xff]
    %v4591 = vld [vmem:[%s4586 + $0x20] sm:$0xff]
    %v4592 = vld [vmem:[%s4586 + $0x28] sm:$0xff]
    %v4593 = vld [vmem:[%s4586 + $0x30] sm:$0xff]
    %v4594 = vld [vmem:[%s4586 + $0x38] sm:$0xff]
    %v4595 = vld [vmem:[%s4586 + $0x40] sm:$0xff]
    %v4596 = vld [vmem:[%s4586 + $0x48] sm:$0xff]
    %v4597 = vld [vmem:[%s4586 + $0x50] sm:$0xff]
    %v4598 = vld [vmem:[%s4586 + $0x58] sm:$0xff]
    %v4599 = vld [vmem:[%s4586 + $0x60] sm:$0xff]
    %v4600 = vld [vmem:[%s4586 + $0x68] sm:$0xff]
    %v4601 = vld [vmem:[%s4586 + $0x70] sm:$0xff]
    %v4602 = vld [vmem:[%s4586 + $0x78] sm:$0xff]
    %v4603 = vld [vmem:[%s4586 + $0x80] sm:$0xff]
    %v4604 = vld [vmem:[%s4586 + $0x88] sm:$0xff]
    %v4605 = vld [vmem:[%s4586 + $0x90] sm:$0xff]
    %v4606 = vld [vmem:[%s4586 + $0x98] sm:$0xff]
    %v4607 = vld [vmem:[%s4586 + $0xa0] sm:$0xff]
    %v4608 = vld [vmem:[%s4586 + $0xa8] sm:$0xff]
    %v4609 = vld [vmem:[%s4586 + $0xb0] sm:$0xff]
    %v4610 = vld [vmem:[%s4586 + $0xb8] sm:$0xff]
    %v4611 = vld [vmem:[%s4586 + $0xc0] sm:$0xff]
    %v4612 = vld [vmem:[%s4586 + $0xc8] sm:$0xff]
    %v4613 = vld [vmem:[%s4586 + $0xd0] sm:$0xff]
    %v4614 = vld [vmem:[%s4586 + $0xd8] sm:$0xff]
    %v4615 = vld [vmem:[%s4586 + $0xe0] sm:$0xff]
    %v4616 = vld [vmem:[%s4586 + $0xe8] sm:$0xff]
    %v4617 = vld [vmem:[%s4586 + $0xf0] sm:$0xff]
    %v4618 = vld [vmem:[%s4586 + $0xf8] sm:$0xff]
    %4619 = vmatprep.subr.mxu0 %v4618
    %4620 = vmatpush1.msra.mxu0 %v4617
    %4621 = vmatprep.subr.mxu0 %v4616
    %4622 = vmatpush1.msra.mxu0 %v4615
    %4623 = vmatprep.subr.mxu0 %v4614
    %4624 = vmatpush1.msra.mxu0 %v4613
    %4625 = vmatprep.subr.mxu0 %v4612
    %4626 = vmatpush1.msra.mxu0 %v4611
    %4627 = vmatprep.subr.mxu0 %v4610
    %4628 = vmatpush1.msra.mxu0 %v4609
    %4629 = vmatprep.subr.mxu0 %v4608
    %4630 = vmatpush1.msra.mxu0 %v4607
    %4631 = vmatprep.subr.mxu0 %v4606
    %4632 = vmatpush1.msra.mxu0 %v4605
    %4633 = vmatprep.subr.mxu0 %v4604
    %4634 = vmatpush1.msra.mxu0 %v4603
    %4635 = vmatprep.subr.mxu0 %v4602
    %4636 = vmatpush1.msra.mxu0 %v4601
    %4637 = vmatprep.subr.mxu0 %v4600
    %4638 = vmatpush1.msra.mxu0 %v4599
    %4639 = vmatprep.subr.mxu0 %v4598
    %4640 = vmatpush1.msra.mxu0 %v4597
    %4641 = vmatprep.subr.mxu0 %v4596
    %4642 = vmatpush1.msra.mxu0 %v4595
    %4643 = vmatprep.subr.mxu0 %v4594
    %4644 = vmatpush1.msra.mxu0 %v4593
    %4645 = vmatprep.subr.mxu0 %v4592
    %4646 = vmatpush1.msra.mxu0 %v4591
    %4647 = vmatprep.subr.mxu0 %v4590
    %4648 = vmatpush1.msra.mxu0 %v4589
    %4649 = vmatprep.subr.mxu0 %v4588
    %4650 = vmatpush1.msra.mxu0 %v4587
    %4651 = vmatprep.subr.mxu0 0.0
    %4652 = vmatpush2.msra.mxu0 0.0
    %4653 = vmatprep.subr.mxu0 0.0
    %4654 = vmatpush2.msra.mxu0 0.0
    %4655 = vmatprep.subr.mxu0 0.0
    %4656 = vmatpush2.msra.mxu0 0.0
    %4657 = vmatprep.subr.mxu0 0.0
    %4658 = vmatpush2.msra.mxu0 0.0
    %4659 = vmatprep.subr.mxu0 0.0
    %4660 = vmatpush2.msra.mxu0 0.0
    %4661 = vmatprep.subr.mxu0 0.0
    %4662 = vmatpush2.msra.mxu0 0.0
    %4663 = vmatprep.subr.mxu0 0.0
    %4664 = vmatpush2.msra.mxu0 0.0
    %4665 = vmatprep.subr.mxu0 0.0
    %4666 = vmatpush2.msra.mxu0 0.0
    %4667 = vmatprep.subr.mxu0 0.0
    %4668 = vmatpush2.msra.mxu0 0.0
    %4669 = vmatprep.subr.mxu0 0.0
    %4670 = vmatpush2.msra.mxu0 0.0
    %4671 = vmatprep.subr.mxu0 0.0
    %4672 = vmatpush2.msra.mxu0 0.0
    %4673 = vmatprep.subr.mxu0 0.0
    %4674 = vmatpush2.msra.mxu0 0.0
    %4675 = vmatprep.subr.mxu0 0.0
    %4676 = vmatpush2.msra.mxu0 0.0
    %4677 = vmatprep.subr.mxu0 0.0
    %4678 = vmatpush2.msra.mxu0 0.0
    %4679 = vmatprep.subr.mxu0 0.0
    %4680 = vmatpush2.msra.mxu0 0.0
    %4681 = vmatprep.subr.mxu0 0.0
    %4682 = vmatpush2.msra.mxu0 0.0
    %4683 = vmatprep.mubr.f32.mxu0 0.0
    %4684 = vmatmul.mubr.f32.gmra.mxu0 %v4578
    %v4685 = vpop.f32.mrf.mxu0
    %v4686 = vadd.f32 0.0, %v4685
    %v4687 = vpop.f32.mrf.mxu0
    %v4688 = vadd.f32 0.0, %v4687
    %4689 = vmatprep.mubr.f32.mxu0 0.0
    %4690 = vmatmul.mubr.f32.gmra.mxu0 %v4579
    %v4691 = vpop.f32.mrf.mxu0
    %v4692 = vadd.f32 0.0, %v4691
    %v4693 = vpop.f32.mrf.mxu0
    %v4694 = vadd.f32 0.0, %v4693
    %4695 = vmatprep.mubr.f32.mxu0 0.0
    %4696 = vmatmul.mubr.f32.gmra.mxu0 %v4580
    %v4697 = vpop.f32.mrf.mxu0
    %v4698 = vadd.f32 0.0, %v4697
    %v4699 = vpop.f32.mrf.mxu0
    %v4700 = vadd.f32 0.0, %v4699
    %4701 = vmatprep.mubr.f32.mxu0 0.0
    %4702 = vmatmul.mubr.f32.gmra.mxu0 %v4581
    %v4703 = vpop.f32.mrf.mxu0
    %v4704 = vadd.f32 0.0, %v4703
    %v4705 = vpop.f32.mrf.mxu0
    %v4706 = vadd.f32 0.0, %v4705
    %4707 = vmatprep.mubr.f32.mxu0 0.0
    %4708 = vmatmul.mubr.f32.gmra.mxu0 %v4582
    %v4709 = vpop.f32.mrf.mxu0
    %v4710 = vadd.f32 0.0, %v4709
    %v4711 = vpop.f32.mrf.mxu0
    %v4712 = vadd.f32 0.0, %v4711
    %4713 = vmatprep.mubr.f32.mxu0 0.0
    %4714 = vmatmul.mubr.f32.gmra.mxu0 %v4583
    %v4715 = vpop.f32.mrf.mxu0
    %v4716 = vadd.f32 0.0, %v4715
    %v4717 = vpop.f32.mrf.mxu0
    %v4718 = vadd.f32 0.0, %v4717
    %4719 = vmatprep.mubr.f32.mxu0 0.0
    %4720 = vmatmul.mubr.f32.gmra.mxu0 %v4584
    %v4721 = vpop.f32.mrf.mxu0
    %v4722 = vadd.f32 0.0, %v4721
    %v4723 = vpop.f32.mrf.mxu0
    %v4724 = vadd.f32 0.0, %v4723
    %4725 = vmatprep.mubr.f32.mxu0 0.0
    %4726 = vmatmul.mubr.f32.gmra.mxu0 %v4585
    %v4727 = vpop.f32.mrf.mxu0
    %v4728 = vadd.f32 0.0, %v4727
    %v4729 = vpop.f32.mrf.mxu0
    %v4730 = vadd.f32 0.0, %v4729
    %4731 = vdwg.mxu0
    %4732 = vst [vmem:[#allocation2 + $0x18] sm:$0xff] %v4686
    %4733 = vst [vmem:[#allocation2 + $0x20] sm:$0xff] %v4692
    %4734 = vst [vmem:[#allocation2 + $0x28] sm:$0xff] %v4698
    %4735 = vst [vmem:[#allocation2 + $0x30] sm:$0xff] %v4704
    %4736 = vst [vmem:[#allocation2 + $0x38] sm:$0xff] %v4710
    %4737 = vst [vmem:[#allocation2 + $0x40] sm:$0xff] %v4716
    %4738 = vst [vmem:[#allocation2 + $0x48] sm:$0xff] %v4722
    %4739 = vst [vmem:[#allocation2 + $0x50] sm:$0xff] %v4728
    %s4740 = scalar_lea.vmem %s7, 3
    %v4741 = vld [vmem:[%s4740] sm:$0x1]
    %v4743 = vlaneseq
    %v4744 = vshrl.u32 %v4743, 7
    %v4745 = vsub.s32 0, %v4744
    %v4746 = vrot.slane %v4741, %v4745
    %v4748 = vadd.f32 %v4746, 0.0
    %v4749 = vld [vmem:[#allocation2] sm:$0xff]
    %v4750 = vld [vmem:[#allocation2 + $0x8] sm:$0xff]
    %v4751 = vld [vmem:[#allocation2 + $0x10] sm:$0xff]
    %v4752 = vld [vmem:[#allocation2 + $0x18] sm:$0xff]
    %v4753 = vld [vmem:[#allocation2 + $0x20] sm:$0xff]
    %v4754 = vld [vmem:[#allocation2 + $0x28] sm:$0xff]
    %v4755 = vld [vmem:[#allocation2 + $0x30] sm:$0xff]
    %v4756 = vld [vmem:[#allocation2 + $0x38] sm:$0xff]
    %s4757 = scalar_lea.vmem %s6, 12
    %v4758 = vld [vmem:[%s4757] sm:$0x1]
    %v4759 = vlaneseq
    %v4760 = vshrl.u32 %v4759, 7
    %v4761 = vsub.s32 0, %v4760
    %v4762 = vrot.slane %v4758, %v4761
    %v4763 = vmul.f32 %v4749, %v4762
    %v4764 = vmul.f32 %v4750, %v4762
    %v4765 = vmul.f32 %v4751, %v4762
    %v4766 = vmul.f32 %v4752, %v4762
    %v4767 = vmul.f32 %v4753, %v4762
    %v4768 = vmul.f32 %v4754, %v4762
    %v4769 = vmul.f32 %v4755, %v4762
    %v4770 = vmul.f32 %v4756, %v4762
    %v4771 = vadd.f32 %v4748, %v4763
    %v4772 = vadd.f32 %v4748, %v4764
    %v4773 = vadd.f32 %v4748, %v4765
    %v4774 = vadd.f32 %v4748, %v4766
    %v4775 = vadd.f32 %v4748, %v4767
    %v4776 = vadd.f32 %v4748, %v4768
    %v4777 = vadd.f32 %v4748, %v4769
    %v4778 = vadd.f32 %v4748, %v4770
    %v4779 = vld [vmem:[#allocation2 + $0x40] sm:$0xff]
    %v4780 = vld [vmem:[%s4757 + $0x1] sm:$0x1]
    %v4781 = vlaneseq
    %v4782 = vshrl.u32 %v4781, 7
    %v4783 = vsub.s32 0, %v4782
    %v4784 = vrot.slane %v4780, %v4783
    %v4785 = vmul.f32 %v4750, %v4784
    %v4786 = vmul.f32 %v4751, %v4784
    %v4787 = vmul.f32 %v4752, %v4784
    %v4788 = vmul.f32 %v4753, %v4784
    %v4789 = vmul.f32 %v4754, %v4784
    %v4790 = vmul.f32 %v4755, %v4784
    %v4791 = vmul.f32 %v4756, %v4784
    %v4792 = vmul.f32 %v4779, %v4784
    %v4793 = vadd.f32 %v4771, %v4785
    %v4794 = vadd.f32 %v4772, %v4786
    %v4795 = vadd.f32 %v4773, %v4787
    %v4796 = vadd.f32 %v4774, %v4788
    %v4797 = vadd.f32 %v4775, %v4789
    %v4798 = vadd.f32 %v4776, %v4790
    %v4799 = vadd.f32 %v4777, %v4791
    %v4800 = vadd.f32 %v4778, %v4792
    %v4801 = vld [vmem:[#allocation2 + $0x48] sm:$0xff]
    %v4802 = vld [vmem:[%s4757 + $0x2] sm:$0x1]
    %v4803 = vlaneseq
    %v4804 = vshrl.u32 %v4803, 7
    %v4805 = vsub.s32 0, %v4804
    %v4806 = vrot.slane %v4802, %v4805
    %v4807 = vmul.f32 %v4751, %v4806
    %v4808 = vmul.f32 %v4752, %v4806
    %v4809 = vmul.f32 %v4753, %v4806
    %v4810 = vmul.f32 %v4754, %v4806
    %v4811 = vmul.f32 %v4755, %v4806
    %v4812 = vmul.f32 %v4756, %v4806
    %v4813 = vmul.f32 %v4779, %v4806
    %v4814 = vmul.f32 %v4801, %v4806
    %v4815 = vadd.f32 %v4793, %v4807
    %v4816 = vadd.f32 %v4794, %v4808
    %v4817 = vadd.f32 %v4795, %v4809
    %v4818 = vadd.f32 %v4796, %v4810
    %v4819 = vadd.f32 %v4797, %v4811
    %v4820 = vadd.f32 %v4798, %v4812
    %v4821 = vadd.f32 %v4799, %v4813
    %v4822 = vadd.f32 %v4800, %v4814
    %v4823 = vld [vmem:[#allocation2 + $0x18] sm:$0xff]
    %v4824 = vld [vmem:[#allocation2 + $0x20] sm:$0xff]
    %v4825 = vld [vmem:[#allocation2 + $0x28] sm:$0xff]
    %v4826 = vld [vmem:[#allocation2 + $0x30] sm:$0xff]
    %v4827 = vld [vmem:[#allocation2 + $0x38] sm:$0xff]
    %v4828 = vld [vmem:[#allocation2 + $0x40] sm:$0xff]
    %v4829 = vld [vmem:[#allocation2 + $0x48] sm:$0xff]
    %v4830 = vld [vmem:[#allocation2 + $0x50] sm:$0xff]
    %v4831 = vld [vmem:[%s4757 + $0x3] sm:$0x1]
    %v4832 = vlaneseq
    %v4833 = vshrl.u32 %v4832, 7
    %v4834 = vsub.s32 0, %v4833
    %v4835 = vrot.slane %v4831, %v4834
    %v4836 = vmul.f32 %v4823, %v4835
    %v4837 = vmul.f32 %v4824, %v4835
    %v4838 = vmul.f32 %v4825, %v4835
    %v4839 = vmul.f32 %v4826, %v4835
    %v4840 = vmul.f32 %v4827, %v4835
    %v4841 = vmul.f32 %v4828, %v4835
    %v4842 = vmul.f32 %v4829, %v4835
    %v4843 = vmul.f32 %v4830, %v4835
    %v4844 = vadd.f32 %v4815, %v4836
    %v4845 = vadd.f32 %v4816, %v4837
    %v4846 = vadd.f32 %v4817, %v4838
    %v4847 = vadd.f32 %v4818, %v4839
    %v4848 = vadd.f32 %v4819, %v4840
    %v4849 = vadd.f32 %v4820, %v4841
    %v4850 = vadd.f32 %v4821, %v4842
    %v4851 = vadd.f32 %v4822, %v4843
    %v4852 = vxor.u32 %v4844, 2147483648
    %v4853 = vxor.u32 %v4845, 2147483648
    %v4854 = vxor.u32 %v4846, 2147483648
    %v4855 = vxor.u32 %v4847, 2147483648
    %v4856 = vxor.u32 %v4848, 2147483648
    %v4857 = vxor.u32 %v4849, 2147483648
    %v4858 = vxor.u32 %v4850, 2147483648
    %v4859 = vxor.u32 %v4851, 2147483648
    %v4860 = vmul.f32 %v4852, 1.442695
    %v4861 = vpow.pop %v4860
    %v4862 = vmul.f32 %v4853, 1.442695
    %v4863 = vpow.pop %v4862
    %v4864 = vmul.f32 %v4854, 1.442695
    %v4865 = vpow.pop %v4864
    %v4866 = vmul.f32 %v4855, 1.442695
    %v4867 = vpow.pop %v4866
    %v4868 = vmul.f32 %v4856, 1.442695
    %v4869 = vpow.pop %v4868
    %v4870 = vmul.f32 %v4857, 1.442695
    %v4871 = vpow.pop %v4870
    %v4872 = vmul.f32 %v4858, 1.442695
    %v4873 = vpow.pop %v4872
    %v4874 = vmul.f32 %v4859, 1.442695
    %v4875 = vpow.pop %v4874
    %v4876 = vadd.f32 %v4861, 1.0
    %v4877 = vadd.f32 %v4863, 1.0
    %v4878 = vadd.f32 %v4865, 1.0
    %v4879 = vadd.f32 %v4867, 1.0
    %v4880 = vadd.f32 %v4869, 1.0
    %v4881 = vadd.f32 %v4871, 1.0
    %v4882 = vadd.f32 %v4873, 1.0
    %v4883 = vadd.f32 %v4875, 1.0
    %v4884 = vrcp.pop %v4876
    %v4885 = vmul.f32 1.0, %v4884
    %v4886 = vrcp.pop %v4877
    %v4887 = vmul.f32 1.0, %v4886
    %v4888 = vrcp.pop %v4878
    %v4889 = vmul.f32 1.0, %v4888
    %v4890 = vrcp.pop %v4879
    %v4891 = vmul.f32 1.0, %v4890
    %v4892 = vrcp.pop %v4880
    %v4893 = vmul.f32 1.0, %v4892
    %v4894 = vrcp.pop %v4881
    %v4895 = vmul.f32 1.0, %v4894
    %v4896 = vrcp.pop %v4882
    %v4897 = vmul.f32 1.0, %v4896
    %v4898 = vrcp.pop %v4883
    %v4899 = vmul.f32 1.0, %v4898
    %v4900 = vmul.f32 %v4844, %v4885
    %v4901 = vmul.f32 %v4845, %v4887
    %v4902 = vmul.f32 %v4846, %v4889
    %v4903 = vmul.f32 %v4847, %v4891
    %v4904 = vmul.f32 %v4848, %v4893
    %v4905 = vmul.f32 %v4849, %v4895
    %v4906 = vmul.f32 %v4850, %v4897
    %v4907 = vmul.f32 %v4851, %v4899
    %s4908 = scalar_lea.vmem [#allocation4], 384
    %v4909 = vld [vmem:[%s4908] sm:$0xff]
    %v4910 = vld [vmem:[%s4908 + $0x8] sm:$0xff]
    %v4911 = vld [vmem:[%s4908 + $0x10] sm:$0xff]
    %v4912 = vld [vmem:[%s4908 + $0x18] sm:$0xff]
    %v4913 = vld [vmem:[%s4908 + $0x20] sm:$0xff]
    %v4914 = vld [vmem:[%s4908 + $0x28] sm:$0xff]
    %v4915 = vld [vmem:[%s4908 + $0x30] sm:$0xff]
    %v4916 = vld [vmem:[%s4908 + $0x38] sm:$0xff]
    %v4917 = vld [vmem:[%s4908 + $0x40] sm:$0xff]
    %v4918 = vld [vmem:[%s4908 + $0x48] sm:$0xff]
    %v4919 = vld [vmem:[%s4908 + $0x50] sm:$0xff]
    %v4920 = vld [vmem:[%s4908 + $0x58] sm:$0xff]
    %v4921 = vld [vmem:[%s4908 + $0x60] sm:$0xff]
    %v4922 = vld [vmem:[%s4908 + $0x68] sm:$0xff]
    %v4923 = vld [vmem:[%s4908 + $0x70] sm:$0xff]
    %v4924 = vld [vmem:[%s4908 + $0x78] sm:$0xff]
    %s4925 = scalar_lea.vmem %s10, 3
    %v4926 = vld [vmem:[%s4925] sm:$0x1]
    %v4928 = vlaneseq
    %v4929 = vshrl.u32 %v4928, 7
    %v4930 = vsub.s32 0, %v4929
    %v4931 = vrot.slane %v4926, %v4930
    %4933 = vmatprep.subr.mxu0 0.0
    %4934 = vmatpush1.msra.mxu0 %v4924
    %4935 = vmatprep.subr.mxu0 0.0
    %4936 = vmatpush1.msra.mxu0 %v4923
    %4937 = vmatprep.subr.mxu0 0.0
    %4938 = vmatpush1.msra.mxu0 %v4922
    %4939 = vmatprep.subr.mxu0 0.0
    %4940 = vmatpush1.msra.mxu0 %v4921
    %4941 = vmatprep.subr.mxu0 0.0
    %4942 = vmatpush1.msra.mxu0 %v4920
    %4943 = vmatprep.subr.mxu0 0.0
    %4944 = vmatpush1.msra.mxu0 %v4919
    %4945 = vmatprep.subr.mxu0 0.0
    %4946 = vmatpush1.msra.mxu0 %v4918
    %4947 = vmatprep.subr.mxu0 0.0
    %4948 = vmatpush1.msra.mxu0 %v4917
    %4949 = vmatprep.subr.mxu0 0.0
    %4950 = vmatpush1.msra.mxu0 %v4916
    %4951 = vmatprep.subr.mxu0 0.0
    %4952 = vmatpush1.msra.mxu0 %v4915
    %4953 = vmatprep.subr.mxu0 0.0
    %4954 = vmatpush1.msra.mxu0 %v4914
    %4955 = vmatprep.subr.mxu0 0.0
    %4956 = vmatpush1.msra.mxu0 %v4913
    %4957 = vmatprep.subr.mxu0 0.0
    %4958 = vmatpush1.msra.mxu0 %v4912
    %4959 = vmatprep.subr.mxu0 0.0
    %4960 = vmatpush1.msra.mxu0 %v4911
    %4961 = vmatprep.subr.mxu0 0.0
    %4962 = vmatpush1.msra.mxu0 %v4910
    %4963 = vmatprep.subr.mxu0 0.0
    %4964 = vmatpush1.msra.mxu0 %v4909
    %4965 = vmatprep.subr.mxu0 0.0
    %4966 = vmatpush2.msra.mxu0 0.0
    %4967 = vmatprep.subr.mxu0 0.0
    %4968 = vmatpush2.msra.mxu0 0.0
    %4969 = vmatprep.subr.mxu0 0.0
    %4970 = vmatpush2.msra.mxu0 0.0
    %4971 = vmatprep.subr.mxu0 0.0
    %4972 = vmatpush2.msra.mxu0 0.0
    %4973 = vmatprep.subr.mxu0 0.0
    %4974 = vmatpush2.msra.mxu0 0.0
    %4975 = vmatprep.subr.mxu0 0.0
    %4976 = vmatpush2.msra.mxu0 0.0
    %4977 = vmatprep.subr.mxu0 0.0
    %4978 = vmatpush2.msra.mxu0 0.0
    %4979 = vmatprep.subr.mxu0 0.0
    %4980 = vmatpush2.msra.mxu0 0.0
    %4981 = vmatprep.subr.mxu0 0.0
    %4982 = vmatpush2.msra.mxu0 0.0
    %4983 = vmatprep.subr.mxu0 0.0
    %4984 = vmatpush2.msra.mxu0 0.0
    %4985 = vmatprep.subr.mxu0 0.0
    %4986 = vmatpush2.msra.mxu0 0.0
    %4987 = vmatprep.subr.mxu0 0.0
    %4988 = vmatpush2.msra.mxu0 0.0
    %4989 = vmatprep.subr.mxu0 0.0
    %4990 = vmatpush2.msra.mxu0 0.0
    %4991 = vmatprep.subr.mxu0 0.0
    %4992 = vmatpush2.msra.mxu0 0.0
    %4993 = vmatprep.subr.mxu0 0.0
    %4994 = vmatpush2.msra.mxu0 0.0
    %4995 = vmatprep.subr.mxu0 0.0
    %4996 = vmatpush2.msra.mxu0 0.0
    %4997 = vmatprep.mubr.f32.mxu0 0.0
    %4998 = vmatmul.mubr.f32.gmra.mxu0 %v4900
    %v4999 = vpop.f32.mrf.mxu0
    %v5000 = vadd.f32 %v4931, %v4999
    %v5001 = vpop.f32.mrf.mxu0
    %5002 = vmatprep.mubr.f32.mxu0 0.0
    %5003 = vmatmul.mubr.f32.gmra.mxu0 %v4901
    %v5004 = vpop.f32.mrf.mxu0
    %v5005 = vadd.f32 %v4931, %v5004
    %v5006 = vpop.f32.mrf.mxu0
    %5007 = vmatprep.mubr.f32.mxu0 0.0
    %5008 = vmatmul.mubr.f32.gmra.mxu0 %v4902
    %v5009 = vpop.f32.mrf.mxu0
    %v5010 = vadd.f32 %v4931, %v5009
    %v5011 = vpop.f32.mrf.mxu0
    %5012 = vmatprep.mubr.f32.mxu0 0.0
    %5013 = vmatmul.mubr.f32.gmra.mxu0 %v4903
    %v5014 = vpop.f32.mrf.mxu0
    %v5015 = vadd.f32 %v4931, %v5014
    %v5016 = vpop.f32.mrf.mxu0
    %5017 = vmatprep.mubr.f32.mxu0 0.0
    %5018 = vmatmul.mubr.f32.gmra.mxu0 %v4904
    %v5019 = vpop.f32.mrf.mxu0
    %v5020 = vadd.f32 %v4931, %v5019
    %v5021 = vpop.f32.mrf.mxu0
    %5022 = vmatprep.mubr.f32.mxu0 0.0
    %5023 = vmatmul.mubr.f32.gmra.mxu0 %v4905
    %v5024 = vpop.f32.mrf.mxu0
    %v5025 = vadd.f32 %v4931, %v5024
    %v5026 = vpop.f32.mrf.mxu0
    %5027 = vmatprep.mubr.f32.mxu0 0.0
    %5028 = vmatmul.mubr.f32.gmra.mxu0 %v4906
    %v5029 = vpop.f32.mrf.mxu0
    %v5030 = vadd.f32 %v4931, %v5029
    %v5031 = vpop.f32.mrf.mxu0
    %5032 = vmatprep.mubr.f32.mxu0 0.0
    %5033 = vmatmul.mubr.f32.gmra.mxu0 %v4907
    %v5034 = vpop.f32.mrf.mxu0
    %v5035 = vadd.f32 %v4931, %v5034
    %v5036 = vpop.f32.mrf.mxu0
    %5037 = vdwg.mxu0
    %v5038 = vmax.f32 %v5000, 0.0
    %v5039 = vmax.f32 %v5005, 0.0
    %v5040 = vmax.f32 %v5010, 0.0
    %v5041 = vmax.f32 %v5015, 0.0
    %v5042 = vmax.f32 %v5020, 0.0
    %v5043 = vmax.f32 %v5025, 0.0
    %v5044 = vmax.f32 %v5030, 0.0
    %v5045 = vmax.f32 %v5035, 0.0
    %vm5046 = vcmp.ne.f32.partialorder %v5000, %v5000
    %vm5047 = vcmp.ne.f32.partialorder %v5005, %v5005
    %vm5048 = vcmp.ne.f32.partialorder %v5010, %v5010
    %vm5049 = vcmp.ne.f32.partialorder %v5015, %v5015
    %vm5050 = vcmp.ne.f32.partialorder %v5020, %v5020
    %vm5051 = vcmp.ne.f32.partialorder %v5025, %v5025
    %vm5052 = vcmp.ne.f32.partialorder %v5030, %v5030
    %vm5053 = vcmp.ne.f32.partialorder %v5035, %v5035
    %v5054 = vadd.f32 %v5000, 0.0
    %v5055 = vadd.f32 %v5005, 0.0
    %v5056 = vadd.f32 %v5010, 0.0
    %v5057 = vadd.f32 %v5015, 0.0
    %v5058 = vadd.f32 %v5020, 0.0
    %v5059 = vadd.f32 %v5025, 0.0
    %v5060 = vadd.f32 %v5030, 0.0
    %v5061 = vadd.f32 %v5035, 0.0
    %v5062 = vand.u32 2147483647, %v5000
    %v5063 = vand.u32 2147483647, %v5005
    %v5064 = vand.u32 2147483647, %v5010
    %v5065 = vand.u32 2147483647, %v5015
    %v5066 = vand.u32 2147483647, %v5020
    %v5067 = vand.u32 2147483647, %v5025
    %v5068 = vand.u32 2147483647, %v5030
    %v5069 = vand.u32 2147483647, %v5035
    %v5070 = vsub.f32 0.0, %v5062
    %v5071 = vsub.f32 0.0, %v5063
    %v5072 = vsub.f32 0.0, %v5064
    %v5073 = vsub.f32 0.0, %v5065
    %v5074 = vsub.f32 0.0, %v5066
    %v5075 = vsub.f32 0.0, %v5067
    %v5076 = vsub.f32 0.0, %v5068
    %v5077 = vsub.f32 0.0, %v5069
    %v5078 = vmul.f32 %v5070, 1.442695
    %v5079 = vpow.pop %v5078
    %v5080 = vmul.f32 %v5071, 1.442695
    %v5081 = vpow.pop %v5080
    %v5082 = vmul.f32 %v5072, 1.442695
    %v5083 = vpow.pop %v5082
    %v5084 = vmul.f32 %v5073, 1.442695
    %v5085 = vpow.pop %v5084
    %v5086 = vmul.f32 %v5074, 1.442695
    %v5087 = vpow.pop %v5086
    %v5088 = vmul.f32 %v5075, 1.442695
    %v5089 = vpow.pop %v5088
    %v5090 = vmul.f32 %v5076, 1.442695
    %v5091 = vpow.pop %v5090
    %v5092 = vmul.f32 %v5077, 1.442695
    %v5093 = vpow.pop %v5092
    %v5094 = vadd.f32 %v5079, 1.0
    %v5095 = vlog2.pop %v5094
    %v5096 = vmul.f32 %v5095, 0.6931472
    %v5097 = vmul.f32 -0.5, %v5079
    %v5098 = vadd.f32 %v5097, 1.0
    %v5099 = vmul.f32 %v5098, %v5079
    %v5100 = vand.u32 2147483647, %v5079
    %vm5101 = vcmp.lt.f32.partialorder %v5100, 0.0004427343
    %v5102 = vsel %vm5101, %v5099, %v5096
    %v5103 = vadd.f32 %v5081, 1.0
    %v5104 = vlog2.pop %v5103
    %v5105 = vmul.f32 %v5104, 0.6931472
    %v5106 = vmul.f32 -0.5, %v5081
    %v5107 = vadd.f32 %v5106, 1.0
    %v5108 = vmul.f32 %v5107, %v5081
    %v5109 = vand.u32 2147483647, %v5081
    %vm5110 = vcmp.lt.f32.partialorder %v5109, 0.0004427343
    %v5111 = vsel %vm5110, %v5108, %v5105
    %v5112 = vadd.f32 %v5083, 1.0
    %v5113 = vlog2.pop %v5112
    %v5114 = vmul.f32 %v5113, 0.6931472
    %v5115 = vmul.f32 -0.5, %v5083
    %v5116 = vadd.f32 %v5115, 1.0
    %v5117 = vmul.f32 %v5116, %v5083
    %v5118 = vand.u32 2147483647, %v5083
    %vm5119 = vcmp.lt.f32.partialorder %v5118, 0.0004427343
    %v5120 = vsel %vm5119, %v5117, %v5114
    %v5121 = vadd.f32 %v5085, 1.0
    %v5122 = vlog2.pop %v5121
    %v5123 = vmul.f32 %v5122, 0.6931472
    %v5124 = vmul.f32 -0.5, %v5085
    %v5125 = vadd.f32 %v5124, 1.0
    %v5126 = vmul.f32 %v5125, %v5085
    %v5127 = vand.u32 2147483647, %v5085
    %vm5128 = vcmp.lt.f32.partialorder %v5127, 0.0004427343
    %v5129 = vsel %vm5128, %v5126, %v5123
    %v5130 = vadd.f32 %v5087, 1.0
    %v5131 = vlog2.pop %v5130
    %v5132 = vmul.f32 %v5131, 0.6931472
    %v5133 = vmul.f32 -0.5, %v5087
    %v5134 = vadd.f32 %v5133, 1.0
    %v5135 = vmul.f32 %v5134, %v5087
    %v5136 = vand.u32 2147483647, %v5087
    %vm5137 = vcmp.lt.f32.partialorder %v5136, 0.0004427343
    %v5138 = vsel %vm5137, %v5135, %v5132
    %v5139 = vadd.f32 %v5089, 1.0
    %v5140 = vlog2.pop %v5139
    %v5141 = vmul.f32 %v5140, 0.6931472
    %v5142 = vmul.f32 -0.5, %v5089
    %v5143 = vadd.f32 %v5142, 1.0
    %v5144 = vmul.f32 %v5143, %v5089
    %v5145 = vand.u32 2147483647, %v5089
    %vm5146 = vcmp.lt.f32.partialorder %v5145, 0.0004427343
    %v5147 = vsel %vm5146, %v5144, %v5141
    %v5148 = vadd.f32 %v5091, 1.0
    %v5149 = vlog2.pop %v5148
    %v5150 = vmul.f32 %v5149, 0.6931472
    %v5151 = vmul.f32 -0.5, %v5091
    %v5152 = vadd.f32 %v5151, 1.0
    %v5153 = vmul.f32 %v5152, %v5091
    %v5154 = vand.u32 2147483647, %v5091
    %vm5155 = vcmp.lt.f32.partialorder %v5154, 0.0004427343
    %v5156 = vsel %vm5155, %v5153, %v5150
    %v5157 = vadd.f32 %v5093, 1.0
    %v5158 = vlog2.pop %v5157
    %v5159 = vmul.f32 %v5158, 0.6931472
    %v5160 = vmul.f32 -0.5, %v5093
    %v5161 = vadd.f32 %v5160, 1.0
    %v5162 = vmul.f32 %v5161, %v5093
    %v5163 = vand.u32 2147483647, %v5093
    %vm5164 = vcmp.lt.f32.partialorder %v5163, 0.0004427343
    %v5165 = vsel %vm5164, %v5162, %v5159
    %v5166 = vadd.f32 %v5038, %v5102
    %v5167 = vadd.f32 %v5039, %v5111
    %v5168 = vadd.f32 %v5040, %v5120
    %v5169 = vadd.f32 %v5041, %v5129
    %v5170 = vadd.f32 %v5042, %v5138
    %v5171 = vadd.f32 %v5043, %v5147
    %v5172 = vadd.f32 %v5044, %v5156
    %v5173 = vadd.f32 %v5045, %v5165
    %v5174 = vsel %vm5046, %v5054, %v5166
    %v5175 = vsel %vm5047, %v5055, %v5167
    %v5176 = vsel %vm5048, %v5056, %v5168
    %v5177 = vsel %vm5049, %v5057, %v5169
    %v5178 = vsel %vm5050, %v5058, %v5170
    %v5179 = vsel %vm5051, %v5059, %v5171
    %v5180 = vsel %vm5052, %v5060, %v5172
    %v5181 = vsel %vm5053, %v5061, %v5173
    %s5182 = scalar_lea.vmem %s8, 384
    %v5183 = vld [vmem:[%s5182] sm:$0xff]
    %v5184 = vld [vmem:[%s5182 + $0x8] sm:$0xff]
    %v5185 = vld [vmem:[%s5182 + $0x10] sm:$0xff]
    %v5186 = vld [vmem:[%s5182 + $0x18] sm:$0xff]
    %v5187 = vld [vmem:[%s5182 + $0x20] sm:$0xff]
    %v5188 = vld [vmem:[%s5182 + $0x28] sm:$0xff]
    %v5189 = vld [vmem:[%s5182 + $0x30] sm:$0xff]
    %v5190 = vld [vmem:[%s5182 + $0x38] sm:$0xff]
    %v5191 = vld [vmem:[%s5182 + $0x40] sm:$0xff]
    %v5192 = vld [vmem:[%s5182 + $0x48] sm:$0xff]
    %v5193 = vld [vmem:[%s5182 + $0x50] sm:$0xff]
    %v5194 = vld [vmem:[%s5182 + $0x58] sm:$0xff]
    %v5195 = vld [vmem:[%s5182 + $0x60] sm:$0xff]
    %v5196 = vld [vmem:[%s5182 + $0x68] sm:$0xff]
    %v5197 = vld [vmem:[%s5182 + $0x70] sm:$0xff]
    %v5198 = vld [vmem:[%s5182 + $0x78] sm:$0xff]
    %5199 = vmatprep.subr.mxu0 0.0
    %5200 = vmatpush1.msra.mxu0 %v5198
    %5201 = vmatprep.subr.mxu0 0.0
    %5202 = vmatpush1.msra.mxu0 %v5197
    %5203 = vmatprep.subr.mxu0 0.0
    %5204 = vmatpush1.msra.mxu0 %v5196
    %5205 = vmatprep.subr.mxu0 0.0
    %5206 = vmatpush1.msra.mxu0 %v5195
    %5207 = vmatprep.subr.mxu0 0.0
    %5208 = vmatpush1.msra.mxu0 %v5194
    %5209 = vmatprep.subr.mxu0 0.0
    %5210 = vmatpush1.msra.mxu0 %v5193
    %5211 = vmatprep.subr.mxu0 0.0
    %5212 = vmatpush1.msra.mxu0 %v5192
    %5213 = vmatprep.subr.mxu0 0.0
    %5214 = vmatpush1.msra.mxu0 %v5191
    %5215 = vmatprep.subr.mxu0 0.0
    %5216 = vmatpush1.msra.mxu0 %v5190
    %5217 = vmatprep.subr.mxu0 0.0
    %5218 = vmatpush1.msra.mxu0 %v5189
    %5219 = vmatprep.subr.mxu0 0.0
    %5220 = vmatpush1.msra.mxu0 %v5188
    %5221 = vmatprep.subr.mxu0 0.0
    %5222 = vmatpush1.msra.mxu0 %v5187
    %5223 = vmatprep.subr.mxu0 0.0
    %5224 = vmatpush1.msra.mxu0 %v5186
    %5225 = vmatprep.subr.mxu0 0.0
    %5226 = vmatpush1.msra.mxu0 %v5185
    %5227 = vmatprep.subr.mxu0 0.0
    %5228 = vmatpush1.msra.mxu0 %v5184
    %5229 = vmatprep.subr.mxu0 0.0
    %5230 = vmatpush1.msra.mxu0 %v5183
    %5231 = vmatprep.subr.mxu0 0.0
    %5232 = vmatpush2.msra.mxu0 0.0
    %5233 = vmatprep.subr.mxu0 0.0
    %5234 = vmatpush2.msra.mxu0 0.0
    %5235 = vmatprep.subr.mxu0 0.0
    %5236 = vmatpush2.msra.mxu0 0.0
    %5237 = vmatprep.subr.mxu0 0.0
    %5238 = vmatpush2.msra.mxu0 0.0
    %5239 = vmatprep.subr.mxu0 0.0
    %5240 = vmatpush2.msra.mxu0 0.0
    %5241 = vmatprep.subr.mxu0 0.0
    %5242 = vmatpush2.msra.mxu0 0.0
    %5243 = vmatprep.subr.mxu0 0.0
    %5244 = vmatpush2.msra.mxu0 0.0
    %5245 = vmatprep.subr.mxu0 0.0
    %5246 = vmatpush2.msra.mxu0 0.0
    %5247 = vmatprep.subr.mxu0 0.0
    %5248 = vmatpush2.msra.mxu0 0.0
    %5249 = vmatprep.subr.mxu0 0.0
    %5250 = vmatpush2.msra.mxu0 0.0
    %5251 = vmatprep.subr.mxu0 0.0
    %5252 = vmatpush2.msra.mxu0 0.0
    %5253 = vmatprep.subr.mxu0 0.0
    %5254 = vmatpush2.msra.mxu0 0.0
    %5255 = vmatprep.subr.mxu0 0.0
    %5256 = vmatpush2.msra.mxu0 0.0
    %5257 = vmatprep.subr.mxu0 0.0
    %5258 = vmatpush2.msra.mxu0 0.0
    %5259 = vmatprep.subr.mxu0 0.0
    %5260 = vmatpush2.msra.mxu0 0.0
    %5261 = vmatprep.subr.mxu0 0.0
    %5262 = vmatpush2.msra.mxu0 0.0
    %5263 = vmatprep.mubr.f32.mxu0 0.0
    %5264 = vmatmul.mubr.f32.gmra.mxu0 %v4900
    %v5265 = vpop.f32.mrf.mxu0
    %v5266 = vadd.f32 0.0, %v5265
    %v5267 = vpop.f32.mrf.mxu0
    %5268 = vmatprep.mubr.f32.mxu0 0.0
    %5269 = vmatmul.mubr.f32.gmra.mxu0 %v4901
    %v5270 = vpop.f32.mrf.mxu0
    %v5271 = vadd.f32 0.0, %v5270
    %v5272 = vpop.f32.mrf.mxu0
    %5273 = vmatprep.mubr.f32.mxu0 0.0
    %5274 = vmatmul.mubr.f32.gmra.mxu0 %v4902
    %v5275 = vpop.f32.mrf.mxu0
    %v5276 = vadd.f32 0.0, %v5275
    %v5277 = vpop.f32.mrf.mxu0
    %5278 = vmatprep.mubr.f32.mxu0 0.0
    %5279 = vmatmul.mubr.f32.gmra.mxu0 %v4903
    %v5280 = vpop.f32.mrf.mxu0
    %v5281 = vadd.f32 0.0, %v5280
    %v5282 = vpop.f32.mrf.mxu0
    %5283 = vmatprep.mubr.f32.mxu0 0.0
    %5284 = vmatmul.mubr.f32.gmra.mxu0 %v4904
    %v5285 = vpop.f32.mrf.mxu0
    %v5286 = vadd.f32 0.0, %v5285
    %v5287 = vpop.f32.mrf.mxu0
    %5288 = vmatprep.mubr.f32.mxu0 0.0
    %5289 = vmatmul.mubr.f32.gmra.mxu0 %v4905
    %v5290 = vpop.f32.mrf.mxu0
    %v5291 = vadd.f32 0.0, %v5290
    %v5292 = vpop.f32.mrf.mxu0
    %5293 = vmatprep.mubr.f32.mxu0 0.0
    %5294 = vmatmul.mubr.f32.gmra.mxu0 %v4906
    %v5295 = vpop.f32.mrf.mxu0
    %v5296 = vadd.f32 0.0, %v5295
    %v5297 = vpop.f32.mrf.mxu0
    %5298 = vmatprep.mubr.f32.mxu0 0.0
    %5299 = vmatmul.mubr.f32.gmra.mxu0 %v4907
    %v5300 = vpop.f32.mrf.mxu0
    %v5301 = vadd.f32 0.0, %v5300
    %v5302 = vpop.f32.mrf.mxu0
    %5303 = vdwg.mxu0
    %s5304 = scalar_lea.vmem %s11, 6
    %v5305 = vld [vmem:[%s5304] sm:$0x1]
    %v5306 = vld [vmem:[%s5304 + $0x1] sm:$0x1]
    %v5307 = vlaneseq
    %v5308 = vshrl.u32 %v5307, 7
    %v5309 = vsub.s32 0, %v5308
    %v5310 = vrot.slane %v5305, %v5309
    %v5311 = vmul.f32 %v5174, %v5310
    %v5312 = vmul.f32 %v5311, 1.442695
    %v5313 = vpow.pop %v5312
    %v5314 = vmul.f32 %v5313, 0.0
    %5316 = vset.pattern.permute.xlu0 0
    %5317 = vperm.xlu0 %5316, %v5266
    %v5318 = vpop.permute.xlu0 %5317
    %v5320 = vmul.f32 %v5174, %v5318
    %v5321 = vadd.f32 %v5314, %v5320
    %5322 = vset.pattern.permute.xlu0 2
    %5323 = vperm.xlu0 %5322, %v5266
    %v5324 = vpop.permute.xlu0 %5323
    %v5326 = vmul.f32 %v5321, %v5324
    %v5327 = vadd.f32 %v5326, 0.0
    %v5328 = vlaneseq
    %v5329 = vshrl.u32 %v5328, 7
    %v5330 = vsub.s32 0, %v5329
    %v5331 = vrot.slane %v5306, %v5330
    %v5332 = vmul.f32 %v5174, %v5331
    %v5333 = vmul.f32 %v5332, 1.442695
    %v5334 = vpow.pop %v5333
    %v5335 = vmul.f32 %v5334, 0.0
    %5336 = vset.pattern.permute.xlu0 1
    %5337 = vperm.xlu0 %5336, %v5266
    %v5338 = vpop.permute.xlu0 %5337
    %v5340 = vmul.f32 %v5174, %v5338
    %v5341 = vadd.f32 %v5335, %v5340
    %5342 = vset.pattern.permute.xlu0 3
    %5343 = vperm.xlu0 %5342, %v5266
    %v5344 = vpop.permute.xlu0 %5343
    %v5346 = vmul.f32 %v5341, %v5344
    %v5347 = vadd.f32 %v5327, %v5346
    %5348 = vst [vmem:[#allocation3] sm:$0xff] %v5347
    %v5349 = vmul.f32 %v5175, %v5310
    %v5350 = vmul.f32 %v5349, 1.442695
    %v5351 = vpow.pop %v5350
    %v5352 = vmul.f32 %v5351, %v5321
    %5354 = vset.pattern.permute.xlu0 0
    %5355 = vperm.xlu0 %5354, %v5271
    %v5356 = vpop.permute.xlu0 %5355
    %v5358 = vmul.f32 %v5175, %v5356
    %v5359 = vadd.f32 %v5352, %v5358
    %5360 = vset.pattern.permute.xlu0 2
    %5361 = vperm.xlu0 %5360, %v5271
    %v5362 = vpop.permute.xlu0 %5361
    %v5364 = vmul.f32 %v5359, %v5362
    %v5365 = vadd.f32 %v5364, 0.0
    %v5366 = vmul.f32 %v5175, %v5331
    %v5367 = vmul.f32 %v5366, 1.442695
    %v5368 = vpow.pop %v5367
    %v5369 = vmul.f32 %v5368, %v5341
    %5370 = vset.pattern.permute.xlu0 1
    %5371 = vperm.xlu0 %5370, %v5271
    %v5372 = vpop.permute.xlu0 %5371
    %v5374 = vmul.f32 %v5175, %v5372
    %v5375 = vadd.f32 %v5369, %v5374
    %5376 = vset.pattern.permute.xlu0 3
    %5377 = vperm.xlu0 %5376, %v5271
    %v5378 = vpop.permute.xlu0 %5377
    %v5380 = vmul.f32 %v5375, %v5378
    %v5381 = vadd.f32 %v5365, %v5380
    %5382 = vst [vmem:[#allocation3 + $0x8] sm:$0xff] %v5381
    %v5383 = vmul.f32 %v5176, %v5310
    %v5384 = vmul.f32 %v5383, 1.442695
    %v5385 = vpow.pop %v5384
    %v5386 = vmul.f32 %v5385, %v5359
    %5388 = vset.pattern.permute.xlu0 0
    %5389 = vperm.xlu0 %5388, %v5276
    %v5390 = vpop.permute.xlu0 %5389
    %v5392 = vmul.f32 %v5176, %v5390
    %v5393 = vadd.f32 %v5386, %v5392
    %5394 = vset.pattern.permute.xlu0 2
    %5395 = vperm.xlu0 %5394, %v5276
    %v5396 = vpop.permute.xlu0 %5395
    %v5398 = vmul.f32 %v5393, %v5396
    %v5399 = vadd.f32 %v5398, 0.0
    %v5400 = vmul.f32 %v5176, %v5331
    %v5401 = vmul.f32 %v5400, 1.442695
    %v5402 = vpow.pop %v5401
    %v5403 = vmul.f32 %v5402, %v5375
    %5404 = vset.pattern.permute.xlu0 1
    %5405 = vperm.xlu0 %5404, %v5276
    %v5406 = vpop.permute.xlu0 %5405
    %v5408 = vmul.f32 %v5176, %v5406
    %v5409 = vadd.f32 %v5403, %v5408
    %5410 = vset.pattern.permute.xlu0 3
    %5411 = vperm.xlu0 %5410, %v5276
    %v5412 = vpop.permute.xlu0 %5411
    %v5414 = vmul.f32 %v5409, %v5412
    %v5415 = vadd.f32 %v5399, %v5414
    %5416 = vst [vmem:[#allocation3 + $0x10] sm:$0xff] %v5415
    %v5417 = vmul.f32 %v5177, %v5310
    %v5418 = vmul.f32 %v5417, 1.442695
    %v5419 = vpow.pop %v5418
    %v5420 = vmul.f32 %v5419, %v5393
    %5422 = vset.pattern.permute.xlu0 0
    %5423 = vperm.xlu0 %5422, %v5281
    %v5424 = vpop.permute.xlu0 %5423
    %v5426 = vmul.f32 %v5177, %v5424
    %v5427 = vadd.f32 %v5420, %v5426
    %5428 = vset.pattern.permute.xlu0 2
    %5429 = vperm.xlu0 %5428, %v5281
    %v5430 = vpop.permute.xlu0 %5429
    %v5432 = vmul.f32 %v5427, %v5430
    %v5433 = vadd.f32 %v5432, 0.0
    %v5434 = vmul.f32 %v5177, %v5331
    %v5435 = vmul.f32 %v5434, 1.442695
    %v5436 = vpow.pop %v5435
    %v5437 = vmul.f32 %v5436, %v5409
    %5438 = vset.pattern.permute.xlu0 1
    %5439 = vperm.xlu0 %5438, %v5281
    %v5440 = vpop.permute.xlu0 %5439
    %v5442 = vmul.f32 %v5177, %v5440
    %v5443 = vadd.f32 %v5437, %v5442
    %5444 = vset.pattern.permute.xlu0 3
    %5445 = vperm.xlu0 %5444, %v5281
    %v5446 = vpop.permute.xlu0 %5445
    %v5448 = vmul.f32 %v5443, %v5446
    %v5449 = vadd.f32 %v5433, %v5448
    %5450 = vst [vmem:[#allocation3 + $0x18] sm:$0xff] %v5449
    %v5451 = vmul.f32 %v5178, %v5310
    %v5452 = vmul.f32 %v5451, 1.442695
    %v5453 = vpow.pop %v5452
    %v5454 = vmul.f32 %v5453, %v5427
    %5456 = vset.pattern.permute.xlu0 0
    %5457 = vperm.xlu0 %5456, %v5286
    %v5458 = vpop.permute.xlu0 %5457
    %v5460 = vmul.f32 %v5178, %v5458
    %v5461 = vadd.f32 %v5454, %v5460
    %5462 = vset.pattern.permute.xlu0 2
    %5463 = vperm.xlu0 %5462, %v5286
    %v5464 = vpop.permute.xlu0 %5463
    %v5466 = vmul.f32 %v5461, %v5464
    %v5467 = vadd.f32 %v5466, 0.0
    %v5468 = vmul.f32 %v5178, %v5331
    %v5469 = vmul.f32 %v5468, 1.442695
    %v5470 = vpow.pop %v5469
    %v5471 = vmul.f32 %v5470, %v5443
    %5472 = vset.pattern.permute.xlu0 1
    %5473 = vperm.xlu0 %5472, %v5286
    %v5474 = vpop.permute.xlu0 %5473
    %v5476 = vmul.f32 %v5178, %v5474
    %v5477 = vadd.f32 %v5471, %v5476
    %5478 = vset.pattern.permute.xlu0 3
    %5479 = vperm.xlu0 %5478, %v5286
    %v5480 = vpop.permute.xlu0 %5479
    %v5482 = vmul.f32 %v5477, %v5480
    %v5483 = vadd.f32 %v5467, %v5482
    %5484 = vst [vmem:[#allocation3 + $0x20] sm:$0xff] %v5483
    %v5485 = vmul.f32 %v5179, %v5310
    %v5486 = vmul.f32 %v5485, 1.442695
    %v5487 = vpow.pop %v5486
    %v5488 = vmul.f32 %v5487, %v5461
    %5490 = vset.pattern.permute.xlu0 0
    %5491 = vperm.xlu0 %5490, %v5291
    %v5492 = vpop.permute.xlu0 %5491
    %v5494 = vmul.f32 %v5179, %v5492
    %v5495 = vadd.f32 %v5488, %v5494
    %5496 = vset.pattern.permute.xlu0 2
    %5497 = vperm.xlu0 %5496, %v5291
    %v5498 = vpop.permute.xlu0 %5497
    %v5500 = vmul.f32 %v5495, %v5498
    %v5501 = vadd.f32 %v5500, 0.0
    %v5502 = vmul.f32 %v5179, %v5331
    %v5503 = vmul.f32 %v5502, 1.442695
    %v5504 = vpow.pop %v5503
    %v5505 = vmul.f32 %v5504, %v5477
    %5506 = vset.pattern.permute.xlu0 1
    %5507 = vperm.xlu0 %5506, %v5291
    %v5508 = vpop.permute.xlu0 %5507
    %v5510 = vmul.f32 %v5179, %v5508
    %v5511 = vadd.f32 %v5505, %v5510
    %5512 = vset.pattern.permute.xlu0 3
    %5513 = vperm.xlu0 %5512, %v5291
    %v5514 = vpop.permute.xlu0 %5513
    %v5516 = vmul.f32 %v5511, %v5514
    %v5517 = vadd.f32 %v5501, %v5516
    %5518 = vst [vmem:[#allocation3 + $0x28] sm:$0xff] %v5517
    %v5519 = vmul.f32 %v5180, %v5310
    %v5520 = vmul.f32 %v5519, 1.442695
    %v5521 = vpow.pop %v5520
    %v5522 = vmul.f32 %v5521, %v5495
    %5524 = vset.pattern.permute.xlu0 0
    %5525 = vperm.xlu0 %5524, %v5296
    %v5526 = vpop.permute.xlu0 %5525
    %v5528 = vmul.f32 %v5180, %v5526
    %v5529 = vadd.f32 %v5522, %v5528
    %5530 = vset.pattern.permute.xlu0 2
    %5531 = vperm.xlu0 %5530, %v5296
    %v5532 = vpop.permute.xlu0 %5531
    %v5534 = vmul.f32 %v5529, %v5532
    %v5535 = vadd.f32 %v5534, 0.0
    %v5536 = vmul.f32 %v5180, %v5331
    %v5537 = vmul.f32 %v5536, 1.442695
    %v5538 = vpow.pop %v5537
    %v5539 = vmul.f32 %v5538, %v5511
    %5540 = vset.pattern.permute.xlu0 1
    %5541 = vperm.xlu0 %5540, %v5296
    %v5542 = vpop.permute.xlu0 %5541
    %v5544 = vmul.f32 %v5180, %v5542
    %v5545 = vadd.f32 %v5539, %v5544
    %5546 = vset.pattern.permute.xlu0 3
    %5547 = vperm.xlu0 %5546, %v5296
    %v5548 = vpop.permute.xlu0 %5547
    %v5550 = vmul.f32 %v5545, %v5548
    %v5551 = vadd.f32 %v5535, %v5550
    %5552 = vst [vmem:[#allocation3 + $0x30] sm:$0xff] %v5551
    %v5553 = vmul.f32 %v5181, %v5310
    %v5554 = vmul.f32 %v5553, 1.442695
    %v5555 = vpow.pop %v5554
    %v5556 = vmul.f32 %v5555, %v5529
    %5558 = vset.pattern.permute.xlu0 0
    %5559 = vperm.xlu0 %5558, %v5301
    %v5560 = vpop.permute.xlu0 %5559
    %v5562 = vmul.f32 %v5181, %v5560
    %v5563 = vadd.f32 %v5556, %v5562
    %5564 = vset.pattern.permute.xlu0 2
    %5565 = vperm.xlu0 %5564, %v5301
    %v5566 = vpop.permute.xlu0 %5565
    %v5568 = vmul.f32 %v5563, %v5566
    %v5569 = vadd.f32 %v5568, 0.0
    %v5570 = vmul.f32 %v5181, %v5331
    %v5571 = vmul.f32 %v5570, 1.442695
    %v5572 = vpow.pop %v5571
    %v5573 = vmul.f32 %v5572, %v5545
    %5574 = vset.pattern.permute.xlu0 1
    %5575 = vperm.xlu0 %5574, %v5301
    %v5576 = vpop.permute.xlu0 %5575
    %v5578 = vmul.f32 %v5181, %v5576
    %v5579 = vadd.f32 %v5573, %v5578
    %5580 = vset.pattern.permute.xlu0 3
    %5581 = vperm.xlu0 %5580, %v5301
    %v5582 = vpop.permute.xlu0 %5581
    %v5584 = vmul.f32 %v5579, %v5582
    %v5585 = vadd.f32 %v5569, %v5584
    %5586 = vst [vmem:[#allocation3 + $0x38] sm:$0xff] %v5585
    %v5587 = vld [vmem:[#allocation3] sm:$0xff]
    %v5588 = vld [vmem:[#allocation3 + $0x8] sm:$0xff]
    %v5589 = vld [vmem:[#allocation3 + $0x10] sm:$0xff]
    %v5590 = vld [vmem:[#allocation3 + $0x18] sm:$0xff]
    %v5591 = vld [vmem:[#allocation3 + $0x20] sm:$0xff]
    %v5592 = vld [vmem:[#allocation3 + $0x28] sm:$0xff]
    %v5593 = vld [vmem:[#allocation3 + $0x30] sm:$0xff]
    %v5594 = vld [vmem:[#allocation3 + $0x38] sm:$0xff]
    %s5595 = scalar_lea.vmem %s12, 3
    %v5596 = vld [vmem:[%s5595] sm:$0x1]
    %v5598 = vlaneseq
    %v5599 = vshrl.u32 %v5598, 7
    %v5600 = vsub.s32 0, %v5599
    %v5601 = vrot.slane %v5596, %v5600
    %v5603 = vmul.f32 %v4900, %v5601
    %v5604 = vmul.f32 %v4901, %v5601
    %v5605 = vmul.f32 %v4902, %v5601
    %v5606 = vmul.f32 %v4903, %v5601
    %v5607 = vmul.f32 %v4904, %v5601
    %v5608 = vmul.f32 %v4905, %v5601
    %v5609 = vmul.f32 %v4906, %v5601
    %v5610 = vmul.f32 %v4907, %v5601
    %v5611 = vadd.f32 %v5587, %v5603
    %v5612 = vadd.f32 %v5588, %v5604
    %v5613 = vadd.f32 %v5589, %v5605
    %v5614 = vadd.f32 %v5590, %v5606
    %v5615 = vadd.f32 %v5591, %v5607
    %v5616 = vadd.f32 %v5592, %v5608
    %v5617 = vadd.f32 %v5593, %v5609
    %v5618 = vadd.f32 %v5594, %v5610
    %v5619 = vxor.u32 %v4688, 2147483648
    %v5620 = vxor.u32 %v4694, 2147483648
    %v5621 = vxor.u32 %v4700, 2147483648
    %v5622 = vxor.u32 %v4706, 2147483648
    %v5623 = vxor.u32 %v4712, 2147483648
    %v5624 = vxor.u32 %v4718, 2147483648
    %v5625 = vxor.u32 %v4724, 2147483648
    %v5626 = vxor.u32 %v4730, 2147483648
    %v5627 = vmul.f32 %v5619, 1.442695
    %v5628 = vpow.pop %v5627
    %v5629 = vmul.f32 %v5620, 1.442695
    %v5630 = vpow.pop %v5629
    %v5631 = vmul.f32 %v5621, 1.442695
    %v5632 = vpow.pop %v5631
    %v5633 = vmul.f32 %v5622, 1.442695
    %v5634 = vpow.pop %v5633
    %v5635 = vmul.f32 %v5623, 1.442695
    %v5636 = vpow.pop %v5635
    %v5637 = vmul.f32 %v5624, 1.442695
    %v5638 = vpow.pop %v5637
    %v5639 = vmul.f32 %v5625, 1.442695
    %v5640 = vpow.pop %v5639
    %v5641 = vmul.f32 %v5626, 1.442695
    %v5642 = vpow.pop %v5641
    %v5643 = vadd.f32 %v5628, 1.0
    %v5644 = vadd.f32 %v5630, 1.0
    %v5645 = vadd.f32 %v5632, 1.0
    %v5646 = vadd.f32 %v5634, 1.0
    %v5647 = vadd.f32 %v5636, 1.0
    %v5648 = vadd.f32 %v5638, 1.0
    %v5649 = vadd.f32 %v5640, 1.0
    %v5650 = vadd.f32 %v5642, 1.0
    %v5651 = vrcp.pop %v5643
    %v5652 = vmul.f32 1.0, %v5651
    %v5653 = vrcp.pop %v5644
    %v5654 = vmul.f32 1.0, %v5653
    %v5655 = vrcp.pop %v5645
    %v5656 = vmul.f32 1.0, %v5655
    %v5657 = vrcp.pop %v5646
    %v5658 = vmul.f32 1.0, %v5657
    %v5659 = vrcp.pop %v5647
    %v5660 = vmul.f32 1.0, %v5659
    %v5661 = vrcp.pop %v5648
    %v5662 = vmul.f32 1.0, %v5661
    %v5663 = vrcp.pop %v5649
    %v5664 = vmul.f32 1.0, %v5663
    %v5665 = vrcp.pop %v5650
    %v5666 = vmul.f32 1.0, %v5665
    %v5667 = vmul.f32 %v4688, %v5652
    %v5668 = vmul.f32 %v4694, %v5654
    %v5669 = vmul.f32 %v4700, %v5656
    %v5670 = vmul.f32 %v4706, %v5658
    %v5671 = vmul.f32 %v4712, %v5660
    %v5672 = vmul.f32 %v4718, %v5662
    %v5673 = vmul.f32 %v4724, %v5664
    %v5674 = vmul.f32 %v4730, %v5666
    %v5675 = vmul.f32 %v5611, %v5667
    %v5676 = vmul.f32 %v5612, %v5668
    %v5677 = vmul.f32 %v5613, %v5669
    %v5678 = vmul.f32 %v5614, %v5670
    %v5679 = vmul.f32 %v5615, %v5671
    %v5680 = vmul.f32 %v5616, %v5672
    %v5681 = vmul.f32 %v5617, %v5673
    %v5682 = vmul.f32 %v5618, %v5674
    %s5683 = scalar_lea.vmem [#allocation7], 384
    %v5684 = vld [vmem:[%s5683] sm:$0xff]
    %v5685 = vld [vmem:[%s5683 + $0x8] sm:$0xff]
    %v5686 = vld [vmem:[%s5683 + $0x10] sm:$0xff]
    %v5687 = vld [vmem:[%s5683 + $0x18] sm:$0xff]
    %v5688 = vld [vmem:[%s5683 + $0x20] sm:$0xff]
    %v5689 = vld [vmem:[%s5683 + $0x28] sm:$0xff]
    %v5690 = vld [vmem:[%s5683 + $0x30] sm:$0xff]
    %v5691 = vld [vmem:[%s5683 + $0x38] sm:$0xff]
    %v5692 = vld [vmem:[%s5683 + $0x40] sm:$0xff]
    %v5693 = vld [vmem:[%s5683 + $0x48] sm:$0xff]
    %v5694 = vld [vmem:[%s5683 + $0x50] sm:$0xff]
    %v5695 = vld [vmem:[%s5683 + $0x58] sm:$0xff]
    %v5696 = vld [vmem:[%s5683 + $0x60] sm:$0xff]
    %v5697 = vld [vmem:[%s5683 + $0x68] sm:$0xff]
    %v5698 = vld [vmem:[%s5683 + $0x70] sm:$0xff]
    %v5699 = vld [vmem:[%s5683 + $0x78] sm:$0xff]
    %5700 = vmatprep.subr.mxu0 0.0
    %5701 = vmatpush1.msra.mxu0 %v5699
    %5702 = vmatprep.subr.mxu0 0.0
    %5703 = vmatpush1.msra.mxu0 %v5698
    %5704 = vmatprep.subr.mxu0 0.0
    %5705 = vmatpush1.msra.mxu0 %v5697
    %5706 = vmatprep.subr.mxu0 0.0
    %5707 = vmatpush1.msra.mxu0 %v5696
    %5708 = vmatprep.subr.mxu0 0.0
    %5709 = vmatpush1.msra.mxu0 %v5695
    %5710 = vmatprep.subr.mxu0 0.0
    %5711 = vmatpush1.msra.mxu0 %v5694
    %5712 = vmatprep.subr.mxu0 0.0
    %5713 = vmatpush1.msra.mxu0 %v5693
    %5714 = vmatprep.subr.mxu0 0.0
    %5715 = vmatpush1.msra.mxu0 %v5692
    %5716 = vmatprep.subr.mxu0 0.0
    %5717 = vmatpush1.msra.mxu0 %v5691
    %5718 = vmatprep.subr.mxu0 0.0
    %5719 = vmatpush1.msra.mxu0 %v5690
    %5720 = vmatprep.subr.mxu0 0.0
    %5721 = vmatpush1.msra.mxu0 %v5689
    %5722 = vmatprep.subr.mxu0 0.0
    %5723 = vmatpush1.msra.mxu0 %v5688
    %5724 = vmatprep.subr.mxu0 0.0
    %5725 = vmatpush1.msra.mxu0 %v5687
    %5726 = vmatprep.subr.mxu0 0.0
    %5727 = vmatpush1.msra.mxu0 %v5686
    %5728 = vmatprep.subr.mxu0 0.0
    %5729 = vmatpush1.msra.mxu0 %v5685
    %5730 = vmatprep.subr.mxu0 0.0
    %5731 = vmatpush1.msra.mxu0 %v5684
    %5732 = vmatprep.subr.mxu0 0.0
    %5733 = vmatpush2.msra.mxu0 0.0
    %5734 = vmatprep.subr.mxu0 0.0
    %5735 = vmatpush2.msra.mxu0 0.0
    %5736 = vmatprep.subr.mxu0 0.0
    %5737 = vmatpush2.msra.mxu0 0.0
    %5738 = vmatprep.subr.mxu0 0.0
    %5739 = vmatpush2.msra.mxu0 0.0
    %5740 = vmatprep.subr.mxu0 0.0
    %5741 = vmatpush2.msra.mxu0 0.0
    %5742 = vmatprep.subr.mxu0 0.0
    %5743 = vmatpush2.msra.mxu0 0.0
    %5744 = vmatprep.subr.mxu0 0.0
    %5745 = vmatpush2.msra.mxu0 0.0
    %5746 = vmatprep.subr.mxu0 0.0
    %5747 = vmatpush2.msra.mxu0 0.0
    %5748 = vmatprep.subr.mxu0 0.0
    %5749 = vmatpush2.msra.mxu0 0.0
    %5750 = vmatprep.subr.mxu0 0.0
    %5751 = vmatpush2.msra.mxu0 0.0
    %5752 = vmatprep.subr.mxu0 0.0
    %5753 = vmatpush2.msra.mxu0 0.0
    %5754 = vmatprep.subr.mxu0 0.0
    %5755 = vmatpush2.msra.mxu0 0.0
    %5756 = vmatprep.subr.mxu0 0.0
    %5757 = vmatpush2.msra.mxu0 0.0
    %5758 = vmatprep.subr.mxu0 0.0
    %5759 = vmatpush2.msra.mxu0 0.0
    %5760 = vmatprep.subr.mxu0 0.0
    %5761 = vmatpush2.msra.mxu0 0.0
    %5762 = vmatprep.subr.mxu0 0.0
    %5763 = vmatpush2.msra.mxu0 0.0
    %5764 = vmatprep.mubr.f32.mxu0 0.0
    %5765 = vmatmul.mubr.f32.gmra.mxu0 %v5675
    %v5766 = vpop.f32.mrf.mxu0
    %v5767 = vadd.f32 0.0, %v5766
    %v5768 = vpop.f32.mrf.mxu0
    %5769 = vmatprep.mubr.f32.mxu0 0.0
    %5770 = vmatmul.mubr.f32.gmra.mxu0 %v5676
    %v5771 = vpop.f32.mrf.mxu0
    %v5772 = vadd.f32 0.0, %v5771
    %v5773 = vpop.f32.mrf.mxu0
    %5774 = vmatprep.mubr.f32.mxu0 0.0
    %5775 = vmatmul.mubr.f32.gmra.mxu0 %v5677
    %v5776 = vpop.f32.mrf.mxu0
    %v5777 = vadd.f32 0.0, %v5776
    %v5778 = vpop.f32.mrf.mxu0
    %5779 = vmatprep.mubr.f32.mxu0 0.0
    %5780 = vmatmul.mubr.f32.gmra.mxu0 %v5678
    %v5781 = vpop.f32.mrf.mxu0
    %v5782 = vadd.f32 0.0, %v5781
    %v5783 = vpop.f32.mrf.mxu0
    %5784 = vmatprep.mubr.f32.mxu0 0.0
    %5785 = vmatmul.mubr.f32.gmra.mxu0 %v5679
    %v5786 = vpop.f32.mrf.mxu0
    %v5787 = vadd.f32 0.0, %v5786
    %v5788 = vpop.f32.mrf.mxu0
    %5789 = vmatprep.mubr.f32.mxu0 0.0
    %5790 = vmatmul.mubr.f32.gmra.mxu0 %v5680
    %v5791 = vpop.f32.mrf.mxu0
    %v5792 = vadd.f32 0.0, %v5791
    %v5793 = vpop.f32.mrf.mxu0
    %5794 = vmatprep.mubr.f32.mxu0 0.0
    %5795 = vmatmul.mubr.f32.gmra.mxu0 %v5681
    %v5796 = vpop.f32.mrf.mxu0
    %v5797 = vadd.f32 0.0, %v5796
    %v5798 = vpop.f32.mrf.mxu0
    %5799 = vmatprep.mubr.f32.mxu0 0.0
    %5800 = vmatmul.mubr.f32.gmra.mxu0 %v5682
    %v5801 = vpop.f32.mrf.mxu0
    %v5802 = vadd.f32 0.0, %v5801
    %v5803 = vpop.f32.mrf.mxu0
    %5804 = vdwg.mxu0
    %v5805 = vld [vmem:[%s1] sm:$0xff]
    %v5806 = vld [vmem:[%s1 + $0x8] sm:$0xff]
    %v5807 = vld [vmem:[%s1 + $0x10] sm:$0xff]
    %v5808 = vld [vmem:[%s1 + $0x18] sm:$0xff]
    %v5809 = vld [vmem:[%s1 + $0x20] sm:$0xff]
    %v5810 = vld [vmem:[%s1 + $0x28] sm:$0xff]
    %v5811 = vld [vmem:[%s1 + $0x30] sm:$0xff]
    %v5812 = vld [vmem:[%s1 + $0x38] sm:$0xff]
    %v5814 = vsel %vm1528, %v5805, 0
    %v5817 = vsel %vm1528, %v5806, 0
    %v5820 = vsel %vm1528, %v5807, 0
    %v5823 = vsel %vm1528, %v5808, 0
    %v5826 = vsel %vm1528, %v5809, 0
    %v5829 = vsel %vm1528, %v5810, 0
    %v5832 = vsel %vm1528, %v5811, 0
    %v5835 = vsel %vm1528, %v5812, 0
    %5837 = vmatprep.subr.mxu0 0.0
    %5838 = vmatpush1.msra.mxu0 0.0
    %5839 = vmatprep.subr.mxu0 0.0
    %5840 = vmatpush1.msra.mxu0 0.0
    %5841 = vmatprep.subr.mxu0 0.0
    %5842 = vmatpush1.msra.mxu0 0.0
    %5843 = vmatprep.subr.mxu0 0.0
    %5844 = vmatpush1.msra.mxu0 0.0
    %5845 = vmatprep.subr.mxu0 0.0
    %5846 = vmatpush1.msra.mxu0 0.0
    %5847 = vmatprep.subr.mxu0 0.0
    %5848 = vmatpush1.msra.mxu0 0.0
    %5849 = vmatprep.subr.mxu0 0.0
    %5850 = vmatpush1.msra.mxu0 0.0
    %5851 = vmatprep.subr.mxu0 0.0
    %5852 = vmatpush1.msra.mxu0 0.0
    %5853 = vmatprep.subr.mxu0 0.0
    %5854 = vmatpush1.msra.mxu0 %v5802
    %5855 = vmatprep.subr.mxu0 0.0
    %5856 = vmatpush1.msra.mxu0 %v5797
    %5857 = vmatprep.subr.mxu0 0.0
    %5858 = vmatpush1.msra.mxu0 %v5792
    %5859 = vmatprep.subr.mxu0 0.0
    %5860 = vmatpush1.msra.mxu0 %v5787
    %5861 = vmatprep.subr.mxu0 0.0
    %5862 = vmatpush1.msra.mxu0 %v5782
    %5863 = vmatprep.subr.mxu0 0.0
    %5864 = vmatpush1.msra.mxu0 %v5777
    %5865 = vmatprep.subr.mxu0 0.0
    %5866 = vmatpush1.msra.mxu0 %v5772
    %5867 = vmatprep.subr.mxu0 0.0
    %5868 = vmatpush1.msra.mxu0 %v5767
    %5869 = vmatprep.subr.mxu0 0.0
    %5870 = vmatpush2.msra.mxu0 0.0
    %5871 = vmatprep.subr.mxu0 0.0
    %5872 = vmatpush2.msra.mxu0 0.0
    %5873 = vmatprep.subr.mxu0 0.0
    %5874 = vmatpush2.msra.mxu0 0.0
    %5875 = vmatprep.subr.mxu0 0.0
    %5876 = vmatpush2.msra.mxu0 0.0
    %5877 = vmatprep.subr.mxu0 0.0
    %5878 = vmatpush2.msra.mxu0 0.0
    %5879 = vmatprep.subr.mxu0 0.0
    %5880 = vmatpush2.msra.mxu0 0.0
    %5881 = vmatprep.subr.mxu0 0.0
    %5882 = vmatpush2.msra.mxu0 0.0
    %5883 = vmatprep.subr.mxu0 0.0
    %5884 = vmatpush2.msra.mxu0 0.0
    %5885 = vmatprep.subr.mxu0 0.0
    %5886 = vmatpush2.msra.mxu0 0.0
    %5887 = vmatprep.subr.mxu0 0.0
    %5888 = vmatpush2.msra.mxu0 0.0
    %5889 = vmatprep.subr.mxu0 0.0
    %5890 = vmatpush2.msra.mxu0 0.0
    %5891 = vmatprep.subr.mxu0 0.0
    %5892 = vmatpush2.msra.mxu0 0.0
    %5893 = vmatprep.subr.mxu0 0.0
    %5894 = vmatpush2.msra.mxu0 0.0
    %5895 = vmatprep.subr.mxu0 0.0
    %5896 = vmatpush2.msra.mxu0 0.0
    %5897 = vmatprep.subr.mxu0 0.0
    %5898 = vmatpush2.msra.mxu0 0.0
    %5899 = vmatprep.subr.mxu0 0.0
    %5900 = vmatpush2.msra.mxu0 0.0
    %5901 = vmatprep.mubr.f32.mxu0 0.0
    %5902 = vmatmul.mubr.f32.gmra.mxu0 %v5814
    %v5903 = vpop.f32.mrf.mxu0
    %v5904 = vadd.f32 %v4578, %v5903
    %v5905 = vpop.f32.mrf.mxu0
    %5906 = vmatprep.mubr.f32.mxu0 0.0
    %5907 = vmatmul.mubr.f32.gmra.mxu0 %v5817
    %v5908 = vpop.f32.mrf.mxu0
    %v5909 = vadd.f32 %v4579, %v5908
    %v5910 = vpop.f32.mrf.mxu0
    %5911 = vmatprep.mubr.f32.mxu0 0.0
    %5912 = vmatmul.mubr.f32.gmra.mxu0 %v5820
    %v5913 = vpop.f32.mrf.mxu0
    %v5914 = vadd.f32 %v4580, %v5913
    %v5915 = vpop.f32.mrf.mxu0
    %5916 = vmatprep.mubr.f32.mxu0 0.0
    %5917 = vmatmul.mubr.f32.gmra.mxu0 %v5823
    %v5918 = vpop.f32.mrf.mxu0
    %v5919 = vadd.f32 %v4581, %v5918
    %v5920 = vpop.f32.mrf.mxu0
    %5921 = vmatprep.mubr.f32.mxu0 0.0
    %5922 = vmatmul.mubr.f32.gmra.mxu0 %v5826
    %v5923 = vpop.f32.mrf.mxu0
    %v5924 = vadd.f32 %v4582, %v5923
    %v5925 = vpop.f32.mrf.mxu0
    %5926 = vmatprep.mubr.f32.mxu0 0.0
    %5927 = vmatmul.mubr.f32.gmra.mxu0 %v5829
    %v5928 = vpop.f32.mrf.mxu0
    %v5929 = vadd.f32 %v4583, %v5928
    %v5930 = vpop.f32.mrf.mxu0
    %5931 = vmatprep.mubr.f32.mxu0 0.0
    %5932 = vmatmul.mubr.f32.gmra.mxu0 %v5832
    %v5933 = vpop.f32.mrf.mxu0
    %v5934 = vadd.f32 %v4584, %v5933
    %v5935 = vpop.f32.mrf.mxu0
    %5936 = vmatprep.mubr.f32.mxu0 0.0
    %5937 = vmatmul.mubr.f32.gmra.mxu0 %v5835
    %v5938 = vpop.f32.mrf.mxu0
    %v5939 = vadd.f32 %v4585, %v5938
    %v5940 = vpop.f32.mrf.mxu0
    %5941 = vdwg.mxu0
    %v5942 = vld [vmem:[%s14] sm:$0x1]
    %v5943 = vmul.f32 %v5904, %v5904
    %v5944 = vmul.f32 %v5909, %v5909
    %v5945 = vmul.f32 %v5914, %v5914
    %v5946 = vmul.f32 %v5919, %v5919
    %v5947 = vmul.f32 %v5924, %v5924
    %v5948 = vmul.f32 %v5929, %v5929
    %v5949 = vmul.f32 %v5934, %v5934
    %v5950 = vmul.f32 %v5939, %v5939
    %5951 = vadd.xlane.f32.xlu0 %v5943
    %v5952 = vpop.xlane.xlu0 %5951
    %5953 = vadd.xlane.f32.xlu0 %v5944
    %v5954 = vpop.xlane.xlu0 %5953
    %5955 = vadd.xlane.f32.xlu0 %v5945
    %v5956 = vpop.xlane.xlu0 %5955
    %5957 = vadd.xlane.f32.xlu0 %v5946
    %v5958 = vpop.xlane.xlu0 %5957
    %5959 = vadd.xlane.f32.xlu0 %v5947
    %v5960 = vpop.xlane.xlu0 %5959
    %5961 = vadd.xlane.f32.xlu0 %v5948
    %v5962 = vpop.xlane.xlu0 %5961
    %5963 = vadd.xlane.f32.xlu0 %v5949
    %v5964 = vpop.xlane.xlu0 %5963
    %5965 = vadd.xlane.f32.xlu0 %v5950
    %v5966 = vpop.xlane.xlu0 %5965
    %v5967 = vmul.f32 %v5952, %v263
    %v5968 = vmul.f32 %v5954, %v263
    %v5969 = vmul.f32 %v5956, %v263
    %v5970 = vmul.f32 %v5958, %v263
    %v5971 = vmul.f32 %v5960, %v263
    %v5972 = vmul.f32 %v5962, %v263
    %v5973 = vmul.f32 %v5964, %v263
    %v5974 = vmul.f32 %v5966, %v263
    %v5975 = vadd.f32 %v5967, 1e-05
    %v5976 = vadd.f32 %v5968, 1e-05
    %v5977 = vadd.f32 %v5969, 1e-05
    %v5978 = vadd.f32 %v5970, 1e-05
    %v5979 = vadd.f32 %v5971, 1e-05
    %v5980 = vadd.f32 %v5972, 1e-05
    %v5981 = vadd.f32 %v5973, 1e-05
    %v5982 = vadd.f32 %v5974, 1e-05
    %v5983 = vrsqrt.pop %v5975
    %v5984 = vrsqrt.pop %v5976
    %v5985 = vrsqrt.pop %v5977
    %v5986 = vrsqrt.pop %v5978
    %v5987 = vrsqrt.pop %v5979
    %v5988 = vrsqrt.pop %v5980
    %v5989 = vrsqrt.pop %v5981
    %v5990 = vrsqrt.pop %v5982
    %v5991 = vmul.f32 %v5904, %v5983
    %v5992 = vmul.f32 %v5909, %v5984
    %v5993 = vmul.f32 %v5914, %v5985
    %v5994 = vmul.f32 %v5919, %v5986
    %v5995 = vmul.f32 %v5924, %v5987
    %v5996 = vmul.f32 %v5929, %v5988
    %v5997 = vmul.f32 %v5934, %v5989
    %v5998 = vmul.f32 %v5939, %v5990
    %v6000 = vlaneseq
    %v6001 = vshrl.u32 %v6000, 7
    %v6002 = vsub.s32 0, %v6001
    %v6003 = vrot.slane %v5942, %v6002
    %v6005 = vmul.f32 %v5991, %v6003
    %v6006 = vmul.f32 %v5992, %v6003
    %v6007 = vmul.f32 %v5993, %v6003
    %v6008 = vmul.f32 %v5994, %v6003
    %v6009 = vmul.f32 %v5995, %v6003
    %v6010 = vmul.f32 %v5996, %v6003
    %v6011 = vmul.f32 %v5997, %v6003
    %v6012 = vmul.f32 %v5998, %v6003
    %v6013 = vld [vmem:[%s15] sm:$0xff]
    %v6014 = vld [vmem:[%s15 + $0x8] sm:$0xff]
    %v6015 = vld [vmem:[%s15 + $0x10] sm:$0xff]
    %v6016 = vld [vmem:[%s15 + $0x18] sm:$0xff]
    %v6017 = vld [vmem:[%s15 + $0x20] sm:$0xff]
    %v6018 = vld [vmem:[%s15 + $0x28] sm:$0xff]
    %v6019 = vld [vmem:[%s15 + $0x30] sm:$0xff]
    %v6020 = vld [vmem:[%s15 + $0x38] sm:$0xff]
    %v6021 = vld [vmem:[%s15 + $0x40] sm:$0xff]
    %v6022 = vld [vmem:[%s15 + $0x48] sm:$0xff]
    %v6023 = vld [vmem:[%s15 + $0x50] sm:$0xff]
    %v6024 = vld [vmem:[%s15 + $0x58] sm:$0xff]
    %v6025 = vld [vmem:[%s15 + $0x60] sm:$0xff]
    %v6026 = vld [vmem:[%s15 + $0x68] sm:$0xff]
    %v6027 = vld [vmem:[%s15 + $0x70] sm:$0xff]
    %v6028 = vld [vmem:[%s15 + $0x78] sm:$0xff]
    %v6029 = vld [vmem:[%s16] sm:$0x1]
    %v6031 = vlaneseq
    %v6032 = vshrl.u32 %v6031, 7
    %v6033 = vsub.s32 0, %v6032
    %v6034 = vrot.slane %v6029, %v6033
    %6036 = vmatprep.subr.mxu0 0.0
    %6037 = vmatpush1.msra.mxu0 %v6028
    %6038 = vmatprep.subr.mxu0 0.0
    %6039 = vmatpush1.msra.mxu0 %v6027
    %6040 = vmatprep.subr.mxu0 0.0
    %6041 = vmatpush1.msra.mxu0 %v6026
    %6042 = vmatprep.subr.mxu0 0.0
    %6043 = vmatpush1.msra.mxu0 %v6025
    %6044 = vmatprep.subr.mxu0 0.0
    %6045 = vmatpush1.msra.mxu0 %v6024
    %6046 = vmatprep.subr.mxu0 0.0
    %6047 = vmatpush1.msra.mxu0 %v6023
    %6048 = vmatprep.subr.mxu0 0.0
    %6049 = vmatpush1.msra.mxu0 %v6022
    %6050 = vmatprep.subr.mxu0 0.0
    %6051 = vmatpush1.msra.mxu0 %v6021
    %6052 = vmatprep.subr.mxu0 0.0
    %6053 = vmatpush1.msra.mxu0 %v6020
    %6054 = vmatprep.subr.mxu0 0.0
    %6055 = vmatpush1.msra.mxu0 %v6019
    %6056 = vmatprep.subr.mxu0 0.0
    %6057 = vmatpush1.msra.mxu0 %v6018
    %6058 = vmatprep.subr.mxu0 0.0
    %6059 = vmatpush1.msra.mxu0 %v6017
    %6060 = vmatprep.subr.mxu0 0.0
    %6061 = vmatpush1.msra.mxu0 %v6016
    %6062 = vmatprep.subr.mxu0 0.0
    %6063 = vmatpush1.msra.mxu0 %v6015
    %6064 = vmatprep.subr.mxu0 0.0
    %6065 = vmatpush1.msra.mxu0 %v6014
    %6066 = vmatprep.subr.mxu0 0.0
    %6067 = vmatpush1.msra.mxu0 %v6013
    %6068 = vmatprep.subr.mxu0 0.0
    %6069 = vmatpush2.msra.mxu0 0.0
    %6070 = vmatprep.subr.mxu0 0.0
    %6071 = vmatpush2.msra.mxu0 0.0
    %6072 = vmatprep.subr.mxu0 0.0
    %6073 = vmatpush2.msra.mxu0 0.0
    %6074 = vmatprep.subr.mxu0 0.0
    %6075 = vmatpush2.msra.mxu0 0.0
    %6076 = vmatprep.subr.mxu0 0.0
    %6077 = vmatpush2.msra.mxu0 0.0
    %6078 = vmatprep.subr.mxu0 0.0
    %6079 = vmatpush2.msra.mxu0 0.0
    %6080 = vmatprep.subr.mxu0 0.0
    %6081 = vmatpush2.msra.mxu0 0.0
    %6082 = vmatprep.subr.mxu0 0.0
    %6083 = vmatpush2.msra.mxu0 0.0
    %6084 = vmatprep.subr.mxu0 0.0
    %6085 = vmatpush2.msra.mxu0 0.0
    %6086 = vmatprep.subr.mxu0 0.0
    %6087 = vmatpush2.msra.mxu0 0.0
    %6088 = vmatprep.subr.mxu0 0.0
    %6089 = vmatpush2.msra.mxu0 0.0
    %6090 = vmatprep.subr.mxu0 0.0
    %6091 = vmatpush2.msra.mxu0 0.0
    %6092 = vmatprep.subr.mxu0 0.0
    %6093 = vmatpush2.msra.mxu0 0.0
    %6094 = vmatprep.subr.mxu0 0.0
    %6095 = vmatpush2.msra.mxu0 0.0
    %6096 = vmatprep.subr.mxu0 0.0
    %6097 = vmatpush2.msra.mxu0 0.0
    %6098 = vmatprep.subr.mxu0 0.0
    %6099 = vmatpush2.msra.mxu0 0.0
    %6100 = vmatprep.mubr.f32.mxu0 0.0
    %6101 = vmatmul.mubr.f32.gmra.mxu0 %v6005
    %v6102 = vpop.f32.mrf.mxu0
    %v6103 = vadd.f32 %v6034, %v6102
    %v6104 = vpop.f32.mrf.mxu0
    %6105 = vmatprep.mubr.f32.mxu0 0.0
    %6106 = vmatmul.mubr.f32.gmra.mxu0 %v6006
    %v6107 = vpop.f32.mrf.mxu0
    %v6108 = vadd.f32 %v6034, %v6107
    %v6109 = vpop.f32.mrf.mxu0
    %6110 = vmatprep.mubr.f32.mxu0 0.0
    %6111 = vmatmul.mubr.f32.gmra.mxu0 %v6007
    %v6112 = vpop.f32.mrf.mxu0
    %v6113 = vadd.f32 %v6034, %v6112
    %v6114 = vpop.f32.mrf.mxu0
    %6115 = vmatprep.mubr.f32.mxu0 0.0
    %6116 = vmatmul.mubr.f32.gmra.mxu0 %v6008
    %v6117 = vpop.f32.mrf.mxu0
    %v6118 = vadd.f32 %v6034, %v6117
    %v6119 = vpop.f32.mrf.mxu0
    %6120 = vmatprep.mubr.f32.mxu0 0.0
    %6121 = vmatmul.mubr.f32.gmra.mxu0 %v6009
    %v6122 = vpop.f32.mrf.mxu0
    %v6123 = vadd.f32 %v6034, %v6122
    %v6124 = vpop.f32.mrf.mxu0
    %6125 = vmatprep.mubr.f32.mxu0 0.0
    %6126 = vmatmul.mubr.f32.gmra.mxu0 %v6010
    %v6127 = vpop.f32.mrf.mxu0
    %v6128 = vadd.f32 %v6034, %v6127
    %v6129 = vpop.f32.mrf.mxu0
    %6130 = vmatprep.mubr.f32.mxu0 0.0
    %6131 = vmatmul.mubr.f32.gmra.mxu0 %v6011
    %v6132 = vpop.f32.mrf.mxu0
    %v6133 = vadd.f32 %v6034, %v6132
    %v6134 = vpop.f32.mrf.mxu0
    %6135 = vmatprep.mubr.f32.mxu0 0.0
    %6136 = vmatmul.mubr.f32.gmra.mxu0 %v6012
    %v6137 = vpop.f32.mrf.mxu0
    %v6138 = vadd.f32 %v6034, %v6137
    %v6139 = vpop.f32.mrf.mxu0
    %6140 = vdwg.mxu0
    %6141 = vst [vmem:[#allocation9] sm:$0xff] %v6103
    %6142 = vst [vmem:[#allocation9 + $0x8] sm:$0xff] %v6108
    %6143 = vst [vmem:[#allocation9 + $0x10] sm:$0xff] %v6113
    %6144 = vst [vmem:[#allocation9 + $0x18] sm:$0xff] %v6118
    %6145 = vst [vmem:[#allocation9 + $0x20] sm:$0xff] %v6123
    %6146 = vst [vmem:[#allocation9 + $0x28] sm:$0xff] %v6128
    %6147 = vst [vmem:[#allocation9 + $0x30] sm:$0xff] %v6133
    %6148 = vst [vmem:[#allocation9 + $0x38] sm:$0xff] %v6138
    // Predicated region
    $region78: #{mamba_forward.1} parent=1 // pred_check
      _
    $region79: #{mamba_forward.1} parent=1 // pred_check_branch
      %6150 = sbr.rel (0) target = $region81
    $region80: #{mamba_forward.1} parent=1 // pred_region
      %s6152 = ssub.s32 1024, 1024
      %6153 = vsyncadd [#allocation6], %s6152
      %s6154 = sshll.u32 [#allocation9], 4
      %s6155 = int_to_ptr.vmem [resolvable:$true] %s6154
      %6160 = dma.vmem_to_hbm [thread:$0]  %s6155, 1024, %s17, [#allocation6], 128, 128, 8
    $region81: #{mamba_forward.1} parent=1 // pred_fallthru
      _
    // Predicated region
    $region82: #{mamba_forward.1} parent=1 // pred_check
      _
    $region83: #{mamba_forward.1} parent=1 // pred_check_branch
      %6162 = sbr.rel (0) target = $region85
    $region84: #{mamba_forward.1} parent=1 // pred_region
      %6163 = dma.done [#allocation6], 1024
    $region85: #{mamba_forward.1} parent=1 // pred_fallthru
      _
    %6164 = vsyncpa [#allocation5], 1
    %6165 = vsyncpa [#allocation8], 1
    %6166 = vsyncpa [#allocation6], 1

</llo_original>
